<compile_context>
chip_gen: v6e
topology: v6e:2x2x1
jax: 0.10.0
libtpu: 0.0.40
codegen_flags: <defaults>
</compile_context>

<pallas_src>
import numpy as np

import jax
import jax.numpy as jnp
from jax import lax
from jax.experimental import pallas as pl
from jax.experimental.pallas import tpu as pltpu


# ---------------------------------------------------------------------------
# Fused RETAIN forward kernel.
# ---------------------------------------------------------------------------
def _retain_fused_kernel(
    # inputs
    xr_ref, rw_ref, rb_ref,
    wih0_ref, wihr_ref, whh_ref, bias_ref,
    wa_ref, ba_ref, wb_ref, bb_ref, wp_ref, bp_ref,
    # outputs
    alpha_ref, beta_ref, y_ref,
    # scratch
    v_scr, gx_a, gx_b, seq_a, seq_b,
):
    T = xr_ref.shape[0]
    L = whh_ref.shape[1]
    H = whh_ref.shape[2]

    # ---- root embedding (Conv1d k=1 == matmul); input is already time-reversed.
    v_scr[...] = (
        jnp.dot(xr_ref[...], rw_ref[...], preferred_element_type=jnp.float32)
        + rb_ref[...]
    )  # (T, E)

    # ---- two L-layer LSTM stacks, interleaved per timestep -------------------
    for l in range(L):
        if l == 0:
            in_a = v_scr[...]
            in_b = v_scr[...]
            wih_a = wih0_ref[0, :, :]
            wih_b = wih0_ref[1, :, :]
        else:
            in_a = seq_a[...]
            in_b = seq_b[...]
            wih_a = wihr_ref[0, l - 1, :, :]
            wih_b = wihr_ref[1, l - 1, :, :]

        # Hoisted input projection: one (T, In) @ (In, 4H) matmul per stack,
        # with the (b_ih + b_hh) bias folded in.  The serial loop below only
        # does the (1, H) @ (H, 4H) recurrence.
        gx_a[...] = (
            jnp.dot(in_a, wih_a, preferred_element_type=jnp.float32)
            + bias_ref[0, l, :, :]
        )
        gx_b[...] = (
            jnp.dot(in_b, wih_b, preferred_element_type=jnp.float32)
            + bias_ref[1, l, :, :]
        )

        whh_a = whh_ref[0, l, :, :]
        whh_b = whh_ref[1, l, :, :]

        def step(t, carry, whh_a=whh_a, whh_b=whh_b):
            h_a, c_a, h_b, c_b = carry  # each (1, H)
            ga = gx_a[pl.ds(t, 1), :] + jnp.dot(
                h_a, whh_a, preferred_element_type=jnp.float32)   # (1, 4H)
            gb = gx_b[pl.ds(t, 1), :] + jnp.dot(
                h_b, whh_b, preferred_element_type=jnp.float32)   # (1, 4H)
            # One sigmoid + one tanh EUP pass per stack over the full gate
            # vector, then static lane slices for i / f / g / o.
            sa = jax.nn.sigmoid(ga)
            ta = jnp.tanh(ga)
            sb = jax.nn.sigmoid(gb)
            tb = jnp.tanh(gb)
            c_a = sa[:, H:2 * H] * c_a + sa[:, 0:H] * ta[:, 2 * H:3 * H]
            c_b = sb[:, H:2 * H] * c_b + sb[:, 0:H] * tb[:, 2 * H:3 * H]
            h_a = sa[:, 3 * H:4 * H] * jnp.tanh(c_a)
            h_b = sb[:, 3 * H:4 * H] * jnp.tanh(c_b)
            seq_a[pl.ds(t, 1), :] = h_a
            seq_b[pl.ds(t, 1), :] = h_b
            return (h_a, c_a, h_b, c_b)

        z = jnp.zeros((1, H), jnp.float32)
        lax.fori_loop(0, T, step, (z, z, z, z), unroll=True)

    # ---- attention maps + weighting + predictor ------------------------------
    # visit attention (Conv1d H->1): VPU multiply + lane reduce (no MXU pass).
    alpha = jax.nn.sigmoid(
        jnp.sum(seq_a[...] * wa_ref[...], axis=-1, keepdims=True) + ba_ref[...]
    )  # (T, 1)
    # feature attention (Conv1d H->E): real matmul.
    beta = jax.nn.sigmoid(
        jnp.dot(seq_b[...], wb_ref[...], preferred_element_type=jnp.float32)
        + bb_ref[...]
    )  # (T, E)
    v_weighted = v_scr[...] * beta * alpha
    # predictor (Conv1d E->1): multiply + lane reduce, then ReLU.
    y = jnp.maximum(
        jnp.sum(v_weighted * wp_ref[...], axis=-1, keepdims=True) + bp_ref[...],
        0.0,
    )  # (T, 1)

    alpha_ref[...] = alpha
    beta_ref[...] = beta
    y_ref[...] = y


# ---------------------------------------------------------------------------
# Parameter construction (deterministic, synthetic, PyTorch-style init).
# ---------------------------------------------------------------------------
def init_retain_params(key, input_size, embedding_size, hidden_size,
                       n_recurrent_layers=3):
    In, E, H, L = input_size, embedding_size, hidden_size, n_recurrent_layers
    keys = iter(jax.random.split(key, 10 * L + 20))

    def u(shape, fan_in):
        bound = 1.0 / float(fan_in) ** 0.5
        return jax.random.uniform(next(keys), shape, jnp.float32, -bound, bound)

    params = {}
    # root_map: Conv1d(In -> E, k=1) as (In, E) matmul weights.
    params["root_w"] = u((In, E), In)
    params["root_b"] = u((1, E), In)

    # Two LSTM stacks (stack 0 = visit/"alpha", stack 1 = feature/"beta").
    params["wih0"] = jnp.stack([u((E, 4 * H), H) for _ in range(2)])  # (2, E, 4H)
    rest = max(L - 1, 1)
    params["wih_rest"] = jnp.stack(
        [jnp.stack([u((H, 4 * H), H) for _ in range(rest)]) for _ in range(2)]
    )  # (2, L-1, H, 4H)  (unused dummy if L == 1)
    params["whh"] = jnp.stack(
        [jnp.stack([u((H, 4 * H), H) for _ in range(L)]) for _ in range(2)]
    )  # (2, L, H, 4H)
    params["bias"] = jnp.stack(
        [jnp.stack([u((1, 4 * H), H) + u((1, 4 * H), H) for _ in range(L)])
         for _ in range(2)]
    )  # (2, L, 1, 4H)   (b_ih + b_hh combined)

    # visit_attention_map: Conv1d(H -> 1) as a (1, H) row (lane reduce).
    params["wa"] = u((1, H), H)
    params["ba"] = u((1, 1), H)
    # feature_attention_map: Conv1d(H -> E) as (H, E) matmul weights.
    params["wb_t"] = u((H, E), H)
    params["bb"] = u((1, E), H)
    # predictor: Conv1d(E -> 1) as a (1, E) row.
    params["wp"] = u((1, E), E)
    params["bp"] = u((1, 1), E)
    return params


# ---------------------------------------------------------------------------
# Forward pass (mirrors RETAINModel.forward).
# ---------------------------------------------------------------------------
def retain_forward(params, x):
    """x: (1, T, input_size) -> (y (1,T), alpha (1,1,T), beta (1,E,T))."""
    assert x.shape[0] == 1, "Only one example can be processed at once"
    x = x.astype(jnp.float32)
    # TODO(synk): the reference `x[:, ::-1, :]` would error on a torch tensor;
    # implemented as the intended time reversal (outputs stay in reversed-time
    # order, exactly as the reference's downstream math implies).
    x_rev = jnp.flip(x[0], axis=0)  # (T, In)

    T = x_rev.shape[0]
    E = params["root_w"].shape[1]
    H = params["whh"].shape[2]

    vmem = pl.BlockSpec(memory_space=pltpu.MemorySpace.VMEM)
    alpha, beta, y = pl.pallas_call(
        _retain_fused_kernel,
        out_shape=(
            jax.ShapeDtypeStruct((T, 1), jnp.float32),   # alpha
            jax.ShapeDtypeStruct((T, E), jnp.float32),   # beta
            jax.ShapeDtypeStruct((T, 1), jnp.float32),   # y
        ),
        in_specs=[vmem] * 13,
        out_specs=(vmem, vmem, vmem),
        scratch_shapes=[
            pltpu.VMEM((T, E), jnp.float32),       # v (reversed-time embedding)
            pltpu.VMEM((T, 4 * H), jnp.float32),   # hoisted gates_x, alpha stack
            pltpu.VMEM((T, 4 * H), jnp.float32),   # hoisted gates_x, beta stack
            pltpu.VMEM((T, H), jnp.float32),       # layer output seq, alpha stack
            pltpu.VMEM((T, H), jnp.float32),       # layer output seq, beta stack
        ],
    )(x_rev, params["root_w"], params["root_b"],
      params["wih0"], params["wih_rest"], params["whh"], params["bias"],
      params["wa"], params["ba"], params["wb_t"], params["bb"],
      params["wp"], params["bp"])

    # Back to PyTorch output layouts.
    y_out = y[:, 0][None, :]   # (1, T)
    alpha_out = alpha.T[None]  # (1, 1, T)
    beta_out = beta.T[None]    # (1, E, T)
    return y_out, alpha_out, beta_out


# ---------------------------------------------------------------------------
# Pure-JAX reference (for a correctness sanity check).
# ---------------------------------------------------------------------------
def _retain_forward_ref(params, x):
    hp = lax.Precision.HIGHEST
    x_rev = jnp.flip(x[0].astype(jnp.float32), axis=0)
    v = jnp.dot(x_rev, params["root_w"], precision=hp) + params["root_b"]
    L = params["whh"].shape[1]
    H = params["whh"].shape[2]

    def run_stack(s, inp):
        h_seq = inp
        for l in range(L):
            wih = params["wih0"][s] if l == 0 else params["wih_rest"][s, l - 1]
            whh = params["whh"][s, l]
            b = params["bias"][s, l]
            gx = jnp.dot(h_seq, wih, precision=hp) + b  # (T, 4H)

            def step(carry, g_t, whh=whh):
                h, c = carry
                g = g_t + jnp.dot(h, whh, precision=hp)
                i = jax.nn.sigmoid(g[:, 0:H])
                f = jax.nn.sigmoid(g[:, H:2 * H])
                gg = jnp.tanh(g[:, 2 * H:3 * H])
                o = jax.nn.sigmoid(g[:, 3 * H:4 * H])
                c = f * c + i * gg
                h = o * jnp.tanh(c)
                return (h, c), h[0]

            init = (jnp.zeros((1, H), jnp.float32), jnp.zeros((1, H), jnp.float32))
            _, h_seq = lax.scan(step, init, gx[:, None, :])
        return h_seq

    alpha_z = run_stack(0, v)
    beta_z = run_stack(1, v)
    alpha = jax.nn.sigmoid(
        jnp.sum(alpha_z * params["wa"], axis=-1, keepdims=True) + params["ba"])
    beta = jax.nn.sigmoid(
        jnp.dot(beta_z, params["wb_t"], precision=hp) + params["bb"])
    # TODO(synk): reference calls self.predictor(z) with `z` undefined (bug in
    # the original source); implemented with v_weighted, the clear intent.
    vw = v * beta * alpha
    y = jnp.maximum(
        jnp.sum(vw * params["wp"], axis=-1, keepdims=True) + params["bp"], 0.0)
    return y[:, 0][None, :], alpha.T[None], beta.T[None]


if __name__ == "__main__":
    input_size = 16
    embedding_size = 32
    hidden_size = 32
    n_layers = 3
    T = 8

    key = jax.random.PRNGKey(0)
    k_params, k_x = jax.random.split(key)
    params = init_retain_params(k_params, input_size, embedding_size,
                                hidden_size, n_layers)
    x = jax.random.normal(k_x, (1, T, input_size), dtype=jnp.float32)

    fwd = jax.jit(retain_forward)
    y, alpha, beta = fwd(params, x)
    jax.block_until_ready((y, alpha, beta))

    assert y.shape == (1, T)
    assert alpha.shape == (1, 1, T)
    assert beta.shape == (1, embedding_size, T)

    # Sanity check against a pure-JAX reference (loose tolerance covers
    # MXU/EUP vs. XLA precision differences; catches structural errors).
    y_r, a_r, b_r = _retain_forward_ref(params, x)
    np.testing.assert_allclose(np.asarray(y), np.asarray(y_r), rtol=3e-2, atol=3e-2)
    np.testing.assert_allclose(np.asarray(alpha), np.asarray(a_r), rtol=3e-2, atol=3e-2)
    np.testing.assert_allclose(np.asarray(beta), np.asarray(b_r), rtol=3e-2, atol=3e-2)

    print("KERNEL_OK")
</pallas_src>

<mosaic_0001>
module attributes {stable_mosaic.version = 11 : i64} {
  func.func @_retain_fused_kernel(%arg0: memref<8x16xf32, #tpu.memory_space<vmem>>, %arg1: memref<16x32xf32, #tpu.memory_space<vmem>>, %arg2: memref<1x32xf32, #tpu.memory_space<vmem>>, %arg3: memref<2x32x128xf32, #tpu.memory_space<vmem>>, %arg4: memref<2x2x32x128xf32, #tpu.memory_space<vmem>>, %arg5: memref<2x3x32x128xf32, #tpu.memory_space<vmem>>, %arg6: memref<2x3x1x128xf32, #tpu.memory_space<vmem>>, %arg7: memref<1x32xf32, #tpu.memory_space<vmem>>, %arg8: memref<1x1xf32, #tpu.memory_space<vmem>>, %arg9: memref<32x32xf32, #tpu.memory_space<vmem>>, %arg10: memref<1x32xf32, #tpu.memory_space<vmem>>, %arg11: memref<1x32xf32, #tpu.memory_space<vmem>>, %arg12: memref<1x1xf32, #tpu.memory_space<vmem>>, %arg13: memref<8x1xf32, #tpu.memory_space<vmem>>, %arg14: memref<8x32xf32, #tpu.memory_space<vmem>>, %arg15: memref<8x1xf32, #tpu.memory_space<vmem>>, %arg16: memref<8x32xf32, #tpu.memory_space<vmem>>, %arg17: memref<8x128xf32, #tpu.memory_space<vmem>>, %arg18: memref<8x128xf32, #tpu.memory_space<vmem>>, %arg19: memref<8x32xf32, #tpu.memory_space<vmem>>, %arg20: memref<8x32xf32, #tpu.memory_space<vmem>>) attributes {dimension_semantics = [], scalar_prefetch = 0 : i64, scratch_operands = 5 : i64, tpu.core_type = #tpu.core_type<tc>} {
    %c0 = arith.constant 0 : index
    %c0_0 = arith.constant 0 : index
    %0 = vector.load %arg0[%c0, %c0_0] : memref<8x16xf32, #tpu.memory_space<vmem>>, vector<8x16xf32>
    %c0_1 = arith.constant 0 : index
    %c0_2 = arith.constant 0 : index
    %1 = vector.load %arg1[%c0_1, %c0_2] : memref<16x32xf32, #tpu.memory_space<vmem>>, vector<16x32xf32>
    %cst = arith.constant dense<0.000000e+00> : vector<8x32xf32>
    %2 = tpu.matmul %0, %1, %cst {dimension_numbers = #tpu.dot_dimension_numbers<[1], [0], [0], [1], [0, 0, 1, 1], [], []>} : vector<8x16xf32>, vector<16x32xf32>, vector<8x32xf32> -> vector<8x32xf32>
    %c0_3 = arith.constant 0 : index
    %c0_4 = arith.constant 0 : index
    %3 = vector.load %arg2[%c0_3, %c0_4] : memref<1x32xf32, #tpu.memory_space<vmem>>, vector<1x32xf32>
    %4 = vector.broadcast %3 : vector<1x32xf32> to vector<8x32xf32>
    %5 = arith.addf %2, %4 : vector<8x32xf32>
    %c0_5 = arith.constant 0 : index
    %c0_6 = arith.constant 0 : index
    %6 = vector.load %arg16[%c0_5, %c0_6] : memref<8x32xf32, #tpu.memory_space<vmem>>, vector<8x32xf32>
    tpu.vector_store %arg16[%c0_5, %c0_6], %5 {strides = array<i32>} : memref<8x32xf32, #tpu.memory_space<vmem>>, vector<8x32xf32>,
    %c0_7 = arith.constant 0 : index
    %c0_8 = arith.constant 0 : index
    %7 = vector.load %arg16[%c0_7, %c0_8] : memref<8x32xf32, #tpu.memory_space<vmem>>, vector<8x32xf32>
    %c0_9 = arith.constant 0 : index
    %c0_10 = arith.constant 0 : index
    %8 = vector.load %arg16[%c0_9, %c0_10] : memref<8x32xf32, #tpu.memory_space<vmem>>, vector<8x32xf32>
    %c0_11 = arith.constant 0 : index
    %c0_12 = arith.constant 0 : index
    %c0_13 = arith.constant 0 : index
    %9 = vector.load %arg3[%c0_11, %c0_12, %c0_13] : memref<2x32x128xf32, #tpu.memory_space<vmem>>, vector<1x32x128xf32>
    %10 = vector.shape_cast %9 : vector<1x32x128xf32> to vector<32x128xf32>
    %c1 = arith.constant 1 : index
    %c0_14 = arith.constant 0 : index
    %c0_15 = arith.constant 0 : index
    %11 = vector.load %arg3[%c1, %c0_14, %c0_15] : memref<2x32x128xf32, #tpu.memory_space<vmem>>, vector<1x32x128xf32>
    %12 = vector.shape_cast %11 : vector<1x32x128xf32> to vector<32x128xf32>
    %cst_16 = arith.constant dense<0.000000e+00> : vector<8x128xf32>
    %13 = tpu.matmul %7, %10, %cst_16 {dimension_numbers = #tpu.dot_dimension_numbers<[1], [0], [0], [1], [0, 0, 1, 1], [], []>} : vector<8x32xf32>, vector<32x128xf32>, vector<8x128xf32> -> vector<8x128xf32>
    %c0_17 = arith.constant 0 : index
    %c0_18 = arith.constant 0 : index
    %c0_19 = arith.constant 0 : index
    %c0_20 = arith.constant 0 : index
    %14 = vector.load %arg6[%c0_17, %c0_18, %c0_19, %c0_20] : memref<2x3x1x128xf32, #tpu.memory_space<vmem>>, vector<1x1x1x128xf32>
    %15 = vector.shape_cast %14 : vector<1x1x1x128xf32> to vector<1x128xf32>
    %16 = vector.broadcast %15 : vector<1x128xf32> to vector<8x128xf32>
    %17 = arith.addf %13, %16 : vector<8x128xf32>
    %c0_21 = arith.constant 0 : index
    %c0_22 = arith.constant 0 : index
    %18 = vector.load %arg17[%c0_21, %c0_22] : memref<8x128xf32, #tpu.memory_space<vmem>>, vector<8x128xf32>
    tpu.vector_store %arg17[%c0_21, %c0_22], %17 {strides = array<i32>} : memref<8x128xf32, #tpu.memory_space<vmem>>, vector<8x128xf32>,
    %cst_23 = arith.constant dense<0.000000e+00> : vector<8x128xf32>
    %19 = tpu.matmul %8, %12, %cst_23 {dimension_numbers = #tpu.dot_dimension_numbers<[1], [0], [0], [1], [0, 0, 1, 1], [], []>} : vector<8x32xf32>, vector<32x128xf32>, vector<8x128xf32> -> vector<8x128xf32>
    %c1_24 = arith.constant 1 : index
    %c0_25 = arith.constant 0 : index
    %c0_26 = arith.constant 0 : index
    %c0_27 = arith.constant 0 : index
    %20 = vector.load %arg6[%c1_24, %c0_25, %c0_26, %c0_27] : memref<2x3x1x128xf32, #tpu.memory_space<vmem>>, vector<1x1x1x128xf32>
    %21 = vector.shape_cast %20 : vector<1x1x1x128xf32> to vector<1x128xf32>
    %22 = vector.broadcast %21 : vector<1x128xf32> to vector<8x128xf32>
    %23 = arith.addf %19, %22 : vector<8x128xf32>
    %c0_28 = arith.constant 0 : index
    %c0_29 = arith.constant 0 : index
    %24 = vector.load %arg18[%c0_28, %c0_29] : memref<8x128xf32, #tpu.memory_space<vmem>>, vector<8x128xf32>
    tpu.vector_store %arg18[%c0_28, %c0_29], %23 {strides = array<i32>} : memref<8x128xf32, #tpu.memory_space<vmem>>, vector<8x128xf32>,
    %c0_30 = arith.constant 0 : index
    %c0_31 = arith.constant 0 : index
    %c0_32 = arith.constant 0 : index
    %c0_33 = arith.constant 0 : index
    %25 = vector.load %arg5[%c0_30, %c0_31, %c0_32, %c0_33] : memref<2x3x32x128xf32, #tpu.memory_space<vmem>>, vector<1x1x32x128xf32>
    %26 = vector.shape_cast %25 : vector<1x1x32x128xf32> to vector<32x128xf32>
    %c1_34 = arith.constant 1 : index
    %c0_35 = arith.constant 0 : index
    %c0_36 = arith.constant 0 : index
    %c0_37 = arith.constant 0 : index
    %27 = vector.load %arg5[%c1_34, %c0_35, %c0_36, %c0_37] : memref<2x3x32x128xf32, #tpu.memory_space<vmem>>, vector<1x1x32x128xf32>
    %28 = vector.shape_cast %27 : vector<1x1x32x128xf32> to vector<32x128xf32>
    %cst_38 = arith.constant 0.000000e+00 : f32
    %29 = vector.broadcast %cst_38 : f32 to vector<1x32xf32>
    %c0_i32 = arith.constant 0 : i32
    %30 = arith.index_cast %c0_i32 : i32 to index
    %c0_39 = arith.constant 0 : index
    %31 = vector.load %arg17[%30, %c0_39] : memref<8x128xf32, #tpu.memory_space<vmem>>, vector<1x128xf32>
    %cst_40 = arith.constant dense<0.000000e+00> : vector<1x128xf32>
    %32 = tpu.matmul %29, %26, %cst_40 {dimension_numbers = #tpu.dot_dimension_numbers<[1], [0], [0], [1], [0, 0, 1, 1], [], []>} : vector<1x32xf32>, vector<32x128xf32>, vector<1x128xf32> -> vector<1x128xf32>
    %33 = arith.addf %31, %32 : vector<1x128xf32>
    %34 = arith.index_cast %c0_i32 : i32 to index
    %c0_41 = arith.constant 0 : index
    %35 = vector.load %arg18[%34, %c0_41] : memref<8x128xf32, #tpu.memory_space<vmem>>, vector<1x128xf32>
    %cst_42 = arith.constant dense<0.000000e+00> : vector<1x128xf32>
    %36 = tpu.matmul %29, %28, %cst_42 {dimension_numbers = #tpu.dot_dimension_numbers<[1], [0], [0], [1], [0, 0, 1, 1], [], []>} : vector<1x32xf32>, vector<32x128xf32>, vector<1x128xf32> -> vector<1x128xf32>
    %37 = arith.addf %35, %36 : vector<1x128xf32>
    %38 = arith.negf %33 : vector<1x128xf32>
    %39 = math.exp %38 : vector<1x128xf32>
    %cst_43 = arith.constant 1.000000e+00 : f32
    %40 = vector.broadcast %cst_43 : f32 to vector<1x128xf32>
    %41 = arith.addf %40, %39 : vector<1x128xf32>
    %42 = arith.divf %40, %41 : vector<1x128xf32>
    %43 = math.tanh %33 : vector<1x128xf32>
    %44 = arith.negf %37 : vector<1x128xf32>
    %45 = math.exp %44 : vector<1x128xf32>
    %cst_44 = arith.constant 1.000000e+00 : f32
    %46 = vector.broadcast %cst_44 : f32 to vector<1x128xf32>
    %47 = arith.addf %46, %45 : vector<1x128xf32>
    %48 = arith.divf %46, %47 : vector<1x128xf32>
    %49 = math.tanh %37 : vector<1x128xf32>
    %50 = vector.extract_strided_slice %42 {offsets = [0, 32], sizes = [1, 32], strides = [1, 1]} : vector<1x128xf32> to vector<1x32xf32>
    %51 = arith.mulf %50, %29 : vector<1x32xf32>
    %52 = vector.extract_strided_slice %42 {offsets = [0, 0], sizes = [1, 32], strides = [1, 1]} : vector<1x128xf32> to vector<1x32xf32>
    %53 = vector.extract_strided_slice %43 {offsets = [0, 64], sizes = [1, 32], strides = [1, 1]} : vector<1x128xf32> to vector<1x32xf32>
    %54 = arith.mulf %52, %53 : vector<1x32xf32>
    %55 = arith.addf %51, %54 : vector<1x32xf32>
    %56 = vector.extract_strided_slice %48 {offsets = [0, 32], sizes = [1, 32], strides = [1, 1]} : vector<1x128xf32> to vector<1x32xf32>
    %57 = arith.mulf %56, %29 : vector<1x32xf32>
    %58 = vector.extract_strided_slice %48 {offsets = [0, 0], sizes = [1, 32], strides = [1, 1]} : vector<1x128xf32> to vector<1x32xf32>
    %59 = vector.extract_strided_slice %49 {offsets = [0, 64], sizes = [1, 32], strides = [1, 1]} : vector<1x128xf32> to vector<1x32xf32>
    %60 = arith.mulf %58, %59 : vector<1x32xf32>
    %61 = arith.addf %57, %60 : vector<1x32xf32>
    %62 = vector.extract_strided_slice %42 {offsets = [0, 96], sizes = [1, 32], strides = [1, 1]} : vector<1x128xf32> to vector<1x32xf32>
    %63 = math.tanh %55 : vector<1x32xf32>
    %64 = arith.mulf %62, %63 : vector<1x32xf32>
    %65 = vector.extract_strided_slice %48 {offsets = [0, 96], sizes = [1, 32], strides = [1, 1]} : vector<1x128xf32> to vector<1x32xf32>
    %66 = math.tanh %61 : vector<1x32xf32>
    %67 = arith.mulf %65, %66 : vector<1x32xf32>
    %68 = arith.index_cast %c0_i32 : i32 to index
    %c0_45 = arith.constant 0 : index
    %69 = vector.load %arg19[%68, %c0_45] : memref<8x32xf32, #tpu.memory_space<vmem>>, vector<1x32xf32>
    tpu.vector_store %arg19[%68, %c0_45], %64 {strides = array<i32>} : memref<8x32xf32, #tpu.memory_space<vmem>>, vector<1x32xf32>,
    %70 = arith.index_cast %c0_i32 : i32 to index
    %c0_46 = arith.constant 0 : index
    %71 = vector.load %arg20[%70, %c0_46] : memref<8x32xf32, #tpu.memory_space<vmem>>, vector<1x32xf32>
    tpu.vector_store %arg20[%70, %c0_46], %67 {strides = array<i32>} : memref<8x32xf32, #tpu.memory_space<vmem>>, vector<1x32xf32>,
    %c1_i32 = arith.constant 1 : i32
    %72 = arith.index_cast %c1_i32 : i32 to index
    %c0_47 = arith.constant 0 : index
    %73 = vector.load %arg17[%72, %c0_47] : memref<8x128xf32, #tpu.memory_space<vmem>>, vector<1x128xf32>
    %cst_48 = arith.constant dense<0.000000e+00> : vector<1x128xf32>
    %74 = tpu.matmul %64, %26, %cst_48 {dimension_numbers = #tpu.dot_dimension_numbers<[1], [0], [0], [1], [0, 0, 1, 1], [], []>} : vector<1x32xf32>, vector<32x128xf32>, vector<1x128xf32> -> vector<1x128xf32>
    %75 = arith.addf %73, %74 : vector<1x128xf32>
    %76 = arith.index_cast %c1_i32 : i32 to index
    %c0_49 = arith.constant 0 : index
    %77 = vector.load %arg18[%76, %c0_49] : memref<8x128xf32, #tpu.memory_space<vmem>>, vector<1x128xf32>
    %cst_50 = arith.constant dense<0.000000e+00> : vector<1x128xf32>
    %78 = tpu.matmul %67, %28, %cst_50 {dimension_numbers = #tpu.dot_dimension_numbers<[1], [0], [0], [1], [0, 0, 1, 1], [], []>} : vector<1x32xf32>, vector<32x128xf32>, vector<1x128xf32> -> vector<1x128xf32>
    %79 = arith.addf %77, %78 : vector<1x128xf32>
    %80 = arith.negf %75 : vector<1x128xf32>
    %81 = math.exp %80 : vector<1x128xf32>
    %cst_51 = arith.constant 1.000000e+00 : f32
    %82 = vector.broadcast %cst_51 : f32 to vector<1x128xf32>
    %83 = arith.addf %82, %81 : vector<1x128xf32>
    %84 = arith.divf %82, %83 : vector<1x128xf32>
    %85 = math.tanh %75 : vector<1x128xf32>
    %86 = arith.negf %79 : vector<1x128xf32>
    %87 = math.exp %86 : vector<1x128xf32>
    %cst_52 = arith.constant 1.000000e+00 : f32
    %88 = vector.broadcast %cst_52 : f32 to vector<1x128xf32>
    %89 = arith.addf %88, %87 : vector<1x128xf32>
    %90 = arith.divf %88, %89 : vector<1x128xf32>
    %91 = math.tanh %79 : vector<1x128xf32>
    %92 = vector.extract_strided_slice %84 {offsets = [0, 32], sizes = [1, 32], strides = [1, 1]} : vector<1x128xf32> to vector<1x32xf32>
    %93 = arith.mulf %92, %55 : vector<1x32xf32>
    %94 = vector.extract_strided_slice %84 {offsets = [0, 0], sizes = [1, 32], strides = [1, 1]} : vector<1x128xf32> to vector<1x32xf32>
    %95 = vector.extract_strided_slice %85 {offsets = [0, 64], sizes = [1, 32], strides = [1, 1]} : vector<1x128xf32> to vector<1x32xf32>
    %96 = arith.mulf %94, %95 : vector<1x32xf32>
    %97 = arith.addf %93, %96 : vector<1x32xf32>
    %98 = vector.extract_strided_slice %90 {offsets = [0, 32], sizes = [1, 32], strides = [1, 1]} : vector<1x128xf32> to vector<1x32xf32>
    %99 = arith.mulf %98, %61 : vector<1x32xf32>
    %100 = vector.extract_strided_slice %90 {offsets = [0, 0], sizes = [1, 32], strides = [1, 1]} : vector<1x128xf32> to vector<1x32xf32>
    %101 = vector.extract_strided_slice %91 {offsets = [0, 64], sizes = [1, 32], strides = [1, 1]} : vector<1x128xf32> to vector<1x32xf32>
    %102 = arith.mulf %100, %101 : vector<1x32xf32>
    %103 = arith.addf %99, %102 : vector<1x32xf32>
    %104 = vector.extract_strided_slice %84 {offsets = [0, 96], sizes = [1, 32], strides = [1, 1]} : vector<1x128xf32> to vector<1x32xf32>
    %105 = math.tanh %97 : vector<1x32xf32>
    %106 = arith.mulf %104, %105 : vector<1x32xf32>
    %107 = vector.extract_strided_slice %90 {offsets = [0, 96], sizes = [1, 32], strides = [1, 1]} : vector<1x128xf32> to vector<1x32xf32>
    %108 = math.tanh %103 : vector<1x32xf32>
    %109 = arith.mulf %107, %108 : vector<1x32xf32>
    %110 = arith.index_cast %c1_i32 : i32 to index
    %c0_53 = arith.constant 0 : index
    %111 = vector.load %arg19[%110, %c0_53] : memref<8x32xf32, #tpu.memory_space<vmem>>, vector<1x32xf32>
    tpu.vector_store %arg19[%110, %c0_53], %106 {strides = array<i32>} : memref<8x32xf32, #tpu.memory_space<vmem>>, vector<1x32xf32>,
    %112 = arith.index_cast %c1_i32 : i32 to index
    %c0_54 = arith.constant 0 : index
    %113 = vector.load %arg20[%112, %c0_54] : memref<8x32xf32, #tpu.memory_space<vmem>>, vector<1x32xf32>
    tpu.vector_store %arg20[%112, %c0_54], %109 {strides = array<i32>} : memref<8x32xf32, #tpu.memory_space<vmem>>, vector<1x32xf32>,
    %c2_i32 = arith.constant 2 : i32
    %114 = arith.index_cast %c2_i32 : i32 to index
    %c0_55 = arith.constant 0 : index
    %115 = vector.load %arg17[%114, %c0_55] : memref<8x128xf32, #tpu.memory_space<vmem>>, vector<1x128xf32>
    %cst_56 = arith.constant dense<0.000000e+00> : vector<1x128xf32>
    %116 = tpu.matmul %106, %26, %cst_56 {dimension_numbers = #tpu.dot_dimension_numbers<[1], [0], [0], [1], [0, 0, 1, 1], [], []>} : vector<1x32xf32>, vector<32x128xf32>, vector<1x128xf32> -> vector<1x128xf32>
    %117 = arith.addf %115, %116 : vector<1x128xf32>
    %118 = arith.index_cast %c2_i32 : i32 to index
    %c0_57 = arith.constant 0 : index
    %119 = vector.load %arg18[%118, %c0_57] : memref<8x128xf32, #tpu.memory_space<vmem>>, vector<1x128xf32>
    %cst_58 = arith.constant dense<0.000000e+00> : vector<1x128xf32>
    %120 = tpu.matmul %109, %28, %cst_58 {dimension_numbers = #tpu.dot_dimension_numbers<[1], [0], [0], [1], [0, 0, 1, 1], [], []>} : vector<1x32xf32>, vector<32x128xf32>, vector<1x128xf32> -> vector<1x128xf32>
    %121 = arith.addf %119, %120 : vector<1x128xf32>
    %122 = arith.negf %117 : vector<1x128xf32>
    %123 = math.exp %122 : vector<1x128xf32>
    %cst_59 = arith.constant 1.000000e+00 : f32
    %124 = vector.broadcast %cst_59 : f32 to vector<1x128xf32>
    %125 = arith.addf %124, %123 : vector<1x128xf32>
    %126 = arith.divf %124, %125 : vector<1x128xf32>
    %127 = math.tanh %117 : vector<1x128xf32>
    %128 = arith.negf %121 : vector<1x128xf32>
    %129 = math.exp %128 : vector<1x128xf32>
    %cst_60 = arith.constant 1.000000e+00 : f32
    %130 = vector.broadcast %cst_60 : f32 to vector<1x128xf32>
    %131 = arith.addf %130, %129 : vector<1x128xf32>
    %132 = arith.divf %130, %131 : vector<1x128xf32>
    %133 = math.tanh %121 : vector<1x128xf32>
    %134 = vector.extract_strided_slice %126 {offsets = [0, 32], sizes = [1, 32], strides = [1, 1]} : vector<1x128xf32> to vector<1x32xf32>
    %135 = arith.mulf %134, %97 : vector<1x32xf32>
    %136 = vector.extract_strided_slice %126 {offsets = [0, 0], sizes = [1, 32], strides = [1, 1]} : vector<1x128xf32> to vector<1x32xf32>
    %137 = vector.extract_strided_slice %127 {offsets = [0, 64], sizes = [1, 32], strides = [1, 1]} : vector<1x128xf32> to vector<1x32xf32>
    %138 = arith.mulf %136, %137 : vector<1x32xf32>
    %139 = arith.addf %135, %138 : vector<1x32xf32>
    %140 = vector.extract_strided_slice %132 {offsets = [0, 32], sizes = [1, 32], strides = [1, 1]} : vector<1x128xf32> to vector<1x32xf32>
    %141 = arith.mulf %140, %103 : vector<1x32xf32>
    %142 = vector.extract_strided_slice %132 {offsets = [0, 0], sizes = [1, 32], strides = [1, 1]} : vector<1x128xf32> to vector<1x32xf32>
    %143 = vector.extract_strided_slice %133 {offsets = [0, 64], sizes = [1, 32], strides = [1, 1]} : vector<1x128xf32> to vector<1x32xf32>
    %144 = arith.mulf %142, %143 : vector<1x32xf32>
    %145 = arith.addf %141, %144 : vector<1x32xf32>
    %146 = vector.extract_strided_slice %126 {offsets = [0, 96], sizes = [1, 32], strides = [1, 1]} : vector<1x128xf32> to vector<1x32xf32>
    %147 = math.tanh %139 : vector<1x32xf32>
    %148 = arith.mulf %146, %147 : vector<1x32xf32>
    %149 = vector.extract_strided_slice %132 {offsets = [0, 96], sizes = [1, 32], strides = [1, 1]} : vector<1x128xf32> to vector<1x32xf32>
    %150 = math.tanh %145 : vector<1x32xf32>
    %151 = arith.mulf %149, %150 : vector<1x32xf32>
    %152 = arith.index_cast %c2_i32 : i32 to index
    %c0_61 = arith.constant 0 : index
    %153 = vector.load %arg19[%152, %c0_61] : memref<8x32xf32, #tpu.memory_space<vmem>>, vector<1x32xf32>
    tpu.vector_store %arg19[%152, %c0_61], %148 {strides = array<i32>} : memref<8x32xf32, #tpu.memory_space<vmem>>, vector<1x32xf32>,
    %154 = arith.index_cast %c2_i32 : i32 to index
    %c0_62 = arith.constant 0 : index
    %155 = vector.load %arg20[%154, %c0_62] : memref<8x32xf32, #tpu.memory_space<vmem>>, vector<1x32xf32>
    tpu.vector_store %arg20[%154, %c0_62], %151 {strides = array<i32>} : memref<8x32xf32, #tpu.memory_space<vmem>>, vector<1x32xf32>,
    %c3_i32 = arith.constant 3 : i32
    %156 = arith.index_cast %c3_i32 : i32 to index
    %c0_63 = arith.constant 0 : index
    %157 = vector.load %arg17[%156, %c0_63] : memref<8x128xf32, #tpu.memory_space<vmem>>, vector<1x128xf32>
    %cst_64 = arith.constant dense<0.000000e+00> : vector<1x128xf32>
    %158 = tpu.matmul %148, %26, %cst_64 {dimension_numbers = #tpu.dot_dimension_numbers<[1], [0], [0], [1], [0, 0, 1, 1], [], []>} : vector<1x32xf32>, vector<32x128xf32>, vector<1x128xf32> -> vector<1x128xf32>
    %159 = arith.addf %157, %158 : vector<1x128xf32>
    %160 = arith.index_cast %c3_i32 : i32 to index
    %c0_65 = arith.constant 0 : index
    %161 = vector.load %arg18[%160, %c0_65] : memref<8x128xf32, #tpu.memory_space<vmem>>, vector<1x128xf32>
    %cst_66 = arith.constant dense<0.000000e+00> : vector<1x128xf32>
    %162 = tpu.matmul %151, %28, %cst_66 {dimension_numbers = #tpu.dot_dimension_numbers<[1], [0], [0], [1], [0, 0, 1, 1], [], []>} : vector<1x32xf32>, vector<32x128xf32>, vector<1x128xf32> -> vector<1x128xf32>
    %163 = arith.addf %161, %162 : vector<1x128xf32>
    %164 = arith.negf %159 : vector<1x128xf32>
    %165 = math.exp %164 : vector<1x128xf32>
    %cst_67 = arith.constant 1.000000e+00 : f32
    %166 = vector.broadcast %cst_67 : f32 to vector<1x128xf32>
    %167 = arith.addf %166, %165 : vector<1x128xf32>
    %168 = arith.divf %166, %167 : vector<1x128xf32>
    %169 = math.tanh %159 : vector<1x128xf32>
    %170 = arith.negf %163 : vector<1x128xf32>
    %171 = math.exp %170 : vector<1x128xf32>
    %cst_68 = arith.constant 1.000000e+00 : f32
    %172 = vector.broadcast %cst_68 : f32 to vector<1x128xf32>
    %173 = arith.addf %172, %171 : vector<1x128xf32>
    %174 = arith.divf %172, %173 : vector<1x128xf32>
    %175 = math.tanh %163 : vector<1x128xf32>
    %176 = vector.extract_strided_slice %168 {offsets = [0, 32], sizes = [1, 32], strides = [1, 1]} : vector<1x128xf32> to vector<1x32xf32>
    %177 = arith.mulf %176, %139 : vector<1x32xf32>
    %178 = vector.extract_strided_slice %168 {offsets = [0, 0], sizes = [1, 32], strides = [1, 1]} : vector<1x128xf32> to vector<1x32xf32>
    %179 = vector.extract_strided_slice %169 {offsets = [0, 64], sizes = [1, 32], strides = [1, 1]} : vector<1x128xf32> to vector<1x32xf32>
    %180 = arith.mulf %178, %179 : vector<1x32xf32>
    %181 = arith.addf %177, %180 : vector<1x32xf32>
    %182 = vector.extract_strided_slice %174 {offsets = [0, 32], sizes = [1, 32], strides = [1, 1]} : vector<1x128xf32> to vector<1x32xf32>
    %183 = arith.mulf %182, %145 : vector<1x32xf32>
    %184 = vector.extract_strided_slice %174 {offsets = [0, 0], sizes = [1, 32], strides = [1, 1]} : vector<1x128xf32> to vector<1x32xf32>
    %185 = vector.extract_strided_slice %175 {offsets = [0, 64], sizes = [1, 32], strides = [1, 1]} : vector<1x128xf32> to vector<1x32xf32>
    %186 = arith.mulf %184, %185 : vector<1x32xf32>
    %187 = arith.addf %183, %186 : vector<1x32xf32>
    %188 = vector.extract_strided_slice %168 {offsets = [0, 96], sizes = [1, 32], strides = [1, 1]} : vector<1x128xf32> to vector<1x32xf32>
    %189 = math.tanh %181 : vector<1x32xf32>
    %190 = arith.mulf %188, %189 : vector<1x32xf32>
    %191 = vector.extract_strided_slice %174 {offsets = [0, 96], sizes = [1, 32], strides = [1, 1]} : vector<1x128xf32> to vector<1x32xf32>
    %192 = math.tanh %187 : vector<1x32xf32>
    %193 = arith.mulf %191, %192 : vector<1x32xf32>
    %194 = arith.index_cast %c3_i32 : i32 to index
    %c0_69 = arith.constant 0 : index
    %195 = vector.load %arg19[%194, %c0_69] : memref<8x32xf32, #tpu.memory_space<vmem>>, vector<1x32xf32>
    tpu.vector_store %arg19[%194, %c0_69], %190 {strides = array<i32>} : memref<8x32xf32, #tpu.memory_space<vmem>>, vector<1x32xf32>,
    %196 = arith.index_cast %c3_i32 : i32 to index
    %c0_70 = arith.constant 0 : index
    %197 = vector.load %arg20[%196, %c0_70] : memref<8x32xf32, #tpu.memory_space<vmem>>, vector<1x32xf32>
    tpu.vector_store %arg20[%196, %c0_70], %193 {strides = array<i32>} : memref<8x32xf32, #tpu.memory_space<vmem>>, vector<1x32xf32>,
    %c4_i32 = arith.constant 4 : i32
    %198 = arith.index_cast %c4_i32 : i32 to index
    %c0_71 = arith.constant 0 : index
    %199 = vector.load %arg17[%198, %c0_71] : memref<8x128xf32, #tpu.memory_space<vmem>>, vector<1x128xf32>
    %cst_72 = arith.constant dense<0.000000e+00> : vector<1x128xf32>
    %200 = tpu.matmul %190, %26, %cst_72 {dimension_numbers = #tpu.dot_dimension_numbers<[1], [0], [0], [1], [0, 0, 1, 1], [], []>} : vector<1x32xf32>, vector<32x128xf32>, vector<1x128xf32> -> vector<1x128xf32>
    %201 = arith.addf %199, %200 : vector<1x128xf32>
    %202 = arith.index_cast %c4_i32 : i32 to index
    %c0_73 = arith.constant 0 : index
    %203 = vector.load %arg18[%202, %c0_73] : memref<8x128xf32, #tpu.memory_space<vmem>>, vector<1x128xf32>
    %cst_74 = arith.constant dense<0.000000e+00> : vector<1x128xf32>
    %204 = tpu.matmul %193, %28, %cst_74 {dimension_numbers = #tpu.dot_dimension_numbers<[1], [0], [0], [1], [0, 0, 1, 1], [], []>} : vector<1x32xf32>, vector<32x128xf32>, vector<1x128xf32> -> vector<1x128xf32>
    %205 = arith.addf %203, %204 : vector<1x128xf32>
    %206 = arith.negf %201 : vector<1x128xf32>
    %207 = math.exp %206 : vector<1x128xf32>
    %cst_75 = arith.constant 1.000000e+00 : f32
    %208 = vector.broadcast %cst_75 : f32 to vector<1x128xf32>
    %209 = arith.addf %208, %207 : vector<1x128xf32>
    %210 = arith.divf %208, %209 : vector<1x128xf32>
    %211 = math.tanh %201 : vector<1x128xf32>
    %212 = arith.negf %205 : vector<1x128xf32>
    %213 = math.exp %212 : vector<1x128xf32>
    %cst_76 = arith.constant 1.000000e+00 : f32
    %214 = vector.broadcast %cst_76 : f32 to vector<1x128xf32>
    %215 = arith.addf %214, %213 : vector<1x128xf32>
    %216 = arith.divf %214, %215 : vector<1x128xf32>
    %217 = math.tanh %205 : vector<1x128xf32>
    %218 = vector.extract_strided_slice %210 {offsets = [0, 32], sizes = [1, 32], strides = [1, 1]} : vector<1x128xf32> to vector<1x32xf32>
    %219 = arith.mulf %218, %181 : vector<1x32xf32>
    %220 = vector.extract_strided_slice %210 {offsets = [0, 0], sizes = [1, 32], strides = [1, 1]} : vector<1x128xf32> to vector<1x32xf32>
    %221 = vector.extract_strided_slice %211 {offsets = [0, 64], sizes = [1, 32], strides = [1, 1]} : vector<1x128xf32> to vector<1x32xf32>
    %222 = arith.mulf %220, %221 : vector<1x32xf32>
    %223 = arith.addf %219, %222 : vector<1x32xf32>
    %224 = vector.extract_strided_slice %216 {offsets = [0, 32], sizes = [1, 32], strides = [1, 1]} : vector<1x128xf32> to vector<1x32xf32>
    %225 = arith.mulf %224, %187 : vector<1x32xf32>
    %226 = vector.extract_strided_slice %216 {offsets = [0, 0], sizes = [1, 32], strides = [1, 1]} : vector<1x128xf32> to vector<1x32xf32>
    %227 = vector.extract_strided_slice %217 {offsets = [0, 64], sizes = [1, 32], strides = [1, 1]} : vector<1x128xf32> to vector<1x32xf32>
    %228 = arith.mulf %226, %227 : vector<1x32xf32>
    %229 = arith.addf %225, %228 : vector<1x32xf32>
    %230 = vector.extract_strided_slice %210 {offsets = [0, 96], sizes = [1, 32], strides = [1, 1]} : vector<1x128xf32> to vector<1x32xf32>
    %231 = math.tanh %223 : vector<1x32xf32>
    %232 = arith.mulf %230, %231 : vector<1x32xf32>
    %233 = vector.extract_strided_slice %216 {offsets = [0, 96], sizes = [1, 32], strides = [1, 1]} : vector<1x128xf32> to vector<1x32xf32>
    %234 = math.tanh %229 : vector<1x32xf32>
    %235 = arith.mulf %233, %234 : vector<1x32xf32>
    %236 = arith.index_cast %c4_i32 : i32 to index
    %c0_77 = arith.constant 0 : index
    %237 = vector.load %arg19[%236, %c0_77] : memref<8x32xf32, #tpu.memory_space<vmem>>, vector<1x32xf32>
    tpu.vector_store %arg19[%236, %c0_77], %232 {strides = array<i32>} : memref<8x32xf32, #tpu.memory_space<vmem>>, vector<1x32xf32>,
    %238 = arith.index_cast %c4_i32 : i32 to index
    %c0_78 = arith.constant 0 : index
    %239 = vector.load %arg20[%238, %c0_78] : memref<8x32xf32, #tpu.memory_space<vmem>>, vector<1x32xf32>
    tpu.vector_store %arg20[%238, %c0_78], %235 {strides = array<i32>} : memref<8x32xf32, #tpu.memory_space<vmem>>, vector<1x32xf32>,
    %c5_i32 = arith.constant 5 : i32
    %240 = arith.index_cast %c5_i32 : i32 to index
    %c0_79 = arith.constant 0 : index
    %241 = vector.load %arg17[%240, %c0_79] : memref<8x128xf32, #tpu.memory_space<vmem>>, vector<1x128xf32>
    %cst_80 = arith.constant dense<0.000000e+00> : vector<1x128xf32>
    %242 = tpu.matmul %232, %26, %cst_80 {dimension_numbers = #tpu.dot_dimension_numbers<[1], [0], [0], [1], [0, 0, 1, 1], [], []>} : vector<1x32xf32>, vector<32x128xf32>, vector<1x128xf32> -> vector<1x128xf32>
    %243 = arith.addf %241, %242 : vector<1x128xf32>
    %244 = arith.index_cast %c5_i32 : i32 to index
    %c0_81 = arith.constant 0 : index
    %245 = vector.load %arg18[%244, %c0_81] : memref<8x128xf32, #tpu.memory_space<vmem>>, vector<1x128xf32>
    %cst_82 = arith.constant dense<0.000000e+00> : vector<1x128xf32>
    %246 = tpu.matmul %235, %28, %cst_82 {dimension_numbers = #tpu.dot_dimension_numbers<[1], [0], [0], [1], [0, 0, 1, 1], [], []>} : vector<1x32xf32>, vector<32x128xf32>, vector<1x128xf32> -> vector<1x128xf32>
    %247 = arith.addf %245, %246 : vector<1x128xf32>
    %248 = arith.negf %243 : vector<1x128xf32>
    %249 = math.exp %248 : vector<1x128xf32>
    %cst_83 = arith.constant 1.000000e+00 : f32
    %250 = vector.broadcast %cst_83 : f32 to vector<1x128xf32>
    %251 = arith.addf %250, %249 : vector<1x128xf32>
    %252 = arith.divf %250, %251 : vector<1x128xf32>
    %253 = math.tanh %243 : vector<1x128xf32>
    %254 = arith.negf %247 : vector<1x128xf32>
    %255 = math.exp %254 : vector<1x128xf32>
    %cst_84 = arith.constant 1.000000e+00 : f32
    %256 = vector.broadcast %cst_84 : f32 to vector<1x128xf32>
    %257 = arith.addf %256, %255 : vector<1x128xf32>
    %258 = arith.divf %256, %257 : vector<1x128xf32>
    %259 = math.tanh %247 : vector<1x128xf32>
    %260 = vector.extract_strided_slice %252 {offsets = [0, 32], sizes = [1, 32], strides = [1, 1]} : vector<1x128xf32> to vector<1x32xf32>
    %261 = arith.mulf %260, %223 : vector<1x32xf32>
    %262 = vector.extract_strided_slice %252 {offsets = [0, 0], sizes = [1, 32], strides = [1, 1]} : vector<1x128xf32> to vector<1x32xf32>
    %263 = vector.extract_strided_slice %253 {offsets = [0, 64], sizes = [1, 32], strides = [1, 1]} : vector<1x128xf32> to vector<1x32xf32>
    %264 = arith.mulf %262, %263 : vector<1x32xf32>
    %265 = arith.addf %261, %264 : vector<1x32xf32>
    %266 = vector.extract_strided_slice %258 {offsets = [0, 32], sizes = [1, 32], strides = [1, 1]} : vector<1x128xf32> to vector<1x32xf32>
    %267 = arith.mulf %266, %229 : vector<1x32xf32>
    %268 = vector.extract_strided_slice %258 {offsets = [0, 0], sizes = [1, 32], strides = [1, 1]} : vector<1x128xf32> to vector<1x32xf32>
    %269 = vector.extract_strided_slice %259 {offsets = [0, 64], sizes = [1, 32], strides = [1, 1]} : vector<1x128xf32> to vector<1x32xf32>
    %270 = arith.mulf %268, %269 : vector<1x32xf32>
    %271 = arith.addf %267, %270 : vector<1x32xf32>
    %272 = vector.extract_strided_slice %252 {offsets = [0, 96], sizes = [1, 32], strides = [1, 1]} : vector<1x128xf32> to vector<1x32xf32>
    %273 = math.tanh %265 : vector<1x32xf32>
    %274 = arith.mulf %272, %273 : vector<1x32xf32>
    %275 = vector.extract_strided_slice %258 {offsets = [0, 96], sizes = [1, 32], strides = [1, 1]} : vector<1x128xf32> to vector<1x32xf32>
    %276 = math.tanh %271 : vector<1x32xf32>
    %277 = arith.mulf %275, %276 : vector<1x32xf32>
    %278 = arith.index_cast %c5_i32 : i32 to index
    %c0_85 = arith.constant 0 : index
    %279 = vector.load %arg19[%278, %c0_85] : memref<8x32xf32, #tpu.memory_space<vmem>>, vector<1x32xf32>
    tpu.vector_store %arg19[%278, %c0_85], %274 {strides = array<i32>} : memref<8x32xf32, #tpu.memory_space<vmem>>, vector<1x32xf32>,
    %280 = arith.index_cast %c5_i32 : i32 to index
    %c0_86 = arith.constant 0 : index
    %281 = vector.load %arg20[%280, %c0_86] : memref<8x32xf32, #tpu.memory_space<vmem>>, vector<1x32xf32>
    tpu.vector_store %arg20[%280, %c0_86], %277 {strides = array<i32>} : memref<8x32xf32, #tpu.memory_space<vmem>>, vector<1x32xf32>,
    %c6_i32 = arith.constant 6 : i32
    %282 = arith.index_cast %c6_i32 : i32 to index
    %c0_87 = arith.constant 0 : index
    %283 = vector.load %arg17[%282, %c0_87] : memref<8x128xf32, #tpu.memory_space<vmem>>, vector<1x128xf32>
    %cst_88 = arith.constant dense<0.000000e+00> : vector<1x128xf32>
    %284 = tpu.matmul %274, %26, %cst_88 {dimension_numbers = #tpu.dot_dimension_numbers<[1], [0], [0], [1], [0, 0, 1, 1], [], []>} : vector<1x32xf32>, vector<32x128xf32>, vector<1x128xf32> -> vector<1x128xf32>
    %285 = arith.addf %283, %284 : vector<1x128xf32>
    %286 = arith.index_cast %c6_i32 : i32 to index
    %c0_89 = arith.constant 0 : index
    %287 = vector.load %arg18[%286, %c0_89] : memref<8x128xf32, #tpu.memory_space<vmem>>, vector<1x128xf32>
    %cst_90 = arith.constant dense<0.000000e+00> : vector<1x128xf32>
    %288 = tpu.matmul %277, %28, %cst_90 {dimension_numbers = #tpu.dot_dimension_numbers<[1], [0], [0], [1], [0, 0, 1, 1], [], []>} : vector<1x32xf32>, vector<32x128xf32>, vector<1x128xf32> -> vector<1x128xf32>
    %289 = arith.addf %287, %288 : vector<1x128xf32>
    %290 = arith.negf %285 : vector<1x128xf32>
    %291 = math.exp %290 : vector<1x128xf32>
    %cst_91 = arith.constant 1.000000e+00 : f32
    %292 = vector.broadcast %cst_91 : f32 to vector<1x128xf32>
    %293 = arith.addf %292, %291 : vector<1x128xf32>
    %294 = arith.divf %292, %293 : vector<1x128xf32>
    %295 = math.tanh %285 : vector<1x128xf32>
    %296 = arith.negf %289 : vector<1x128xf32>
    %297 = math.exp %296 : vector<1x128xf32>
    %cst_92 = arith.constant 1.000000e+00 : f32
    %298 = vector.broadcast %cst_92 : f32 to vector<1x128xf32>
    %299 = arith.addf %298, %297 : vector<1x128xf32>
    %300 = arith.divf %298, %299 : vector<1x128xf32>
    %301 = math.tanh %289 : vector<1x128xf32>
    %302 = vector.extract_strided_slice %294 {offsets = [0, 32], sizes = [1, 32], strides = [1, 1]} : vector<1x128xf32> to vector<1x32xf32>
    %303 = arith.mulf %302, %265 : vector<1x32xf32>
    %304 = vector.extract_strided_slice %294 {offsets = [0, 0], sizes = [1, 32], strides = [1, 1]} : vector<1x128xf32> to vector<1x32xf32>
    %305 = vector.extract_strided_slice %295 {offsets = [0, 64], sizes = [1, 32], strides = [1, 1]} : vector<1x128xf32> to vector<1x32xf32>
    %306 = arith.mulf %304, %305 : vector<1x32xf32>
    %307 = arith.addf %303, %306 : vector<1x32xf32>
    %308 = vector.extract_strided_slice %300 {offsets = [0, 32], sizes = [1, 32], strides = [1, 1]} : vector<1x128xf32> to vector<1x32xf32>
    %309 = arith.mulf %308, %271 : vector<1x32xf32>
    %310 = vector.extract_strided_slice %300 {offsets = [0, 0], sizes = [1, 32], strides = [1, 1]} : vector<1x128xf32> to vector<1x32xf32>
    %311 = vector.extract_strided_slice %301 {offsets = [0, 64], sizes = [1, 32], strides = [1, 1]} : vector<1x128xf32> to vector<1x32xf32>
    %312 = arith.mulf %310, %311 : vector<1x32xf32>
    %313 = arith.addf %309, %312 : vector<1x32xf32>
    %314 = vector.extract_strided_slice %294 {offsets = [0, 96], sizes = [1, 32], strides = [1, 1]} : vector<1x128xf32> to vector<1x32xf32>
    %315 = math.tanh %307 : vector<1x32xf32>
    %316 = arith.mulf %314, %315 : vector<1x32xf32>
    %317 = vector.extract_strided_slice %300 {offsets = [0, 96], sizes = [1, 32], strides = [1, 1]} : vector<1x128xf32> to vector<1x32xf32>
    %318 = math.tanh %313 : vector<1x32xf32>
    %319 = arith.mulf %317, %318 : vector<1x32xf32>
    %320 = arith.index_cast %c6_i32 : i32 to index
    %c0_93 = arith.constant 0 : index
    %321 = vector.load %arg19[%320, %c0_93] : memref<8x32xf32, #tpu.memory_space<vmem>>, vector<1x32xf32>
    tpu.vector_store %arg19[%320, %c0_93], %316 {strides = array<i32>} : memref<8x32xf32, #tpu.memory_space<vmem>>, vector<1x32xf32>,
    %322 = arith.index_cast %c6_i32 : i32 to index
    %c0_94 = arith.constant 0 : index
    %323 = vector.load %arg20[%322, %c0_94] : memref<8x32xf32, #tpu.memory_space<vmem>>, vector<1x32xf32>
    tpu.vector_store %arg20[%322, %c0_94], %319 {strides = array<i32>} : memref<8x32xf32, #tpu.memory_space<vmem>>, vector<1x32xf32>,
    %c7_i32 = arith.constant 7 : i32
    %324 = arith.index_cast %c7_i32 : i32 to index
    %c0_95 = arith.constant 0 : index
    %325 = vector.load %arg17[%324, %c0_95] : memref<8x128xf32, #tpu.memory_space<vmem>>, vector<1x128xf32>
    %cst_96 = arith.constant dense<0.000000e+00> : vector<1x128xf32>
    %326 = tpu.matmul %316, %26, %cst_96 {dimension_numbers = #tpu.dot_dimension_numbers<[1], [0], [0], [1], [0, 0, 1, 1], [], []>} : vector<1x32xf32>, vector<32x128xf32>, vector<1x128xf32> -> vector<1x128xf32>
    %327 = arith.addf %325, %326 : vector<1x128xf32>
    %328 = arith.index_cast %c7_i32 : i32 to index
    %c0_97 = arith.constant 0 : index
    %329 = vector.load %arg18[%328, %c0_97] : memref<8x128xf32, #tpu.memory_space<vmem>>, vector<1x128xf32>
    %cst_98 = arith.constant dense<0.000000e+00> : vector<1x128xf32>
    %330 = tpu.matmul %319, %28, %cst_98 {dimension_numbers = #tpu.dot_dimension_numbers<[1], [0], [0], [1], [0, 0, 1, 1], [], []>} : vector<1x32xf32>, vector<32x128xf32>, vector<1x128xf32> -> vector<1x128xf32>
    %331 = arith.addf %329, %330 : vector<1x128xf32>
    %332 = arith.negf %327 : vector<1x128xf32>
    %333 = math.exp %332 : vector<1x128xf32>
    %cst_99 = arith.constant 1.000000e+00 : f32
    %334 = vector.broadcast %cst_99 : f32 to vector<1x128xf32>
    %335 = arith.addf %334, %333 : vector<1x128xf32>
    %336 = arith.divf %334, %335 : vector<1x128xf32>
    %337 = math.tanh %327 : vector<1x128xf32>
    %338 = arith.negf %331 : vector<1x128xf32>
    %339 = math.exp %338 : vector<1x128xf32>
    %cst_100 = arith.constant 1.000000e+00 : f32
    %340 = vector.broadcast %cst_100 : f32 to vector<1x128xf32>
    %341 = arith.addf %340, %339 : vector<1x128xf32>
    %342 = arith.divf %340, %341 : vector<1x128xf32>
    %343 = math.tanh %331 : vector<1x128xf32>
    %344 = vector.extract_strided_slice %336 {offsets = [0, 32], sizes = [1, 32], strides = [1, 1]} : vector<1x128xf32> to vector<1x32xf32>
    %345 = arith.mulf %344, %307 : vector<1x32xf32>
    %346 = vector.extract_strided_slice %336 {offsets = [0, 0], sizes = [1, 32], strides = [1, 1]} : vector<1x128xf32> to vector<1x32xf32>
    %347 = vector.extract_strided_slice %337 {offsets = [0, 64], sizes = [1, 32], strides = [1, 1]} : vector<1x128xf32> to vector<1x32xf32>
    %348 = arith.mulf %346, %347 : vector<1x32xf32>
    %349 = arith.addf %345, %348 : vector<1x32xf32>
    %350 = vector.extract_strided_slice %342 {offsets = [0, 32], sizes = [1, 32], strides = [1, 1]} : vector<1x128xf32> to vector<1x32xf32>
    %351 = arith.mulf %350, %313 : vector<1x32xf32>
    %352 = vector.extract_strided_slice %342 {offsets = [0, 0], sizes = [1, 32], strides = [1, 1]} : vector<1x128xf32> to vector<1x32xf32>
    %353 = vector.extract_strided_slice %343 {offsets = [0, 64], sizes = [1, 32], strides = [1, 1]} : vector<1x128xf32> to vector<1x32xf32>
    %354 = arith.mulf %352, %353 : vector<1x32xf32>
    %355 = arith.addf %351, %354 : vector<1x32xf32>
    %356 = vector.extract_strided_slice %336 {offsets = [0, 96], sizes = [1, 32], strides = [1, 1]} : vector<1x128xf32> to vector<1x32xf32>
    %357 = math.tanh %349 : vector<1x32xf32>
    %358 = arith.mulf %356, %357 : vector<1x32xf32>
    %359 = vector.extract_strided_slice %342 {offsets = [0, 96], sizes = [1, 32], strides = [1, 1]} : vector<1x128xf32> to vector<1x32xf32>
    %360 = math.tanh %355 : vector<1x32xf32>
    %361 = arith.mulf %359, %360 : vector<1x32xf32>
    %362 = arith.index_cast %c7_i32 : i32 to index
    %c0_101 = arith.constant 0 : index
    %363 = vector.load %arg19[%362, %c0_101] : memref<8x32xf32, #tpu.memory_space<vmem>>, vector<1x32xf32>
    tpu.vector_store %arg19[%362, %c0_101], %358 {strides = array<i32>} : memref<8x32xf32, #tpu.memory_space<vmem>>, vector<1x32xf32>,
    %364 = arith.index_cast %c7_i32 : i32 to index
    %c0_102 = arith.constant 0 : index
    %365 = vector.load %arg20[%364, %c0_102] : memref<8x32xf32, #tpu.memory_space<vmem>>, vector<1x32xf32>
    tpu.vector_store %arg20[%364, %c0_102], %361 {strides = array<i32>} : memref<8x32xf32, #tpu.memory_space<vmem>>, vector<1x32xf32>,
    %c8_i32 = arith.constant 8 : i32
    %c0_103 = arith.constant 0 : index
    %c0_104 = arith.constant 0 : index
    %366 = vector.load %arg19[%c0_103, %c0_104] : memref<8x32xf32, #tpu.memory_space<vmem>>, vector<8x32xf32>
    %c0_105 = arith.constant 0 : index
    %c0_106 = arith.constant 0 : index
    %367 = vector.load %arg20[%c0_105, %c0_106] : memref<8x32xf32, #tpu.memory_space<vmem>>, vector<8x32xf32>
    %c0_107 = arith.constant 0 : index
    %c0_108 = arith.constant 0 : index
    %c0_109 = arith.constant 0 : index
    %c0_110 = arith.constant 0 : index
    %368 = vector.load %arg4[%c0_107, %c0_108, %c0_109, %c0_110] : memref<2x2x32x128xf32, #tpu.memory_space<vmem>>, vector<1x1x32x128xf32>
    %369 = vector.shape_cast %368 : vector<1x1x32x128xf32> to vector<32x128xf32>
    %c1_111 = arith.constant 1 : index
    %c0_112 = arith.constant 0 : index
    %c0_113 = arith.constant 0 : index
    %c0_114 = arith.constant 0 : index
    %370 = vector.load %arg4[%c1_111, %c0_112, %c0_113, %c0_114] : memref<2x2x32x128xf32, #tpu.memory_space<vmem>>, vector<1x1x32x128xf32>
    %371 = vector.shape_cast %370 : vector<1x1x32x128xf32> to vector<32x128xf32>
    %cst_115 = arith.constant dense<0.000000e+00> : vector<8x128xf32>
    %372 = tpu.matmul %366, %369, %cst_115 {dimension_numbers = #tpu.dot_dimension_numbers<[1], [0], [0], [1], [0, 0, 1, 1], [], []>} : vector<8x32xf32>, vector<32x128xf32>, vector<8x128xf32> -> vector<8x128xf32>
    %c0_116 = arith.constant 0 : index
    %c1_117 = arith.constant 1 : index
    %c0_118 = arith.constant 0 : index
    %c0_119 = arith.constant 0 : index
    %373 = vector.load %arg6[%c0_116, %c1_117, %c0_118, %c0_119] : memref<2x3x1x128xf32, #tpu.memory_space<vmem>>, vector<1x1x1x128xf32>
    %374 = vector.shape_cast %373 : vector<1x1x1x128xf32> to vector<1x128xf32>
    %375 = vector.broadcast %374 : vector<1x128xf32> to vector<8x128xf32>
    %376 = arith.addf %372, %375 : vector<8x128xf32>
    %c0_120 = arith.constant 0 : index
    %c0_121 = arith.constant 0 : index
    %377 = vector.load %arg17[%c0_120, %c0_121] : memref<8x128xf32, #tpu.memory_space<vmem>>, vector<8x128xf32>
    tpu.vector_store %arg17[%c0_120, %c0_121], %376 {strides = array<i32>} : memref<8x128xf32, #tpu.memory_space<vmem>>, vector<8x128xf32>,
    %cst_122 = arith.constant dense<0.000000e+00> : vector<8x128xf32>
    %378 = tpu.matmul %367, %371, %cst_122 {dimension_numbers = #tpu.dot_dimension_numbers<[1], [0], [0], [1], [0, 0, 1, 1], [], []>} : vector<8x32xf32>, vector<32x128xf32>, vector<8x128xf32> -> vector<8x128xf32>
    %c1_123 = arith.constant 1 : index
    %c1_124 = arith.constant 1 : index
    %c0_125 = arith.constant 0 : index
    %c0_126 = arith.constant 0 : index
    %379 = vector.load %arg6[%c1_123, %c1_124, %c0_125, %c0_126] : memref<2x3x1x128xf32, #tpu.memory_space<vmem>>, vector<1x1x1x128xf32>
    %380 = vector.shape_cast %379 : vector<1x1x1x128xf32> to vector<1x128xf32>
    %381 = vector.broadcast %380 : vector<1x128xf32> to vector<8x128xf32>
    %382 = arith.addf %378, %381 : vector<8x128xf32>
    %c0_127 = arith.constant 0 : index
    %c0_128 = arith.constant 0 : index
    %383 = vector.load %arg18[%c0_127, %c0_128] : memref<8x128xf32, #tpu.memory_space<vmem>>, vector<8x128xf32>
    tpu.vector_store %arg18[%c0_127, %c0_128], %382 {strides = array<i32>} : memref<8x128xf32, #tpu.memory_space<vmem>>, vector<8x128xf32>,
    %c0_129 = arith.constant 0 : index
    %c1_130 = arith.constant 1 : index
    %c0_131 = arith.constant 0 : index
    %c0_132 = arith.constant 0 : index
    %384 = vector.load %arg5[%c0_129, %c1_130, %c0_131, %c0_132] : memref<2x3x32x128xf32, #tpu.memory_space<vmem>>, vector<1x1x32x128xf32>
    %385 = vector.shape_cast %384 : vector<1x1x32x128xf32> to vector<32x128xf32>
    %c1_133 = arith.constant 1 : index
    %c1_134 = arith.constant 1 : index
    %c0_135 = arith.constant 0 : index
    %c0_136 = arith.constant 0 : index
    %386 = vector.load %arg5[%c1_133, %c1_134, %c0_135, %c0_136] : memref<2x3x32x128xf32, #tpu.memory_space<vmem>>, vector<1x1x32x128xf32>
    %387 = vector.shape_cast %386 : vector<1x1x32x128xf32> to vector<32x128xf32>
    %cst_137 = arith.constant 0.000000e+00 : f32
    %388 = vector.broadcast %cst_137 : f32 to vector<1x32xf32>
    %c0_i32_138 = arith.constant 0 : i32
    %389 = arith.index_cast %c0_i32_138 : i32 to index
    %c0_139 = arith.constant 0 : index
    %390 = vector.load %arg17[%389, %c0_139] : memref<8x128xf32, #tpu.memory_space<vmem>>, vector<1x128xf32>
    %cst_140 = arith.constant dense<0.000000e+00> : vector<1x128xf32>
    %391 = tpu.matmul %388, %385, %cst_140 {dimension_numbers = #tpu.dot_dimension_numbers<[1], [0], [0], [1], [0, 0, 1, 1], [], []>} : vector<1x32xf32>, vector<32x128xf32>, vector<1x128xf32> -> vector<1x128xf32>
    %392 = arith.addf %390, %391 : vector<1x128xf32>
    %393 = arith.index_cast %c0_i32_138 : i32 to index
    %c0_141 = arith.constant 0 : index
    %394 = vector.load %arg18[%393, %c0_141] : memref<8x128xf32, #tpu.memory_space<vmem>>, vector<1x128xf32>
    %cst_142 = arith.constant dense<0.000000e+00> : vector<1x128xf32>
    %395 = tpu.matmul %388, %387, %cst_142 {dimension_numbers = #tpu.dot_dimension_numbers<[1], [0], [0], [1], [0, 0, 1, 1], [], []>} : vector<1x32xf32>, vector<32x128xf32>, vector<1x128xf32> -> vector<1x128xf32>
    %396 = arith.addf %394, %395 : vector<1x128xf32>
    %397 = arith.negf %392 : vector<1x128xf32>
    %398 = math.exp %397 : vector<1x128xf32>
    %cst_143 = arith.constant 1.000000e+00 : f32
    %399 = vector.broadcast %cst_143 : f32 to vector<1x128xf32>
    %400 = arith.addf %399, %398 : vector<1x128xf32>
    %401 = arith.divf %399, %400 : vector<1x128xf32>
    %402 = math.tanh %392 : vector<1x128xf32>
    %403 = arith.negf %396 : vector<1x128xf32>
    %404 = math.exp %403 : vector<1x128xf32>
    %cst_144 = arith.constant 1.000000e+00 : f32
    %405 = vector.broadcast %cst_144 : f32 to vector<1x128xf32>
    %406 = arith.addf %405, %404 : vector<1x128xf32>
    %407 = arith.divf %405, %406 : vector<1x128xf32>
    %408 = math.tanh %396 : vector<1x128xf32>
    %409 = vector.extract_strided_slice %401 {offsets = [0, 32], sizes = [1, 32], strides = [1, 1]} : vector<1x128xf32> to vector<1x32xf32>
    %410 = arith.mulf %409, %388 : vector<1x32xf32>
    %411 = vector.extract_strided_slice %401 {offsets = [0, 0], sizes = [1, 32], strides = [1, 1]} : vector<1x128xf32> to vector<1x32xf32>
    %412 = vector.extract_strided_slice %402 {offsets = [0, 64], sizes = [1, 32], strides = [1, 1]} : vector<1x128xf32> to vector<1x32xf32>
    %413 = arith.mulf %411, %412 : vector<1x32xf32>
    %414 = arith.addf %410, %413 : vector<1x32xf32>
    %415 = vector.extract_strided_slice %407 {offsets = [0, 32], sizes = [1, 32], strides = [1, 1]} : vector<1x128xf32> to vector<1x32xf32>
    %416 = arith.mulf %415, %388 : vector<1x32xf32>
    %417 = vector.extract_strided_slice %407 {offsets = [0, 0], sizes = [1, 32], strides = [1, 1]} : vector<1x128xf32> to vector<1x32xf32>
    %418 = vector.extract_strided_slice %408 {offsets = [0, 64], sizes = [1, 32], strides = [1, 1]} : vector<1x128xf32> to vector<1x32xf32>
    %419 = arith.mulf %417, %418 : vector<1x32xf32>
    %420 = arith.addf %416, %419 : vector<1x32xf32>
    %421 = vector.extract_strided_slice %401 {offsets = [0, 96], sizes = [1, 32], strides = [1, 1]} : vector<1x128xf32> to vector<1x32xf32>
    %422 = math.tanh %414 : vector<1x32xf32>
    %423 = arith.mulf %421, %422 : vector<1x32xf32>
    %424 = vector.extract_strided_slice %407 {offsets = [0, 96], sizes = [1, 32], strides = [1, 1]} : vector<1x128xf32> to vector<1x32xf32>
    %425 = math.tanh %420 : vector<1x32xf32>
    %426 = arith.mulf %424, %425 : vector<1x32xf32>
    %427 = arith.index_cast %c0_i32_138 : i32 to index
    %c0_145 = arith.constant 0 : index
    %428 = vector.load %arg19[%427, %c0_145] : memref<8x32xf32, #tpu.memory_space<vmem>>, vector<1x32xf32>
    tpu.vector_store %arg19[%427, %c0_145], %423 {strides = array<i32>} : memref<8x32xf32, #tpu.memory_space<vmem>>, vector<1x32xf32>,
    %429 = arith.index_cast %c0_i32_138 : i32 to index
    %c0_146 = arith.constant 0 : index
    %430 = vector.load %arg20[%429, %c0_146] : memref<8x32xf32, #tpu.memory_space<vmem>>, vector<1x32xf32>
    tpu.vector_store %arg20[%429, %c0_146], %426 {strides = array<i32>} : memref<8x32xf32, #tpu.memory_space<vmem>>, vector<1x32xf32>,
    %c1_i32_147 = arith.constant 1 : i32
    %431 = arith.index_cast %c1_i32_147 : i32 to index
    %c0_148 = arith.constant 0 : index
    %432 = vector.load %arg17[%431, %c0_148] : memref<8x128xf32, #tpu.memory_space<vmem>>, vector<1x128xf32>
    %cst_149 = arith.constant dense<0.000000e+00> : vector<1x128xf32>
    %433 = tpu.matmul %423, %385, %cst_149 {dimension_numbers = #tpu.dot_dimension_numbers<[1], [0], [0], [1], [0, 0, 1, 1], [], []>} : vector<1x32xf32>, vector<32x128xf32>, vector<1x128xf32> -> vector<1x128xf32>
    %434 = arith.addf %432, %433 : vector<1x128xf32>
    %435 = arith.index_cast %c1_i32_147 : i32 to index
    %c0_150 = arith.constant 0 : index
    %436 = vector.load %arg18[%435, %c0_150] : memref<8x128xf32, #tpu.memory_space<vmem>>, vector<1x128xf32>
    %cst_151 = arith.constant dense<0.000000e+00> : vector<1x128xf32>
    %437 = tpu.matmul %426, %387, %cst_151 {dimension_numbers = #tpu.dot_dimension_numbers<[1], [0], [0], [1], [0, 0, 1, 1], [], []>} : vector<1x32xf32>, vector<32x128xf32>, vector<1x128xf32> -> vector<1x128xf32>
    %438 = arith.addf %436, %437 : vector<1x128xf32>
    %439 = arith.negf %434 : vector<1x128xf32>
    %440 = math.exp %439 : vector<1x128xf32>
    %cst_152 = arith.constant 1.000000e+00 : f32
    %441 = vector.broadcast %cst_152 : f32 to vector<1x128xf32>
    %442 = arith.addf %441, %440 : vector<1x128xf32>
    %443 = arith.divf %441, %442 : vector<1x128xf32>
    %444 = math.tanh %434 : vector<1x128xf32>
    %445 = arith.negf %438 : vector<1x128xf32>
    %446 = math.exp %445 : vector<1x128xf32>
    %cst_153 = arith.constant 1.000000e+00 : f32
    %447 = vector.broadcast %cst_153 : f32 to vector<1x128xf32>
    %448 = arith.addf %447, %446 : vector<1x128xf32>
    %449 = arith.divf %447, %448 : vector<1x128xf32>
    %450 = math.tanh %438 : vector<1x128xf32>
    %451 = vector.extract_strided_slice %443 {offsets = [0, 32], sizes = [1, 32], strides = [1, 1]} : vector<1x128xf32> to vector<1x32xf32>
    %452 = arith.mulf %451, %414 : vector<1x32xf32>
    %453 = vector.extract_strided_slice %443 {offsets = [0, 0], sizes = [1, 32], strides = [1, 1]} : vector<1x128xf32> to vector<1x32xf32>
    %454 = vector.extract_strided_slice %444 {offsets = [0, 64], sizes = [1, 32], strides = [1, 1]} : vector<1x128xf32> to vector<1x32xf32>
    %455 = arith.mulf %453, %454 : vector<1x32xf32>
    %456 = arith.addf %452, %455 : vector<1x32xf32>
    %457 = vector.extract_strided_slice %449 {offsets = [0, 32], sizes = [1, 32], strides = [1, 1]} : vector<1x128xf32> to vector<1x32xf32>
    %458 = arith.mulf %457, %420 : vector<1x32xf32>
    %459 = vector.extract_strided_slice %449 {offsets = [0, 0], sizes = [1, 32], strides = [1, 1]} : vector<1x128xf32> to vector<1x32xf32>
    %460 = vector.extract_strided_slice %450 {offsets = [0, 64], sizes = [1, 32], strides = [1, 1]} : vector<1x128xf32> to vector<1x32xf32>
    %461 = arith.mulf %459, %460 : vector<1x32xf32>
    %462 = arith.addf %458, %461 : vector<1x32xf32>
    %463 = vector.extract_strided_slice %443 {offsets = [0, 96], sizes = [1, 32], strides = [1, 1]} : vector<1x128xf32> to vector<1x32xf32>
    %464 = math.tanh %456 : vector<1x32xf32>
    %465 = arith.mulf %463, %464 : vector<1x32xf32>
    %466 = vector.extract_strided_slice %449 {offsets = [0, 96], sizes = [1, 32], strides = [1, 1]} : vector<1x128xf32> to vector<1x32xf32>
    %467 = math.tanh %462 : vector<1x32xf32>
    %468 = arith.mulf %466, %467 : vector<1x32xf32>
    %469 = arith.index_cast %c1_i32_147 : i32 to index
    %c0_154 = arith.constant 0 : index
    %470 = vector.load %arg19[%469, %c0_154] : memref<8x32xf32, #tpu.memory_space<vmem>>, vector<1x32xf32>
    tpu.vector_store %arg19[%469, %c0_154], %465 {strides = array<i32>} : memref<8x32xf32, #tpu.memory_space<vmem>>, vector<1x32xf32>,
    %471 = arith.index_cast %c1_i32_147 : i32 to index
    %c0_155 = arith.constant 0 : index
    %472 = vector.load %arg20[%471, %c0_155] : memref<8x32xf32, #tpu.memory_space<vmem>>, vector<1x32xf32>
    tpu.vector_store %arg20[%471, %c0_155], %468 {strides = array<i32>} : memref<8x32xf32, #tpu.memory_space<vmem>>, vector<1x32xf32>,
    %c2_i32_156 = arith.constant 2 : i32
    %473 = arith.index_cast %c2_i32_156 : i32 to index
    %c0_157 = arith.constant 0 : index
    %474 = vector.load %arg17[%473, %c0_157] : memref<8x128xf32, #tpu.memory_space<vmem>>, vector<1x128xf32>
    %cst_158 = arith.constant dense<0.000000e+00> : vector<1x128xf32>
    %475 = tpu.matmul %465, %385, %cst_158 {dimension_numbers = #tpu.dot_dimension_numbers<[1], [0], [0], [1], [0, 0, 1, 1], [], []>} : vector<1x32xf32>, vector<32x128xf32>, vector<1x128xf32> -> vector<1x128xf32>
    %476 = arith.addf %474, %475 : vector<1x128xf32>
    %477 = arith.index_cast %c2_i32_156 : i32 to index
    %c0_159 = arith.constant 0 : index
    %478 = vector.load %arg18[%477, %c0_159] : memref<8x128xf32, #tpu.memory_space<vmem>>, vector<1x128xf32>
    %cst_160 = arith.constant dense<0.000000e+00> : vector<1x128xf32>
    %479 = tpu.matmul %468, %387, %cst_160 {dimension_numbers = #tpu.dot_dimension_numbers<[1], [0], [0], [1], [0, 0, 1, 1], [], []>} : vector<1x32xf32>, vector<32x128xf32>, vector<1x128xf32> -> vector<1x128xf32>
    %480 = arith.addf %478, %479 : vector<1x128xf32>
    %481 = arith.negf %476 : vector<1x128xf32>
    %482 = math.exp %481 : vector<1x128xf32>
    %cst_161 = arith.constant 1.000000e+00 : f32
    %483 = vector.broadcast %cst_161 : f32 to vector<1x128xf32>
    %484 = arith.addf %483, %482 : vector<1x128xf32>
    %485 = arith.divf %483, %484 : vector<1x128xf32>
    %486 = math.tanh %476 : vector<1x128xf32>
    %487 = arith.negf %480 : vector<1x128xf32>
    %488 = math.exp %487 : vector<1x128xf32>
    %cst_162 = arith.constant 1.000000e+00 : f32
    %489 = vector.broadcast %cst_162 : f32 to vector<1x128xf32>
    %490 = arith.addf %489, %488 : vector<1x128xf32>
    %491 = arith.divf %489, %490 : vector<1x128xf32>
    %492 = math.tanh %480 : vector<1x128xf32>
    %493 = vector.extract_strided_slice %485 {offsets = [0, 32], sizes = [1, 32], strides = [1, 1]} : vector<1x128xf32> to vector<1x32xf32>
    %494 = arith.mulf %493, %456 : vector<1x32xf32>
    %495 = vector.extract_strided_slice %485 {offsets = [0, 0], sizes = [1, 32], strides = [1, 1]} : vector<1x128xf32> to vector<1x32xf32>
    %496 = vector.extract_strided_slice %486 {offsets = [0, 64], sizes = [1, 32], strides = [1, 1]} : vector<1x128xf32> to vector<1x32xf32>
    %497 = arith.mulf %495, %496 : vector<1x32xf32>
    %498 = arith.addf %494, %497 : vector<1x32xf32>
    %499 = vector.extract_strided_slice %491 {offsets = [0, 32], sizes = [1, 32], strides = [1, 1]} : vector<1x128xf32> to vector<1x32xf32>
    %500 = arith.mulf %499, %462 : vector<1x32xf32>
    %501 = vector.extract_strided_slice %491 {offsets = [0, 0], sizes = [1, 32], strides = [1, 1]} : vector<1x128xf32> to vector<1x32xf32>
    %502 = vector.extract_strided_slice %492 {offsets = [0, 64], sizes = [1, 32], strides = [1, 1]} : vector<1x128xf32> to vector<1x32xf32>
    %503 = arith.mulf %501, %502 : vector<1x32xf32>
    %504 = arith.addf %500, %503 : vector<1x32xf32>
    %505 = vector.extract_strided_slice %485 {offsets = [0, 96], sizes = [1, 32], strides = [1, 1]} : vector<1x128xf32> to vector<1x32xf32>
    %506 = math.tanh %498 : vector<1x32xf32>
    %507 = arith.mulf %505, %506 : vector<1x32xf32>
    %508 = vector.extract_strided_slice %491 {offsets = [0, 96], sizes = [1, 32], strides = [1, 1]} : vector<1x128xf32> to vector<1x32xf32>
    %509 = math.tanh %504 : vector<1x32xf32>
    %510 = arith.mulf %508, %509 : vector<1x32xf32>
    %511 = arith.index_cast %c2_i32_156 : i32 to index
    %c0_163 = arith.constant 0 : index
    %512 = vector.load %arg19[%511, %c0_163] : memref<8x32xf32, #tpu.memory_space<vmem>>, vector<1x32xf32>
    tpu.vector_store %arg19[%511, %c0_163], %507 {strides = array<i32>} : memref<8x32xf32, #tpu.memory_space<vmem>>, vector<1x32xf32>,
    %513 = arith.index_cast %c2_i32_156 : i32 to index
    %c0_164 = arith.constant 0 : index
    %514 = vector.load %arg20[%513, %c0_164] : memref<8x32xf32, #tpu.memory_space<vmem>>, vector<1x32xf32>
    tpu.vector_store %arg20[%513, %c0_164], %510 {strides = array<i32>} : memref<8x32xf32, #tpu.memory_space<vmem>>, vector<1x32xf32>,
    %c3_i32_165 = arith.constant 3 : i32
    %515 = arith.index_cast %c3_i32_165 : i32 to index
    %c0_166 = arith.constant 0 : index
    %516 = vector.load %arg17[%515, %c0_166] : memref<8x128xf32, #tpu.memory_space<vmem>>, vector<1x128xf32>
    %cst_167 = arith.constant dense<0.000000e+00> : vector<1x128xf32>
    %517 = tpu.matmul %507, %385, %cst_167 {dimension_numbers = #tpu.dot_dimension_numbers<[1], [0], [0], [1], [0, 0, 1, 1], [], []>} : vector<1x32xf32>, vector<32x128xf32>, vector<1x128xf32> -> vector<1x128xf32>
    %518 = arith.addf %516, %517 : vector<1x128xf32>
    %519 = arith.index_cast %c3_i32_165 : i32 to index
    %c0_168 = arith.constant 0 : index
    %520 = vector.load %arg18[%519, %c0_168] : memref<8x128xf32, #tpu.memory_space<vmem>>, vector<1x128xf32>
    %cst_169 = arith.constant dense<0.000000e+00> : vector<1x128xf32>
    %521 = tpu.matmul %510, %387, %cst_169 {dimension_numbers = #tpu.dot_dimension_numbers<[1], [0], [0], [1], [0, 0, 1, 1], [], []>} : vector<1x32xf32>, vector<32x128xf32>, vector<1x128xf32> -> vector<1x128xf32>
    %522 = arith.addf %520, %521 : vector<1x128xf32>
    %523 = arith.negf %518 : vector<1x128xf32>
    %524 = math.exp %523 : vector<1x128xf32>
    %cst_170 = arith.constant 1.000000e+00 : f32
    %525 = vector.broadcast %cst_170 : f32 to vector<1x128xf32>
    %526 = arith.addf %525, %524 : vector<1x128xf32>
    %527 = arith.divf %525, %526 : vector<1x128xf32>
    %528 = math.tanh %518 : vector<1x128xf32>
    %529 = arith.negf %522 : vector<1x128xf32>
    %530 = math.exp %529 : vector<1x128xf32>
    %cst_171 = arith.constant 1.000000e+00 : f32
    %531 = vector.broadcast %cst_171 : f32 to vector<1x128xf32>
    %532 = arith.addf %531, %530 : vector<1x128xf32>
    %533 = arith.divf %531, %532 : vector<1x128xf32>
    %534 = math.tanh %522 : vector<1x128xf32>
    %535 = vector.extract_strided_slice %527 {offsets = [0, 32], sizes = [1, 32], strides = [1, 1]} : vector<1x128xf32> to vector<1x32xf32>
    %536 = arith.mulf %535, %498 : vector<1x32xf32>
    %537 = vector.extract_strided_slice %527 {offsets = [0, 0], sizes = [1, 32], strides = [1, 1]} : vector<1x128xf32> to vector<1x32xf32>
    %538 = vector.extract_strided_slice %528 {offsets = [0, 64], sizes = [1, 32], strides = [1, 1]} : vector<1x128xf32> to vector<1x32xf32>
    %539 = arith.mulf %537, %538 : vector<1x32xf32>
    %540 = arith.addf %536, %539 : vector<1x32xf32>
    %541 = vector.extract_strided_slice %533 {offsets = [0, 32], sizes = [1, 32], strides = [1, 1]} : vector<1x128xf32> to vector<1x32xf32>
    %542 = arith.mulf %541, %504 : vector<1x32xf32>
    %543 = vector.extract_strided_slice %533 {offsets = [0, 0], sizes = [1, 32], strides = [1, 1]} : vector<1x128xf32> to vector<1x32xf32>
    %544 = vector.extract_strided_slice %534 {offsets = [0, 64], sizes = [1, 32], strides = [1, 1]} : vector<1x128xf32> to vector<1x32xf32>
    %545 = arith.mulf %543, %544 : vector<1x32xf32>
    %546 = arith.addf %542, %545 : vector<1x32xf32>
    %547 = vector.extract_strided_slice %527 {offsets = [0, 96], sizes = [1, 32], strides = [1, 1]} : vector<1x128xf32> to vector<1x32xf32>
    %548 = math.tanh %540 : vector<1x32xf32>
    %549 = arith.mulf %547, %548 : vector<1x32xf32>
    %550 = vector.extract_strided_slice %533 {offsets = [0, 96], sizes = [1, 32], strides = [1, 1]} : vector<1x128xf32> to vector<1x32xf32>
    %551 = math.tanh %546 : vector<1x32xf32>
    %552 = arith.mulf %550, %551 : vector<1x32xf32>
    %553 = arith.index_cast %c3_i32_165 : i32 to index
    %c0_172 = arith.constant 0 : index
    %554 = vector.load %arg19[%553, %c0_172] : memref<8x32xf32, #tpu.memory_space<vmem>>, vector<1x32xf32>
    tpu.vector_store %arg19[%553, %c0_172], %549 {strides = array<i32>} : memref<8x32xf32, #tpu.memory_space<vmem>>, vector<1x32xf32>,
    %555 = arith.index_cast %c3_i32_165 : i32 to index
    %c0_173 = arith.constant 0 : index
    %556 = vector.load %arg20[%555, %c0_173] : memref<8x32xf32, #tpu.memory_space<vmem>>, vector<1x32xf32>
    tpu.vector_store %arg20[%555, %c0_173], %552 {strides = array<i32>} : memref<8x32xf32, #tpu.memory_space<vmem>>, vector<1x32xf32>,
    %c4_i32_174 = arith.constant 4 : i32
    %557 = arith.index_cast %c4_i32_174 : i32 to index
    %c0_175 = arith.constant 0 : index
    %558 = vector.load %arg17[%557, %c0_175] : memref<8x128xf32, #tpu.memory_space<vmem>>, vector<1x128xf32>
    %cst_176 = arith.constant dense<0.000000e+00> : vector<1x128xf32>
    %559 = tpu.matmul %549, %385, %cst_176 {dimension_numbers = #tpu.dot_dimension_numbers<[1], [0], [0], [1], [0, 0, 1, 1], [], []>} : vector<1x32xf32>, vector<32x128xf32>, vector<1x128xf32> -> vector<1x128xf32>
    %560 = arith.addf %558, %559 : vector<1x128xf32>
    %561 = arith.index_cast %c4_i32_174 : i32 to index
    %c0_177 = arith.constant 0 : index
    %562 = vector.load %arg18[%561, %c0_177] : memref<8x128xf32, #tpu.memory_space<vmem>>, vector<1x128xf32>
    %cst_178 = arith.constant dense<0.000000e+00> : vector<1x128xf32>
    %563 = tpu.matmul %552, %387, %cst_178 {dimension_numbers = #tpu.dot_dimension_numbers<[1], [0], [0], [1], [0, 0, 1, 1], [], []>} : vector<1x32xf32>, vector<32x128xf32>, vector<1x128xf32> -> vector<1x128xf32>
    %564 = arith.addf %562, %563 : vector<1x128xf32>
    %565 = arith.negf %560 : vector<1x128xf32>
    %566 = math.exp %565 : vector<1x128xf32>
    %cst_179 = arith.constant 1.000000e+00 : f32
    %567 = vector.broadcast %cst_179 : f32 to vector<1x128xf32>
    %568 = arith.addf %567, %566 : vector<1x128xf32>
    %569 = arith.divf %567, %568 : vector<1x128xf32>
    %570 = math.tanh %560 : vector<1x128xf32>
    %571 = arith.negf %564 : vector<1x128xf32>
    %572 = math.exp %571 : vector<1x128xf32>
    %cst_180 = arith.constant 1.000000e+00 : f32
    %573 = vector.broadcast %cst_180 : f32 to vector<1x128xf32>
    %574 = arith.addf %573, %572 : vector<1x128xf32>
    %575 = arith.divf %573, %574 : vector<1x128xf32>
    %576 = math.tanh %564 : vector<1x128xf32>
    %577 = vector.extract_strided_slice %569 {offsets = [0, 32], sizes = [1, 32], strides = [1, 1]} : vector<1x128xf32> to vector<1x32xf32>
    %578 = arith.mulf %577, %540 : vector<1x32xf32>
    %579 = vector.extract_strided_slice %569 {offsets = [0, 0], sizes = [1, 32], strides = [1, 1]} : vector<1x128xf32> to vector<1x32xf32>
    %580 = vector.extract_strided_slice %570 {offsets = [0, 64], sizes = [1, 32], strides = [1, 1]} : vector<1x128xf32> to vector<1x32xf32>
    %581 = arith.mulf %579, %580 : vector<1x32xf32>
    %582 = arith.addf %578, %581 : vector<1x32xf32>
    %583 = vector.extract_strided_slice %575 {offsets = [0, 32], sizes = [1, 32], strides = [1, 1]} : vector<1x128xf32> to vector<1x32xf32>
    %584 = arith.mulf %583, %546 : vector<1x32xf32>
    %585 = vector.extract_strided_slice %575 {offsets = [0, 0], sizes = [1, 32], strides = [1, 1]} : vector<1x128xf32> to vector<1x32xf32>
    %586 = vector.extract_strided_slice %576 {offsets = [0, 64], sizes = [1, 32], strides = [1, 1]} : vector<1x128xf32> to vector<1x32xf32>
    %587 = arith.mulf %585, %586 : vector<1x32xf32>
    %588 = arith.addf %584, %587 : vector<1x32xf32>
    %589 = vector.extract_strided_slice %569 {offsets = [0, 96], sizes = [1, 32], strides = [1, 1]} : vector<1x128xf32> to vector<1x32xf32>
    %590 = math.tanh %582 : vector<1x32xf32>
    %591 = arith.mulf %589, %590 : vector<1x32xf32>
    %592 = vector.extract_strided_slice %575 {offsets = [0, 96], sizes = [1, 32], strides = [1, 1]} : vector<1x128xf32> to vector<1x32xf32>
    %593 = math.tanh %588 : vector<1x32xf32>
    %594 = arith.mulf %592, %593 : vector<1x32xf32>
    %595 = arith.index_cast %c4_i32_174 : i32 to index
    %c0_181 = arith.constant 0 : index
    %596 = vector.load %arg19[%595, %c0_181] : memref<8x32xf32, #tpu.memory_space<vmem>>, vector<1x32xf32>
    tpu.vector_store %arg19[%595, %c0_181], %591 {strides = array<i32>} : memref<8x32xf32, #tpu.memory_space<vmem>>, vector<1x32xf32>,
    %597 = arith.index_cast %c4_i32_174 : i32 to index
    %c0_182 = arith.constant 0 : index
    %598 = vector.load %arg20[%597, %c0_182] : memref<8x32xf32, #tpu.memory_space<vmem>>, vector<1x32xf32>
    tpu.vector_store %arg20[%597, %c0_182], %594 {strides = array<i32>} : memref<8x32xf32, #tpu.memory_space<vmem>>, vector<1x32xf32>,
    %c5_i32_183 = arith.constant 5 : i32
    %599 = arith.index_cast %c5_i32_183 : i32 to index
    %c0_184 = arith.constant 0 : index
    %600 = vector.load %arg17[%599, %c0_184] : memref<8x128xf32, #tpu.memory_space<vmem>>, vector<1x128xf32>
    %cst_185 = arith.constant dense<0.000000e+00> : vector<1x128xf32>
    %601 = tpu.matmul %591, %385, %cst_185 {dimension_numbers = #tpu.dot_dimension_numbers<[1], [0], [0], [1], [0, 0, 1, 1], [], []>} : vector<1x32xf32>, vector<32x128xf32>, vector<1x128xf32> -> vector<1x128xf32>
    %602 = arith.addf %600, %601 : vector<1x128xf32>
    %603 = arith.index_cast %c5_i32_183 : i32 to index
    %c0_186 = arith.constant 0 : index
    %604 = vector.load %arg18[%603, %c0_186] : memref<8x128xf32, #tpu.memory_space<vmem>>, vector<1x128xf32>
    %cst_187 = arith.constant dense<0.000000e+00> : vector<1x128xf32>
    %605 = tpu.matmul %594, %387, %cst_187 {dimension_numbers = #tpu.dot_dimension_numbers<[1], [0], [0], [1], [0, 0, 1, 1], [], []>} : vector<1x32xf32>, vector<32x128xf32>, vector<1x128xf32> -> vector<1x128xf32>
    %606 = arith.addf %604, %605 : vector<1x128xf32>
    %607 = arith.negf %602 : vector<1x128xf32>
    %608 = math.exp %607 : vector<1x128xf32>
    %cst_188 = arith.constant 1.000000e+00 : f32
    %609 = vector.broadcast %cst_188 : f32 to vector<1x128xf32>
    %610 = arith.addf %609, %608 : vector<1x128xf32>
    %611 = arith.divf %609, %610 : vector<1x128xf32>
    %612 = math.tanh %602 : vector<1x128xf32>
    %613 = arith.negf %606 : vector<1x128xf32>
    %614 = math.exp %613 : vector<1x128xf32>
    %cst_189 = arith.constant 1.000000e+00 : f32
    %615 = vector.broadcast %cst_189 : f32 to vector<1x128xf32>
    %616 = arith.addf %615, %614 : vector<1x128xf32>
    %617 = arith.divf %615, %616 : vector<1x128xf32>
    %618 = math.tanh %606 : vector<1x128xf32>
    %619 = vector.extract_strided_slice %611 {offsets = [0, 32], sizes = [1, 32], strides = [1, 1]} : vector<1x128xf32> to vector<1x32xf32>
    %620 = arith.mulf %619, %582 : vector<1x32xf32>
    %621 = vector.extract_strided_slice %611 {offsets = [0, 0], sizes = [1, 32], strides = [1, 1]} : vector<1x128xf32> to vector<1x32xf32>
    %622 = vector.extract_strided_slice %612 {offsets = [0, 64], sizes = [1, 32], strides = [1, 1]} : vector<1x128xf32> to vector<1x32xf32>
    %623 = arith.mulf %621, %622 : vector<1x32xf32>
    %624 = arith.addf %620, %623 : vector<1x32xf32>
    %625 = vector.extract_strided_slice %617 {offsets = [0, 32], sizes = [1, 32], strides = [1, 1]} : vector<1x128xf32> to vector<1x32xf32>
    %626 = arith.mulf %625, %588 : vector<1x32xf32>
    %627 = vector.extract_strided_slice %617 {offsets = [0, 0], sizes = [1, 32], strides = [1, 1]} : vector<1x128xf32> to vector<1x32xf32>
    %628 = vector.extract_strided_slice %618 {offsets = [0, 64], sizes = [1, 32], strides = [1, 1]} : vector<1x128xf32> to vector<1x32xf32>
    %629 = arith.mulf %627, %628 : vector<1x32xf32>
    %630 = arith.addf %626, %629 : vector<1x32xf32>
    %631 = vector.extract_strided_slice %611 {offsets = [0, 96], sizes = [1, 32], strides = [1, 1]} : vector<1x128xf32> to vector<1x32xf32>
    %632 = math.tanh %624 : vector<1x32xf32>
    %633 = arith.mulf %631, %632 : vector<1x32xf32>
    %634 = vector.extract_strided_slice %617 {offsets = [0, 96], sizes = [1, 32], strides = [1, 1]} : vector<1x128xf32> to vector<1x32xf32>
    %635 = math.tanh %630 : vector<1x32xf32>
    %636 = arith.mulf %634, %635 : vector<1x32xf32>
    %637 = arith.index_cast %c5_i32_183 : i32 to index
    %c0_190 = arith.constant 0 : index
    %638 = vector.load %arg19[%637, %c0_190] : memref<8x32xf32, #tpu.memory_space<vmem>>, vector<1x32xf32>
    tpu.vector_store %arg19[%637, %c0_190], %633 {strides = array<i32>} : memref<8x32xf32, #tpu.memory_space<vmem>>, vector<1x32xf32>,
    %639 = arith.index_cast %c5_i32_183 : i32 to index
    %c0_191 = arith.constant 0 : index
    %640 = vector.load %arg20[%639, %c0_191] : memref<8x32xf32, #tpu.memory_space<vmem>>, vector<1x32xf32>
    tpu.vector_store %arg20[%639, %c0_191], %636 {strides = array<i32>} : memref<8x32xf32, #tpu.memory_space<vmem>>, vector<1x32xf32>,
    %c6_i32_192 = arith.constant 6 : i32
    %641 = arith.index_cast %c6_i32_192 : i32 to index
    %c0_193 = arith.constant 0 : index
    %642 = vector.load %arg17[%641, %c0_193] : memref<8x128xf32, #tpu.memory_space<vmem>>, vector<1x128xf32>
    %cst_194 = arith.constant dense<0.000000e+00> : vector<1x128xf32>
    %643 = tpu.matmul %633, %385, %cst_194 {dimension_numbers = #tpu.dot_dimension_numbers<[1], [0], [0], [1], [0, 0, 1, 1], [], []>} : vector<1x32xf32>, vector<32x128xf32>, vector<1x128xf32> -> vector<1x128xf32>
    %644 = arith.addf %642, %643 : vector<1x128xf32>
    %645 = arith.index_cast %c6_i32_192 : i32 to index
    %c0_195 = arith.constant 0 : index
    %646 = vector.load %arg18[%645, %c0_195] : memref<8x128xf32, #tpu.memory_space<vmem>>, vector<1x128xf32>
    %cst_196 = arith.constant dense<0.000000e+00> : vector<1x128xf32>
    %647 = tpu.matmul %636, %387, %cst_196 {dimension_numbers = #tpu.dot_dimension_numbers<[1], [0], [0], [1], [0, 0, 1, 1], [], []>} : vector<1x32xf32>, vector<32x128xf32>, vector<1x128xf32> -> vector<1x128xf32>
    %648 = arith.addf %646, %647 : vector<1x128xf32>
    %649 = arith.negf %644 : vector<1x128xf32>
    %650 = math.exp %649 : vector<1x128xf32>
    %cst_197 = arith.constant 1.000000e+00 : f32
    %651 = vector.broadcast %cst_197 : f32 to vector<1x128xf32>
    %652 = arith.addf %651, %650 : vector<1x128xf32>
    %653 = arith.divf %651, %652 : vector<1x128xf32>
    %654 = math.tanh %644 : vector<1x128xf32>
    %655 = arith.negf %648 : vector<1x128xf32>
    %656 = math.exp %655 : vector<1x128xf32>
    %cst_198 = arith.constant 1.000000e+00 : f32
    %657 = vector.broadcast %cst_198 : f32 to vector<1x128xf32>
    %658 = arith.addf %657, %656 : vector<1x128xf32>
    %659 = arith.divf %657, %658 : vector<1x128xf32>
    %660 = math.tanh %648 : vector<1x128xf32>
    %661 = vector.extract_strided_slice %653 {offsets = [0, 32], sizes = [1, 32], strides = [1, 1]} : vector<1x128xf32> to vector<1x32xf32>
    %662 = arith.mulf %661, %624 : vector<1x32xf32>
    %663 = vector.extract_strided_slice %653 {offsets = [0, 0], sizes = [1, 32], strides = [1, 1]} : vector<1x128xf32> to vector<1x32xf32>
    %664 = vector.extract_strided_slice %654 {offsets = [0, 64], sizes = [1, 32], strides = [1, 1]} : vector<1x128xf32> to vector<1x32xf32>
    %665 = arith.mulf %663, %664 : vector<1x32xf32>
    %666 = arith.addf %662, %665 : vector<1x32xf32>
    %667 = vector.extract_strided_slice %659 {offsets = [0, 32], sizes = [1, 32], strides = [1, 1]} : vector<1x128xf32> to vector<1x32xf32>
    %668 = arith.mulf %667, %630 : vector<1x32xf32>
    %669 = vector.extract_strided_slice %659 {offsets = [0, 0], sizes = [1, 32], strides = [1, 1]} : vector<1x128xf32> to vector<1x32xf32>
    %670 = vector.extract_strided_slice %660 {offsets = [0, 64], sizes = [1, 32], strides = [1, 1]} : vector<1x128xf32> to vector<1x32xf32>
    %671 = arith.mulf %669, %670 : vector<1x32xf32>
    %672 = arith.addf %668, %671 : vector<1x32xf32>
    %673 = vector.extract_strided_slice %653 {offsets = [0, 96], sizes = [1, 32], strides = [1, 1]} : vector<1x128xf32> to vector<1x32xf32>
    %674 = math.tanh %666 : vector<1x32xf32>
    %675 = arith.mulf %673, %674 : vector<1x32xf32>
    %676 = vector.extract_strided_slice %659 {offsets = [0, 96], sizes = [1, 32], strides = [1, 1]} : vector<1x128xf32> to vector<1x32xf32>
    %677 = math.tanh %672 : vector<1x32xf32>
    %678 = arith.mulf %676, %677 : vector<1x32xf32>
    %679 = arith.index_cast %c6_i32_192 : i32 to index
    %c0_199 = arith.constant 0 : index
    %680 = vector.load %arg19[%679, %c0_199] : memref<8x32xf32, #tpu.memory_space<vmem>>, vector<1x32xf32>
    tpu.vector_store %arg19[%679, %c0_199], %675 {strides = array<i32>} : memref<8x32xf32, #tpu.memory_space<vmem>>, vector<1x32xf32>,
    %681 = arith.index_cast %c6_i32_192 : i32 to index
    %c0_200 = arith.constant 0 : index
    %682 = vector.load %arg20[%681, %c0_200] : memref<8x32xf32, #tpu.memory_space<vmem>>, vector<1x32xf32>
    tpu.vector_store %arg20[%681, %c0_200], %678 {strides = array<i32>} : memref<8x32xf32, #tpu.memory_space<vmem>>, vector<1x32xf32>,
    %c7_i32_201 = arith.constant 7 : i32
    %683 = arith.index_cast %c7_i32_201 : i32 to index
    %c0_202 = arith.constant 0 : index
    %684 = vector.load %arg17[%683, %c0_202] : memref<8x128xf32, #tpu.memory_space<vmem>>, vector<1x128xf32>
    %cst_203 = arith.constant dense<0.000000e+00> : vector<1x128xf32>
    %685 = tpu.matmul %675, %385, %cst_203 {dimension_numbers = #tpu.dot_dimension_numbers<[1], [0], [0], [1], [0, 0, 1, 1], [], []>} : vector<1x32xf32>, vector<32x128xf32>, vector<1x128xf32> -> vector<1x128xf32>
    %686 = arith.addf %684, %685 : vector<1x128xf32>
    %687 = arith.index_cast %c7_i32_201 : i32 to index
    %c0_204 = arith.constant 0 : index
    %688 = vector.load %arg18[%687, %c0_204] : memref<8x128xf32, #tpu.memory_space<vmem>>, vector<1x128xf32>
    %cst_205 = arith.constant dense<0.000000e+00> : vector<1x128xf32>
    %689 = tpu.matmul %678, %387, %cst_205 {dimension_numbers = #tpu.dot_dimension_numbers<[1], [0], [0], [1], [0, 0, 1, 1], [], []>} : vector<1x32xf32>, vector<32x128xf32>, vector<1x128xf32> -> vector<1x128xf32>
    %690 = arith.addf %688, %689 : vector<1x128xf32>
    %691 = arith.negf %686 : vector<1x128xf32>
    %692 = math.exp %691 : vector<1x128xf32>
    %cst_206 = arith.constant 1.000000e+00 : f32
    %693 = vector.broadcast %cst_206 : f32 to vector<1x128xf32>
    %694 = arith.addf %693, %692 : vector<1x128xf32>
    %695 = arith.divf %693, %694 : vector<1x128xf32>
    %696 = math.tanh %686 : vector<1x128xf32>
    %697 = arith.negf %690 : vector<1x128xf32>
    %698 = math.exp %697 : vector<1x128xf32>
    %cst_207 = arith.constant 1.000000e+00 : f32
    %699 = vector.broadcast %cst_207 : f32 to vector<1x128xf32>
    %700 = arith.addf %699, %698 : vector<1x128xf32>
    %701 = arith.divf %699, %700 : vector<1x128xf32>
    %702 = math.tanh %690 : vector<1x128xf32>
    %703 = vector.extract_strided_slice %695 {offsets = [0, 32], sizes = [1, 32], strides = [1, 1]} : vector<1x128xf32> to vector<1x32xf32>
    %704 = arith.mulf %703, %666 : vector<1x32xf32>
    %705 = vector.extract_strided_slice %695 {offsets = [0, 0], sizes = [1, 32], strides = [1, 1]} : vector<1x128xf32> to vector<1x32xf32>
    %706 = vector.extract_strided_slice %696 {offsets = [0, 64], sizes = [1, 32], strides = [1, 1]} : vector<1x128xf32> to vector<1x32xf32>
    %707 = arith.mulf %705, %706 : vector<1x32xf32>
    %708 = arith.addf %704, %707 : vector<1x32xf32>
    %709 = vector.extract_strided_slice %701 {offsets = [0, 32], sizes = [1, 32], strides = [1, 1]} : vector<1x128xf32> to vector<1x32xf32>
    %710 = arith.mulf %709, %672 : vector<1x32xf32>
    %711 = vector.extract_strided_slice %701 {offsets = [0, 0], sizes = [1, 32], strides = [1, 1]} : vector<1x128xf32> to vector<1x32xf32>
    %712 = vector.extract_strided_slice %702 {offsets = [0, 64], sizes = [1, 32], strides = [1, 1]} : vector<1x128xf32> to vector<1x32xf32>
    %713 = arith.mulf %711, %712 : vector<1x32xf32>
    %714 = arith.addf %710, %713 : vector<1x32xf32>
    %715 = vector.extract_strided_slice %695 {offsets = [0, 96], sizes = [1, 32], strides = [1, 1]} : vector<1x128xf32> to vector<1x32xf32>
    %716 = math.tanh %708 : vector<1x32xf32>
    %717 = arith.mulf %715, %716 : vector<1x32xf32>
    %718 = vector.extract_strided_slice %701 {offsets = [0, 96], sizes = [1, 32], strides = [1, 1]} : vector<1x128xf32> to vector<1x32xf32>
    %719 = math.tanh %714 : vector<1x32xf32>
    %720 = arith.mulf %718, %719 : vector<1x32xf32>
    %721 = arith.index_cast %c7_i32_201 : i32 to index
    %c0_208 = arith.constant 0 : index
    %722 = vector.load %arg19[%721, %c0_208] : memref<8x32xf32, #tpu.memory_space<vmem>>, vector<1x32xf32>
    tpu.vector_store %arg19[%721, %c0_208], %717 {strides = array<i32>} : memref<8x32xf32, #tpu.memory_space<vmem>>, vector<1x32xf32>,
    %723 = arith.index_cast %c7_i32_201 : i32 to index
    %c0_209 = arith.constant 0 : index
    %724 = vector.load %arg20[%723, %c0_209] : memref<8x32xf32, #tpu.memory_space<vmem>>, vector<1x32xf32>
    tpu.vector_store %arg20[%723, %c0_209], %720 {strides = array<i32>} : memref<8x32xf32, #tpu.memory_space<vmem>>, vector<1x32xf32>,
    %c8_i32_210 = arith.constant 8 : i32
    %c0_211 = arith.constant 0 : index
    %c0_212 = arith.constant 0 : index
    %725 = vector.load %arg19[%c0_211, %c0_212] : memref<8x32xf32, #tpu.memory_space<vmem>>, vector<8x32xf32>
    %c0_213 = arith.constant 0 : index
    %c0_214 = arith.constant 0 : index
    %726 = vector.load %arg20[%c0_213, %c0_214] : memref<8x32xf32, #tpu.memory_space<vmem>>, vector<8x32xf32>
    %c0_215 = arith.constant 0 : index
    %c1_216 = arith.constant 1 : index
    %c0_217 = arith.constant 0 : index
    %c0_218 = arith.constant 0 : index
    %727 = vector.load %arg4[%c0_215, %c1_216, %c0_217, %c0_218] : memref<2x2x32x128xf32, #tpu.memory_space<vmem>>, vector<1x1x32x128xf32>
    %728 = vector.shape_cast %727 : vector<1x1x32x128xf32> to vector<32x128xf32>
    %c1_219 = arith.constant 1 : index
    %c1_220 = arith.constant 1 : index
    %c0_221 = arith.constant 0 : index
    %c0_222 = arith.constant 0 : index
    %729 = vector.load %arg4[%c1_219, %c1_220, %c0_221, %c0_222] : memref<2x2x32x128xf32, #tpu.memory_space<vmem>>, vector<1x1x32x128xf32>
    %730 = vector.shape_cast %729 : vector<1x1x32x128xf32> to vector<32x128xf32>
    %cst_223 = arith.constant dense<0.000000e+00> : vector<8x128xf32>
    %731 = tpu.matmul %725, %728, %cst_223 {dimension_numbers = #tpu.dot_dimension_numbers<[1], [0], [0], [1], [0, 0, 1, 1], [], []>} : vector<8x32xf32>, vector<32x128xf32>, vector<8x128xf32> -> vector<8x128xf32>
    %c0_224 = arith.constant 0 : index
    %c2 = arith.constant 2 : index
    %c0_225 = arith.constant 0 : index
    %c0_226 = arith.constant 0 : index
    %732 = vector.load %arg6[%c0_224, %c2, %c0_225, %c0_226] : memref<2x3x1x128xf32, #tpu.memory_space<vmem>>, vector<1x1x1x128xf32>
    %733 = vector.shape_cast %732 : vector<1x1x1x128xf32> to vector<1x128xf32>
    %734 = vector.broadcast %733 : vector<1x128xf32> to vector<8x128xf32>
    %735 = arith.addf %731, %734 : vector<8x128xf32>
    %c0_227 = arith.constant 0 : index
    %c0_228 = arith.constant 0 : index
    %736 = vector.load %arg17[%c0_227, %c0_228] : memref<8x128xf32, #tpu.memory_space<vmem>>, vector<8x128xf32>
    tpu.vector_store %arg17[%c0_227, %c0_228], %735 {strides = array<i32>} : memref<8x128xf32, #tpu.memory_space<vmem>>, vector<8x128xf32>,
    %cst_229 = arith.constant dense<0.000000e+00> : vector<8x128xf32>
    %737 = tpu.matmul %726, %730, %cst_229 {dimension_numbers = #tpu.dot_dimension_numbers<[1], [0], [0], [1], [0, 0, 1, 1], [], []>} : vector<8x32xf32>, vector<32x128xf32>, vector<8x128xf32> -> vector<8x128xf32>
    %c1_230 = arith.constant 1 : index
    %c2_231 = arith.constant 2 : index
    %c0_232 = arith.constant 0 : index
    %c0_233 = arith.constant 0 : index
    %738 = vector.load %arg6[%c1_230, %c2_231, %c0_232, %c0_233] : memref<2x3x1x128xf32, #tpu.memory_space<vmem>>, vector<1x1x1x128xf32>
    %739 = vector.shape_cast %738 : vector<1x1x1x128xf32> to vector<1x128xf32>
    %740 = vector.broadcast %739 : vector<1x128xf32> to vector<8x128xf32>
    %741 = arith.addf %737, %740 : vector<8x128xf32>
    %c0_234 = arith.constant 0 : index
    %c0_235 = arith.constant 0 : index
    %742 = vector.load %arg18[%c0_234, %c0_235] : memref<8x128xf32, #tpu.memory_space<vmem>>, vector<8x128xf32>
    tpu.vector_store %arg18[%c0_234, %c0_235], %741 {strides = array<i32>} : memref<8x128xf32, #tpu.memory_space<vmem>>, vector<8x128xf32>,
    %c0_236 = arith.constant 0 : index
    %c2_237 = arith.constant 2 : index
    %c0_238 = arith.constant 0 : index
    %c0_239 = arith.constant 0 : index
    %743 = vector.load %arg5[%c0_236, %c2_237, %c0_238, %c0_239] : memref<2x3x32x128xf32, #tpu.memory_space<vmem>>, vector<1x1x32x128xf32>
    %744 = vector.shape_cast %743 : vector<1x1x32x128xf32> to vector<32x128xf32>
    %c1_240 = arith.constant 1 : index
    %c2_241 = arith.constant 2 : index
    %c0_242 = arith.constant 0 : index
    %c0_243 = arith.constant 0 : index
    %745 = vector.load %arg5[%c1_240, %c2_241, %c0_242, %c0_243] : memref<2x3x32x128xf32, #tpu.memory_space<vmem>>, vector<1x1x32x128xf32>
    %746 = vector.shape_cast %745 : vector<1x1x32x128xf32> to vector<32x128xf32>
    %cst_244 = arith.constant 0.000000e+00 : f32
    %747 = vector.broadcast %cst_244 : f32 to vector<1x32xf32>
    %c0_i32_245 = arith.constant 0 : i32
    %748 = arith.index_cast %c0_i32_245 : i32 to index
    %c0_246 = arith.constant 0 : index
    %749 = vector.load %arg17[%748, %c0_246] : memref<8x128xf32, #tpu.memory_space<vmem>>, vector<1x128xf32>
    %cst_247 = arith.constant dense<0.000000e+00> : vector<1x128xf32>
    %750 = tpu.matmul %747, %744, %cst_247 {dimension_numbers = #tpu.dot_dimension_numbers<[1], [0], [0], [1], [0, 0, 1, 1], [], []>} : vector<1x32xf32>, vector<32x128xf32>, vector<1x128xf32> -> vector<1x128xf32>
    %751 = arith.addf %749, %750 : vector<1x128xf32>
    %752 = arith.index_cast %c0_i32_245 : i32 to index
    %c0_248 = arith.constant 0 : index
    %753 = vector.load %arg18[%752, %c0_248] : memref<8x128xf32, #tpu.memory_space<vmem>>, vector<1x128xf32>
    %cst_249 = arith.constant dense<0.000000e+00> : vector<1x128xf32>
    %754 = tpu.matmul %747, %746, %cst_249 {dimension_numbers = #tpu.dot_dimension_numbers<[1], [0], [0], [1], [0, 0, 1, 1], [], []>} : vector<1x32xf32>, vector<32x128xf32>, vector<1x128xf32> -> vector<1x128xf32>
    %755 = arith.addf %753, %754 : vector<1x128xf32>
    %756 = arith.negf %751 : vector<1x128xf32>
    %757 = math.exp %756 : vector<1x128xf32>
    %cst_250 = arith.constant 1.000000e+00 : f32
    %758 = vector.broadcast %cst_250 : f32 to vector<1x128xf32>
    %759 = arith.addf %758, %757 : vector<1x128xf32>
    %760 = arith.divf %758, %759 : vector<1x128xf32>
    %761 = math.tanh %751 : vector<1x128xf32>
    %762 = arith.negf %755 : vector<1x128xf32>
    %763 = math.exp %762 : vector<1x128xf32>
    %cst_251 = arith.constant 1.000000e+00 : f32
    %764 = vector.broadcast %cst_251 : f32 to vector<1x128xf32>
    %765 = arith.addf %764, %763 : vector<1x128xf32>
    %766 = arith.divf %764, %765 : vector<1x128xf32>
    %767 = math.tanh %755 : vector<1x128xf32>
    %768 = vector.extract_strided_slice %760 {offsets = [0, 32], sizes = [1, 32], strides = [1, 1]} : vector<1x128xf32> to vector<1x32xf32>
    %769 = arith.mulf %768, %747 : vector<1x32xf32>
    %770 = vector.extract_strided_slice %760 {offsets = [0, 0], sizes = [1, 32], strides = [1, 1]} : vector<1x128xf32> to vector<1x32xf32>
    %771 = vector.extract_strided_slice %761 {offsets = [0, 64], sizes = [1, 32], strides = [1, 1]} : vector<1x128xf32> to vector<1x32xf32>
    %772 = arith.mulf %770, %771 : vector<1x32xf32>
    %773 = arith.addf %769, %772 : vector<1x32xf32>
    %774 = vector.extract_strided_slice %766 {offsets = [0, 32], sizes = [1, 32], strides = [1, 1]} : vector<1x128xf32> to vector<1x32xf32>
    %775 = arith.mulf %774, %747 : vector<1x32xf32>
    %776 = vector.extract_strided_slice %766 {offsets = [0, 0], sizes = [1, 32], strides = [1, 1]} : vector<1x128xf32> to vector<1x32xf32>
    %777 = vector.extract_strided_slice %767 {offsets = [0, 64], sizes = [1, 32], strides = [1, 1]} : vector<1x128xf32> to vector<1x32xf32>
    %778 = arith.mulf %776, %777 : vector<1x32xf32>
    %779 = arith.addf %775, %778 : vector<1x32xf32>
    %780 = vector.extract_strided_slice %760 {offsets = [0, 96], sizes = [1, 32], strides = [1, 1]} : vector<1x128xf32> to vector<1x32xf32>
    %781 = math.tanh %773 : vector<1x32xf32>
    %782 = arith.mulf %780, %781 : vector<1x32xf32>
    %783 = vector.extract_strided_slice %766 {offsets = [0, 96], sizes = [1, 32], strides = [1, 1]} : vector<1x128xf32> to vector<1x32xf32>
    %784 = math.tanh %779 : vector<1x32xf32>
    %785 = arith.mulf %783, %784 : vector<1x32xf32>
    %786 = arith.index_cast %c0_i32_245 : i32 to index
    %c0_252 = arith.constant 0 : index
    %787 = vector.load %arg19[%786, %c0_252] : memref<8x32xf32, #tpu.memory_space<vmem>>, vector<1x32xf32>
    tpu.vector_store %arg19[%786, %c0_252], %782 {strides = array<i32>} : memref<8x32xf32, #tpu.memory_space<vmem>>, vector<1x32xf32>,
    %788 = arith.index_cast %c0_i32_245 : i32 to index
    %c0_253 = arith.constant 0 : index
    %789 = vector.load %arg20[%788, %c0_253] : memref<8x32xf32, #tpu.memory_space<vmem>>, vector<1x32xf32>
    tpu.vector_store %arg20[%788, %c0_253], %785 {strides = array<i32>} : memref<8x32xf32, #tpu.memory_space<vmem>>, vector<1x32xf32>,
    %c1_i32_254 = arith.constant 1 : i32
    %790 = arith.index_cast %c1_i32_254 : i32 to index
    %c0_255 = arith.constant 0 : index
    %791 = vector.load %arg17[%790, %c0_255] : memref<8x128xf32, #tpu.memory_space<vmem>>, vector<1x128xf32>
    %cst_256 = arith.constant dense<0.000000e+00> : vector<1x128xf32>
    %792 = tpu.matmul %782, %744, %cst_256 {dimension_numbers = #tpu.dot_dimension_numbers<[1], [0], [0], [1], [0, 0, 1, 1], [], []>} : vector<1x32xf32>, vector<32x128xf32>, vector<1x128xf32> -> vector<1x128xf32>
    %793 = arith.addf %791, %792 : vector<1x128xf32>
    %794 = arith.index_cast %c1_i32_254 : i32 to index
    %c0_257 = arith.constant 0 : index
    %795 = vector.load %arg18[%794, %c0_257] : memref<8x128xf32, #tpu.memory_space<vmem>>, vector<1x128xf32>
    %cst_258 = arith.constant dense<0.000000e+00> : vector<1x128xf32>
    %796 = tpu.matmul %785, %746, %cst_258 {dimension_numbers = #tpu.dot_dimension_numbers<[1], [0], [0], [1], [0, 0, 1, 1], [], []>} : vector<1x32xf32>, vector<32x128xf32>, vector<1x128xf32> -> vector<1x128xf32>
    %797 = arith.addf %795, %796 : vector<1x128xf32>
    %798 = arith.negf %793 : vector<1x128xf32>
    %799 = math.exp %798 : vector<1x128xf32>
    %cst_259 = arith.constant 1.000000e+00 : f32
    %800 = vector.broadcast %cst_259 : f32 to vector<1x128xf32>
    %801 = arith.addf %800, %799 : vector<1x128xf32>
    %802 = arith.divf %800, %801 : vector<1x128xf32>
    %803 = math.tanh %793 : vector<1x128xf32>
    %804 = arith.negf %797 : vector<1x128xf32>
    %805 = math.exp %804 : vector<1x128xf32>
    %cst_260 = arith.constant 1.000000e+00 : f32
    %806 = vector.broadcast %cst_260 : f32 to vector<1x128xf32>
    %807 = arith.addf %806, %805 : vector<1x128xf32>
    %808 = arith.divf %806, %807 : vector<1x128xf32>
    %809 = math.tanh %797 : vector<1x128xf32>
    %810 = vector.extract_strided_slice %802 {offsets = [0, 32], sizes = [1, 32], strides = [1, 1]} : vector<1x128xf32> to vector<1x32xf32>
    %811 = arith.mulf %810, %773 : vector<1x32xf32>
    %812 = vector.extract_strided_slice %802 {offsets = [0, 0], sizes = [1, 32], strides = [1, 1]} : vector<1x128xf32> to vector<1x32xf32>
    %813 = vector.extract_strided_slice %803 {offsets = [0, 64], sizes = [1, 32], strides = [1, 1]} : vector<1x128xf32> to vector<1x32xf32>
    %814 = arith.mulf %812, %813 : vector<1x32xf32>
    %815 = arith.addf %811, %814 : vector<1x32xf32>
    %816 = vector.extract_strided_slice %808 {offsets = [0, 32], sizes = [1, 32], strides = [1, 1]} : vector<1x128xf32> to vector<1x32xf32>
    %817 = arith.mulf %816, %779 : vector<1x32xf32>
    %818 = vector.extract_strided_slice %808 {offsets = [0, 0], sizes = [1, 32], strides = [1, 1]} : vector<1x128xf32> to vector<1x32xf32>
    %819 = vector.extract_strided_slice %809 {offsets = [0, 64], sizes = [1, 32], strides = [1, 1]} : vector<1x128xf32> to vector<1x32xf32>
    %820 = arith.mulf %818, %819 : vector<1x32xf32>
    %821 = arith.addf %817, %820 : vector<1x32xf32>
    %822 = vector.extract_strided_slice %802 {offsets = [0, 96], sizes = [1, 32], strides = [1, 1]} : vector<1x128xf32> to vector<1x32xf32>
    %823 = math.tanh %815 : vector<1x32xf32>
    %824 = arith.mulf %822, %823 : vector<1x32xf32>
    %825 = vector.extract_strided_slice %808 {offsets = [0, 96], sizes = [1, 32], strides = [1, 1]} : vector<1x128xf32> to vector<1x32xf32>
    %826 = math.tanh %821 : vector<1x32xf32>
    %827 = arith.mulf %825, %826 : vector<1x32xf32>
    %828 = arith.index_cast %c1_i32_254 : i32 to index
    %c0_261 = arith.constant 0 : index
    %829 = vector.load %arg19[%828, %c0_261] : memref<8x32xf32, #tpu.memory_space<vmem>>, vector<1x32xf32>
    tpu.vector_store %arg19[%828, %c0_261], %824 {strides = array<i32>} : memref<8x32xf32, #tpu.memory_space<vmem>>, vector<1x32xf32>,
    %830 = arith.index_cast %c1_i32_254 : i32 to index
    %c0_262 = arith.constant 0 : index
    %831 = vector.load %arg20[%830, %c0_262] : memref<8x32xf32, #tpu.memory_space<vmem>>, vector<1x32xf32>
    tpu.vector_store %arg20[%830, %c0_262], %827 {strides = array<i32>} : memref<8x32xf32, #tpu.memory_space<vmem>>, vector<1x32xf32>,
    %c2_i32_263 = arith.constant 2 : i32
    %832 = arith.index_cast %c2_i32_263 : i32 to index
    %c0_264 = arith.constant 0 : index
    %833 = vector.load %arg17[%832, %c0_264] : memref<8x128xf32, #tpu.memory_space<vmem>>, vector<1x128xf32>
    %cst_265 = arith.constant dense<0.000000e+00> : vector<1x128xf32>
    %834 = tpu.matmul %824, %744, %cst_265 {dimension_numbers = #tpu.dot_dimension_numbers<[1], [0], [0], [1], [0, 0, 1, 1], [], []>} : vector<1x32xf32>, vector<32x128xf32>, vector<1x128xf32> -> vector<1x128xf32>
    %835 = arith.addf %833, %834 : vector<1x128xf32>
    %836 = arith.index_cast %c2_i32_263 : i32 to index
    %c0_266 = arith.constant 0 : index
    %837 = vector.load %arg18[%836, %c0_266] : memref<8x128xf32, #tpu.memory_space<vmem>>, vector<1x128xf32>
    %cst_267 = arith.constant dense<0.000000e+00> : vector<1x128xf32>
    %838 = tpu.matmul %827, %746, %cst_267 {dimension_numbers = #tpu.dot_dimension_numbers<[1], [0], [0], [1], [0, 0, 1, 1], [], []>} : vector<1x32xf32>, vector<32x128xf32>, vector<1x128xf32> -> vector<1x128xf32>
    %839 = arith.addf %837, %838 : vector<1x128xf32>
    %840 = arith.negf %835 : vector<1x128xf32>
    %841 = math.exp %840 : vector<1x128xf32>
    %cst_268 = arith.constant 1.000000e+00 : f32
    %842 = vector.broadcast %cst_268 : f32 to vector<1x128xf32>
    %843 = arith.addf %842, %841 : vector<1x128xf32>
    %844 = arith.divf %842, %843 : vector<1x128xf32>
    %845 = math.tanh %835 : vector<1x128xf32>
    %846 = arith.negf %839 : vector<1x128xf32>
    %847 = math.exp %846 : vector<1x128xf32>
    %cst_269 = arith.constant 1.000000e+00 : f32
    %848 = vector.broadcast %cst_269 : f32 to vector<1x128xf32>
    %849 = arith.addf %848, %847 : vector<1x128xf32>
    %850 = arith.divf %848, %849 : vector<1x128xf32>
    %851 = math.tanh %839 : vector<1x128xf32>
    %852 = vector.extract_strided_slice %844 {offsets = [0, 32], sizes = [1, 32], strides = [1, 1]} : vector<1x128xf32> to vector<1x32xf32>
    %853 = arith.mulf %852, %815 : vector<1x32xf32>
    %854 = vector.extract_strided_slice %844 {offsets = [0, 0], sizes = [1, 32], strides = [1, 1]} : vector<1x128xf32> to vector<1x32xf32>
    %855 = vector.extract_strided_slice %845 {offsets = [0, 64], sizes = [1, 32], strides = [1, 1]} : vector<1x128xf32> to vector<1x32xf32>
    %856 = arith.mulf %854, %855 : vector<1x32xf32>
    %857 = arith.addf %853, %856 : vector<1x32xf32>
    %858 = vector.extract_strided_slice %850 {offsets = [0, 32], sizes = [1, 32], strides = [1, 1]} : vector<1x128xf32> to vector<1x32xf32>
    %859 = arith.mulf %858, %821 : vector<1x32xf32>
    %860 = vector.extract_strided_slice %850 {offsets = [0, 0], sizes = [1, 32], strides = [1, 1]} : vector<1x128xf32> to vector<1x32xf32>
    %861 = vector.extract_strided_slice %851 {offsets = [0, 64], sizes = [1, 32], strides = [1, 1]} : vector<1x128xf32> to vector<1x32xf32>
    %862 = arith.mulf %860, %861 : vector<1x32xf32>
    %863 = arith.addf %859, %862 : vector<1x32xf32>
    %864 = vector.extract_strided_slice %844 {offsets = [0, 96], sizes = [1, 32], strides = [1, 1]} : vector<1x128xf32> to vector<1x32xf32>
    %865 = math.tanh %857 : vector<1x32xf32>
    %866 = arith.mulf %864, %865 : vector<1x32xf32>
    %867 = vector.extract_strided_slice %850 {offsets = [0, 96], sizes = [1, 32], strides = [1, 1]} : vector<1x128xf32> to vector<1x32xf32>
    %868 = math.tanh %863 : vector<1x32xf32>
    %869 = arith.mulf %867, %868 : vector<1x32xf32>
    %870 = arith.index_cast %c2_i32_263 : i32 to index
    %c0_270 = arith.constant 0 : index
    %871 = vector.load %arg19[%870, %c0_270] : memref<8x32xf32, #tpu.memory_space<vmem>>, vector<1x32xf32>
    tpu.vector_store %arg19[%870, %c0_270], %866 {strides = array<i32>} : memref<8x32xf32, #tpu.memory_space<vmem>>, vector<1x32xf32>,
    %872 = arith.index_cast %c2_i32_263 : i32 to index
    %c0_271 = arith.constant 0 : index
    %873 = vector.load %arg20[%872, %c0_271] : memref<8x32xf32, #tpu.memory_space<vmem>>, vector<1x32xf32>
    tpu.vector_store %arg20[%872, %c0_271], %869 {strides = array<i32>} : memref<8x32xf32, #tpu.memory_space<vmem>>, vector<1x32xf32>,
    %c3_i32_272 = arith.constant 3 : i32
    %874 = arith.index_cast %c3_i32_272 : i32 to index
    %c0_273 = arith.constant 0 : index
    %875 = vector.load %arg17[%874, %c0_273] : memref<8x128xf32, #tpu.memory_space<vmem>>, vector<1x128xf32>
    %cst_274 = arith.constant dense<0.000000e+00> : vector<1x128xf32>
    %876 = tpu.matmul %866, %744, %cst_274 {dimension_numbers = #tpu.dot_dimension_numbers<[1], [0], [0], [1], [0, 0, 1, 1], [], []>} : vector<1x32xf32>, vector<32x128xf32>, vector<1x128xf32> -> vector<1x128xf32>
    %877 = arith.addf %875, %876 : vector<1x128xf32>
    %878 = arith.index_cast %c3_i32_272 : i32 to index
    %c0_275 = arith.constant 0 : index
    %879 = vector.load %arg18[%878, %c0_275] : memref<8x128xf32, #tpu.memory_space<vmem>>, vector<1x128xf32>
    %cst_276 = arith.constant dense<0.000000e+00> : vector<1x128xf32>
    %880 = tpu.matmul %869, %746, %cst_276 {dimension_numbers = #tpu.dot_dimension_numbers<[1], [0], [0], [1], [0, 0, 1, 1], [], []>} : vector<1x32xf32>, vector<32x128xf32>, vector<1x128xf32> -> vector<1x128xf32>
    %881 = arith.addf %879, %880 : vector<1x128xf32>
    %882 = arith.negf %877 : vector<1x128xf32>
    %883 = math.exp %882 : vector<1x128xf32>
    %cst_277 = arith.constant 1.000000e+00 : f32
    %884 = vector.broadcast %cst_277 : f32 to vector<1x128xf32>
    %885 = arith.addf %884, %883 : vector<1x128xf32>
    %886 = arith.divf %884, %885 : vector<1x128xf32>
    %887 = math.tanh %877 : vector<1x128xf32>
    %888 = arith.negf %881 : vector<1x128xf32>
    %889 = math.exp %888 : vector<1x128xf32>
    %cst_278 = arith.constant 1.000000e+00 : f32
    %890 = vector.broadcast %cst_278 : f32 to vector<1x128xf32>
    %891 = arith.addf %890, %889 : vector<1x128xf32>
    %892 = arith.divf %890, %891 : vector<1x128xf32>
    %893 = math.tanh %881 : vector<1x128xf32>
    %894 = vector.extract_strided_slice %886 {offsets = [0, 32], sizes = [1, 32], strides = [1, 1]} : vector<1x128xf32> to vector<1x32xf32>
    %895 = arith.mulf %894, %857 : vector<1x32xf32>
    %896 = vector.extract_strided_slice %886 {offsets = [0, 0], sizes = [1, 32], strides = [1, 1]} : vector<1x128xf32> to vector<1x32xf32>
    %897 = vector.extract_strided_slice %887 {offsets = [0, 64], sizes = [1, 32], strides = [1, 1]} : vector<1x128xf32> to vector<1x32xf32>
    %898 = arith.mulf %896, %897 : vector<1x32xf32>
    %899 = arith.addf %895, %898 : vector<1x32xf32>
    %900 = vector.extract_strided_slice %892 {offsets = [0, 32], sizes = [1, 32], strides = [1, 1]} : vector<1x128xf32> to vector<1x32xf32>
    %901 = arith.mulf %900, %863 : vector<1x32xf32>
    %902 = vector.extract_strided_slice %892 {offsets = [0, 0], sizes = [1, 32], strides = [1, 1]} : vector<1x128xf32> to vector<1x32xf32>
    %903 = vector.extract_strided_slice %893 {offsets = [0, 64], sizes = [1, 32], strides = [1, 1]} : vector<1x128xf32> to vector<1x32xf32>
    %904 = arith.mulf %902, %903 : vector<1x32xf32>
    %905 = arith.addf %901, %904 : vector<1x32xf32>
    %906 = vector.extract_strided_slice %886 {offsets = [0, 96], sizes = [1, 32], strides = [1, 1]} : vector<1x128xf32> to vector<1x32xf32>
    %907 = math.tanh %899 : vector<1x32xf32>
    %908 = arith.mulf %906, %907 : vector<1x32xf32>
    %909 = vector.extract_strided_slice %892 {offsets = [0, 96], sizes = [1, 32], strides = [1, 1]} : vector<1x128xf32> to vector<1x32xf32>
    %910 = math.tanh %905 : vector<1x32xf32>
    %911 = arith.mulf %909, %910 : vector<1x32xf32>
    %912 = arith.index_cast %c3_i32_272 : i32 to index
    %c0_279 = arith.constant 0 : index
    %913 = vector.load %arg19[%912, %c0_279] : memref<8x32xf32, #tpu.memory_space<vmem>>, vector<1x32xf32>
    tpu.vector_store %arg19[%912, %c0_279], %908 {strides = array<i32>} : memref<8x32xf32, #tpu.memory_space<vmem>>, vector<1x32xf32>,
    %914 = arith.index_cast %c3_i32_272 : i32 to index
    %c0_280 = arith.constant 0 : index
    %915 = vector.load %arg20[%914, %c0_280] : memref<8x32xf32, #tpu.memory_space<vmem>>, vector<1x32xf32>
    tpu.vector_store %arg20[%914, %c0_280], %911 {strides = array<i32>} : memref<8x32xf32, #tpu.memory_space<vmem>>, vector<1x32xf32>,
    %c4_i32_281 = arith.constant 4 : i32
    %916 = arith.index_cast %c4_i32_281 : i32 to index
    %c0_282 = arith.constant 0 : index
    %917 = vector.load %arg17[%916, %c0_282] : memref<8x128xf32, #tpu.memory_space<vmem>>, vector<1x128xf32>
    %cst_283 = arith.constant dense<0.000000e+00> : vector<1x128xf32>
    %918 = tpu.matmul %908, %744, %cst_283 {dimension_numbers = #tpu.dot_dimension_numbers<[1], [0], [0], [1], [0, 0, 1, 1], [], []>} : vector<1x32xf32>, vector<32x128xf32>, vector<1x128xf32> -> vector<1x128xf32>
    %919 = arith.addf %917, %918 : vector<1x128xf32>
    %920 = arith.index_cast %c4_i32_281 : i32 to index
    %c0_284 = arith.constant 0 : index
    %921 = vector.load %arg18[%920, %c0_284] : memref<8x128xf32, #tpu.memory_space<vmem>>, vector<1x128xf32>
    %cst_285 = arith.constant dense<0.000000e+00> : vector<1x128xf32>
    %922 = tpu.matmul %911, %746, %cst_285 {dimension_numbers = #tpu.dot_dimension_numbers<[1], [0], [0], [1], [0, 0, 1, 1], [], []>} : vector<1x32xf32>, vector<32x128xf32>, vector<1x128xf32> -> vector<1x128xf32>
    %923 = arith.addf %921, %922 : vector<1x128xf32>
    %924 = arith.negf %919 : vector<1x128xf32>
    %925 = math.exp %924 : vector<1x128xf32>
    %cst_286 = arith.constant 1.000000e+00 : f32
    %926 = vector.broadcast %cst_286 : f32 to vector<1x128xf32>
    %927 = arith.addf %926, %925 : vector<1x128xf32>
    %928 = arith.divf %926, %927 : vector<1x128xf32>
    %929 = math.tanh %919 : vector<1x128xf32>
    %930 = arith.negf %923 : vector<1x128xf32>
    %931 = math.exp %930 : vector<1x128xf32>
    %cst_287 = arith.constant 1.000000e+00 : f32
    %932 = vector.broadcast %cst_287 : f32 to vector<1x128xf32>
    %933 = arith.addf %932, %931 : vector<1x128xf32>
    %934 = arith.divf %932, %933 : vector<1x128xf32>
    %935 = math.tanh %923 : vector<1x128xf32>
    %936 = vector.extract_strided_slice %928 {offsets = [0, 32], sizes = [1, 32], strides = [1, 1]} : vector<1x128xf32> to vector<1x32xf32>
    %937 = arith.mulf %936, %899 : vector<1x32xf32>
    %938 = vector.extract_strided_slice %928 {offsets = [0, 0], sizes = [1, 32], strides = [1, 1]} : vector<1x128xf32> to vector<1x32xf32>
    %939 = vector.extract_strided_slice %929 {offsets = [0, 64], sizes = [1, 32], strides = [1, 1]} : vector<1x128xf32> to vector<1x32xf32>
    %940 = arith.mulf %938, %939 : vector<1x32xf32>
    %941 = arith.addf %937, %940 : vector<1x32xf32>
    %942 = vector.extract_strided_slice %934 {offsets = [0, 32], sizes = [1, 32], strides = [1, 1]} : vector<1x128xf32> to vector<1x32xf32>
    %943 = arith.mulf %942, %905 : vector<1x32xf32>
    %944 = vector.extract_strided_slice %934 {offsets = [0, 0], sizes = [1, 32], strides = [1, 1]} : vector<1x128xf32> to vector<1x32xf32>
    %945 = vector.extract_strided_slice %935 {offsets = [0, 64], sizes = [1, 32], strides = [1, 1]} : vector<1x128xf32> to vector<1x32xf32>
    %946 = arith.mulf %944, %945 : vector<1x32xf32>
    %947 = arith.addf %943, %946 : vector<1x32xf32>
    %948 = vector.extract_strided_slice %928 {offsets = [0, 96], sizes = [1, 32], strides = [1, 1]} : vector<1x128xf32> to vector<1x32xf32>
    %949 = math.tanh %941 : vector<1x32xf32>
    %950 = arith.mulf %948, %949 : vector<1x32xf32>
    %951 = vector.extract_strided_slice %934 {offsets = [0, 96], sizes = [1, 32], strides = [1, 1]} : vector<1x128xf32> to vector<1x32xf32>
    %952 = math.tanh %947 : vector<1x32xf32>
    %953 = arith.mulf %951, %952 : vector<1x32xf32>
    %954 = arith.index_cast %c4_i32_281 : i32 to index
    %c0_288 = arith.constant 0 : index
    %955 = vector.load %arg19[%954, %c0_288] : memref<8x32xf32, #tpu.memory_space<vmem>>, vector<1x32xf32>
    tpu.vector_store %arg19[%954, %c0_288], %950 {strides = array<i32>} : memref<8x32xf32, #tpu.memory_space<vmem>>, vector<1x32xf32>,
    %956 = arith.index_cast %c4_i32_281 : i32 to index
    %c0_289 = arith.constant 0 : index
    %957 = vector.load %arg20[%956, %c0_289] : memref<8x32xf32, #tpu.memory_space<vmem>>, vector<1x32xf32>
    tpu.vector_store %arg20[%956, %c0_289], %953 {strides = array<i32>} : memref<8x32xf32, #tpu.memory_space<vmem>>, vector<1x32xf32>,
    %c5_i32_290 = arith.constant 5 : i32
    %958 = arith.index_cast %c5_i32_290 : i32 to index
    %c0_291 = arith.constant 0 : index
    %959 = vector.load %arg17[%958, %c0_291] : memref<8x128xf32, #tpu.memory_space<vmem>>, vector<1x128xf32>
    %cst_292 = arith.constant dense<0.000000e+00> : vector<1x128xf32>
    %960 = tpu.matmul %950, %744, %cst_292 {dimension_numbers = #tpu.dot_dimension_numbers<[1], [0], [0], [1], [0, 0, 1, 1], [], []>} : vector<1x32xf32>, vector<32x128xf32>, vector<1x128xf32> -> vector<1x128xf32>
    %961 = arith.addf %959, %960 : vector<1x128xf32>
    %962 = arith.index_cast %c5_i32_290 : i32 to index
    %c0_293 = arith.constant 0 : index
    %963 = vector.load %arg18[%962, %c0_293] : memref<8x128xf32, #tpu.memory_space<vmem>>, vector<1x128xf32>
    %cst_294 = arith.constant dense<0.000000e+00> : vector<1x128xf32>
    %964 = tpu.matmul %953, %746, %cst_294 {dimension_numbers = #tpu.dot_dimension_numbers<[1], [0], [0], [1], [0, 0, 1, 1], [], []>} : vector<1x32xf32>, vector<32x128xf32>, vector<1x128xf32> -> vector<1x128xf32>
    %965 = arith.addf %963, %964 : vector<1x128xf32>
    %966 = arith.negf %961 : vector<1x128xf32>
    %967 = math.exp %966 : vector<1x128xf32>
    %cst_295 = arith.constant 1.000000e+00 : f32
    %968 = vector.broadcast %cst_295 : f32 to vector<1x128xf32>
    %969 = arith.addf %968, %967 : vector<1x128xf32>
    %970 = arith.divf %968, %969 : vector<1x128xf32>
    %971 = math.tanh %961 : vector<1x128xf32>
    %972 = arith.negf %965 : vector<1x128xf32>
    %973 = math.exp %972 : vector<1x128xf32>
    %cst_296 = arith.constant 1.000000e+00 : f32
    %974 = vector.broadcast %cst_296 : f32 to vector<1x128xf32>
    %975 = arith.addf %974, %973 : vector<1x128xf32>
    %976 = arith.divf %974, %975 : vector<1x128xf32>
    %977 = math.tanh %965 : vector<1x128xf32>
    %978 = vector.extract_strided_slice %970 {offsets = [0, 32], sizes = [1, 32], strides = [1, 1]} : vector<1x128xf32> to vector<1x32xf32>
    %979 = arith.mulf %978, %941 : vector<1x32xf32>
    %980 = vector.extract_strided_slice %970 {offsets = [0, 0], sizes = [1, 32], strides = [1, 1]} : vector<1x128xf32> to vector<1x32xf32>
    %981 = vector.extract_strided_slice %971 {offsets = [0, 64], sizes = [1, 32], strides = [1, 1]} : vector<1x128xf32> to vector<1x32xf32>
    %982 = arith.mulf %980, %981 : vector<1x32xf32>
    %983 = arith.addf %979, %982 : vector<1x32xf32>
    %984 = vector.extract_strided_slice %976 {offsets = [0, 32], sizes = [1, 32], strides = [1, 1]} : vector<1x128xf32> to vector<1x32xf32>
    %985 = arith.mulf %984, %947 : vector<1x32xf32>
    %986 = vector.extract_strided_slice %976 {offsets = [0, 0], sizes = [1, 32], strides = [1, 1]} : vector<1x128xf32> to vector<1x32xf32>
    %987 = vector.extract_strided_slice %977 {offsets = [0, 64], sizes = [1, 32], strides = [1, 1]} : vector<1x128xf32> to vector<1x32xf32>
    %988 = arith.mulf %986, %987 : vector<1x32xf32>
    %989 = arith.addf %985, %988 : vector<1x32xf32>
    %990 = vector.extract_strided_slice %970 {offsets = [0, 96], sizes = [1, 32], strides = [1, 1]} : vector<1x128xf32> to vector<1x32xf32>
    %991 = math.tanh %983 : vector<1x32xf32>
    %992 = arith.mulf %990, %991 : vector<1x32xf32>
    %993 = vector.extract_strided_slice %976 {offsets = [0, 96], sizes = [1, 32], strides = [1, 1]} : vector<1x128xf32> to vector<1x32xf32>
    %994 = math.tanh %989 : vector<1x32xf32>
    %995 = arith.mulf %993, %994 : vector<1x32xf32>
    %996 = arith.index_cast %c5_i32_290 : i32 to index
    %c0_297 = arith.constant 0 : index
    %997 = vector.load %arg19[%996, %c0_297] : memref<8x32xf32, #tpu.memory_space<vmem>>, vector<1x32xf32>
    tpu.vector_store %arg19[%996, %c0_297], %992 {strides = array<i32>} : memref<8x32xf32, #tpu.memory_space<vmem>>, vector<1x32xf32>,
    %998 = arith.index_cast %c5_i32_290 : i32 to index
    %c0_298 = arith.constant 0 : index
    %999 = vector.load %arg20[%998, %c0_298] : memref<8x32xf32, #tpu.memory_space<vmem>>, vector<1x32xf32>
    tpu.vector_store %arg20[%998, %c0_298], %995 {strides = array<i32>} : memref<8x32xf32, #tpu.memory_space<vmem>>, vector<1x32xf32>,
    %c6_i32_299 = arith.constant 6 : i32
    %1000 = arith.index_cast %c6_i32_299 : i32 to index
    %c0_300 = arith.constant 0 : index
    %1001 = vector.load %arg17[%1000, %c0_300] : memref<8x128xf32, #tpu.memory_space<vmem>>, vector<1x128xf32>
    %cst_301 = arith.constant dense<0.000000e+00> : vector<1x128xf32>
    %1002 = tpu.matmul %992, %744, %cst_301 {dimension_numbers = #tpu.dot_dimension_numbers<[1], [0], [0], [1], [0, 0, 1, 1], [], []>} : vector<1x32xf32>, vector<32x128xf32>, vector<1x128xf32> -> vector<1x128xf32>
    %1003 = arith.addf %1001, %1002 : vector<1x128xf32>
    %1004 = arith.index_cast %c6_i32_299 : i32 to index
    %c0_302 = arith.constant 0 : index
    %1005 = vector.load %arg18[%1004, %c0_302] : memref<8x128xf32, #tpu.memory_space<vmem>>, vector<1x128xf32>
    %cst_303 = arith.constant dense<0.000000e+00> : vector<1x128xf32>
    %1006 = tpu.matmul %995, %746, %cst_303 {dimension_numbers = #tpu.dot_dimension_numbers<[1], [0], [0], [1], [0, 0, 1, 1], [], []>} : vector<1x32xf32>, vector<32x128xf32>, vector<1x128xf32> -> vector<1x128xf32>
    %1007 = arith.addf %1005, %1006 : vector<1x128xf32>
    %1008 = arith.negf %1003 : vector<1x128xf32>
    %1009 = math.exp %1008 : vector<1x128xf32>
    %cst_304 = arith.constant 1.000000e+00 : f32
    %1010 = vector.broadcast %cst_304 : f32 to vector<1x128xf32>
    %1011 = arith.addf %1010, %1009 : vector<1x128xf32>
    %1012 = arith.divf %1010, %1011 : vector<1x128xf32>
    %1013 = math.tanh %1003 : vector<1x128xf32>
    %1014 = arith.negf %1007 : vector<1x128xf32>
    %1015 = math.exp %1014 : vector<1x128xf32>
    %cst_305 = arith.constant 1.000000e+00 : f32
    %1016 = vector.broadcast %cst_305 : f32 to vector<1x128xf32>
    %1017 = arith.addf %1016, %1015 : vector<1x128xf32>
    %1018 = arith.divf %1016, %1017 : vector<1x128xf32>
    %1019 = math.tanh %1007 : vector<1x128xf32>
    %1020 = vector.extract_strided_slice %1012 {offsets = [0, 32], sizes = [1, 32], strides = [1, 1]} : vector<1x128xf32> to vector<1x32xf32>
    %1021 = arith.mulf %1020, %983 : vector<1x32xf32>
    %1022 = vector.extract_strided_slice %1012 {offsets = [0, 0], sizes = [1, 32], strides = [1, 1]} : vector<1x128xf32> to vector<1x32xf32>
    %1023 = vector.extract_strided_slice %1013 {offsets = [0, 64], sizes = [1, 32], strides = [1, 1]} : vector<1x128xf32> to vector<1x32xf32>
    %1024 = arith.mulf %1022, %1023 : vector<1x32xf32>
    %1025 = arith.addf %1021, %1024 : vector<1x32xf32>
    %1026 = vector.extract_strided_slice %1018 {offsets = [0, 32], sizes = [1, 32], strides = [1, 1]} : vector<1x128xf32> to vector<1x32xf32>
    %1027 = arith.mulf %1026, %989 : vector<1x32xf32>
    %1028 = vector.extract_strided_slice %1018 {offsets = [0, 0], sizes = [1, 32], strides = [1, 1]} : vector<1x128xf32> to vector<1x32xf32>
    %1029 = vector.extract_strided_slice %1019 {offsets = [0, 64], sizes = [1, 32], strides = [1, 1]} : vector<1x128xf32> to vector<1x32xf32>
    %1030 = arith.mulf %1028, %1029 : vector<1x32xf32>
    %1031 = arith.addf %1027, %1030 : vector<1x32xf32>
    %1032 = vector.extract_strided_slice %1012 {offsets = [0, 96], sizes = [1, 32], strides = [1, 1]} : vector<1x128xf32> to vector<1x32xf32>
    %1033 = math.tanh %1025 : vector<1x32xf32>
    %1034 = arith.mulf %1032, %1033 : vector<1x32xf32>
    %1035 = vector.extract_strided_slice %1018 {offsets = [0, 96], sizes = [1, 32], strides = [1, 1]} : vector<1x128xf32> to vector<1x32xf32>
    %1036 = math.tanh %1031 : vector<1x32xf32>
    %1037 = arith.mulf %1035, %1036 : vector<1x32xf32>
    %1038 = arith.index_cast %c6_i32_299 : i32 to index
    %c0_306 = arith.constant 0 : index
    %1039 = vector.load %arg19[%1038, %c0_306] : memref<8x32xf32, #tpu.memory_space<vmem>>, vector<1x32xf32>
    tpu.vector_store %arg19[%1038, %c0_306], %1034 {strides = array<i32>} : memref<8x32xf32, #tpu.memory_space<vmem>>, vector<1x32xf32>,
    %1040 = arith.index_cast %c6_i32_299 : i32 to index
    %c0_307 = arith.constant 0 : index
    %1041 = vector.load %arg20[%1040, %c0_307] : memref<8x32xf32, #tpu.memory_space<vmem>>, vector<1x32xf32>
    tpu.vector_store %arg20[%1040, %c0_307], %1037 {strides = array<i32>} : memref<8x32xf32, #tpu.memory_space<vmem>>, vector<1x32xf32>,
    %c7_i32_308 = arith.constant 7 : i32
    %1042 = arith.index_cast %c7_i32_308 : i32 to index
    %c0_309 = arith.constant 0 : index
    %1043 = vector.load %arg17[%1042, %c0_309] : memref<8x128xf32, #tpu.memory_space<vmem>>, vector<1x128xf32>
    %cst_310 = arith.constant dense<0.000000e+00> : vector<1x128xf32>
    %1044 = tpu.matmul %1034, %744, %cst_310 {dimension_numbers = #tpu.dot_dimension_numbers<[1], [0], [0], [1], [0, 0, 1, 1], [], []>} : vector<1x32xf32>, vector<32x128xf32>, vector<1x128xf32> -> vector<1x128xf32>
    %1045 = arith.addf %1043, %1044 : vector<1x128xf32>
    %1046 = arith.index_cast %c7_i32_308 : i32 to index
    %c0_311 = arith.constant 0 : index
    %1047 = vector.load %arg18[%1046, %c0_311] : memref<8x128xf32, #tpu.memory_space<vmem>>, vector<1x128xf32>
    %cst_312 = arith.constant dense<0.000000e+00> : vector<1x128xf32>
    %1048 = tpu.matmul %1037, %746, %cst_312 {dimension_numbers = #tpu.dot_dimension_numbers<[1], [0], [0], [1], [0, 0, 1, 1], [], []>} : vector<1x32xf32>, vector<32x128xf32>, vector<1x128xf32> -> vector<1x128xf32>
    %1049 = arith.addf %1047, %1048 : vector<1x128xf32>
    %1050 = arith.negf %1045 : vector<1x128xf32>
    %1051 = math.exp %1050 : vector<1x128xf32>
    %cst_313 = arith.constant 1.000000e+00 : f32
    %1052 = vector.broadcast %cst_313 : f32 to vector<1x128xf32>
    %1053 = arith.addf %1052, %1051 : vector<1x128xf32>
    %1054 = arith.divf %1052, %1053 : vector<1x128xf32>
    %1055 = math.tanh %1045 : vector<1x128xf32>
    %1056 = arith.negf %1049 : vector<1x128xf32>
    %1057 = math.exp %1056 : vector<1x128xf32>
    %cst_314 = arith.constant 1.000000e+00 : f32
    %1058 = vector.broadcast %cst_314 : f32 to vector<1x128xf32>
    %1059 = arith.addf %1058, %1057 : vector<1x128xf32>
    %1060 = arith.divf %1058, %1059 : vector<1x128xf32>
    %1061 = math.tanh %1049 : vector<1x128xf32>
    %1062 = vector.extract_strided_slice %1054 {offsets = [0, 32], sizes = [1, 32], strides = [1, 1]} : vector<1x128xf32> to vector<1x32xf32>
    %1063 = arith.mulf %1062, %1025 : vector<1x32xf32>
    %1064 = vector.extract_strided_slice %1054 {offsets = [0, 0], sizes = [1, 32], strides = [1, 1]} : vector<1x128xf32> to vector<1x32xf32>
    %1065 = vector.extract_strided_slice %1055 {offsets = [0, 64], sizes = [1, 32], strides = [1, 1]} : vector<1x128xf32> to vector<1x32xf32>
    %1066 = arith.mulf %1064, %1065 : vector<1x32xf32>
    %1067 = arith.addf %1063, %1066 : vector<1x32xf32>
    %1068 = vector.extract_strided_slice %1060 {offsets = [0, 32], sizes = [1, 32], strides = [1, 1]} : vector<1x128xf32> to vector<1x32xf32>
    %1069 = arith.mulf %1068, %1031 : vector<1x32xf32>
    %1070 = vector.extract_strided_slice %1060 {offsets = [0, 0], sizes = [1, 32], strides = [1, 1]} : vector<1x128xf32> to vector<1x32xf32>
    %1071 = vector.extract_strided_slice %1061 {offsets = [0, 64], sizes = [1, 32], strides = [1, 1]} : vector<1x128xf32> to vector<1x32xf32>
    %1072 = arith.mulf %1070, %1071 : vector<1x32xf32>
    %1073 = arith.addf %1069, %1072 : vector<1x32xf32>
    %1074 = vector.extract_strided_slice %1054 {offsets = [0, 96], sizes = [1, 32], strides = [1, 1]} : vector<1x128xf32> to vector<1x32xf32>
    %1075 = math.tanh %1067 : vector<1x32xf32>
    %1076 = arith.mulf %1074, %1075 : vector<1x32xf32>
    %1077 = vector.extract_strided_slice %1060 {offsets = [0, 96], sizes = [1, 32], strides = [1, 1]} : vector<1x128xf32> to vector<1x32xf32>
    %1078 = math.tanh %1073 : vector<1x32xf32>
    %1079 = arith.mulf %1077, %1078 : vector<1x32xf32>
    %1080 = arith.index_cast %c7_i32_308 : i32 to index
    %c0_315 = arith.constant 0 : index
    %1081 = vector.load %arg19[%1080, %c0_315] : memref<8x32xf32, #tpu.memory_space<vmem>>, vector<1x32xf32>
    tpu.vector_store %arg19[%1080, %c0_315], %1076 {strides = array<i32>} : memref<8x32xf32, #tpu.memory_space<vmem>>, vector<1x32xf32>,
    %1082 = arith.index_cast %c7_i32_308 : i32 to index
    %c0_316 = arith.constant 0 : index
    %1083 = vector.load %arg20[%1082, %c0_316] : memref<8x32xf32, #tpu.memory_space<vmem>>, vector<1x32xf32>
    tpu.vector_store %arg20[%1082, %c0_316], %1079 {strides = array<i32>} : memref<8x32xf32, #tpu.memory_space<vmem>>, vector<1x32xf32>,
    %c8_i32_317 = arith.constant 8 : i32
    %c0_318 = arith.constant 0 : index
    %c0_319 = arith.constant 0 : index
    %1084 = vector.load %arg19[%c0_318, %c0_319] : memref<8x32xf32, #tpu.memory_space<vmem>>, vector<8x32xf32>
    %c0_320 = arith.constant 0 : index
    %c0_321 = arith.constant 0 : index
    %1085 = vector.load %arg7[%c0_320, %c0_321] : memref<1x32xf32, #tpu.memory_space<vmem>>, vector<1x32xf32>
    %1086 = vector.broadcast %1085 : vector<1x32xf32> to vector<8x32xf32>
    %1087 = arith.mulf %1084, %1086 : vector<8x32xf32>
    %cst_322 = arith.constant dense<0.000000e+00> : vector<8xf32>
    %1088 = vector.multi_reduction <add>, %1087, %cst_322 [1] : vector<8x32xf32> to vector<8xf32>
    %1089 = vector.shape_cast %1088 : vector<8xf32> to vector<8x1xf32>
    %c0_323 = arith.constant 0 : index
    %c0_324 = arith.constant 0 : index
    %1090 = vector.load %arg8[%c0_323, %c0_324] : memref<1x1xf32, #tpu.memory_space<vmem>>, vector<1x1xf32>
    %1091 = vector.broadcast %1090 : vector<1x1xf32> to vector<8x1xf32>
    %1092 = arith.addf %1089, %1091 : vector<8x1xf32>
    %1093 = arith.negf %1092 : vector<8x1xf32>
    %1094 = math.exp %1093 : vector<8x1xf32>
    %cst_325 = arith.constant 1.000000e+00 : f32
    %1095 = vector.broadcast %cst_325 : f32 to vector<8x1xf32>
    %1096 = arith.addf %1095, %1094 : vector<8x1xf32>
    %1097 = arith.divf %1095, %1096 : vector<8x1xf32>
    %c0_326 = arith.constant 0 : index
    %c0_327 = arith.constant 0 : index
    %1098 = vector.load %arg20[%c0_326, %c0_327] : memref<8x32xf32, #tpu.memory_space<vmem>>, vector<8x32xf32>
    %c0_328 = arith.constant 0 : index
    %c0_329 = arith.constant 0 : index
    %1099 = vector.load %arg9[%c0_328, %c0_329] : memref<32x32xf32, #tpu.memory_space<vmem>>, vector<32x32xf32>
    %cst_330 = arith.constant dense<0.000000e+00> : vector<8x32xf32>
    %1100 = tpu.matmul %1098, %1099, %cst_330 {dimension_numbers = #tpu.dot_dimension_numbers<[1], [0], [0], [1], [0, 0, 1, 1], [], []>} : vector<8x32xf32>, vector<32x32xf32>, vector<8x32xf32> -> vector<8x32xf32>
    %c0_331 = arith.constant 0 : index
    %c0_332 = arith.constant 0 : index
    %1101 = vector.load %arg10[%c0_331, %c0_332] : memref<1x32xf32, #tpu.memory_space<vmem>>, vector<1x32xf32>
    %1102 = vector.broadcast %1101 : vector<1x32xf32> to vector<8x32xf32>
    %1103 = arith.addf %1100, %1102 : vector<8x32xf32>
    %1104 = arith.negf %1103 : vector<8x32xf32>
    %1105 = math.exp %1104 : vector<8x32xf32>
    %cst_333 = arith.constant 1.000000e+00 : f32
    %1106 = vector.broadcast %cst_333 : f32 to vector<8x32xf32>
    %1107 = arith.addf %1106, %1105 : vector<8x32xf32>
    %1108 = arith.divf %1106, %1107 : vector<8x32xf32>
    %c0_334 = arith.constant 0 : index
    %c0_335 = arith.constant 0 : index
    %1109 = vector.load %arg16[%c0_334, %c0_335] : memref<8x32xf32, #tpu.memory_space<vmem>>, vector<8x32xf32>
    %1110 = arith.mulf %1109, %1108 : vector<8x32xf32>
    %1111 = vector.broadcast %1097 : vector<8x1xf32> to vector<8x32xf32>
    %1112 = arith.mulf %1110, %1111 : vector<8x32xf32>
    %c0_336 = arith.constant 0 : index
    %c0_337 = arith.constant 0 : index
    %1113 = vector.load %arg11[%c0_336, %c0_337] : memref<1x32xf32, #tpu.memory_space<vmem>>, vector<1x32xf32>
    %1114 = vector.broadcast %1113 : vector<1x32xf32> to vector<8x32xf32>
    %1115 = arith.mulf %1112, %1114 : vector<8x32xf32>
    %cst_338 = arith.constant dense<0.000000e+00> : vector<8xf32>
    %1116 = vector.multi_reduction <add>, %1115, %cst_338 [1] : vector<8x32xf32> to vector<8xf32>
    %1117 = vector.shape_cast %1116 : vector<8xf32> to vector<8x1xf32>
    %c0_339 = arith.constant 0 : index
    %c0_340 = arith.constant 0 : index
    %1118 = vector.load %arg12[%c0_339, %c0_340] : memref<1x1xf32, #tpu.memory_space<vmem>>, vector<1x1xf32>
    %1119 = vector.broadcast %1118 : vector<1x1xf32> to vector<8x1xf32>
    %1120 = arith.addf %1117, %1119 : vector<8x1xf32>
    %cst_341 = arith.constant 0.000000e+00 : f32
    %1121 = vector.broadcast %cst_341 : f32 to vector<8x1xf32>
    %1122 = arith.maximumf %1120, %1121 : vector<8x1xf32>
    %c0_342 = arith.constant 0 : index
    %c0_343 = arith.constant 0 : index
    %1123 = vector.load %arg13[%c0_342, %c0_343] : memref<8x1xf32, #tpu.memory_space<vmem>>, vector<8x1xf32>
    tpu.vector_store %arg13[%c0_342, %c0_343], %1097 {strides = array<i32>} : memref<8x1xf32, #tpu.memory_space<vmem>>, vector<8x1xf32>,
    %c0_344 = arith.constant 0 : index
    %c0_345 = arith.constant 0 : index
    %1124 = vector.load %arg14[%c0_344, %c0_345] : memref<8x32xf32, #tpu.memory_space<vmem>>, vector<8x32xf32>
    tpu.vector_store %arg14[%c0_344, %c0_345], %1108 {strides = array<i32>} : memref<8x32xf32, #tpu.memory_space<vmem>>, vector<8x32xf32>,
    %c0_346 = arith.constant 0 : index
    %c0_347 = arith.constant 0 : index
    %1125 = vector.load %arg15[%c0_346, %c0_347] : memref<8x1xf32, #tpu.memory_space<vmem>>, vector<8x1xf32>
    tpu.vector_store %arg15[%c0_346, %c0_347], %1122 {strides = array<i32>} : memref<8x1xf32, #tpu.memory_space<vmem>>, vector<8x1xf32>,
    return
  }
}

</mosaic_0001>

<llo_original>
// kernel: retain_forward.1
$region0: #{retain_forward.1}
  #allocation0 [shape = 'u32[]', space=smem, size = 0x4, offset = 0x4, fixed_abs, tag = 'smem constant byte address 0x4 - core index']
  #allocation1 [shape = 'u32[144,128]{1,0:T(1,128)}', space=vmem, size = 0x12000, scoped, tag = 'internal scratch']
  #allocation2 [shape = 'f32[8,32]{1,0:T(8,128)}', space=vmem, size = 0x1000, scoped, tag = 'scratch operand']
  #allocation3 [shape = 'f32[8,128]{1,0:T(8,128)}', space=vmem, size = 0x1000, scoped, tag = 'scratch operand']
  #allocation4 [shape = 'f32[8,128]{1,0:T(8,128)}', space=vmem, size = 0x1000, scoped, tag = 'scratch operand']
  #allocation5 [shape = 'f32[8,32]{1,0:T(8,128)}', space=vmem, size = 0x1000, scoped, tag = 'scratch operand']
  #allocation6 [shape = 'f32[8,32]{1,0:T(8,128)}', space=vmem, size = 0x1000, scoped, tag = 'scratch operand']
  #allocation7 [shape = 'f32[1,1]{1,0:T(1,128)S(1)}', space=vmem, size = 0x200, scoped, tag = 'scoped memory for retain_forward.1']
  #allocation8 [shape = 'f32[1,1]{1,0:T(1,128)S(1)}', space=vmem, size = 0x200, scoped, tag = 'scoped memory for retain_forward.1']
  %s0 = inlined_call_operand.vmem [shape: f32[8,16], index: 0, kind: input, shape index: {}]
  %s1 = inlined_call_operand.vmem [shape: f32[16,32], index: 1, kind: input, shape index: {}]
  %s2 = inlined_call_operand.vmem [shape: f32[1,32], index: 2, kind: input, shape index: {}]
  %s3 = inlined_call_operand.hbm [shape: f32[2,32,128], index: 3, kind: input, shape index: {}]
  %s4 = inlined_call_operand.hbm [shape: f32[2,2,32,128], index: 4, kind: input, shape index: {}]
  %s5 = inlined_call_operand.hbm [shape: f32[2,3,32,128], index: 5, kind: input, shape index: {}]
  %s6 = inlined_call_operand.vmem [shape: f32[2,3,1,128], index: 6, kind: input, shape index: {}]
  %s7 = inlined_call_operand.vmem [shape: f32[1,32], index: 7, kind: input, shape index: {}]
  %s8 = inlined_call_operand.<no memory space> [shape: f32[1,1], index: 8, kind: input, shape index: {}]
  %s9 = inlined_call_operand.hbm [shape: f32[32,32], index: 9, kind: input, shape index: {}]
  %s10 = inlined_call_operand.hbm [shape: f32[1,32], index: 10, kind: input, shape index: {}]
  %s11 = inlined_call_operand.vmem [shape: f32[1,32], index: 11, kind: input, shape index: {}]
  %s12 = inlined_call_operand.<no memory space> [shape: f32[1,1], index: 12, kind: input, shape index: {}]
  %s13 = inlined_call_operand.vmem [shape: f32[8,1], index: 13, kind: output, shape index: {0}]
  %s14 = inlined_call_operand.hbm [shape: f32[8,32], index: 14, kind: output, shape index: {1}]
  %s15 = inlined_call_operand.vmem [shape: f32[8,1], index: 15, kind: output, shape index: {2}]
  %16 = xla_tuple %s13, %s14, %s15
  %s17 = sld [smem:[#allocation0]]
  $region98: #{retain_forward.1} parent=0
    _
  %s19 = ssub.s32 1, %s17
  %s20 = scalar_select 0, %s19, %s17
  %v21 = vstv %s8
  %22 = vst [vmem:[#allocation7] sm:$0x1] %v21
  %v23 = vstv %s12
  %24 = vst [vmem:[#allocation8] sm:$0x1] %v23
  $region1: #{retain_forward.1} parent=0
    #allocation9 [shape = 'u8[32768]{0}', space=vmem, size = 0x8000, scoped, tag = 'input window, operand 3, single buffered']
    #allocation10 [shape = 's32[1]{0}', space=sflag, size = 0x4, scoped, tag = 'scoped memory for retain_forward.1']
    #allocation11 [shape = 's32[1]{0}', space=sflag, size = 0x4, scoped, tag = 'scoped memory for retain_forward.1']
    #allocation12 [shape = 'u8[65536]{0}', space=vmem, size = 0x10000, scoped, tag = 'input window, operand 4, single buffered']
    #allocation13 [shape = 's32[1]{0}', space=sflag, size = 0x4, scoped, tag = 'scoped memory for retain_forward.1']
    #allocation14 [shape = 'u8[98304]{0}', space=vmem, size = 0x18000, scoped, tag = 'input window, operand 5, single buffered']
    #allocation15 [shape = 'u8[16384]{0}', space=vmem, size = 0x4000, scoped, tag = 'input window, operand 9, single buffered']
    #allocation16 [shape = 's32[1]{0}', space=sflag, size = 0x4, scoped, tag = 'scoped memory for retain_forward.1']
    #allocation17 [shape = 'u8[512]{0}', space=vmem, size = 0x400, scoped, tag = 'input window, operand 10, single buffered']
    #allocation18 [shape = 'u8[4096]{0}', space=vmem, size = 0x1000, scoped, tag = 'output window, operand 1, single buffered']
    %25 = vsyncpa [#allocation10], 0
    %26 = vsyncpa [#allocation13], 0
    %27 = vsyncpa [#allocation16], 0
    %28 = vsyncpa [#allocation11], 0
    // Predicated region
    $region2: #{retain_forward.1} parent=1 // pred_check
      _
    $region3: #{retain_forward.1} parent=1 // pred_check_branch
      %30 = sbr.rel (0) target = $region5
    $region4: #{retain_forward.1} parent=1 // pred_region
      _
    $region5: #{retain_forward.1} parent=1 // pred_fallthru
      _
    // Predicated region
    $region6: #{retain_forward.1} parent=1 // pred_check
      _
    $region7: #{retain_forward.1} parent=1 // pred_check_branch
      %32 = sbr.rel (0) target = $region9
    $region8: #{retain_forward.1} parent=1 // pred_region
      _
    $region9: #{retain_forward.1} parent=1 // pred_fallthru
      _
    // Predicated region
    $region10: #{retain_forward.1} parent=1 // pred_check
      _
    $region11: #{retain_forward.1} parent=1 // pred_check_branch
      %34 = sbr.rel (0) target = $region13
    $region12: #{retain_forward.1} parent=1 // pred_region
      _
    $region13: #{retain_forward.1} parent=1 // pred_fallthru
      _
    // Predicated region
    $region14: #{retain_forward.1} parent=1 // pred_check
      _
    $region15: #{retain_forward.1} parent=1 // pred_check_branch
      %36 = sbr.rel (0) target = $region17
    $region16: #{retain_forward.1} parent=1 // pred_region
      %s38 = ssub.s32 1024, 1024
      %39 = vsyncadd [#allocation10], %s38
      %s40 = sshll.u32 [#allocation9], 4
      %s41 = int_to_ptr.vmem [resolvable:$true] %s40
      %46 = dma.hbm_to_vmem [thread:$0]  %s3, 1024, %s41, [#allocation10], 128, 128, 8
    $region17: #{retain_forward.1} parent=1 // pred_fallthru
      _
    // Predicated region
    $region18: #{retain_forward.1} parent=1 // pred_check
      _
    $region19: #{retain_forward.1} parent=1 // pred_check_branch
      %48 = sbr.rel (0) target = $region21
    $region20: #{retain_forward.1} parent=1 // pred_region
      %s50 = ssub.s32 2048, 2048
      %51 = vsyncadd [#allocation13], %s50
      %s52 = sshll.u32 [#allocation12], 4
      %s53 = int_to_ptr.vmem [resolvable:$true] %s52
      %58 = dma.hbm_to_vmem [thread:$0]  %s4, 2048, %s53, [#allocation13], 128, 128, 8
    $region21: #{retain_forward.1} parent=1 // pred_fallthru
      _
    // Predicated region
    $region22: #{retain_forward.1} parent=1 // pred_check
      _
    $region23: #{retain_forward.1} parent=1 // pred_check_branch
      %60 = sbr.rel (0) target = $region25
    $region24: #{retain_forward.1} parent=1 // pred_region
      %s62 = ssub.s32 3072, 3072
      %63 = vsyncadd [#allocation13], %s62
      %s64 = sshll.u32 [#allocation14], 4
      %s65 = int_to_ptr.vmem [resolvable:$true] %s64
      %70 = dma.hbm_to_vmem [thread:$0]  %s5, 3072, %s65, [#allocation13], 128, 128, 8
    $region25: #{retain_forward.1} parent=1 // pred_fallthru
      _
    // Predicated region
    $region26: #{retain_forward.1} parent=1 // pred_check
      _
    $region27: #{retain_forward.1} parent=1 // pred_check_branch
      %72 = sbr.rel (0) target = $region29
    $region28: #{retain_forward.1} parent=1 // pred_region
      _
    $region29: #{retain_forward.1} parent=1 // pred_fallthru
      _
    // Predicated region
    $region30: #{retain_forward.1} parent=1 // pred_check
      _
    $region31: #{retain_forward.1} parent=1 // pred_check_branch
      %74 = sbr.rel (0) target = $region33
    $region32: #{retain_forward.1} parent=1 // pred_region
      _
    $region33: #{retain_forward.1} parent=1 // pred_fallthru
      _
    // Predicated region
    $region34: #{retain_forward.1} parent=1 // pred_check
      _
    $region35: #{retain_forward.1} parent=1 // pred_check_branch
      %76 = sbr.rel (0) target = $region37
    $region36: #{retain_forward.1} parent=1 // pred_region
      _
    $region37: #{retain_forward.1} parent=1 // pred_fallthru
      _
    // Predicated region
    $region38: #{retain_forward.1} parent=1 // pred_check
      _
    $region39: #{retain_forward.1} parent=1 // pred_check_branch
      %78 = sbr.rel (0) target = $region41
    $region40: #{retain_forward.1} parent=1 // pred_region
      %s80 = ssub.s32 512, 512
      %81 = vsyncadd [#allocation16], %s80
      %s82 = sshll.u32 [#allocation15], 4
      %s83 = int_to_ptr.vmem [resolvable:$true] %s82
      %88 = dma.hbm_to_vmem [thread:$0]  %s9, 512, %s83, [#allocation16], 128, 128, 8
    $region41: #{retain_forward.1} parent=1 // pred_fallthru
      _
    // Predicated region
    $region42: #{retain_forward.1} parent=1 // pred_check
      _
    $region43: #{retain_forward.1} parent=1 // pred_check_branch
      %90 = sbr.rel (0) target = $region45
    $region44: #{retain_forward.1} parent=1 // pred_region
      %s92 = ssub.s32 16, 16
      %93 = vsyncadd [#allocation16], %s92
      %s95 = sshll.u32 [#allocation17], 4
      %s96 = int_to_ptr.vmem [resolvable:$true] %s95
      %98 = dma.hbm_to_vmem [thread:$0]  %s10, 16, %s96, [#allocation16]
    $region45: #{retain_forward.1} parent=1 // pred_fallthru
      _
    // Predicated region
    $region46: #{retain_forward.1} parent=1 // pred_check
      _
    $region47: #{retain_forward.1} parent=1 // pred_check_branch
      %100 = sbr.rel (0) target = $region49
    $region48: #{retain_forward.1} parent=1 // pred_region
      _
    $region49: #{retain_forward.1} parent=1 // pred_fallthru
      _
    // Predicated region
    $region50: #{retain_forward.1} parent=1 // pred_check
      _
    $region51: #{retain_forward.1} parent=1 // pred_check_branch
      %102 = sbr.rel (0) target = $region53
    $region52: #{retain_forward.1} parent=1 // pred_region
      _
    $region53: #{retain_forward.1} parent=1 // pred_fallthru
      _
    // Predicated region
    $region54: #{retain_forward.1} parent=1 // pred_check
      _
    $region55: #{retain_forward.1} parent=1 // pred_check_branch
      %104 = sbr.rel (0) target = $region57
    $region56: #{retain_forward.1} parent=1 // pred_region
      %105 = dma.done [#allocation10], 1024
    $region57: #{retain_forward.1} parent=1 // pred_fallthru
      _
    // Predicated region
    $region58: #{retain_forward.1} parent=1 // pred_check
      _
    $region59: #{retain_forward.1} parent=1 // pred_check_branch
      %107 = sbr.rel (0) target = $region61
    $region60: #{retain_forward.1} parent=1 // pred_region
      %108 = dma.done [#allocation13], 2048
    $region61: #{retain_forward.1} parent=1 // pred_fallthru
      _
    // Predicated region
    $region62: #{retain_forward.1} parent=1 // pred_check
      _
    $region63: #{retain_forward.1} parent=1 // pred_check_branch
      %110 = sbr.rel (0) target = $region65
    $region64: #{retain_forward.1} parent=1 // pred_region
      %111 = dma.done [#allocation13], 3072
    $region65: #{retain_forward.1} parent=1 // pred_fallthru
      _
    // Predicated region
    $region66: #{retain_forward.1} parent=1 // pred_check
      _
    $region67: #{retain_forward.1} parent=1 // pred_check_branch
      %113 = sbr.rel (0) target = $region69
    $region68: #{retain_forward.1} parent=1 // pred_region
      %114 = dma.done [#allocation16], 512
    $region69: #{retain_forward.1} parent=1 // pred_fallthru
      _
    // Predicated region
    $region70: #{retain_forward.1} parent=1 // pred_check
      _
    $region71: #{retain_forward.1} parent=1 // pred_check_branch
      %116 = sbr.rel (0) target = $region73
    $region72: #{retain_forward.1} parent=1 // pred_region
      %117 = dma.done [#allocation16], 16
    $region73: #{retain_forward.1} parent=1 // pred_fallthru
      _
    %v118 = vld [vmem:[%s0] sm:$0xff]
    %v119 = vld [vmem:[%s1] sm:$0xff]
    %v120 = vld [vmem:[%s1 + $0x8] sm:$0xff]
    %v121 = vld [vmem:[%s2] sm:$0x1]
    %v123 = vlaneseq
    %v124 = vshrl.u32 %v123, 7
    %v125 = vsub.s32 0, %v124
    %v126 = vrot.slane %v121, %v125
    %vm128 = vcmask 130048
    %v130 = vsel %vm128, %v118, 0
    %132 = vmatprep.subr.mxu0 0.0
    %133 = vmatpush1.msra.mxu0 0.0
    %134 = vmatprep.subr.mxu0 0.0
    %135 = vmatpush1.msra.mxu0 0.0
    %136 = vmatprep.subr.mxu0 0.0
    %137 = vmatpush1.msra.mxu0 0.0
    %138 = vmatprep.subr.mxu0 0.0
    %139 = vmatpush1.msra.mxu0 0.0
    %140 = vmatprep.subr.mxu0 0.0
    %141 = vmatpush1.msra.mxu0 0.0
    %142 = vmatprep.subr.mxu0 0.0
    %143 = vmatpush1.msra.mxu0 0.0
    %144 = vmatprep.subr.mxu0 0.0
    %145 = vmatpush1.msra.mxu0 0.0
    %146 = vmatprep.subr.mxu0 0.0
    %147 = vmatpush1.msra.mxu0 0.0
    %148 = vmatprep.subr.mxu0 0.0
    %149 = vmatpush1.msra.mxu0 0.0
    %150 = vmatprep.subr.mxu0 0.0
    %151 = vmatpush1.msra.mxu0 0.0
    %152 = vmatprep.subr.mxu0 0.0
    %153 = vmatpush1.msra.mxu0 0.0
    %154 = vmatprep.subr.mxu0 0.0
    %155 = vmatpush1.msra.mxu0 0.0
    %156 = vmatprep.subr.mxu0 0.0
    %157 = vmatpush1.msra.mxu0 0.0
    %158 = vmatprep.subr.mxu0 0.0
    %159 = vmatpush1.msra.mxu0 0.0
    %160 = vmatprep.subr.mxu0 0.0
    %161 = vmatpush1.msra.mxu0 %v120
    %162 = vmatprep.subr.mxu0 0.0
    %163 = vmatpush1.msra.mxu0 %v119
    %164 = vmatprep.subr.mxu0 0.0
    %165 = vmatpush2.msra.mxu0 0.0
    %166 = vmatprep.subr.mxu0 0.0
    %167 = vmatpush2.msra.mxu0 0.0
    %168 = vmatprep.subr.mxu0 0.0
    %169 = vmatpush2.msra.mxu0 0.0
    %170 = vmatprep.subr.mxu0 0.0
    %171 = vmatpush2.msra.mxu0 0.0
    %172 = vmatprep.subr.mxu0 0.0
    %173 = vmatpush2.msra.mxu0 0.0
    %174 = vmatprep.subr.mxu0 0.0
    %175 = vmatpush2.msra.mxu0 0.0
    %176 = vmatprep.subr.mxu0 0.0
    %177 = vmatpush2.msra.mxu0 0.0
    %178 = vmatprep.subr.mxu0 0.0
    %179 = vmatpush2.msra.mxu0 0.0
    %180 = vmatprep.subr.mxu0 0.0
    %181 = vmatpush2.msra.mxu0 0.0
    %182 = vmatprep.subr.mxu0 0.0
    %183 = vmatpush2.msra.mxu0 0.0
    %184 = vmatprep.subr.mxu0 0.0
    %185 = vmatpush2.msra.mxu0 0.0
    %186 = vmatprep.subr.mxu0 0.0
    %187 = vmatpush2.msra.mxu0 0.0
    %188 = vmatprep.subr.mxu0 0.0
    %189 = vmatpush2.msra.mxu0 0.0
    %190 = vmatprep.subr.mxu0 0.0
    %191 = vmatpush2.msra.mxu0 0.0
    %192 = vmatprep.subr.mxu0 0.0
    %193 = vmatpush2.msra.mxu0 0.0
    %194 = vmatprep.subr.mxu0 0.0
    %195 = vmatpush2.msra.mxu0 0.0
    %196 = vmatprep.mubr.f32.mxu0 0.0
    %197 = vmatmul.mubr.f32.gmra.mxu0 %v130
    %v198 = vpop.f32.mrf.mxu0
    %v199 = vadd.f32 %v126, %v198
    %v200 = vpop.f32.mrf.mxu0
    %201 = vdwg.mxu0
    %vm202 = vcmask 261120
    %203 = vst.msk [vmem:[#allocation2] sm:$0xff] %vm202, %v199
    %v204 = vld [vmem:[#allocation2] sm:$0xff]
    %v205 = vld [vmem:[#allocation9] sm:$0xff]
    %v206 = vld [vmem:[#allocation9 + $0x8] sm:$0xff]
    %v207 = vld [vmem:[#allocation9 + $0x10] sm:$0xff]
    %v208 = vld [vmem:[#allocation9 + $0x18] sm:$0xff]
    %s209 = scalar_lea.vmem [#allocation9], 32
    %v210 = vld [vmem:[%s209] sm:$0xff]
    %v211 = vld [vmem:[%s209 + $0x8] sm:$0xff]
    %v212 = vld [vmem:[%s209 + $0x10] sm:$0xff]
    %v213 = vld [vmem:[%s209 + $0x18] sm:$0xff]
    %v214 = vld [vmem:[%s6] sm:$0x1]
    %v216 = vlaneseq
    %v217 = vshrl.u32 %v216, 7
    %v218 = vsub.s32 0, %v217
    %v219 = vrot.slane %v214, %v218
    %v222 = vsel %vm202, %v204, 0
    %224 = vmatprep.subr.mxu0 0.0
    %225 = vmatpush1.msra.mxu0 0.0
    %226 = vmatprep.subr.mxu0 0.0
    %227 = vmatpush1.msra.mxu0 0.0
    %228 = vmatprep.subr.mxu0 0.0
    %229 = vmatpush1.msra.mxu0 0.0
    %230 = vmatprep.subr.mxu0 0.0
    %231 = vmatpush1.msra.mxu0 0.0
    %232 = vmatprep.subr.mxu0 0.0
    %233 = vmatpush1.msra.mxu0 0.0
    %234 = vmatprep.subr.mxu0 0.0
    %235 = vmatpush1.msra.mxu0 0.0
    %236 = vmatprep.subr.mxu0 0.0
    %237 = vmatpush1.msra.mxu0 0.0
    %238 = vmatprep.subr.mxu0 0.0
    %239 = vmatpush1.msra.mxu0 0.0
    %240 = vmatprep.subr.mxu0 0.0
    %241 = vmatpush1.msra.mxu0 0.0
    %242 = vmatprep.subr.mxu0 0.0
    %243 = vmatpush1.msra.mxu0 0.0
    %244 = vmatprep.subr.mxu0 0.0
    %245 = vmatpush1.msra.mxu0 0.0
    %246 = vmatprep.subr.mxu0 0.0
    %247 = vmatpush1.msra.mxu0 0.0
    %248 = vmatprep.subr.mxu0 0.0
    %249 = vmatpush1.msra.mxu0 %v208
    %250 = vmatprep.subr.mxu0 0.0
    %251 = vmatpush1.msra.mxu0 %v207
    %252 = vmatprep.subr.mxu0 0.0
    %253 = vmatpush1.msra.mxu0 %v206
    %254 = vmatprep.subr.mxu0 0.0
    %255 = vmatpush1.msra.mxu0 %v205
    %256 = vmatprep.subr.mxu0 0.0
    %257 = vmatpush2.msra.mxu0 0.0
    %258 = vmatprep.subr.mxu0 0.0
    %259 = vmatpush2.msra.mxu0 0.0
    %260 = vmatprep.subr.mxu0 0.0
    %261 = vmatpush2.msra.mxu0 0.0
    %262 = vmatprep.subr.mxu0 0.0
    %263 = vmatpush2.msra.mxu0 0.0
    %264 = vmatprep.subr.mxu0 0.0
    %265 = vmatpush2.msra.mxu0 0.0
    %266 = vmatprep.subr.mxu0 0.0
    %267 = vmatpush2.msra.mxu0 0.0
    %268 = vmatprep.subr.mxu0 0.0
    %269 = vmatpush2.msra.mxu0 0.0
    %270 = vmatprep.subr.mxu0 0.0
    %271 = vmatpush2.msra.mxu0 0.0
    %272 = vmatprep.subr.mxu0 0.0
    %273 = vmatpush2.msra.mxu0 0.0
    %274 = vmatprep.subr.mxu0 0.0
    %275 = vmatpush2.msra.mxu0 0.0
    %276 = vmatprep.subr.mxu0 0.0
    %277 = vmatpush2.msra.mxu0 0.0
    %278 = vmatprep.subr.mxu0 0.0
    %279 = vmatpush2.msra.mxu0 0.0
    %280 = vmatprep.subr.mxu0 0.0
    %281 = vmatpush2.msra.mxu0 0.0
    %282 = vmatprep.subr.mxu0 0.0
    %283 = vmatpush2.msra.mxu0 0.0
    %284 = vmatprep.subr.mxu0 0.0
    %285 = vmatpush2.msra.mxu0 0.0
    %286 = vmatprep.subr.mxu0 0.0
    %287 = vmatpush2.msra.mxu0 0.0
    %288 = vmatprep.mubr.f32.mxu0 0.0
    %289 = vmatmul.mubr.f32.gmra.mxu0 %v222
    %v290 = vpop.f32.mrf.mxu0
    %v291 = vadd.f32 %v219, %v290
    %v292 = vpop.f32.mrf.mxu0
    %293 = vdwg.mxu0
    %294 = vst [vmem:[#allocation3] sm:$0xff] %v291
    %s295 = scalar_lea.vmem %s6, 3
    %v296 = vld [vmem:[%s295] sm:$0x1]
    %v298 = vlaneseq
    %v299 = vshrl.u32 %v298, 7
    %v300 = vsub.s32 0, %v299
    %v301 = vrot.slane %v296, %v300
    %303 = vmatprep.subr.mxu0 0.0
    %304 = vmatpush1.msra.mxu0 0.0
    %305 = vmatprep.subr.mxu0 0.0
    %306 = vmatpush1.msra.mxu0 0.0
    %307 = vmatprep.subr.mxu0 0.0
    %308 = vmatpush1.msra.mxu0 0.0
    %309 = vmatprep.subr.mxu0 0.0
    %310 = vmatpush1.msra.mxu0 0.0
    %311 = vmatprep.subr.mxu0 0.0
    %312 = vmatpush1.msra.mxu0 0.0
    %313 = vmatprep.subr.mxu0 0.0
    %314 = vmatpush1.msra.mxu0 0.0
    %315 = vmatprep.subr.mxu0 0.0
    %316 = vmatpush1.msra.mxu0 0.0
    %317 = vmatprep.subr.mxu0 0.0
    %318 = vmatpush1.msra.mxu0 0.0
    %319 = vmatprep.subr.mxu0 0.0
    %320 = vmatpush1.msra.mxu0 0.0
    %321 = vmatprep.subr.mxu0 0.0
    %322 = vmatpush1.msra.mxu0 0.0
    %323 = vmatprep.subr.mxu0 0.0
    %324 = vmatpush1.msra.mxu0 0.0
    %325 = vmatprep.subr.mxu0 0.0
    %326 = vmatpush1.msra.mxu0 0.0
    %327 = vmatprep.subr.mxu0 0.0
    %328 = vmatpush1.msra.mxu0 %v213
    %329 = vmatprep.subr.mxu0 0.0
    %330 = vmatpush1.msra.mxu0 %v212
    %331 = vmatprep.subr.mxu0 0.0
    %332 = vmatpush1.msra.mxu0 %v211
    %333 = vmatprep.subr.mxu0 0.0
    %334 = vmatpush1.msra.mxu0 %v210
    %335 = vmatprep.subr.mxu0 0.0
    %336 = vmatpush2.msra.mxu0 0.0
    %337 = vmatprep.subr.mxu0 0.0
    %338 = vmatpush2.msra.mxu0 0.0
    %339 = vmatprep.subr.mxu0 0.0
    %340 = vmatpush2.msra.mxu0 0.0
    %341 = vmatprep.subr.mxu0 0.0
    %342 = vmatpush2.msra.mxu0 0.0
    %343 = vmatprep.subr.mxu0 0.0
    %344 = vmatpush2.msra.mxu0 0.0
    %345 = vmatprep.subr.mxu0 0.0
    %346 = vmatpush2.msra.mxu0 0.0
    %347 = vmatprep.subr.mxu0 0.0
    %348 = vmatpush2.msra.mxu0 0.0
    %349 = vmatprep.subr.mxu0 0.0
    %350 = vmatpush2.msra.mxu0 0.0
    %351 = vmatprep.subr.mxu0 0.0
    %352 = vmatpush2.msra.mxu0 0.0
    %353 = vmatprep.subr.mxu0 0.0
    %354 = vmatpush2.msra.mxu0 0.0
    %355 = vmatprep.subr.mxu0 0.0
    %356 = vmatpush2.msra.mxu0 0.0
    %357 = vmatprep.subr.mxu0 0.0
    %358 = vmatpush2.msra.mxu0 0.0
    %359 = vmatprep.subr.mxu0 0.0
    %360 = vmatpush2.msra.mxu0 0.0
    %361 = vmatprep.subr.mxu0 0.0
    %362 = vmatpush2.msra.mxu0 0.0
    %363 = vmatprep.subr.mxu0 0.0
    %364 = vmatpush2.msra.mxu0 0.0
    %365 = vmatprep.subr.mxu0 0.0
    %366 = vmatpush2.msra.mxu0 0.0
    %367 = vmatprep.mubr.f32.mxu0 0.0
    %368 = vmatmul.mubr.f32.gmra.mxu0 %v222
    %v369 = vpop.f32.mrf.mxu0
    %v370 = vadd.f32 %v301, %v369
    %v371 = vpop.f32.mrf.mxu0
    %372 = vdwg.mxu0
    %373 = vst [vmem:[#allocation4] sm:$0xff] %v370
    %v374 = vld [vmem:[#allocation14] sm:$0xff]
    %v375 = vld [vmem:[#allocation14 + $0x8] sm:$0xff]
    %v376 = vld [vmem:[#allocation14 + $0x10] sm:$0xff]
    %v377 = vld [vmem:[#allocation14 + $0x18] sm:$0xff]
    %s378 = scalar_lea.vmem [#allocation14], 96
    %v379 = vld [vmem:[%s378] sm:$0xff]
    %v380 = vld [vmem:[%s378 + $0x8] sm:$0xff]
    %v381 = vld [vmem:[%s378 + $0x10] sm:$0xff]
    %v382 = vld [vmem:[%s378 + $0x18] sm:$0xff]
    %v383 = vld [vmem:[#allocation3] sm:$0x1]
    %v385 = vsel %vm202, 0.0, 0
    %387 = vmatprep.subr.mxu0 0.0
    %388 = vmatpush1.msra.mxu0 0.0
    %389 = vmatprep.subr.mxu0 0.0
    %390 = vmatpush1.msra.mxu0 0.0
    %391 = vmatprep.subr.mxu0 0.0
    %392 = vmatpush1.msra.mxu0 0.0
    %393 = vmatprep.subr.mxu0 0.0
    %394 = vmatpush1.msra.mxu0 0.0
    %395 = vmatprep.subr.mxu0 0.0
    %396 = vmatpush1.msra.mxu0 0.0
    %397 = vmatprep.subr.mxu0 0.0
    %398 = vmatpush1.msra.mxu0 0.0
    %399 = vmatprep.subr.mxu0 0.0
    %400 = vmatpush1.msra.mxu0 0.0
    %401 = vmatprep.subr.mxu0 0.0
    %402 = vmatpush1.msra.mxu0 0.0
    %403 = vmatprep.subr.mxu0 0.0
    %404 = vmatpush1.msra.mxu0 0.0
    %405 = vmatprep.subr.mxu0 0.0
    %406 = vmatpush1.msra.mxu0 0.0
    %407 = vmatprep.subr.mxu0 0.0
    %408 = vmatpush1.msra.mxu0 0.0
    %409 = vmatprep.subr.mxu0 0.0
    %410 = vmatpush1.msra.mxu0 0.0
    %411 = vmatprep.subr.mxu0 0.0
    %412 = vmatpush1.msra.mxu0 %v377
    %413 = vmatprep.subr.mxu0 0.0
    %414 = vmatpush1.msra.mxu0 %v376
    %415 = vmatprep.subr.mxu0 0.0
    %416 = vmatpush1.msra.mxu0 %v375
    %417 = vmatprep.subr.mxu0 0.0
    %418 = vmatpush1.msra.mxu0 %v374
    %419 = vmatprep.subr.mxu0 0.0
    %420 = vmatpush2.msra.mxu0 0.0
    %421 = vmatprep.subr.mxu0 0.0
    %422 = vmatpush2.msra.mxu0 0.0
    %423 = vmatprep.subr.mxu0 0.0
    %424 = vmatpush2.msra.mxu0 0.0
    %425 = vmatprep.subr.mxu0 0.0
    %426 = vmatpush2.msra.mxu0 0.0
    %427 = vmatprep.subr.mxu0 0.0
    %428 = vmatpush2.msra.mxu0 0.0
    %429 = vmatprep.subr.mxu0 0.0
    %430 = vmatpush2.msra.mxu0 0.0
    %431 = vmatprep.subr.mxu0 0.0
    %432 = vmatpush2.msra.mxu0 0.0
    %433 = vmatprep.subr.mxu0 0.0
    %434 = vmatpush2.msra.mxu0 0.0
    %435 = vmatprep.subr.mxu0 0.0
    %436 = vmatpush2.msra.mxu0 0.0
    %437 = vmatprep.subr.mxu0 0.0
    %438 = vmatpush2.msra.mxu0 0.0
    %439 = vmatprep.subr.mxu0 0.0
    %440 = vmatpush2.msra.mxu0 0.0
    %441 = vmatprep.subr.mxu0 0.0
    %442 = vmatpush2.msra.mxu0 0.0
    %443 = vmatprep.subr.mxu0 0.0
    %444 = vmatpush2.msra.mxu0 0.0
    %445 = vmatprep.subr.mxu0 0.0
    %446 = vmatpush2.msra.mxu0 0.0
    %447 = vmatprep.subr.mxu0 0.0
    %448 = vmatpush2.msra.mxu0 0.0
    %449 = vmatprep.subr.mxu0 0.0
    %450 = vmatpush2.msra.mxu0 0.0
    %451 = vmatprep.mubr.f32.mxu0 0.0
    %452 = vmatmul.mubr.f32.gmra.mxu0 %v385
    %v453 = vpop.f32.mrf.mxu0
    %v454 = vadd.f32 0.0, %v453
    %v455 = vpop.f32.mrf.mxu0
    %456 = vdwg.mxu0
    %v457 = vadd.f32 %v383, %v454
    %v458 = vld [vmem:[#allocation4] sm:$0x1]
    %459 = vmatprep.subr.mxu0 0.0
    %460 = vmatpush1.msra.mxu0 0.0
    %461 = vmatprep.subr.mxu0 0.0
    %462 = vmatpush1.msra.mxu0 0.0
    %463 = vmatprep.subr.mxu0 0.0
    %464 = vmatpush1.msra.mxu0 0.0
    %465 = vmatprep.subr.mxu0 0.0
    %466 = vmatpush1.msra.mxu0 0.0
    %467 = vmatprep.subr.mxu0 0.0
    %468 = vmatpush1.msra.mxu0 0.0
    %469 = vmatprep.subr.mxu0 0.0
    %470 = vmatpush1.msra.mxu0 0.0
    %471 = vmatprep.subr.mxu0 0.0
    %472 = vmatpush1.msra.mxu0 0.0
    %473 = vmatprep.subr.mxu0 0.0
    %474 = vmatpush1.msra.mxu0 0.0
    %475 = vmatprep.subr.mxu0 0.0
    %476 = vmatpush1.msra.mxu0 0.0
    %477 = vmatprep.subr.mxu0 0.0
    %478 = vmatpush1.msra.mxu0 0.0
    %479 = vmatprep.subr.mxu0 0.0
    %480 = vmatpush1.msra.mxu0 0.0
    %481 = vmatprep.subr.mxu0 0.0
    %482 = vmatpush1.msra.mxu0 0.0
    %483 = vmatprep.subr.mxu0 0.0
    %484 = vmatpush1.msra.mxu0 %v382
    %485 = vmatprep.subr.mxu0 0.0
    %486 = vmatpush1.msra.mxu0 %v381
    %487 = vmatprep.subr.mxu0 0.0
    %488 = vmatpush1.msra.mxu0 %v380
    %489 = vmatprep.subr.mxu0 0.0
    %490 = vmatpush1.msra.mxu0 %v379
    %491 = vmatprep.subr.mxu0 0.0
    %492 = vmatpush2.msra.mxu0 0.0
    %493 = vmatprep.subr.mxu0 0.0
    %494 = vmatpush2.msra.mxu0 0.0
    %495 = vmatprep.subr.mxu0 0.0
    %496 = vmatpush2.msra.mxu0 0.0
    %497 = vmatprep.subr.mxu0 0.0
    %498 = vmatpush2.msra.mxu0 0.0
    %499 = vmatprep.subr.mxu0 0.0
    %500 = vmatpush2.msra.mxu0 0.0
    %501 = vmatprep.subr.mxu0 0.0
    %502 = vmatpush2.msra.mxu0 0.0
    %503 = vmatprep.subr.mxu0 0.0
    %504 = vmatpush2.msra.mxu0 0.0
    %505 = vmatprep.subr.mxu0 0.0
    %506 = vmatpush2.msra.mxu0 0.0
    %507 = vmatprep.subr.mxu0 0.0
    %508 = vmatpush2.msra.mxu0 0.0
    %509 = vmatprep.subr.mxu0 0.0
    %510 = vmatpush2.msra.mxu0 0.0
    %511 = vmatprep.subr.mxu0 0.0
    %512 = vmatpush2.msra.mxu0 0.0
    %513 = vmatprep.subr.mxu0 0.0
    %514 = vmatpush2.msra.mxu0 0.0
    %515 = vmatprep.subr.mxu0 0.0
    %516 = vmatpush2.msra.mxu0 0.0
    %517 = vmatprep.subr.mxu0 0.0
    %518 = vmatpush2.msra.mxu0 0.0
    %519 = vmatprep.subr.mxu0 0.0
    %520 = vmatpush2.msra.mxu0 0.0
    %521 = vmatprep.subr.mxu0 0.0
    %522 = vmatpush2.msra.mxu0 0.0
    %523 = vmatprep.mubr.f32.mxu0 0.0
    %524 = vmatmul.mubr.f32.gmra.mxu0 %v385
    %v525 = vpop.f32.mrf.mxu0
    %v526 = vadd.f32 0.0, %v525
    %v527 = vpop.f32.mrf.mxu0
    %528 = vdwg.mxu0
    %v529 = vadd.f32 %v458, %v526
    %v530 = vxor.u32 %v457, 2147483648
    %v531 = vmul.f32 %v530, 1.442695
    %v532 = vpow.pop %v531
    %v533 = vadd.f32 %v532, 1.0
    %v534 = vrcp.pop %v533
    %v535 = vmul.f32 1.0, %v534
    %v536 = vtanh.pop %v457
    %v537 = vxor.u32 %v529, 2147483648
    %v538 = vmul.f32 %v537, 1.442695
    %v539 = vpow.pop %v538
    %v540 = vadd.f32 %v539, 1.0
    %v541 = vrcp.pop %v540
    %v542 = vmul.f32 1.0, %v541
    %v543 = vtanh.pop %v529
    %v544 = vmul.f32 %v535, 0.0
    %546 = vrot.lane.b32.xlu0 %v536, 64
    %v547 = vpop.permute.xlu0 %546
    %v549 = vmul.f32 %v535, %v547
    %551 = vrot.lane.b32.xlu0 %v549, 32
    %v552 = vpop.permute.xlu0 %551
    %v554 = vadd.f32 %v544, %v552
    %v555 = vmul.f32 %v542, 0.0
    %557 = vrot.lane.b32.xlu0 %v543, 64
    %v558 = vpop.permute.xlu0 %557
    %v560 = vmul.f32 %v542, %v558
    %562 = vrot.lane.b32.xlu0 %v560, 32
    %v563 = vpop.permute.xlu0 %562
    %v565 = vadd.f32 %v555, %v563
    %v566 = vtanh.pop %v554
    %568 = vrot.lane.b32.xlu0 %v566, 64
    %v569 = vpop.permute.xlu0 %568
    %v571 = vmul.f32 %v535, %v569
    %v572 = vtanh.pop %v565
    %574 = vrot.lane.b32.xlu0 %v572, 64
    %v575 = vpop.permute.xlu0 %574
    %v577 = vmul.f32 %v542, %v575
    %579 = vrot.lane.b32.xlu0 %v571, 32
    %v580 = vpop.permute.xlu0 %579
    %vm582 = vcmask 253952
    %583 = vst.msk [vmem:[#allocation5] sm:$0x1] %vm582, %v580
    %585 = vrot.lane.b32.xlu0 %v577, 32
    %v586 = vpop.permute.xlu0 %585
    %588 = vst.msk [vmem:[#allocation6] sm:$0x1] %vm582, %v586
    %v589 = vld [vmem:[#allocation3 + $0x1] sm:$0x1]
    %v590 = vsel %vm202, %v580, 0
    %592 = vmatprep.subr.mxu0 0.0
    %593 = vmatpush1.msra.mxu0 0.0
    %594 = vmatprep.subr.mxu0 0.0
    %595 = vmatpush1.msra.mxu0 0.0
    %596 = vmatprep.subr.mxu0 0.0
    %597 = vmatpush1.msra.mxu0 0.0
    %598 = vmatprep.subr.mxu0 0.0
    %599 = vmatpush1.msra.mxu0 0.0
    %600 = vmatprep.subr.mxu0 0.0
    %601 = vmatpush1.msra.mxu0 0.0
    %602 = vmatprep.subr.mxu0 0.0
    %603 = vmatpush1.msra.mxu0 0.0
    %604 = vmatprep.subr.mxu0 0.0
    %605 = vmatpush1.msra.mxu0 0.0
    %606 = vmatprep.subr.mxu0 0.0
    %607 = vmatpush1.msra.mxu0 0.0
    %608 = vmatprep.subr.mxu0 0.0
    %609 = vmatpush1.msra.mxu0 0.0
    %610 = vmatprep.subr.mxu0 0.0
    %611 = vmatpush1.msra.mxu0 0.0
    %612 = vmatprep.subr.mxu0 0.0
    %613 = vmatpush1.msra.mxu0 0.0
    %614 = vmatprep.subr.mxu0 0.0
    %615 = vmatpush1.msra.mxu0 0.0
    %616 = vmatprep.subr.mxu0 0.0
    %617 = vmatpush1.msra.mxu0 %v377
    %618 = vmatprep.subr.mxu0 0.0
    %619 = vmatpush1.msra.mxu0 %v376
    %620 = vmatprep.subr.mxu0 0.0
    %621 = vmatpush1.msra.mxu0 %v375
    %622 = vmatprep.subr.mxu0 0.0
    %623 = vmatpush1.msra.mxu0 %v374
    %624 = vmatprep.subr.mxu0 0.0
    %625 = vmatpush2.msra.mxu0 0.0
    %626 = vmatprep.subr.mxu0 0.0
    %627 = vmatpush2.msra.mxu0 0.0
    %628 = vmatprep.subr.mxu0 0.0
    %629 = vmatpush2.msra.mxu0 0.0
    %630 = vmatprep.subr.mxu0 0.0
    %631 = vmatpush2.msra.mxu0 0.0
    %632 = vmatprep.subr.mxu0 0.0
    %633 = vmatpush2.msra.mxu0 0.0
    %634 = vmatprep.subr.mxu0 0.0
    %635 = vmatpush2.msra.mxu0 0.0
    %636 = vmatprep.subr.mxu0 0.0
    %637 = vmatpush2.msra.mxu0 0.0
    %638 = vmatprep.subr.mxu0 0.0
    %639 = vmatpush2.msra.mxu0 0.0
    %640 = vmatprep.subr.mxu0 0.0
    %641 = vmatpush2.msra.mxu0 0.0
    %642 = vmatprep.subr.mxu0 0.0
    %643 = vmatpush2.msra.mxu0 0.0
    %644 = vmatprep.subr.mxu0 0.0
    %645 = vmatpush2.msra.mxu0 0.0
    %646 = vmatprep.subr.mxu0 0.0
    %647 = vmatpush2.msra.mxu0 0.0
    %648 = vmatprep.subr.mxu0 0.0
    %649 = vmatpush2.msra.mxu0 0.0
    %650 = vmatprep.subr.mxu0 0.0
    %651 = vmatpush2.msra.mxu0 0.0
    %652 = vmatprep.subr.mxu0 0.0
    %653 = vmatpush2.msra.mxu0 0.0
    %654 = vmatprep.subr.mxu0 0.0
    %655 = vmatpush2.msra.mxu0 0.0
    %656 = vmatprep.mubr.f32.mxu0 0.0
    %657 = vmatmul.mubr.f32.gmra.mxu0 %v590
    %v658 = vpop.f32.mrf.mxu0
    %v659 = vadd.f32 0.0, %v658
    %v660 = vpop.f32.mrf.mxu0
    %661 = vdwg.mxu0
    %v662 = vadd.f32 %v589, %v659
    %v663 = vld [vmem:[#allocation4 + $0x1] sm:$0x1]
    %v664 = vsel %vm202, %v586, 0
    %666 = vmatprep.subr.mxu0 0.0
    %667 = vmatpush1.msra.mxu0 0.0
    %668 = vmatprep.subr.mxu0 0.0
    %669 = vmatpush1.msra.mxu0 0.0
    %670 = vmatprep.subr.mxu0 0.0
    %671 = vmatpush1.msra.mxu0 0.0
    %672 = vmatprep.subr.mxu0 0.0
    %673 = vmatpush1.msra.mxu0 0.0
    %674 = vmatprep.subr.mxu0 0.0
    %675 = vmatpush1.msra.mxu0 0.0
    %676 = vmatprep.subr.mxu0 0.0
    %677 = vmatpush1.msra.mxu0 0.0
    %678 = vmatprep.subr.mxu0 0.0
    %679 = vmatpush1.msra.mxu0 0.0
    %680 = vmatprep.subr.mxu0 0.0
    %681 = vmatpush1.msra.mxu0 0.0
    %682 = vmatprep.subr.mxu0 0.0
    %683 = vmatpush1.msra.mxu0 0.0
    %684 = vmatprep.subr.mxu0 0.0
    %685 = vmatpush1.msra.mxu0 0.0
    %686 = vmatprep.subr.mxu0 0.0
    %687 = vmatpush1.msra.mxu0 0.0
    %688 = vmatprep.subr.mxu0 0.0
    %689 = vmatpush1.msra.mxu0 0.0
    %690 = vmatprep.subr.mxu0 0.0
    %691 = vmatpush1.msra.mxu0 %v382
    %692 = vmatprep.subr.mxu0 0.0
    %693 = vmatpush1.msra.mxu0 %v381
    %694 = vmatprep.subr.mxu0 0.0
    %695 = vmatpush1.msra.mxu0 %v380
    %696 = vmatprep.subr.mxu0 0.0
    %697 = vmatpush1.msra.mxu0 %v379
    %698 = vmatprep.subr.mxu0 0.0
    %699 = vmatpush2.msra.mxu0 0.0
    %700 = vmatprep.subr.mxu0 0.0
    %701 = vmatpush2.msra.mxu0 0.0
    %702 = vmatprep.subr.mxu0 0.0
    %703 = vmatpush2.msra.mxu0 0.0
    %704 = vmatprep.subr.mxu0 0.0
    %705 = vmatpush2.msra.mxu0 0.0
    %706 = vmatprep.subr.mxu0 0.0
    %707 = vmatpush2.msra.mxu0 0.0
    %708 = vmatprep.subr.mxu0 0.0
    %709 = vmatpush2.msra.mxu0 0.0
    %710 = vmatprep.subr.mxu0 0.0
    %711 = vmatpush2.msra.mxu0 0.0
    %712 = vmatprep.subr.mxu0 0.0
    %713 = vmatpush2.msra.mxu0 0.0
    %714 = vmatprep.subr.mxu0 0.0
    %715 = vmatpush2.msra.mxu0 0.0
    %716 = vmatprep.subr.mxu0 0.0
    %717 = vmatpush2.msra.mxu0 0.0
    %718 = vmatprep.subr.mxu0 0.0
    %719 = vmatpush2.msra.mxu0 0.0
    %720 = vmatprep.subr.mxu0 0.0
    %721 = vmatpush2.msra.mxu0 0.0
    %722 = vmatprep.subr.mxu0 0.0
    %723 = vmatpush2.msra.mxu0 0.0
    %724 = vmatprep.subr.mxu0 0.0
    %725 = vmatpush2.msra.mxu0 0.0
    %726 = vmatprep.subr.mxu0 0.0
    %727 = vmatpush2.msra.mxu0 0.0
    %728 = vmatprep.subr.mxu0 0.0
    %729 = vmatpush2.msra.mxu0 0.0
    %730 = vmatprep.mubr.f32.mxu0 0.0
    %731 = vmatmul.mubr.f32.gmra.mxu0 %v664
    %v732 = vpop.f32.mrf.mxu0
    %v733 = vadd.f32 0.0, %v732
    %v734 = vpop.f32.mrf.mxu0
    %735 = vdwg.mxu0
    %v736 = vadd.f32 %v663, %v733
    %v737 = vxor.u32 %v662, 2147483648
    %v738 = vmul.f32 %v737, 1.442695
    %v739 = vpow.pop %v738
    %v740 = vadd.f32 %v739, 1.0
    %v741 = vrcp.pop %v740
    %v742 = vmul.f32 1.0, %v741
    %v743 = vtanh.pop %v662
    %v744 = vxor.u32 %v736, 2147483648
    %v745 = vmul.f32 %v744, 1.442695
    %v746 = vpow.pop %v745
    %v747 = vadd.f32 %v746, 1.0
    %v748 = vrcp.pop %v747
    %v749 = vmul.f32 1.0, %v748
    %v750 = vtanh.pop %v736
    %v751 = vmul.f32 %v742, %v554
    %753 = vrot.lane.b32.xlu0 %v743, 64
    %v754 = vpop.permute.xlu0 %753
    %v756 = vmul.f32 %v742, %v754
    %758 = vrot.lane.b32.xlu0 %v756, 32
    %v759 = vpop.permute.xlu0 %758
    %v761 = vadd.f32 %v751, %v759
    %v762 = vmul.f32 %v749, %v565
    %764 = vrot.lane.b32.xlu0 %v750, 64
    %v765 = vpop.permute.xlu0 %764
    %v767 = vmul.f32 %v749, %v765
    %769 = vrot.lane.b32.xlu0 %v767, 32
    %v770 = vpop.permute.xlu0 %769
    %v772 = vadd.f32 %v762, %v770
    %v773 = vtanh.pop %v761
    %775 = vrot.lane.b32.xlu0 %v773, 64
    %v776 = vpop.permute.xlu0 %775
    %v778 = vmul.f32 %v742, %v776
    %v779 = vtanh.pop %v772
    %781 = vrot.lane.b32.xlu0 %v779, 64
    %v782 = vpop.permute.xlu0 %781
    %v784 = vmul.f32 %v749, %v782
    %786 = vrot.lane.b32.xlu0 %v778, 32
    %v787 = vpop.permute.xlu0 %786
    %789 = vst.msk [vmem:[#allocation5 + $0x1] sm:$0x1] %vm582, %v787
    %791 = vrot.lane.b32.xlu0 %v784, 32
    %v792 = vpop.permute.xlu0 %791
    %794 = vst.msk [vmem:[#allocation6 + $0x1] sm:$0x1] %vm582, %v792
    %v795 = vld [vmem:[#allocation3 + $0x2] sm:$0x1]
    %v796 = vsel %vm202, %v787, 0
    %798 = vmatprep.subr.mxu0 0.0
    %799 = vmatpush1.msra.mxu0 0.0
    %800 = vmatprep.subr.mxu0 0.0
    %801 = vmatpush1.msra.mxu0 0.0
    %802 = vmatprep.subr.mxu0 0.0
    %803 = vmatpush1.msra.mxu0 0.0
    %804 = vmatprep.subr.mxu0 0.0
    %805 = vmatpush1.msra.mxu0 0.0
    %806 = vmatprep.subr.mxu0 0.0
    %807 = vmatpush1.msra.mxu0 0.0
    %808 = vmatprep.subr.mxu0 0.0
    %809 = vmatpush1.msra.mxu0 0.0
    %810 = vmatprep.subr.mxu0 0.0
    %811 = vmatpush1.msra.mxu0 0.0
    %812 = vmatprep.subr.mxu0 0.0
    %813 = vmatpush1.msra.mxu0 0.0
    %814 = vmatprep.subr.mxu0 0.0
    %815 = vmatpush1.msra.mxu0 0.0
    %816 = vmatprep.subr.mxu0 0.0
    %817 = vmatpush1.msra.mxu0 0.0
    %818 = vmatprep.subr.mxu0 0.0
    %819 = vmatpush1.msra.mxu0 0.0
    %820 = vmatprep.subr.mxu0 0.0
    %821 = vmatpush1.msra.mxu0 0.0
    %822 = vmatprep.subr.mxu0 0.0
    %823 = vmatpush1.msra.mxu0 %v377
    %824 = vmatprep.subr.mxu0 0.0
    %825 = vmatpush1.msra.mxu0 %v376
    %826 = vmatprep.subr.mxu0 0.0
    %827 = vmatpush1.msra.mxu0 %v375
    %828 = vmatprep.subr.mxu0 0.0
    %829 = vmatpush1.msra.mxu0 %v374
    %830 = vmatprep.subr.mxu0 0.0
    %831 = vmatpush2.msra.mxu0 0.0
    %832 = vmatprep.subr.mxu0 0.0
    %833 = vmatpush2.msra.mxu0 0.0
    %834 = vmatprep.subr.mxu0 0.0
    %835 = vmatpush2.msra.mxu0 0.0
    %836 = vmatprep.subr.mxu0 0.0
    %837 = vmatpush2.msra.mxu0 0.0
    %838 = vmatprep.subr.mxu0 0.0
    %839 = vmatpush2.msra.mxu0 0.0
    %840 = vmatprep.subr.mxu0 0.0
    %841 = vmatpush2.msra.mxu0 0.0
    %842 = vmatprep.subr.mxu0 0.0
    %843 = vmatpush2.msra.mxu0 0.0
    %844 = vmatprep.subr.mxu0 0.0
    %845 = vmatpush2.msra.mxu0 0.0
    %846 = vmatprep.subr.mxu0 0.0
    %847 = vmatpush2.msra.mxu0 0.0
    %848 = vmatprep.subr.mxu0 0.0
    %849 = vmatpush2.msra.mxu0 0.0
    %850 = vmatprep.subr.mxu0 0.0
    %851 = vmatpush2.msra.mxu0 0.0
    %852 = vmatprep.subr.mxu0 0.0
    %853 = vmatpush2.msra.mxu0 0.0
    %854 = vmatprep.subr.mxu0 0.0
    %855 = vmatpush2.msra.mxu0 0.0
    %856 = vmatprep.subr.mxu0 0.0
    %857 = vmatpush2.msra.mxu0 0.0
    %858 = vmatprep.subr.mxu0 0.0
    %859 = vmatpush2.msra.mxu0 0.0
    %860 = vmatprep.subr.mxu0 0.0
    %861 = vmatpush2.msra.mxu0 0.0
    %862 = vmatprep.mubr.f32.mxu0 0.0
    %863 = vmatmul.mubr.f32.gmra.mxu0 %v796
    %v864 = vpop.f32.mrf.mxu0
    %v865 = vadd.f32 0.0, %v864
    %v866 = vpop.f32.mrf.mxu0
    %867 = vdwg.mxu0
    %v868 = vadd.f32 %v795, %v865
    %v869 = vld [vmem:[#allocation4 + $0x2] sm:$0x1]
    %v870 = vsel %vm202, %v792, 0
    %872 = vmatprep.subr.mxu0 0.0
    %873 = vmatpush1.msra.mxu0 0.0
    %874 = vmatprep.subr.mxu0 0.0
    %875 = vmatpush1.msra.mxu0 0.0
    %876 = vmatprep.subr.mxu0 0.0
    %877 = vmatpush1.msra.mxu0 0.0
    %878 = vmatprep.subr.mxu0 0.0
    %879 = vmatpush1.msra.mxu0 0.0
    %880 = vmatprep.subr.mxu0 0.0
    %881 = vmatpush1.msra.mxu0 0.0
    %882 = vmatprep.subr.mxu0 0.0
    %883 = vmatpush1.msra.mxu0 0.0
    %884 = vmatprep.subr.mxu0 0.0
    %885 = vmatpush1.msra.mxu0 0.0
    %886 = vmatprep.subr.mxu0 0.0
    %887 = vmatpush1.msra.mxu0 0.0
    %888 = vmatprep.subr.mxu0 0.0
    %889 = vmatpush1.msra.mxu0 0.0
    %890 = vmatprep.subr.mxu0 0.0
    %891 = vmatpush1.msra.mxu0 0.0
    %892 = vmatprep.subr.mxu0 0.0
    %893 = vmatpush1.msra.mxu0 0.0
    %894 = vmatprep.subr.mxu0 0.0
    %895 = vmatpush1.msra.mxu0 0.0
    %896 = vmatprep.subr.mxu0 0.0
    %897 = vmatpush1.msra.mxu0 %v382
    %898 = vmatprep.subr.mxu0 0.0
    %899 = vmatpush1.msra.mxu0 %v381
    %900 = vmatprep.subr.mxu0 0.0
    %901 = vmatpush1.msra.mxu0 %v380
    %902 = vmatprep.subr.mxu0 0.0
    %903 = vmatpush1.msra.mxu0 %v379
    %904 = vmatprep.subr.mxu0 0.0
    %905 = vmatpush2.msra.mxu0 0.0
    %906 = vmatprep.subr.mxu0 0.0
    %907 = vmatpush2.msra.mxu0 0.0
    %908 = vmatprep.subr.mxu0 0.0
    %909 = vmatpush2.msra.mxu0 0.0
    %910 = vmatprep.subr.mxu0 0.0
    %911 = vmatpush2.msra.mxu0 0.0
    %912 = vmatprep.subr.mxu0 0.0
    %913 = vmatpush2.msra.mxu0 0.0
    %914 = vmatprep.subr.mxu0 0.0
    %915 = vmatpush2.msra.mxu0 0.0
    %916 = vmatprep.subr.mxu0 0.0
    %917 = vmatpush2.msra.mxu0 0.0
    %918 = vmatprep.subr.mxu0 0.0
    %919 = vmatpush2.msra.mxu0 0.0
    %920 = vmatprep.subr.mxu0 0.0
    %921 = vmatpush2.msra.mxu0 0.0
    %922 = vmatprep.subr.mxu0 0.0
    %923 = vmatpush2.msra.mxu0 0.0
    %924 = vmatprep.subr.mxu0 0.0
    %925 = vmatpush2.msra.mxu0 0.0
    %926 = vmatprep.subr.mxu0 0.0
    %927 = vmatpush2.msra.mxu0 0.0
    %928 = vmatprep.subr.mxu0 0.0
    %929 = vmatpush2.msra.mxu0 0.0
    %930 = vmatprep.subr.mxu0 0.0
    %931 = vmatpush2.msra.mxu0 0.0
    %932 = vmatprep.subr.mxu0 0.0
    %933 = vmatpush2.msra.mxu0 0.0
    %934 = vmatprep.subr.mxu0 0.0
    %935 = vmatpush2.msra.mxu0 0.0
    %936 = vmatprep.mubr.f32.mxu0 0.0
    %937 = vmatmul.mubr.f32.gmra.mxu0 %v870
    %v938 = vpop.f32.mrf.mxu0
    %v939 = vadd.f32 0.0, %v938
    %v940 = vpop.f32.mrf.mxu0
    %941 = vdwg.mxu0
    %v942 = vadd.f32 %v869, %v939
    %v943 = vxor.u32 %v868, 2147483648
    %v944 = vmul.f32 %v943, 1.442695
    %v945 = vpow.pop %v944
    %v946 = vadd.f32 %v945, 1.0
    %v947 = vrcp.pop %v946
    %v948 = vmul.f32 1.0, %v947
    %v949 = vtanh.pop %v868
    %v950 = vxor.u32 %v942, 2147483648
    %v951 = vmul.f32 %v950, 1.442695
    %v952 = vpow.pop %v951
    %v953 = vadd.f32 %v952, 1.0
    %v954 = vrcp.pop %v953
    %v955 = vmul.f32 1.0, %v954
    %v956 = vtanh.pop %v942
    %v957 = vmul.f32 %v948, %v761
    %959 = vrot.lane.b32.xlu0 %v949, 64
    %v960 = vpop.permute.xlu0 %959
    %v962 = vmul.f32 %v948, %v960
    %964 = vrot.lane.b32.xlu0 %v962, 32
    %v965 = vpop.permute.xlu0 %964
    %v967 = vadd.f32 %v957, %v965
    %v968 = vmul.f32 %v955, %v772
    %970 = vrot.lane.b32.xlu0 %v956, 64
    %v971 = vpop.permute.xlu0 %970
    %v973 = vmul.f32 %v955, %v971
    %975 = vrot.lane.b32.xlu0 %v973, 32
    %v976 = vpop.permute.xlu0 %975
    %v978 = vadd.f32 %v968, %v976
    %v979 = vtanh.pop %v967
    %981 = vrot.lane.b32.xlu0 %v979, 64
    %v982 = vpop.permute.xlu0 %981
    %v984 = vmul.f32 %v948, %v982
    %v985 = vtanh.pop %v978
    %987 = vrot.lane.b32.xlu0 %v985, 64
    %v988 = vpop.permute.xlu0 %987
    %v990 = vmul.f32 %v955, %v988
    %992 = vrot.lane.b32.xlu0 %v984, 32
    %v993 = vpop.permute.xlu0 %992
    %995 = vst.msk [vmem:[#allocation5 + $0x2] sm:$0x1] %vm582, %v993
    %997 = vrot.lane.b32.xlu0 %v990, 32
    %v998 = vpop.permute.xlu0 %997
    %1000 = vst.msk [vmem:[#allocation6 + $0x2] sm:$0x1] %vm582, %v998
    %v1001 = vld [vmem:[#allocation3 + $0x3] sm:$0x1]
    %v1002 = vsel %vm202, %v993, 0
    %1004 = vmatprep.subr.mxu0 0.0
    %1005 = vmatpush1.msra.mxu0 0.0
    %1006 = vmatprep.subr.mxu0 0.0
    %1007 = vmatpush1.msra.mxu0 0.0
    %1008 = vmatprep.subr.mxu0 0.0
    %1009 = vmatpush1.msra.mxu0 0.0
    %1010 = vmatprep.subr.mxu0 0.0
    %1011 = vmatpush1.msra.mxu0 0.0
    %1012 = vmatprep.subr.mxu0 0.0
    %1013 = vmatpush1.msra.mxu0 0.0
    %1014 = vmatprep.subr.mxu0 0.0
    %1015 = vmatpush1.msra.mxu0 0.0
    %1016 = vmatprep.subr.mxu0 0.0
    %1017 = vmatpush1.msra.mxu0 0.0
    %1018 = vmatprep.subr.mxu0 0.0
    %1019 = vmatpush1.msra.mxu0 0.0
    %1020 = vmatprep.subr.mxu0 0.0
    %1021 = vmatpush1.msra.mxu0 0.0
    %1022 = vmatprep.subr.mxu0 0.0
    %1023 = vmatpush1.msra.mxu0 0.0
    %1024 = vmatprep.subr.mxu0 0.0
    %1025 = vmatpush1.msra.mxu0 0.0
    %1026 = vmatprep.subr.mxu0 0.0
    %1027 = vmatpush1.msra.mxu0 0.0
    %1028 = vmatprep.subr.mxu0 0.0
    %1029 = vmatpush1.msra.mxu0 %v377
    %1030 = vmatprep.subr.mxu0 0.0
    %1031 = vmatpush1.msra.mxu0 %v376
    %1032 = vmatprep.subr.mxu0 0.0
    %1033 = vmatpush1.msra.mxu0 %v375
    %1034 = vmatprep.subr.mxu0 0.0
    %1035 = vmatpush1.msra.mxu0 %v374
    %1036 = vmatprep.subr.mxu0 0.0
    %1037 = vmatpush2.msra.mxu0 0.0
    %1038 = vmatprep.subr.mxu0 0.0
    %1039 = vmatpush2.msra.mxu0 0.0
    %1040 = vmatprep.subr.mxu0 0.0
    %1041 = vmatpush2.msra.mxu0 0.0
    %1042 = vmatprep.subr.mxu0 0.0
    %1043 = vmatpush2.msra.mxu0 0.0
    %1044 = vmatprep.subr.mxu0 0.0
    %1045 = vmatpush2.msra.mxu0 0.0
    %1046 = vmatprep.subr.mxu0 0.0
    %1047 = vmatpush2.msra.mxu0 0.0
    %1048 = vmatprep.subr.mxu0 0.0
    %1049 = vmatpush2.msra.mxu0 0.0
    %1050 = vmatprep.subr.mxu0 0.0
    %1051 = vmatpush2.msra.mxu0 0.0
    %1052 = vmatprep.subr.mxu0 0.0
    %1053 = vmatpush2.msra.mxu0 0.0
    %1054 = vmatprep.subr.mxu0 0.0
    %1055 = vmatpush2.msra.mxu0 0.0
    %1056 = vmatprep.subr.mxu0 0.0
    %1057 = vmatpush2.msra.mxu0 0.0
    %1058 = vmatprep.subr.mxu0 0.0
    %1059 = vmatpush2.msra.mxu0 0.0
    %1060 = vmatprep.subr.mxu0 0.0
    %1061 = vmatpush2.msra.mxu0 0.0
    %1062 = vmatprep.subr.mxu0 0.0
    %1063 = vmatpush2.msra.mxu0 0.0
    %1064 = vmatprep.subr.mxu0 0.0
    %1065 = vmatpush2.msra.mxu0 0.0
    %1066 = vmatprep.subr.mxu0 0.0
    %1067 = vmatpush2.msra.mxu0 0.0
    %1068 = vmatprep.mubr.f32.mxu0 0.0
    %1069 = vmatmul.mubr.f32.gmra.mxu0 %v1002
    %v1070 = vpop.f32.mrf.mxu0
    %v1071 = vadd.f32 0.0, %v1070
    %v1072 = vpop.f32.mrf.mxu0
    %1073 = vdwg.mxu0
    %v1074 = vadd.f32 %v1001, %v1071
    %v1075 = vld [vmem:[#allocation4 + $0x3] sm:$0x1]
    %v1076 = vsel %vm202, %v998, 0
    %1078 = vmatprep.subr.mxu0 0.0
    %1079 = vmatpush1.msra.mxu0 0.0
    %1080 = vmatprep.subr.mxu0 0.0
    %1081 = vmatpush1.msra.mxu0 0.0
    %1082 = vmatprep.subr.mxu0 0.0
    %1083 = vmatpush1.msra.mxu0 0.0
    %1084 = vmatprep.subr.mxu0 0.0
    %1085 = vmatpush1.msra.mxu0 0.0
    %1086 = vmatprep.subr.mxu0 0.0
    %1087 = vmatpush1.msra.mxu0 0.0
    %1088 = vmatprep.subr.mxu0 0.0
    %1089 = vmatpush1.msra.mxu0 0.0
    %1090 = vmatprep.subr.mxu0 0.0
    %1091 = vmatpush1.msra.mxu0 0.0
    %1092 = vmatprep.subr.mxu0 0.0
    %1093 = vmatpush1.msra.mxu0 0.0
    %1094 = vmatprep.subr.mxu0 0.0
    %1095 = vmatpush1.msra.mxu0 0.0
    %1096 = vmatprep.subr.mxu0 0.0
    %1097 = vmatpush1.msra.mxu0 0.0
    %1098 = vmatprep.subr.mxu0 0.0
    %1099 = vmatpush1.msra.mxu0 0.0
    %1100 = vmatprep.subr.mxu0 0.0
    %1101 = vmatpush1.msra.mxu0 0.0
    %1102 = vmatprep.subr.mxu0 0.0
    %1103 = vmatpush1.msra.mxu0 %v382
    %1104 = vmatprep.subr.mxu0 0.0
    %1105 = vmatpush1.msra.mxu0 %v381
    %1106 = vmatprep.subr.mxu0 0.0
    %1107 = vmatpush1.msra.mxu0 %v380
    %1108 = vmatprep.subr.mxu0 0.0
    %1109 = vmatpush1.msra.mxu0 %v379
    %1110 = vmatprep.subr.mxu0 0.0
    %1111 = vmatpush2.msra.mxu0 0.0
    %1112 = vmatprep.subr.mxu0 0.0
    %1113 = vmatpush2.msra.mxu0 0.0
    %1114 = vmatprep.subr.mxu0 0.0
    %1115 = vmatpush2.msra.mxu0 0.0
    %1116 = vmatprep.subr.mxu0 0.0
    %1117 = vmatpush2.msra.mxu0 0.0
    %1118 = vmatprep.subr.mxu0 0.0
    %1119 = vmatpush2.msra.mxu0 0.0
    %1120 = vmatprep.subr.mxu0 0.0
    %1121 = vmatpush2.msra.mxu0 0.0
    %1122 = vmatprep.subr.mxu0 0.0
    %1123 = vmatpush2.msra.mxu0 0.0
    %1124 = vmatprep.subr.mxu0 0.0
    %1125 = vmatpush2.msra.mxu0 0.0
    %1126 = vmatprep.subr.mxu0 0.0
    %1127 = vmatpush2.msra.mxu0 0.0
    %1128 = vmatprep.subr.mxu0 0.0
    %1129 = vmatpush2.msra.mxu0 0.0
    %1130 = vmatprep.subr.mxu0 0.0
    %1131 = vmatpush2.msra.mxu0 0.0
    %1132 = vmatprep.subr.mxu0 0.0
    %1133 = vmatpush2.msra.mxu0 0.0
    %1134 = vmatprep.subr.mxu0 0.0
    %1135 = vmatpush2.msra.mxu0 0.0
    %1136 = vmatprep.subr.mxu0 0.0
    %1137 = vmatpush2.msra.mxu0 0.0
    %1138 = vmatprep.subr.mxu0 0.0
    %1139 = vmatpush2.msra.mxu0 0.0
    %1140 = vmatprep.subr.mxu0 0.0
    %1141 = vmatpush2.msra.mxu0 0.0
    %1142 = vmatprep.mubr.f32.mxu0 0.0
    %1143 = vmatmul.mubr.f32.gmra.mxu0 %v1076
    %v1144 = vpop.f32.mrf.mxu0
    %v1145 = vadd.f32 0.0, %v1144
    %v1146 = vpop.f32.mrf.mxu0
    %1147 = vdwg.mxu0
    %v1148 = vadd.f32 %v1075, %v1145
    %v1149 = vxor.u32 %v1074, 2147483648
    %v1150 = vmul.f32 %v1149, 1.442695
    %v1151 = vpow.pop %v1150
    %v1152 = vadd.f32 %v1151, 1.0
    %v1153 = vrcp.pop %v1152
    %v1154 = vmul.f32 1.0, %v1153
    %v1155 = vtanh.pop %v1074
    %v1156 = vxor.u32 %v1148, 2147483648
    %v1157 = vmul.f32 %v1156, 1.442695
    %v1158 = vpow.pop %v1157
    %v1159 = vadd.f32 %v1158, 1.0
    %v1160 = vrcp.pop %v1159
    %v1161 = vmul.f32 1.0, %v1160
    %v1162 = vtanh.pop %v1148
    %v1163 = vmul.f32 %v1154, %v967
    %1165 = vrot.lane.b32.xlu0 %v1155, 64
    %v1166 = vpop.permute.xlu0 %1165
    %v1168 = vmul.f32 %v1154, %v1166
    %1170 = vrot.lane.b32.xlu0 %v1168, 32
    %v1171 = vpop.permute.xlu0 %1170
    %v1173 = vadd.f32 %v1163, %v1171
    %v1174 = vmul.f32 %v1161, %v978
    %1176 = vrot.lane.b32.xlu0 %v1162, 64
    %v1177 = vpop.permute.xlu0 %1176
    %v1179 = vmul.f32 %v1161, %v1177
    %1181 = vrot.lane.b32.xlu0 %v1179, 32
    %v1182 = vpop.permute.xlu0 %1181
    %v1184 = vadd.f32 %v1174, %v1182
    %v1185 = vtanh.pop %v1173
    %1187 = vrot.lane.b32.xlu0 %v1185, 64
    %v1188 = vpop.permute.xlu0 %1187
    %v1190 = vmul.f32 %v1154, %v1188
    %v1191 = vtanh.pop %v1184
    %1193 = vrot.lane.b32.xlu0 %v1191, 64
    %v1194 = vpop.permute.xlu0 %1193
    %v1196 = vmul.f32 %v1161, %v1194
    %1198 = vrot.lane.b32.xlu0 %v1190, 32
    %v1199 = vpop.permute.xlu0 %1198
    %1201 = vst.msk [vmem:[#allocation5 + $0x3] sm:$0x1] %vm582, %v1199
    %1203 = vrot.lane.b32.xlu0 %v1196, 32
    %v1204 = vpop.permute.xlu0 %1203
    %1206 = vst.msk [vmem:[#allocation6 + $0x3] sm:$0x1] %vm582, %v1204
    %v1207 = vld [vmem:[#allocation3 + $0x4] sm:$0x1]
    %v1208 = vsel %vm202, %v1199, 0
    %1210 = vmatprep.subr.mxu0 0.0
    %1211 = vmatpush1.msra.mxu0 0.0
    %1212 = vmatprep.subr.mxu0 0.0
    %1213 = vmatpush1.msra.mxu0 0.0
    %1214 = vmatprep.subr.mxu0 0.0
    %1215 = vmatpush1.msra.mxu0 0.0
    %1216 = vmatprep.subr.mxu0 0.0
    %1217 = vmatpush1.msra.mxu0 0.0
    %1218 = vmatprep.subr.mxu0 0.0
    %1219 = vmatpush1.msra.mxu0 0.0
    %1220 = vmatprep.subr.mxu0 0.0
    %1221 = vmatpush1.msra.mxu0 0.0
    %1222 = vmatprep.subr.mxu0 0.0
    %1223 = vmatpush1.msra.mxu0 0.0
    %1224 = vmatprep.subr.mxu0 0.0
    %1225 = vmatpush1.msra.mxu0 0.0
    %1226 = vmatprep.subr.mxu0 0.0
    %1227 = vmatpush1.msra.mxu0 0.0
    %1228 = vmatprep.subr.mxu0 0.0
    %1229 = vmatpush1.msra.mxu0 0.0
    %1230 = vmatprep.subr.mxu0 0.0
    %1231 = vmatpush1.msra.mxu0 0.0
    %1232 = vmatprep.subr.mxu0 0.0
    %1233 = vmatpush1.msra.mxu0 0.0
    %1234 = vmatprep.subr.mxu0 0.0
    %1235 = vmatpush1.msra.mxu0 %v377
    %1236 = vmatprep.subr.mxu0 0.0
    %1237 = vmatpush1.msra.mxu0 %v376
    %1238 = vmatprep.subr.mxu0 0.0
    %1239 = vmatpush1.msra.mxu0 %v375
    %1240 = vmatprep.subr.mxu0 0.0
    %1241 = vmatpush1.msra.mxu0 %v374
    %1242 = vmatprep.subr.mxu0 0.0
    %1243 = vmatpush2.msra.mxu0 0.0
    %1244 = vmatprep.subr.mxu0 0.0
    %1245 = vmatpush2.msra.mxu0 0.0
    %1246 = vmatprep.subr.mxu0 0.0
    %1247 = vmatpush2.msra.mxu0 0.0
    %1248 = vmatprep.subr.mxu0 0.0
    %1249 = vmatpush2.msra.mxu0 0.0
    %1250 = vmatprep.subr.mxu0 0.0
    %1251 = vmatpush2.msra.mxu0 0.0
    %1252 = vmatprep.subr.mxu0 0.0
    %1253 = vmatpush2.msra.mxu0 0.0
    %1254 = vmatprep.subr.mxu0 0.0
    %1255 = vmatpush2.msra.mxu0 0.0
    %1256 = vmatprep.subr.mxu0 0.0
    %1257 = vmatpush2.msra.mxu0 0.0
    %1258 = vmatprep.subr.mxu0 0.0
    %1259 = vmatpush2.msra.mxu0 0.0
    %1260 = vmatprep.subr.mxu0 0.0
    %1261 = vmatpush2.msra.mxu0 0.0
    %1262 = vmatprep.subr.mxu0 0.0
    %1263 = vmatpush2.msra.mxu0 0.0
    %1264 = vmatprep.subr.mxu0 0.0
    %1265 = vmatpush2.msra.mxu0 0.0
    %1266 = vmatprep.subr.mxu0 0.0
    %1267 = vmatpush2.msra.mxu0 0.0
    %1268 = vmatprep.subr.mxu0 0.0
    %1269 = vmatpush2.msra.mxu0 0.0
    %1270 = vmatprep.subr.mxu0 0.0
    %1271 = vmatpush2.msra.mxu0 0.0
    %1272 = vmatprep.subr.mxu0 0.0
    %1273 = vmatpush2.msra.mxu0 0.0
    %1274 = vmatprep.mubr.f32.mxu0 0.0
    %1275 = vmatmul.mubr.f32.gmra.mxu0 %v1208
    %v1276 = vpop.f32.mrf.mxu0
    %v1277 = vadd.f32 0.0, %v1276
    %v1278 = vpop.f32.mrf.mxu0
    %1279 = vdwg.mxu0
    %v1280 = vadd.f32 %v1207, %v1277
    %v1281 = vld [vmem:[#allocation4 + $0x4] sm:$0x1]
    %v1282 = vsel %vm202, %v1204, 0
    %1284 = vmatprep.subr.mxu0 0.0
    %1285 = vmatpush1.msra.mxu0 0.0
    %1286 = vmatprep.subr.mxu0 0.0
    %1287 = vmatpush1.msra.mxu0 0.0
    %1288 = vmatprep.subr.mxu0 0.0
    %1289 = vmatpush1.msra.mxu0 0.0
    %1290 = vmatprep.subr.mxu0 0.0
    %1291 = vmatpush1.msra.mxu0 0.0
    %1292 = vmatprep.subr.mxu0 0.0
    %1293 = vmatpush1.msra.mxu0 0.0
    %1294 = vmatprep.subr.mxu0 0.0
    %1295 = vmatpush1.msra.mxu0 0.0
    %1296 = vmatprep.subr.mxu0 0.0
    %1297 = vmatpush1.msra.mxu0 0.0
    %1298 = vmatprep.subr.mxu0 0.0
    %1299 = vmatpush1.msra.mxu0 0.0
    %1300 = vmatprep.subr.mxu0 0.0
    %1301 = vmatpush1.msra.mxu0 0.0
    %1302 = vmatprep.subr.mxu0 0.0
    %1303 = vmatpush1.msra.mxu0 0.0
    %1304 = vmatprep.subr.mxu0 0.0
    %1305 = vmatpush1.msra.mxu0 0.0
    %1306 = vmatprep.subr.mxu0 0.0
    %1307 = vmatpush1.msra.mxu0 0.0
    %1308 = vmatprep.subr.mxu0 0.0
    %1309 = vmatpush1.msra.mxu0 %v382
    %1310 = vmatprep.subr.mxu0 0.0
    %1311 = vmatpush1.msra.mxu0 %v381
    %1312 = vmatprep.subr.mxu0 0.0
    %1313 = vmatpush1.msra.mxu0 %v380
    %1314 = vmatprep.subr.mxu0 0.0
    %1315 = vmatpush1.msra.mxu0 %v379
    %1316 = vmatprep.subr.mxu0 0.0
    %1317 = vmatpush2.msra.mxu0 0.0
    %1318 = vmatprep.subr.mxu0 0.0
    %1319 = vmatpush2.msra.mxu0 0.0
    %1320 = vmatprep.subr.mxu0 0.0
    %1321 = vmatpush2.msra.mxu0 0.0
    %1322 = vmatprep.subr.mxu0 0.0
    %1323 = vmatpush2.msra.mxu0 0.0
    %1324 = vmatprep.subr.mxu0 0.0
    %1325 = vmatpush2.msra.mxu0 0.0
    %1326 = vmatprep.subr.mxu0 0.0
    %1327 = vmatpush2.msra.mxu0 0.0
    %1328 = vmatprep.subr.mxu0 0.0
    %1329 = vmatpush2.msra.mxu0 0.0
    %1330 = vmatprep.subr.mxu0 0.0
    %1331 = vmatpush2.msra.mxu0 0.0
    %1332 = vmatprep.subr.mxu0 0.0
    %1333 = vmatpush2.msra.mxu0 0.0
    %1334 = vmatprep.subr.mxu0 0.0
    %1335 = vmatpush2.msra.mxu0 0.0
    %1336 = vmatprep.subr.mxu0 0.0
    %1337 = vmatpush2.msra.mxu0 0.0
    %1338 = vmatprep.subr.mxu0 0.0
    %1339 = vmatpush2.msra.mxu0 0.0
    %1340 = vmatprep.subr.mxu0 0.0
    %1341 = vmatpush2.msra.mxu0 0.0
    %1342 = vmatprep.subr.mxu0 0.0
    %1343 = vmatpush2.msra.mxu0 0.0
    %1344 = vmatprep.subr.mxu0 0.0
    %1345 = vmatpush2.msra.mxu0 0.0
    %1346 = vmatprep.subr.mxu0 0.0
    %1347 = vmatpush2.msra.mxu0 0.0
    %1348 = vmatprep.mubr.f32.mxu0 0.0
    %1349 = vmatmul.mubr.f32.gmra.mxu0 %v1282
    %v1350 = vpop.f32.mrf.mxu0
    %v1351 = vadd.f32 0.0, %v1350
    %v1352 = vpop.f32.mrf.mxu0
    %1353 = vdwg.mxu0
    %v1354 = vadd.f32 %v1281, %v1351
    %v1355 = vxor.u32 %v1280, 2147483648
    %v1356 = vmul.f32 %v1355, 1.442695
    %v1357 = vpow.pop %v1356
    %v1358 = vadd.f32 %v1357, 1.0
    %v1359 = vrcp.pop %v1358
    %v1360 = vmul.f32 1.0, %v1359
    %v1361 = vtanh.pop %v1280
    %v1362 = vxor.u32 %v1354, 2147483648
    %v1363 = vmul.f32 %v1362, 1.442695
    %v1364 = vpow.pop %v1363
    %v1365 = vadd.f32 %v1364, 1.0
    %v1366 = vrcp.pop %v1365
    %v1367 = vmul.f32 1.0, %v1366
    %v1368 = vtanh.pop %v1354
    %v1369 = vmul.f32 %v1360, %v1173
    %1371 = vrot.lane.b32.xlu0 %v1361, 64
    %v1372 = vpop.permute.xlu0 %1371
    %v1374 = vmul.f32 %v1360, %v1372
    %1376 = vrot.lane.b32.xlu0 %v1374, 32
    %v1377 = vpop.permute.xlu0 %1376
    %v1379 = vadd.f32 %v1369, %v1377
    %v1380 = vmul.f32 %v1367, %v1184
    %1382 = vrot.lane.b32.xlu0 %v1368, 64
    %v1383 = vpop.permute.xlu0 %1382
    %v1385 = vmul.f32 %v1367, %v1383
    %1387 = vrot.lane.b32.xlu0 %v1385, 32
    %v1388 = vpop.permute.xlu0 %1387
    %v1390 = vadd.f32 %v1380, %v1388
    %v1391 = vtanh.pop %v1379
    %1393 = vrot.lane.b32.xlu0 %v1391, 64
    %v1394 = vpop.permute.xlu0 %1393
    %v1396 = vmul.f32 %v1360, %v1394
    %v1397 = vtanh.pop %v1390
    %1399 = vrot.lane.b32.xlu0 %v1397, 64
    %v1400 = vpop.permute.xlu0 %1399
    %v1402 = vmul.f32 %v1367, %v1400
    %1404 = vrot.lane.b32.xlu0 %v1396, 32
    %v1405 = vpop.permute.xlu0 %1404
    %1407 = vst.msk [vmem:[#allocation5 + $0x4] sm:$0x1] %vm582, %v1405
    %1409 = vrot.lane.b32.xlu0 %v1402, 32
    %v1410 = vpop.permute.xlu0 %1409
    %1412 = vst.msk [vmem:[#allocation6 + $0x4] sm:$0x1] %vm582, %v1410
    %v1413 = vld [vmem:[#allocation3 + $0x5] sm:$0x1]
    %v1414 = vsel %vm202, %v1405, 0
    %1416 = vmatprep.subr.mxu0 0.0
    %1417 = vmatpush1.msra.mxu0 0.0
    %1418 = vmatprep.subr.mxu0 0.0
    %1419 = vmatpush1.msra.mxu0 0.0
    %1420 = vmatprep.subr.mxu0 0.0
    %1421 = vmatpush1.msra.mxu0 0.0
    %1422 = vmatprep.subr.mxu0 0.0
    %1423 = vmatpush1.msra.mxu0 0.0
    %1424 = vmatprep.subr.mxu0 0.0
    %1425 = vmatpush1.msra.mxu0 0.0
    %1426 = vmatprep.subr.mxu0 0.0
    %1427 = vmatpush1.msra.mxu0 0.0
    %1428 = vmatprep.subr.mxu0 0.0
    %1429 = vmatpush1.msra.mxu0 0.0
    %1430 = vmatprep.subr.mxu0 0.0
    %1431 = vmatpush1.msra.mxu0 0.0
    %1432 = vmatprep.subr.mxu0 0.0
    %1433 = vmatpush1.msra.mxu0 0.0
    %1434 = vmatprep.subr.mxu0 0.0
    %1435 = vmatpush1.msra.mxu0 0.0
    %1436 = vmatprep.subr.mxu0 0.0
    %1437 = vmatpush1.msra.mxu0 0.0
    %1438 = vmatprep.subr.mxu0 0.0
    %1439 = vmatpush1.msra.mxu0 0.0
    %1440 = vmatprep.subr.mxu0 0.0
    %1441 = vmatpush1.msra.mxu0 %v377
    %1442 = vmatprep.subr.mxu0 0.0
    %1443 = vmatpush1.msra.mxu0 %v376
    %1444 = vmatprep.subr.mxu0 0.0
    %1445 = vmatpush1.msra.mxu0 %v375
    %1446 = vmatprep.subr.mxu0 0.0
    %1447 = vmatpush1.msra.mxu0 %v374
    %1448 = vmatprep.subr.mxu0 0.0
    %1449 = vmatpush2.msra.mxu0 0.0
    %1450 = vmatprep.subr.mxu0 0.0
    %1451 = vmatpush2.msra.mxu0 0.0
    %1452 = vmatprep.subr.mxu0 0.0
    %1453 = vmatpush2.msra.mxu0 0.0
    %1454 = vmatprep.subr.mxu0 0.0
    %1455 = vmatpush2.msra.mxu0 0.0
    %1456 = vmatprep.subr.mxu0 0.0
    %1457 = vmatpush2.msra.mxu0 0.0
    %1458 = vmatprep.subr.mxu0 0.0
    %1459 = vmatpush2.msra.mxu0 0.0
    %1460 = vmatprep.subr.mxu0 0.0
    %1461 = vmatpush2.msra.mxu0 0.0
    %1462 = vmatprep.subr.mxu0 0.0
    %1463 = vmatpush2.msra.mxu0 0.0
    %1464 = vmatprep.subr.mxu0 0.0
    %1465 = vmatpush2.msra.mxu0 0.0
    %1466 = vmatprep.subr.mxu0 0.0
    %1467 = vmatpush2.msra.mxu0 0.0
    %1468 = vmatprep.subr.mxu0 0.0
    %1469 = vmatpush2.msra.mxu0 0.0
    %1470 = vmatprep.subr.mxu0 0.0
    %1471 = vmatpush2.msra.mxu0 0.0
    %1472 = vmatprep.subr.mxu0 0.0
    %1473 = vmatpush2.msra.mxu0 0.0
    %1474 = vmatprep.subr.mxu0 0.0
    %1475 = vmatpush2.msra.mxu0 0.0
    %1476 = vmatprep.subr.mxu0 0.0
    %1477 = vmatpush2.msra.mxu0 0.0
    %1478 = vmatprep.subr.mxu0 0.0
    %1479 = vmatpush2.msra.mxu0 0.0
    %1480 = vmatprep.mubr.f32.mxu0 0.0
    %1481 = vmatmul.mubr.f32.gmra.mxu0 %v1414
    %v1482 = vpop.f32.mrf.mxu0
    %v1483 = vadd.f32 0.0, %v1482
    %v1484 = vpop.f32.mrf.mxu0
    %1485 = vdwg.mxu0
    %v1486 = vadd.f32 %v1413, %v1483
    %v1487 = vld [vmem:[#allocation4 + $0x5] sm:$0x1]
    %v1488 = vsel %vm202, %v1410, 0
    %1490 = vmatprep.subr.mxu0 0.0
    %1491 = vmatpush1.msra.mxu0 0.0
    %1492 = vmatprep.subr.mxu0 0.0
    %1493 = vmatpush1.msra.mxu0 0.0
    %1494 = vmatprep.subr.mxu0 0.0
    %1495 = vmatpush1.msra.mxu0 0.0
    %1496 = vmatprep.subr.mxu0 0.0
    %1497 = vmatpush1.msra.mxu0 0.0
    %1498 = vmatprep.subr.mxu0 0.0
    %1499 = vmatpush1.msra.mxu0 0.0
    %1500 = vmatprep.subr.mxu0 0.0
    %1501 = vmatpush1.msra.mxu0 0.0
    %1502 = vmatprep.subr.mxu0 0.0
    %1503 = vmatpush1.msra.mxu0 0.0
    %1504 = vmatprep.subr.mxu0 0.0
    %1505 = vmatpush1.msra.mxu0 0.0
    %1506 = vmatprep.subr.mxu0 0.0
    %1507 = vmatpush1.msra.mxu0 0.0
    %1508 = vmatprep.subr.mxu0 0.0
    %1509 = vmatpush1.msra.mxu0 0.0
    %1510 = vmatprep.subr.mxu0 0.0
    %1511 = vmatpush1.msra.mxu0 0.0
    %1512 = vmatprep.subr.mxu0 0.0
    %1513 = vmatpush1.msra.mxu0 0.0
    %1514 = vmatprep.subr.mxu0 0.0
    %1515 = vmatpush1.msra.mxu0 %v382
    %1516 = vmatprep.subr.mxu0 0.0
    %1517 = vmatpush1.msra.mxu0 %v381
    %1518 = vmatprep.subr.mxu0 0.0
    %1519 = vmatpush1.msra.mxu0 %v380
    %1520 = vmatprep.subr.mxu0 0.0
    %1521 = vmatpush1.msra.mxu0 %v379
    %1522 = vmatprep.subr.mxu0 0.0
    %1523 = vmatpush2.msra.mxu0 0.0
    %1524 = vmatprep.subr.mxu0 0.0
    %1525 = vmatpush2.msra.mxu0 0.0
    %1526 = vmatprep.subr.mxu0 0.0
    %1527 = vmatpush2.msra.mxu0 0.0
    %1528 = vmatprep.subr.mxu0 0.0
    %1529 = vmatpush2.msra.mxu0 0.0
    %1530 = vmatprep.subr.mxu0 0.0
    %1531 = vmatpush2.msra.mxu0 0.0
    %1532 = vmatprep.subr.mxu0 0.0
    %1533 = vmatpush2.msra.mxu0 0.0
    %1534 = vmatprep.subr.mxu0 0.0
    %1535 = vmatpush2.msra.mxu0 0.0
    %1536 = vmatprep.subr.mxu0 0.0
    %1537 = vmatpush2.msra.mxu0 0.0
    %1538 = vmatprep.subr.mxu0 0.0
    %1539 = vmatpush2.msra.mxu0 0.0
    %1540 = vmatprep.subr.mxu0 0.0
    %1541 = vmatpush2.msra.mxu0 0.0
    %1542 = vmatprep.subr.mxu0 0.0
    %1543 = vmatpush2.msra.mxu0 0.0
    %1544 = vmatprep.subr.mxu0 0.0
    %1545 = vmatpush2.msra.mxu0 0.0
    %1546 = vmatprep.subr.mxu0 0.0
    %1547 = vmatpush2.msra.mxu0 0.0
    %1548 = vmatprep.subr.mxu0 0.0
    %1549 = vmatpush2.msra.mxu0 0.0
    %1550 = vmatprep.subr.mxu0 0.0
    %1551 = vmatpush2.msra.mxu0 0.0
    %1552 = vmatprep.subr.mxu0 0.0
    %1553 = vmatpush2.msra.mxu0 0.0
    %1554 = vmatprep.mubr.f32.mxu0 0.0
    %1555 = vmatmul.mubr.f32.gmra.mxu0 %v1488
    %v1556 = vpop.f32.mrf.mxu0
    %v1557 = vadd.f32 0.0, %v1556
    %v1558 = vpop.f32.mrf.mxu0
    %1559 = vdwg.mxu0
    %v1560 = vadd.f32 %v1487, %v1557
    %v1561 = vxor.u32 %v1486, 2147483648
    %v1562 = vmul.f32 %v1561, 1.442695
    %v1563 = vpow.pop %v1562
    %v1564 = vadd.f32 %v1563, 1.0
    %v1565 = vrcp.pop %v1564
    %v1566 = vmul.f32 1.0, %v1565
    %v1567 = vtanh.pop %v1486
    %v1568 = vxor.u32 %v1560, 2147483648
    %v1569 = vmul.f32 %v1568, 1.442695
    %v1570 = vpow.pop %v1569
    %v1571 = vadd.f32 %v1570, 1.0
    %v1572 = vrcp.pop %v1571
    %v1573 = vmul.f32 1.0, %v1572
    %v1574 = vtanh.pop %v1560
    %v1575 = vmul.f32 %v1566, %v1379
    %1577 = vrot.lane.b32.xlu0 %v1567, 64
    %v1578 = vpop.permute.xlu0 %1577
    %v1580 = vmul.f32 %v1566, %v1578
    %1582 = vrot.lane.b32.xlu0 %v1580, 32
    %v1583 = vpop.permute.xlu0 %1582
    %v1585 = vadd.f32 %v1575, %v1583
    %v1586 = vmul.f32 %v1573, %v1390
    %1588 = vrot.lane.b32.xlu0 %v1574, 64
    %v1589 = vpop.permute.xlu0 %1588
    %v1591 = vmul.f32 %v1573, %v1589
    %1593 = vrot.lane.b32.xlu0 %v1591, 32
    %v1594 = vpop.permute.xlu0 %1593
    %v1596 = vadd.f32 %v1586, %v1594
    %v1597 = vtanh.pop %v1585
    %1599 = vrot.lane.b32.xlu0 %v1597, 64
    %v1600 = vpop.permute.xlu0 %1599
    %v1602 = vmul.f32 %v1566, %v1600
    %v1603 = vtanh.pop %v1596
    %1605 = vrot.lane.b32.xlu0 %v1603, 64
    %v1606 = vpop.permute.xlu0 %1605
    %v1608 = vmul.f32 %v1573, %v1606
    %1610 = vrot.lane.b32.xlu0 %v1602, 32
    %v1611 = vpop.permute.xlu0 %1610
    %1613 = vst.msk [vmem:[#allocation5 + $0x5] sm:$0x1] %vm582, %v1611
    %1615 = vrot.lane.b32.xlu0 %v1608, 32
    %v1616 = vpop.permute.xlu0 %1615
    %1618 = vst.msk [vmem:[#allocation6 + $0x5] sm:$0x1] %vm582, %v1616
    %v1619 = vld [vmem:[#allocation3 + $0x6] sm:$0x1]
    %v1620 = vsel %vm202, %v1611, 0
    %1622 = vmatprep.subr.mxu0 0.0
    %1623 = vmatpush1.msra.mxu0 0.0
    %1624 = vmatprep.subr.mxu0 0.0
    %1625 = vmatpush1.msra.mxu0 0.0
    %1626 = vmatprep.subr.mxu0 0.0
    %1627 = vmatpush1.msra.mxu0 0.0
    %1628 = vmatprep.subr.mxu0 0.0
    %1629 = vmatpush1.msra.mxu0 0.0
    %1630 = vmatprep.subr.mxu0 0.0
    %1631 = vmatpush1.msra.mxu0 0.0
    %1632 = vmatprep.subr.mxu0 0.0
    %1633 = vmatpush1.msra.mxu0 0.0
    %1634 = vmatprep.subr.mxu0 0.0
    %1635 = vmatpush1.msra.mxu0 0.0
    %1636 = vmatprep.subr.mxu0 0.0
    %1637 = vmatpush1.msra.mxu0 0.0
    %1638 = vmatprep.subr.mxu0 0.0
    %1639 = vmatpush1.msra.mxu0 0.0
    %1640 = vmatprep.subr.mxu0 0.0
    %1641 = vmatpush1.msra.mxu0 0.0
    %1642 = vmatprep.subr.mxu0 0.0
    %1643 = vmatpush1.msra.mxu0 0.0
    %1644 = vmatprep.subr.mxu0 0.0
    %1645 = vmatpush1.msra.mxu0 0.0
    %1646 = vmatprep.subr.mxu0 0.0
    %1647 = vmatpush1.msra.mxu0 %v377
    %1648 = vmatprep.subr.mxu0 0.0
    %1649 = vmatpush1.msra.mxu0 %v376
    %1650 = vmatprep.subr.mxu0 0.0
    %1651 = vmatpush1.msra.mxu0 %v375
    %1652 = vmatprep.subr.mxu0 0.0
    %1653 = vmatpush1.msra.mxu0 %v374
    %1654 = vmatprep.subr.mxu0 0.0
    %1655 = vmatpush2.msra.mxu0 0.0
    %1656 = vmatprep.subr.mxu0 0.0
    %1657 = vmatpush2.msra.mxu0 0.0
    %1658 = vmatprep.subr.mxu0 0.0
    %1659 = vmatpush2.msra.mxu0 0.0
    %1660 = vmatprep.subr.mxu0 0.0
    %1661 = vmatpush2.msra.mxu0 0.0
    %1662 = vmatprep.subr.mxu0 0.0
    %1663 = vmatpush2.msra.mxu0 0.0
    %1664 = vmatprep.subr.mxu0 0.0
    %1665 = vmatpush2.msra.mxu0 0.0
    %1666 = vmatprep.subr.mxu0 0.0
    %1667 = vmatpush2.msra.mxu0 0.0
    %1668 = vmatprep.subr.mxu0 0.0
    %1669 = vmatpush2.msra.mxu0 0.0
    %1670 = vmatprep.subr.mxu0 0.0
    %1671 = vmatpush2.msra.mxu0 0.0
    %1672 = vmatprep.subr.mxu0 0.0
    %1673 = vmatpush2.msra.mxu0 0.0
    %1674 = vmatprep.subr.mxu0 0.0
    %1675 = vmatpush2.msra.mxu0 0.0
    %1676 = vmatprep.subr.mxu0 0.0
    %1677 = vmatpush2.msra.mxu0 0.0
    %1678 = vmatprep.subr.mxu0 0.0
    %1679 = vmatpush2.msra.mxu0 0.0
    %1680 = vmatprep.subr.mxu0 0.0
    %1681 = vmatpush2.msra.mxu0 0.0
    %1682 = vmatprep.subr.mxu0 0.0
    %1683 = vmatpush2.msra.mxu0 0.0
    %1684 = vmatprep.subr.mxu0 0.0
    %1685 = vmatpush2.msra.mxu0 0.0
    %1686 = vmatprep.mubr.f32.mxu0 0.0
    %1687 = vmatmul.mubr.f32.gmra.mxu0 %v1620
    %v1688 = vpop.f32.mrf.mxu0
    %v1689 = vadd.f32 0.0, %v1688
    %v1690 = vpop.f32.mrf.mxu0
    %1691 = vdwg.mxu0
    %v1692 = vadd.f32 %v1619, %v1689
    %v1693 = vld [vmem:[#allocation4 + $0x6] sm:$0x1]
    %v1694 = vsel %vm202, %v1616, 0
    %1696 = vmatprep.subr.mxu0 0.0
    %1697 = vmatpush1.msra.mxu0 0.0
    %1698 = vmatprep.subr.mxu0 0.0
    %1699 = vmatpush1.msra.mxu0 0.0
    %1700 = vmatprep.subr.mxu0 0.0
    %1701 = vmatpush1.msra.mxu0 0.0
    %1702 = vmatprep.subr.mxu0 0.0
    %1703 = vmatpush1.msra.mxu0 0.0
    %1704 = vmatprep.subr.mxu0 0.0
    %1705 = vmatpush1.msra.mxu0 0.0
    %1706 = vmatprep.subr.mxu0 0.0
    %1707 = vmatpush1.msra.mxu0 0.0
    %1708 = vmatprep.subr.mxu0 0.0
    %1709 = vmatpush1.msra.mxu0 0.0
    %1710 = vmatprep.subr.mxu0 0.0
    %1711 = vmatpush1.msra.mxu0 0.0
    %1712 = vmatprep.subr.mxu0 0.0
    %1713 = vmatpush1.msra.mxu0 0.0
    %1714 = vmatprep.subr.mxu0 0.0
    %1715 = vmatpush1.msra.mxu0 0.0
    %1716 = vmatprep.subr.mxu0 0.0
    %1717 = vmatpush1.msra.mxu0 0.0
    %1718 = vmatprep.subr.mxu0 0.0
    %1719 = vmatpush1.msra.mxu0 0.0
    %1720 = vmatprep.subr.mxu0 0.0
    %1721 = vmatpush1.msra.mxu0 %v382
    %1722 = vmatprep.subr.mxu0 0.0
    %1723 = vmatpush1.msra.mxu0 %v381
    %1724 = vmatprep.subr.mxu0 0.0
    %1725 = vmatpush1.msra.mxu0 %v380
    %1726 = vmatprep.subr.mxu0 0.0
    %1727 = vmatpush1.msra.mxu0 %v379
    %1728 = vmatprep.subr.mxu0 0.0
    %1729 = vmatpush2.msra.mxu0 0.0
    %1730 = vmatprep.subr.mxu0 0.0
    %1731 = vmatpush2.msra.mxu0 0.0
    %1732 = vmatprep.subr.mxu0 0.0
    %1733 = vmatpush2.msra.mxu0 0.0
    %1734 = vmatprep.subr.mxu0 0.0
    %1735 = vmatpush2.msra.mxu0 0.0
    %1736 = vmatprep.subr.mxu0 0.0
    %1737 = vmatpush2.msra.mxu0 0.0
    %1738 = vmatprep.subr.mxu0 0.0
    %1739 = vmatpush2.msra.mxu0 0.0
    %1740 = vmatprep.subr.mxu0 0.0
    %1741 = vmatpush2.msra.mxu0 0.0
    %1742 = vmatprep.subr.mxu0 0.0
    %1743 = vmatpush2.msra.mxu0 0.0
    %1744 = vmatprep.subr.mxu0 0.0
    %1745 = vmatpush2.msra.mxu0 0.0
    %1746 = vmatprep.subr.mxu0 0.0
    %1747 = vmatpush2.msra.mxu0 0.0
    %1748 = vmatprep.subr.mxu0 0.0
    %1749 = vmatpush2.msra.mxu0 0.0
    %1750 = vmatprep.subr.mxu0 0.0
    %1751 = vmatpush2.msra.mxu0 0.0
    %1752 = vmatprep.subr.mxu0 0.0
    %1753 = vmatpush2.msra.mxu0 0.0
    %1754 = vmatprep.subr.mxu0 0.0
    %1755 = vmatpush2.msra.mxu0 0.0
    %1756 = vmatprep.subr.mxu0 0.0
    %1757 = vmatpush2.msra.mxu0 0.0
    %1758 = vmatprep.subr.mxu0 0.0
    %1759 = vmatpush2.msra.mxu0 0.0
    %1760 = vmatprep.mubr.f32.mxu0 0.0
    %1761 = vmatmul.mubr.f32.gmra.mxu0 %v1694
    %v1762 = vpop.f32.mrf.mxu0
    %v1763 = vadd.f32 0.0, %v1762
    %v1764 = vpop.f32.mrf.mxu0
    %1765 = vdwg.mxu0
    %v1766 = vadd.f32 %v1693, %v1763
    %v1767 = vxor.u32 %v1692, 2147483648
    %v1768 = vmul.f32 %v1767, 1.442695
    %v1769 = vpow.pop %v1768
    %v1770 = vadd.f32 %v1769, 1.0
    %v1771 = vrcp.pop %v1770
    %v1772 = vmul.f32 1.0, %v1771
    %v1773 = vtanh.pop %v1692
    %v1774 = vxor.u32 %v1766, 2147483648
    %v1775 = vmul.f32 %v1774, 1.442695
    %v1776 = vpow.pop %v1775
    %v1777 = vadd.f32 %v1776, 1.0
    %v1778 = vrcp.pop %v1777
    %v1779 = vmul.f32 1.0, %v1778
    %v1780 = vtanh.pop %v1766
    %v1781 = vmul.f32 %v1772, %v1585
    %1783 = vrot.lane.b32.xlu0 %v1773, 64
    %v1784 = vpop.permute.xlu0 %1783
    %v1786 = vmul.f32 %v1772, %v1784
    %1788 = vrot.lane.b32.xlu0 %v1786, 32
    %v1789 = vpop.permute.xlu0 %1788
    %v1791 = vadd.f32 %v1781, %v1789
    %v1792 = vmul.f32 %v1779, %v1596
    %1794 = vrot.lane.b32.xlu0 %v1780, 64
    %v1795 = vpop.permute.xlu0 %1794
    %v1797 = vmul.f32 %v1779, %v1795
    %1799 = vrot.lane.b32.xlu0 %v1797, 32
    %v1800 = vpop.permute.xlu0 %1799
    %v1802 = vadd.f32 %v1792, %v1800
    %v1803 = vtanh.pop %v1791
    %1805 = vrot.lane.b32.xlu0 %v1803, 64
    %v1806 = vpop.permute.xlu0 %1805
    %v1808 = vmul.f32 %v1772, %v1806
    %v1809 = vtanh.pop %v1802
    %1811 = vrot.lane.b32.xlu0 %v1809, 64
    %v1812 = vpop.permute.xlu0 %1811
    %v1814 = vmul.f32 %v1779, %v1812
    %1816 = vrot.lane.b32.xlu0 %v1808, 32
    %v1817 = vpop.permute.xlu0 %1816
    %1819 = vst.msk [vmem:[#allocation5 + $0x6] sm:$0x1] %vm582, %v1817
    %1821 = vrot.lane.b32.xlu0 %v1814, 32
    %v1822 = vpop.permute.xlu0 %1821
    %1824 = vst.msk [vmem:[#allocation6 + $0x6] sm:$0x1] %vm582, %v1822
    %v1825 = vld [vmem:[#allocation3 + $0x7] sm:$0x1]
    %v1826 = vsel %vm202, %v1817, 0
    %1828 = vmatprep.subr.mxu0 0.0
    %1829 = vmatpush1.msra.mxu0 0.0
    %1830 = vmatprep.subr.mxu0 0.0
    %1831 = vmatpush1.msra.mxu0 0.0
    %1832 = vmatprep.subr.mxu0 0.0
    %1833 = vmatpush1.msra.mxu0 0.0
    %1834 = vmatprep.subr.mxu0 0.0
    %1835 = vmatpush1.msra.mxu0 0.0
    %1836 = vmatprep.subr.mxu0 0.0
    %1837 = vmatpush1.msra.mxu0 0.0
    %1838 = vmatprep.subr.mxu0 0.0
    %1839 = vmatpush1.msra.mxu0 0.0
    %1840 = vmatprep.subr.mxu0 0.0
    %1841 = vmatpush1.msra.mxu0 0.0
    %1842 = vmatprep.subr.mxu0 0.0
    %1843 = vmatpush1.msra.mxu0 0.0
    %1844 = vmatprep.subr.mxu0 0.0
    %1845 = vmatpush1.msra.mxu0 0.0
    %1846 = vmatprep.subr.mxu0 0.0
    %1847 = vmatpush1.msra.mxu0 0.0
    %1848 = vmatprep.subr.mxu0 0.0
    %1849 = vmatpush1.msra.mxu0 0.0
    %1850 = vmatprep.subr.mxu0 0.0
    %1851 = vmatpush1.msra.mxu0 0.0
    %1852 = vmatprep.subr.mxu0 0.0
    %1853 = vmatpush1.msra.mxu0 %v377
    %1854 = vmatprep.subr.mxu0 0.0
    %1855 = vmatpush1.msra.mxu0 %v376
    %1856 = vmatprep.subr.mxu0 0.0
    %1857 = vmatpush1.msra.mxu0 %v375
    %1858 = vmatprep.subr.mxu0 0.0
    %1859 = vmatpush1.msra.mxu0 %v374
    %1860 = vmatprep.subr.mxu0 0.0
    %1861 = vmatpush2.msra.mxu0 0.0
    %1862 = vmatprep.subr.mxu0 0.0
    %1863 = vmatpush2.msra.mxu0 0.0
    %1864 = vmatprep.subr.mxu0 0.0
    %1865 = vmatpush2.msra.mxu0 0.0
    %1866 = vmatprep.subr.mxu0 0.0
    %1867 = vmatpush2.msra.mxu0 0.0
    %1868 = vmatprep.subr.mxu0 0.0
    %1869 = vmatpush2.msra.mxu0 0.0
    %1870 = vmatprep.subr.mxu0 0.0
    %1871 = vmatpush2.msra.mxu0 0.0
    %1872 = vmatprep.subr.mxu0 0.0
    %1873 = vmatpush2.msra.mxu0 0.0
    %1874 = vmatprep.subr.mxu0 0.0
    %1875 = vmatpush2.msra.mxu0 0.0
    %1876 = vmatprep.subr.mxu0 0.0
    %1877 = vmatpush2.msra.mxu0 0.0
    %1878 = vmatprep.subr.mxu0 0.0
    %1879 = vmatpush2.msra.mxu0 0.0
    %1880 = vmatprep.subr.mxu0 0.0
    %1881 = vmatpush2.msra.mxu0 0.0
    %1882 = vmatprep.subr.mxu0 0.0
    %1883 = vmatpush2.msra.mxu0 0.0
    %1884 = vmatprep.subr.mxu0 0.0
    %1885 = vmatpush2.msra.mxu0 0.0
    %1886 = vmatprep.subr.mxu0 0.0
    %1887 = vmatpush2.msra.mxu0 0.0
    %1888 = vmatprep.subr.mxu0 0.0
    %1889 = vmatpush2.msra.mxu0 0.0
    %1890 = vmatprep.subr.mxu0 0.0
    %1891 = vmatpush2.msra.mxu0 0.0
    %1892 = vmatprep.mubr.f32.mxu0 0.0
    %1893 = vmatmul.mubr.f32.gmra.mxu0 %v1826
    %v1894 = vpop.f32.mrf.mxu0
    %v1895 = vadd.f32 0.0, %v1894
    %v1896 = vpop.f32.mrf.mxu0
    %1897 = vdwg.mxu0
    %v1898 = vadd.f32 %v1825, %v1895
    %v1899 = vld [vmem:[#allocation4 + $0x7] sm:$0x1]
    %v1900 = vsel %vm202, %v1822, 0
    %1902 = vmatprep.subr.mxu0 0.0
    %1903 = vmatpush1.msra.mxu0 0.0
    %1904 = vmatprep.subr.mxu0 0.0
    %1905 = vmatpush1.msra.mxu0 0.0
    %1906 = vmatprep.subr.mxu0 0.0
    %1907 = vmatpush1.msra.mxu0 0.0
    %1908 = vmatprep.subr.mxu0 0.0
    %1909 = vmatpush1.msra.mxu0 0.0
    %1910 = vmatprep.subr.mxu0 0.0
    %1911 = vmatpush1.msra.mxu0 0.0
    %1912 = vmatprep.subr.mxu0 0.0
    %1913 = vmatpush1.msra.mxu0 0.0
    %1914 = vmatprep.subr.mxu0 0.0
    %1915 = vmatpush1.msra.mxu0 0.0
    %1916 = vmatprep.subr.mxu0 0.0
    %1917 = vmatpush1.msra.mxu0 0.0
    %1918 = vmatprep.subr.mxu0 0.0
    %1919 = vmatpush1.msra.mxu0 0.0
    %1920 = vmatprep.subr.mxu0 0.0
    %1921 = vmatpush1.msra.mxu0 0.0
    %1922 = vmatprep.subr.mxu0 0.0
    %1923 = vmatpush1.msra.mxu0 0.0
    %1924 = vmatprep.subr.mxu0 0.0
    %1925 = vmatpush1.msra.mxu0 0.0
    %1926 = vmatprep.subr.mxu0 0.0
    %1927 = vmatpush1.msra.mxu0 %v382
    %1928 = vmatprep.subr.mxu0 0.0
    %1929 = vmatpush1.msra.mxu0 %v381
    %1930 = vmatprep.subr.mxu0 0.0
    %1931 = vmatpush1.msra.mxu0 %v380
    %1932 = vmatprep.subr.mxu0 0.0
    %1933 = vmatpush1.msra.mxu0 %v379
    %1934 = vmatprep.subr.mxu0 0.0
    %1935 = vmatpush2.msra.mxu0 0.0
    %1936 = vmatprep.subr.mxu0 0.0
    %1937 = vmatpush2.msra.mxu0 0.0
    %1938 = vmatprep.subr.mxu0 0.0
    %1939 = vmatpush2.msra.mxu0 0.0
    %1940 = vmatprep.subr.mxu0 0.0
    %1941 = vmatpush2.msra.mxu0 0.0
    %1942 = vmatprep.subr.mxu0 0.0
    %1943 = vmatpush2.msra.mxu0 0.0
    %1944 = vmatprep.subr.mxu0 0.0
    %1945 = vmatpush2.msra.mxu0 0.0
    %1946 = vmatprep.subr.mxu0 0.0
    %1947 = vmatpush2.msra.mxu0 0.0
    %1948 = vmatprep.subr.mxu0 0.0
    %1949 = vmatpush2.msra.mxu0 0.0
    %1950 = vmatprep.subr.mxu0 0.0
    %1951 = vmatpush2.msra.mxu0 0.0
    %1952 = vmatprep.subr.mxu0 0.0
    %1953 = vmatpush2.msra.mxu0 0.0
    %1954 = vmatprep.subr.mxu0 0.0
    %1955 = vmatpush2.msra.mxu0 0.0
    %1956 = vmatprep.subr.mxu0 0.0
    %1957 = vmatpush2.msra.mxu0 0.0
    %1958 = vmatprep.subr.mxu0 0.0
    %1959 = vmatpush2.msra.mxu0 0.0
    %1960 = vmatprep.subr.mxu0 0.0
    %1961 = vmatpush2.msra.mxu0 0.0
    %1962 = vmatprep.subr.mxu0 0.0
    %1963 = vmatpush2.msra.mxu0 0.0
    %1964 = vmatprep.subr.mxu0 0.0
    %1965 = vmatpush2.msra.mxu0 0.0
    %1966 = vmatprep.mubr.f32.mxu0 0.0
    %1967 = vmatmul.mubr.f32.gmra.mxu0 %v1900
    %v1968 = vpop.f32.mrf.mxu0
    %v1969 = vadd.f32 0.0, %v1968
    %v1970 = vpop.f32.mrf.mxu0
    %1971 = vdwg.mxu0
    %v1972 = vadd.f32 %v1899, %v1969
    %v1973 = vxor.u32 %v1898, 2147483648
    %v1974 = vmul.f32 %v1973, 1.442695
    %v1975 = vpow.pop %v1974
    %v1976 = vadd.f32 %v1975, 1.0
    %v1977 = vrcp.pop %v1976
    %v1978 = vmul.f32 1.0, %v1977
    %v1979 = vtanh.pop %v1898
    %v1980 = vxor.u32 %v1972, 2147483648
    %v1981 = vmul.f32 %v1980, 1.442695
    %v1982 = vpow.pop %v1981
    %v1983 = vadd.f32 %v1982, 1.0
    %v1984 = vrcp.pop %v1983
    %v1985 = vmul.f32 1.0, %v1984
    %v1986 = vtanh.pop %v1972
    %v1987 = vmul.f32 %v1978, %v1791
    %1989 = vrot.lane.b32.xlu0 %v1979, 64
    %v1990 = vpop.permute.xlu0 %1989
    %v1992 = vmul.f32 %v1978, %v1990
    %1994 = vrot.lane.b32.xlu0 %v1992, 32
    %v1995 = vpop.permute.xlu0 %1994
    %v1997 = vadd.f32 %v1987, %v1995
    %v1998 = vmul.f32 %v1985, %v1802
    %2000 = vrot.lane.b32.xlu0 %v1986, 64
    %v2001 = vpop.permute.xlu0 %2000
    %v2003 = vmul.f32 %v1985, %v2001
    %2005 = vrot.lane.b32.xlu0 %v2003, 32
    %v2006 = vpop.permute.xlu0 %2005
    %v2008 = vadd.f32 %v1998, %v2006
    %v2009 = vtanh.pop %v1997
    %2011 = vrot.lane.b32.xlu0 %v2009, 64
    %v2012 = vpop.permute.xlu0 %2011
    %v2014 = vmul.f32 %v1978, %v2012
    %v2015 = vtanh.pop %v2008
    %2017 = vrot.lane.b32.xlu0 %v2015, 64
    %v2018 = vpop.permute.xlu0 %2017
    %v2020 = vmul.f32 %v1985, %v2018
    %2022 = vrot.lane.b32.xlu0 %v2014, 32
    %v2023 = vpop.permute.xlu0 %2022
    %2025 = vst.msk [vmem:[#allocation5 + $0x7] sm:$0x1] %vm582, %v2023
    %2027 = vrot.lane.b32.xlu0 %v2020, 32
    %v2028 = vpop.permute.xlu0 %2027
    %2030 = vst.msk [vmem:[#allocation6 + $0x7] sm:$0x1] %vm582, %v2028
    %v2031 = vld [vmem:[#allocation5] sm:$0xff]
    %v2032 = vld [vmem:[#allocation6] sm:$0xff]
    %v2033 = vld [vmem:[#allocation12] sm:$0xff]
    %v2034 = vld [vmem:[#allocation12 + $0x8] sm:$0xff]
    %v2035 = vld [vmem:[#allocation12 + $0x10] sm:$0xff]
    %v2036 = vld [vmem:[#allocation12 + $0x18] sm:$0xff]
    %s2037 = scalar_lea.vmem [#allocation12], 64
    %v2038 = vld [vmem:[%s2037] sm:$0xff]
    %v2039 = vld [vmem:[%s2037 + $0x8] sm:$0xff]
    %v2040 = vld [vmem:[%s2037 + $0x10] sm:$0xff]
    %v2041 = vld [vmem:[%s2037 + $0x18] sm:$0xff]
    %s2042 = scalar_lea.vmem %s6, 1
    %v2043 = vld [vmem:[%s2042] sm:$0x1]
    %v2045 = vlaneseq
    %v2046 = vshrl.u32 %v2045, 7
    %v2047 = vsub.s32 0, %v2046
    %v2048 = vrot.slane %v2043, %v2047
    %v2051 = vsel %vm202, %v2031, 0
    %2053 = vmatprep.subr.mxu0 0.0
    %2054 = vmatpush1.msra.mxu0 0.0
    %2055 = vmatprep.subr.mxu0 0.0
    %2056 = vmatpush1.msra.mxu0 0.0
    %2057 = vmatprep.subr.mxu0 0.0
    %2058 = vmatpush1.msra.mxu0 0.0
    %2059 = vmatprep.subr.mxu0 0.0
    %2060 = vmatpush1.msra.mxu0 0.0
    %2061 = vmatprep.subr.mxu0 0.0
    %2062 = vmatpush1.msra.mxu0 0.0
    %2063 = vmatprep.subr.mxu0 0.0
    %2064 = vmatpush1.msra.mxu0 0.0
    %2065 = vmatprep.subr.mxu0 0.0
    %2066 = vmatpush1.msra.mxu0 0.0
    %2067 = vmatprep.subr.mxu0 0.0
    %2068 = vmatpush1.msra.mxu0 0.0
    %2069 = vmatprep.subr.mxu0 0.0
    %2070 = vmatpush1.msra.mxu0 0.0
    %2071 = vmatprep.subr.mxu0 0.0
    %2072 = vmatpush1.msra.mxu0 0.0
    %2073 = vmatprep.subr.mxu0 0.0
    %2074 = vmatpush1.msra.mxu0 0.0
    %2075 = vmatprep.subr.mxu0 0.0
    %2076 = vmatpush1.msra.mxu0 0.0
    %2077 = vmatprep.subr.mxu0 0.0
    %2078 = vmatpush1.msra.mxu0 %v2036
    %2079 = vmatprep.subr.mxu0 0.0
    %2080 = vmatpush1.msra.mxu0 %v2035
    %2081 = vmatprep.subr.mxu0 0.0
    %2082 = vmatpush1.msra.mxu0 %v2034
    %2083 = vmatprep.subr.mxu0 0.0
    %2084 = vmatpush1.msra.mxu0 %v2033
    %2085 = vmatprep.subr.mxu0 0.0
    %2086 = vmatpush2.msra.mxu0 0.0
    %2087 = vmatprep.subr.mxu0 0.0
    %2088 = vmatpush2.msra.mxu0 0.0
    %2089 = vmatprep.subr.mxu0 0.0
    %2090 = vmatpush2.msra.mxu0 0.0
    %2091 = vmatprep.subr.mxu0 0.0
    %2092 = vmatpush2.msra.mxu0 0.0
    %2093 = vmatprep.subr.mxu0 0.0
    %2094 = vmatpush2.msra.mxu0 0.0
    %2095 = vmatprep.subr.mxu0 0.0
    %2096 = vmatpush2.msra.mxu0 0.0
    %2097 = vmatprep.subr.mxu0 0.0
    %2098 = vmatpush2.msra.mxu0 0.0
    %2099 = vmatprep.subr.mxu0 0.0
    %2100 = vmatpush2.msra.mxu0 0.0
    %2101 = vmatprep.subr.mxu0 0.0
    %2102 = vmatpush2.msra.mxu0 0.0
    %2103 = vmatprep.subr.mxu0 0.0
    %2104 = vmatpush2.msra.mxu0 0.0
    %2105 = vmatprep.subr.mxu0 0.0
    %2106 = vmatpush2.msra.mxu0 0.0
    %2107 = vmatprep.subr.mxu0 0.0
    %2108 = vmatpush2.msra.mxu0 0.0
    %2109 = vmatprep.subr.mxu0 0.0
    %2110 = vmatpush2.msra.mxu0 0.0
    %2111 = vmatprep.subr.mxu0 0.0
    %2112 = vmatpush2.msra.mxu0 0.0
    %2113 = vmatprep.subr.mxu0 0.0
    %2114 = vmatpush2.msra.mxu0 0.0
    %2115 = vmatprep.subr.mxu0 0.0
    %2116 = vmatpush2.msra.mxu0 0.0
    %2117 = vmatprep.mubr.f32.mxu0 0.0
    %2118 = vmatmul.mubr.f32.gmra.mxu0 %v2051
    %v2119 = vpop.f32.mrf.mxu0
    %v2120 = vadd.f32 %v2048, %v2119
    %v2121 = vpop.f32.mrf.mxu0
    %2122 = vdwg.mxu0
    %2123 = vst [vmem:[#allocation3] sm:$0xff] %v2120
    %s2124 = scalar_lea.vmem %s6, 4
    %v2125 = vld [vmem:[%s2124] sm:$0x1]
    %v2127 = vlaneseq
    %v2128 = vshrl.u32 %v2127, 7
    %v2129 = vsub.s32 0, %v2128
    %v2130 = vrot.slane %v2125, %v2129
    %v2133 = vsel %vm202, %v2032, 0
    %2135 = vmatprep.subr.mxu0 0.0
    %2136 = vmatpush1.msra.mxu0 0.0
    %2137 = vmatprep.subr.mxu0 0.0
    %2138 = vmatpush1.msra.mxu0 0.0
    %2139 = vmatprep.subr.mxu0 0.0
    %2140 = vmatpush1.msra.mxu0 0.0
    %2141 = vmatprep.subr.mxu0 0.0
    %2142 = vmatpush1.msra.mxu0 0.0
    %2143 = vmatprep.subr.mxu0 0.0
    %2144 = vmatpush1.msra.mxu0 0.0
    %2145 = vmatprep.subr.mxu0 0.0
    %2146 = vmatpush1.msra.mxu0 0.0
    %2147 = vmatprep.subr.mxu0 0.0
    %2148 = vmatpush1.msra.mxu0 0.0
    %2149 = vmatprep.subr.mxu0 0.0
    %2150 = vmatpush1.msra.mxu0 0.0
    %2151 = vmatprep.subr.mxu0 0.0
    %2152 = vmatpush1.msra.mxu0 0.0
    %2153 = vmatprep.subr.mxu0 0.0
    %2154 = vmatpush1.msra.mxu0 0.0
    %2155 = vmatprep.subr.mxu0 0.0
    %2156 = vmatpush1.msra.mxu0 0.0
    %2157 = vmatprep.subr.mxu0 0.0
    %2158 = vmatpush1.msra.mxu0 0.0
    %2159 = vmatprep.subr.mxu0 0.0
    %2160 = vmatpush1.msra.mxu0 %v2041
    %2161 = vmatprep.subr.mxu0 0.0
    %2162 = vmatpush1.msra.mxu0 %v2040
    %2163 = vmatprep.subr.mxu0 0.0
    %2164 = vmatpush1.msra.mxu0 %v2039
    %2165 = vmatprep.subr.mxu0 0.0
    %2166 = vmatpush1.msra.mxu0 %v2038
    %2167 = vmatprep.subr.mxu0 0.0
    %2168 = vmatpush2.msra.mxu0 0.0
    %2169 = vmatprep.subr.mxu0 0.0
    %2170 = vmatpush2.msra.mxu0 0.0
    %2171 = vmatprep.subr.mxu0 0.0
    %2172 = vmatpush2.msra.mxu0 0.0
    %2173 = vmatprep.subr.mxu0 0.0
    %2174 = vmatpush2.msra.mxu0 0.0
    %2175 = vmatprep.subr.mxu0 0.0
    %2176 = vmatpush2.msra.mxu0 0.0
    %2177 = vmatprep.subr.mxu0 0.0
    %2178 = vmatpush2.msra.mxu0 0.0
    %2179 = vmatprep.subr.mxu0 0.0
    %2180 = vmatpush2.msra.mxu0 0.0
    %2181 = vmatprep.subr.mxu0 0.0
    %2182 = vmatpush2.msra.mxu0 0.0
    %2183 = vmatprep.subr.mxu0 0.0
    %2184 = vmatpush2.msra.mxu0 0.0
    %2185 = vmatprep.subr.mxu0 0.0
    %2186 = vmatpush2.msra.mxu0 0.0
    %2187 = vmatprep.subr.mxu0 0.0
    %2188 = vmatpush2.msra.mxu0 0.0
    %2189 = vmatprep.subr.mxu0 0.0
    %2190 = vmatpush2.msra.mxu0 0.0
    %2191 = vmatprep.subr.mxu0 0.0
    %2192 = vmatpush2.msra.mxu0 0.0
    %2193 = vmatprep.subr.mxu0 0.0
    %2194 = vmatpush2.msra.mxu0 0.0
    %2195 = vmatprep.subr.mxu0 0.0
    %2196 = vmatpush2.msra.mxu0 0.0
    %2197 = vmatprep.subr.mxu0 0.0
    %2198 = vmatpush2.msra.mxu0 0.0
    %2199 = vmatprep.mubr.f32.mxu0 0.0
    %2200 = vmatmul.mubr.f32.gmra.mxu0 %v2133
    %v2201 = vpop.f32.mrf.mxu0
    %v2202 = vadd.f32 %v2130, %v2201
    %v2203 = vpop.f32.mrf.mxu0
    %2204 = vdwg.mxu0
    %2205 = vst [vmem:[#allocation4] sm:$0xff] %v2202
    %s2206 = scalar_lea.vmem [#allocation14], 32
    %v2207 = vld [vmem:[%s2206] sm:$0xff]
    %v2208 = vld [vmem:[%s2206 + $0x8] sm:$0xff]
    %v2209 = vld [vmem:[%s2206 + $0x10] sm:$0xff]
    %v2210 = vld [vmem:[%s2206 + $0x18] sm:$0xff]
    %s2211 = scalar_lea.vmem [#allocation14], 128
    %v2212 = vld [vmem:[%s2211] sm:$0xff]
    %v2213 = vld [vmem:[%s2211 + $0x8] sm:$0xff]
    %v2214 = vld [vmem:[%s2211 + $0x10] sm:$0xff]
    %v2215 = vld [vmem:[%s2211 + $0x18] sm:$0xff]
    %v2216 = vld [vmem:[#allocation3] sm:$0x1]
    %2217 = vmatprep.subr.mxu0 0.0
    %2218 = vmatpush1.msra.mxu0 0.0
    %2219 = vmatprep.subr.mxu0 0.0
    %2220 = vmatpush1.msra.mxu0 0.0
    %2221 = vmatprep.subr.mxu0 0.0
    %2222 = vmatpush1.msra.mxu0 0.0
    %2223 = vmatprep.subr.mxu0 0.0
    %2224 = vmatpush1.msra.mxu0 0.0
    %2225 = vmatprep.subr.mxu0 0.0
    %2226 = vmatpush1.msra.mxu0 0.0
    %2227 = vmatprep.subr.mxu0 0.0
    %2228 = vmatpush1.msra.mxu0 0.0
    %2229 = vmatprep.subr.mxu0 0.0
    %2230 = vmatpush1.msra.mxu0 0.0
    %2231 = vmatprep.subr.mxu0 0.0
    %2232 = vmatpush1.msra.mxu0 0.0
    %2233 = vmatprep.subr.mxu0 0.0
    %2234 = vmatpush1.msra.mxu0 0.0
    %2235 = vmatprep.subr.mxu0 0.0
    %2236 = vmatpush1.msra.mxu0 0.0
    %2237 = vmatprep.subr.mxu0 0.0
    %2238 = vmatpush1.msra.mxu0 0.0
    %2239 = vmatprep.subr.mxu0 0.0
    %2240 = vmatpush1.msra.mxu0 0.0
    %2241 = vmatprep.subr.mxu0 0.0
    %2242 = vmatpush1.msra.mxu0 %v2210
    %2243 = vmatprep.subr.mxu0 0.0
    %2244 = vmatpush1.msra.mxu0 %v2209
    %2245 = vmatprep.subr.mxu0 0.0
    %2246 = vmatpush1.msra.mxu0 %v2208
    %2247 = vmatprep.subr.mxu0 0.0
    %2248 = vmatpush1.msra.mxu0 %v2207
    %2249 = vmatprep.subr.mxu0 0.0
    %2250 = vmatpush2.msra.mxu0 0.0
    %2251 = vmatprep.subr.mxu0 0.0
    %2252 = vmatpush2.msra.mxu0 0.0
    %2253 = vmatprep.subr.mxu0 0.0
    %2254 = vmatpush2.msra.mxu0 0.0
    %2255 = vmatprep.subr.mxu0 0.0
    %2256 = vmatpush2.msra.mxu0 0.0
    %2257 = vmatprep.subr.mxu0 0.0
    %2258 = vmatpush2.msra.mxu0 0.0
    %2259 = vmatprep.subr.mxu0 0.0
    %2260 = vmatpush2.msra.mxu0 0.0
    %2261 = vmatprep.subr.mxu0 0.0
    %2262 = vmatpush2.msra.mxu0 0.0
    %2263 = vmatprep.subr.mxu0 0.0
    %2264 = vmatpush2.msra.mxu0 0.0
    %2265 = vmatprep.subr.mxu0 0.0
    %2266 = vmatpush2.msra.mxu0 0.0
    %2267 = vmatprep.subr.mxu0 0.0
    %2268 = vmatpush2.msra.mxu0 0.0
    %2269 = vmatprep.subr.mxu0 0.0
    %2270 = vmatpush2.msra.mxu0 0.0
    %2271 = vmatprep.subr.mxu0 0.0
    %2272 = vmatpush2.msra.mxu0 0.0
    %2273 = vmatprep.subr.mxu0 0.0
    %2274 = vmatpush2.msra.mxu0 0.0
    %2275 = vmatprep.subr.mxu0 0.0
    %2276 = vmatpush2.msra.mxu0 0.0
    %2277 = vmatprep.subr.mxu0 0.0
    %2278 = vmatpush2.msra.mxu0 0.0
    %2279 = vmatprep.subr.mxu0 0.0
    %2280 = vmatpush2.msra.mxu0 0.0
    %2281 = vmatprep.mubr.f32.mxu0 0.0
    %2282 = vmatmul.mubr.f32.gmra.mxu0 %v385
    %v2283 = vpop.f32.mrf.mxu0
    %v2284 = vadd.f32 0.0, %v2283
    %v2285 = vpop.f32.mrf.mxu0
    %2286 = vdwg.mxu0
    %v2287 = vadd.f32 %v2216, %v2284
    %v2288 = vld [vmem:[#allocation4] sm:$0x1]
    %2289 = vmatprep.subr.mxu0 0.0
    %2290 = vmatpush1.msra.mxu0 0.0
    %2291 = vmatprep.subr.mxu0 0.0
    %2292 = vmatpush1.msra.mxu0 0.0
    %2293 = vmatprep.subr.mxu0 0.0
    %2294 = vmatpush1.msra.mxu0 0.0
    %2295 = vmatprep.subr.mxu0 0.0
    %2296 = vmatpush1.msra.mxu0 0.0
    %2297 = vmatprep.subr.mxu0 0.0
    %2298 = vmatpush1.msra.mxu0 0.0
    %2299 = vmatprep.subr.mxu0 0.0
    %2300 = vmatpush1.msra.mxu0 0.0
    %2301 = vmatprep.subr.mxu0 0.0
    %2302 = vmatpush1.msra.mxu0 0.0
    %2303 = vmatprep.subr.mxu0 0.0
    %2304 = vmatpush1.msra.mxu0 0.0
    %2305 = vmatprep.subr.mxu0 0.0
    %2306 = vmatpush1.msra.mxu0 0.0
    %2307 = vmatprep.subr.mxu0 0.0
    %2308 = vmatpush1.msra.mxu0 0.0
    %2309 = vmatprep.subr.mxu0 0.0
    %2310 = vmatpush1.msra.mxu0 0.0
    %2311 = vmatprep.subr.mxu0 0.0
    %2312 = vmatpush1.msra.mxu0 0.0
    %2313 = vmatprep.subr.mxu0 0.0
    %2314 = vmatpush1.msra.mxu0 %v2215
    %2315 = vmatprep.subr.mxu0 0.0
    %2316 = vmatpush1.msra.mxu0 %v2214
    %2317 = vmatprep.subr.mxu0 0.0
    %2318 = vmatpush1.msra.mxu0 %v2213
    %2319 = vmatprep.subr.mxu0 0.0
    %2320 = vmatpush1.msra.mxu0 %v2212
    %2321 = vmatprep.subr.mxu0 0.0
    %2322 = vmatpush2.msra.mxu0 0.0
    %2323 = vmatprep.subr.mxu0 0.0
    %2324 = vmatpush2.msra.mxu0 0.0
    %2325 = vmatprep.subr.mxu0 0.0
    %2326 = vmatpush2.msra.mxu0 0.0
    %2327 = vmatprep.subr.mxu0 0.0
    %2328 = vmatpush2.msra.mxu0 0.0
    %2329 = vmatprep.subr.mxu0 0.0
    %2330 = vmatpush2.msra.mxu0 0.0
    %2331 = vmatprep.subr.mxu0 0.0
    %2332 = vmatpush2.msra.mxu0 0.0
    %2333 = vmatprep.subr.mxu0 0.0
    %2334 = vmatpush2.msra.mxu0 0.0
    %2335 = vmatprep.subr.mxu0 0.0
    %2336 = vmatpush2.msra.mxu0 0.0
    %2337 = vmatprep.subr.mxu0 0.0
    %2338 = vmatpush2.msra.mxu0 0.0
    %2339 = vmatprep.subr.mxu0 0.0
    %2340 = vmatpush2.msra.mxu0 0.0
    %2341 = vmatprep.subr.mxu0 0.0
    %2342 = vmatpush2.msra.mxu0 0.0
    %2343 = vmatprep.subr.mxu0 0.0
    %2344 = vmatpush2.msra.mxu0 0.0
    %2345 = vmatprep.subr.mxu0 0.0
    %2346 = vmatpush2.msra.mxu0 0.0
    %2347 = vmatprep.subr.mxu0 0.0
    %2348 = vmatpush2.msra.mxu0 0.0
    %2349 = vmatprep.subr.mxu0 0.0
    %2350 = vmatpush2.msra.mxu0 0.0
    %2351 = vmatprep.subr.mxu0 0.0
    %2352 = vmatpush2.msra.mxu0 0.0
    %2353 = vmatprep.mubr.f32.mxu0 0.0
    %2354 = vmatmul.mubr.f32.gmra.mxu0 %v385
    %v2355 = vpop.f32.mrf.mxu0
    %v2356 = vadd.f32 0.0, %v2355
    %v2357 = vpop.f32.mrf.mxu0
    %2358 = vdwg.mxu0
    %v2359 = vadd.f32 %v2288, %v2356
    %v2360 = vxor.u32 %v2287, 2147483648
    %v2361 = vmul.f32 %v2360, 1.442695
    %v2362 = vpow.pop %v2361
    %v2363 = vadd.f32 %v2362, 1.0
    %v2364 = vrcp.pop %v2363
    %v2365 = vmul.f32 1.0, %v2364
    %v2366 = vtanh.pop %v2287
    %v2367 = vxor.u32 %v2359, 2147483648
    %v2368 = vmul.f32 %v2367, 1.442695
    %v2369 = vpow.pop %v2368
    %v2370 = vadd.f32 %v2369, 1.0
    %v2371 = vrcp.pop %v2370
    %v2372 = vmul.f32 1.0, %v2371
    %v2373 = vtanh.pop %v2359
    %v2374 = vmul.f32 %v2365, 0.0
    %2376 = vrot.lane.b32.xlu0 %v2366, 64
    %v2377 = vpop.permute.xlu0 %2376
    %v2379 = vmul.f32 %v2365, %v2377
    %2381 = vrot.lane.b32.xlu0 %v2379, 32
    %v2382 = vpop.permute.xlu0 %2381
    %v2384 = vadd.f32 %v2374, %v2382
    %v2385 = vmul.f32 %v2372, 0.0
    %2387 = vrot.lane.b32.xlu0 %v2373, 64
    %v2388 = vpop.permute.xlu0 %2387
    %v2390 = vmul.f32 %v2372, %v2388
    %2392 = vrot.lane.b32.xlu0 %v2390, 32
    %v2393 = vpop.permute.xlu0 %2392
    %v2395 = vadd.f32 %v2385, %v2393
    %v2396 = vtanh.pop %v2384
    %2398 = vrot.lane.b32.xlu0 %v2396, 64
    %v2399 = vpop.permute.xlu0 %2398
    %v2401 = vmul.f32 %v2365, %v2399
    %v2402 = vtanh.pop %v2395
    %2404 = vrot.lane.b32.xlu0 %v2402, 64
    %v2405 = vpop.permute.xlu0 %2404
    %v2407 = vmul.f32 %v2372, %v2405
    %2409 = vrot.lane.b32.xlu0 %v2401, 32
    %v2410 = vpop.permute.xlu0 %2409
    %2412 = vst.msk [vmem:[#allocation5] sm:$0x1] %vm582, %v2410
    %2414 = vrot.lane.b32.xlu0 %v2407, 32
    %v2415 = vpop.permute.xlu0 %2414
    %2417 = vst.msk [vmem:[#allocation6] sm:$0x1] %vm582, %v2415
    %v2418 = vld [vmem:[#allocation3 + $0x1] sm:$0x1]
    %v2419 = vsel %vm202, %v2410, 0
    %2421 = vmatprep.subr.mxu0 0.0
    %2422 = vmatpush1.msra.mxu0 0.0
    %2423 = vmatprep.subr.mxu0 0.0
    %2424 = vmatpush1.msra.mxu0 0.0
    %2425 = vmatprep.subr.mxu0 0.0
    %2426 = vmatpush1.msra.mxu0 0.0
    %2427 = vmatprep.subr.mxu0 0.0
    %2428 = vmatpush1.msra.mxu0 0.0
    %2429 = vmatprep.subr.mxu0 0.0
    %2430 = vmatpush1.msra.mxu0 0.0
    %2431 = vmatprep.subr.mxu0 0.0
    %2432 = vmatpush1.msra.mxu0 0.0
    %2433 = vmatprep.subr.mxu0 0.0
    %2434 = vmatpush1.msra.mxu0 0.0
    %2435 = vmatprep.subr.mxu0 0.0
    %2436 = vmatpush1.msra.mxu0 0.0
    %2437 = vmatprep.subr.mxu0 0.0
    %2438 = vmatpush1.msra.mxu0 0.0
    %2439 = vmatprep.subr.mxu0 0.0
    %2440 = vmatpush1.msra.mxu0 0.0
    %2441 = vmatprep.subr.mxu0 0.0
    %2442 = vmatpush1.msra.mxu0 0.0
    %2443 = vmatprep.subr.mxu0 0.0
    %2444 = vmatpush1.msra.mxu0 0.0
    %2445 = vmatprep.subr.mxu0 0.0
    %2446 = vmatpush1.msra.mxu0 %v2210
    %2447 = vmatprep.subr.mxu0 0.0
    %2448 = vmatpush1.msra.mxu0 %v2209
    %2449 = vmatprep.subr.mxu0 0.0
    %2450 = vmatpush1.msra.mxu0 %v2208
    %2451 = vmatprep.subr.mxu0 0.0
    %2452 = vmatpush1.msra.mxu0 %v2207
    %2453 = vmatprep.subr.mxu0 0.0
    %2454 = vmatpush2.msra.mxu0 0.0
    %2455 = vmatprep.subr.mxu0 0.0
    %2456 = vmatpush2.msra.mxu0 0.0
    %2457 = vmatprep.subr.mxu0 0.0
    %2458 = vmatpush2.msra.mxu0 0.0
    %2459 = vmatprep.subr.mxu0 0.0
    %2460 = vmatpush2.msra.mxu0 0.0
    %2461 = vmatprep.subr.mxu0 0.0
    %2462 = vmatpush2.msra.mxu0 0.0
    %2463 = vmatprep.subr.mxu0 0.0
    %2464 = vmatpush2.msra.mxu0 0.0
    %2465 = vmatprep.subr.mxu0 0.0
    %2466 = vmatpush2.msra.mxu0 0.0
    %2467 = vmatprep.subr.mxu0 0.0
    %2468 = vmatpush2.msra.mxu0 0.0
    %2469 = vmatprep.subr.mxu0 0.0
    %2470 = vmatpush2.msra.mxu0 0.0
    %2471 = vmatprep.subr.mxu0 0.0
    %2472 = vmatpush2.msra.mxu0 0.0
    %2473 = vmatprep.subr.mxu0 0.0
    %2474 = vmatpush2.msra.mxu0 0.0
    %2475 = vmatprep.subr.mxu0 0.0
    %2476 = vmatpush2.msra.mxu0 0.0
    %2477 = vmatprep.subr.mxu0 0.0
    %2478 = vmatpush2.msra.mxu0 0.0
    %2479 = vmatprep.subr.mxu0 0.0
    %2480 = vmatpush2.msra.mxu0 0.0
    %2481 = vmatprep.subr.mxu0 0.0
    %2482 = vmatpush2.msra.mxu0 0.0
    %2483 = vmatprep.subr.mxu0 0.0
    %2484 = vmatpush2.msra.mxu0 0.0
    %2485 = vmatprep.mubr.f32.mxu0 0.0
    %2486 = vmatmul.mubr.f32.gmra.mxu0 %v2419
    %v2487 = vpop.f32.mrf.mxu0
    %v2488 = vadd.f32 0.0, %v2487
    %v2489 = vpop.f32.mrf.mxu0
    %2490 = vdwg.mxu0
    %v2491 = vadd.f32 %v2418, %v2488
    %v2492 = vld [vmem:[#allocation4 + $0x1] sm:$0x1]
    %v2493 = vsel %vm202, %v2415, 0
    %2495 = vmatprep.subr.mxu0 0.0
    %2496 = vmatpush1.msra.mxu0 0.0
    %2497 = vmatprep.subr.mxu0 0.0
    %2498 = vmatpush1.msra.mxu0 0.0
    %2499 = vmatprep.subr.mxu0 0.0
    %2500 = vmatpush1.msra.mxu0 0.0
    %2501 = vmatprep.subr.mxu0 0.0
    %2502 = vmatpush1.msra.mxu0 0.0
    %2503 = vmatprep.subr.mxu0 0.0
    %2504 = vmatpush1.msra.mxu0 0.0
    %2505 = vmatprep.subr.mxu0 0.0
    %2506 = vmatpush1.msra.mxu0 0.0
    %2507 = vmatprep.subr.mxu0 0.0
    %2508 = vmatpush1.msra.mxu0 0.0
    %2509 = vmatprep.subr.mxu0 0.0
    %2510 = vmatpush1.msra.mxu0 0.0
    %2511 = vmatprep.subr.mxu0 0.0
    %2512 = vmatpush1.msra.mxu0 0.0
    %2513 = vmatprep.subr.mxu0 0.0
    %2514 = vmatpush1.msra.mxu0 0.0
    %2515 = vmatprep.subr.mxu0 0.0
    %2516 = vmatpush1.msra.mxu0 0.0
    %2517 = vmatprep.subr.mxu0 0.0
    %2518 = vmatpush1.msra.mxu0 0.0
    %2519 = vmatprep.subr.mxu0 0.0
    %2520 = vmatpush1.msra.mxu0 %v2215
    %2521 = vmatprep.subr.mxu0 0.0
    %2522 = vmatpush1.msra.mxu0 %v2214
    %2523 = vmatprep.subr.mxu0 0.0
    %2524 = vmatpush1.msra.mxu0 %v2213
    %2525 = vmatprep.subr.mxu0 0.0
    %2526 = vmatpush1.msra.mxu0 %v2212
    %2527 = vmatprep.subr.mxu0 0.0
    %2528 = vmatpush2.msra.mxu0 0.0
    %2529 = vmatprep.subr.mxu0 0.0
    %2530 = vmatpush2.msra.mxu0 0.0
    %2531 = vmatprep.subr.mxu0 0.0
    %2532 = vmatpush2.msra.mxu0 0.0
    %2533 = vmatprep.subr.mxu0 0.0
    %2534 = vmatpush2.msra.mxu0 0.0
    %2535 = vmatprep.subr.mxu0 0.0
    %2536 = vmatpush2.msra.mxu0 0.0
    %2537 = vmatprep.subr.mxu0 0.0
    %2538 = vmatpush2.msra.mxu0 0.0
    %2539 = vmatprep.subr.mxu0 0.0
    %2540 = vmatpush2.msra.mxu0 0.0
    %2541 = vmatprep.subr.mxu0 0.0
    %2542 = vmatpush2.msra.mxu0 0.0
    %2543 = vmatprep.subr.mxu0 0.0
    %2544 = vmatpush2.msra.mxu0 0.0
    %2545 = vmatprep.subr.mxu0 0.0
    %2546 = vmatpush2.msra.mxu0 0.0
    %2547 = vmatprep.subr.mxu0 0.0
    %2548 = vmatpush2.msra.mxu0 0.0
    %2549 = vmatprep.subr.mxu0 0.0
    %2550 = vmatpush2.msra.mxu0 0.0
    %2551 = vmatprep.subr.mxu0 0.0
    %2552 = vmatpush2.msra.mxu0 0.0
    %2553 = vmatprep.subr.mxu0 0.0
    %2554 = vmatpush2.msra.mxu0 0.0
    %2555 = vmatprep.subr.mxu0 0.0
    %2556 = vmatpush2.msra.mxu0 0.0
    %2557 = vmatprep.subr.mxu0 0.0
    %2558 = vmatpush2.msra.mxu0 0.0
    %2559 = vmatprep.mubr.f32.mxu0 0.0
    %2560 = vmatmul.mubr.f32.gmra.mxu0 %v2493
    %v2561 = vpop.f32.mrf.mxu0
    %v2562 = vadd.f32 0.0, %v2561
    %v2563 = vpop.f32.mrf.mxu0
    %2564 = vdwg.mxu0
    %v2565 = vadd.f32 %v2492, %v2562
    %v2566 = vxor.u32 %v2491, 2147483648
    %v2567 = vmul.f32 %v2566, 1.442695
    %v2568 = vpow.pop %v2567
    %v2569 = vadd.f32 %v2568, 1.0
    %v2570 = vrcp.pop %v2569
    %v2571 = vmul.f32 1.0, %v2570
    %v2572 = vtanh.pop %v2491
    %v2573 = vxor.u32 %v2565, 2147483648
    %v2574 = vmul.f32 %v2573, 1.442695
    %v2575 = vpow.pop %v2574
    %v2576 = vadd.f32 %v2575, 1.0
    %v2577 = vrcp.pop %v2576
    %v2578 = vmul.f32 1.0, %v2577
    %v2579 = vtanh.pop %v2565
    %v2580 = vmul.f32 %v2571, %v2384
    %2582 = vrot.lane.b32.xlu0 %v2572, 64
    %v2583 = vpop.permute.xlu0 %2582
    %v2585 = vmul.f32 %v2571, %v2583
    %2587 = vrot.lane.b32.xlu0 %v2585, 32
    %v2588 = vpop.permute.xlu0 %2587
    %v2590 = vadd.f32 %v2580, %v2588
    %v2591 = vmul.f32 %v2578, %v2395
    %2593 = vrot.lane.b32.xlu0 %v2579, 64
    %v2594 = vpop.permute.xlu0 %2593
    %v2596 = vmul.f32 %v2578, %v2594
    %2598 = vrot.lane.b32.xlu0 %v2596, 32
    %v2599 = vpop.permute.xlu0 %2598
    %v2601 = vadd.f32 %v2591, %v2599
    %v2602 = vtanh.pop %v2590
    %2604 = vrot.lane.b32.xlu0 %v2602, 64
    %v2605 = vpop.permute.xlu0 %2604
    %v2607 = vmul.f32 %v2571, %v2605
    %v2608 = vtanh.pop %v2601
    %2610 = vrot.lane.b32.xlu0 %v2608, 64
    %v2611 = vpop.permute.xlu0 %2610
    %v2613 = vmul.f32 %v2578, %v2611
    %2615 = vrot.lane.b32.xlu0 %v2607, 32
    %v2616 = vpop.permute.xlu0 %2615
    %2618 = vst.msk [vmem:[#allocation5 + $0x1] sm:$0x1] %vm582, %v2616
    %2620 = vrot.lane.b32.xlu0 %v2613, 32
    %v2621 = vpop.permute.xlu0 %2620
    %2623 = vst.msk [vmem:[#allocation6 + $0x1] sm:$0x1] %vm582, %v2621
    %v2624 = vld [vmem:[#allocation3 + $0x2] sm:$0x1]
    %v2625 = vsel %vm202, %v2616, 0
    %2627 = vmatprep.subr.mxu0 0.0
    %2628 = vmatpush1.msra.mxu0 0.0
    %2629 = vmatprep.subr.mxu0 0.0
    %2630 = vmatpush1.msra.mxu0 0.0
    %2631 = vmatprep.subr.mxu0 0.0
    %2632 = vmatpush1.msra.mxu0 0.0
    %2633 = vmatprep.subr.mxu0 0.0
    %2634 = vmatpush1.msra.mxu0 0.0
    %2635 = vmatprep.subr.mxu0 0.0
    %2636 = vmatpush1.msra.mxu0 0.0
    %2637 = vmatprep.subr.mxu0 0.0
    %2638 = vmatpush1.msra.mxu0 0.0
    %2639 = vmatprep.subr.mxu0 0.0
    %2640 = vmatpush1.msra.mxu0 0.0
    %2641 = vmatprep.subr.mxu0 0.0
    %2642 = vmatpush1.msra.mxu0 0.0
    %2643 = vmatprep.subr.mxu0 0.0
    %2644 = vmatpush1.msra.mxu0 0.0
    %2645 = vmatprep.subr.mxu0 0.0
    %2646 = vmatpush1.msra.mxu0 0.0
    %2647 = vmatprep.subr.mxu0 0.0
    %2648 = vmatpush1.msra.mxu0 0.0
    %2649 = vmatprep.subr.mxu0 0.0
    %2650 = vmatpush1.msra.mxu0 0.0
    %2651 = vmatprep.subr.mxu0 0.0
    %2652 = vmatpush1.msra.mxu0 %v2210
    %2653 = vmatprep.subr.mxu0 0.0
    %2654 = vmatpush1.msra.mxu0 %v2209
    %2655 = vmatprep.subr.mxu0 0.0
    %2656 = vmatpush1.msra.mxu0 %v2208
    %2657 = vmatprep.subr.mxu0 0.0
    %2658 = vmatpush1.msra.mxu0 %v2207
    %2659 = vmatprep.subr.mxu0 0.0
    %2660 = vmatpush2.msra.mxu0 0.0
    %2661 = vmatprep.subr.mxu0 0.0
    %2662 = vmatpush2.msra.mxu0 0.0
    %2663 = vmatprep.subr.mxu0 0.0
    %2664 = vmatpush2.msra.mxu0 0.0
    %2665 = vmatprep.subr.mxu0 0.0
    %2666 = vmatpush2.msra.mxu0 0.0
    %2667 = vmatprep.subr.mxu0 0.0
    %2668 = vmatpush2.msra.mxu0 0.0
    %2669 = vmatprep.subr.mxu0 0.0
    %2670 = vmatpush2.msra.mxu0 0.0
    %2671 = vmatprep.subr.mxu0 0.0
    %2672 = vmatpush2.msra.mxu0 0.0
    %2673 = vmatprep.subr.mxu0 0.0
    %2674 = vmatpush2.msra.mxu0 0.0
    %2675 = vmatprep.subr.mxu0 0.0
    %2676 = vmatpush2.msra.mxu0 0.0
    %2677 = vmatprep.subr.mxu0 0.0
    %2678 = vmatpush2.msra.mxu0 0.0
    %2679 = vmatprep.subr.mxu0 0.0
    %2680 = vmatpush2.msra.mxu0 0.0
    %2681 = vmatprep.subr.mxu0 0.0
    %2682 = vmatpush2.msra.mxu0 0.0
    %2683 = vmatprep.subr.mxu0 0.0
    %2684 = vmatpush2.msra.mxu0 0.0
    %2685 = vmatprep.subr.mxu0 0.0
    %2686 = vmatpush2.msra.mxu0 0.0
    %2687 = vmatprep.subr.mxu0 0.0
    %2688 = vmatpush2.msra.mxu0 0.0
    %2689 = vmatprep.subr.mxu0 0.0
    %2690 = vmatpush2.msra.mxu0 0.0
    %2691 = vmatprep.mubr.f32.mxu0 0.0
    %2692 = vmatmul.mubr.f32.gmra.mxu0 %v2625
    %v2693 = vpop.f32.mrf.mxu0
    %v2694 = vadd.f32 0.0, %v2693
    %v2695 = vpop.f32.mrf.mxu0
    %2696 = vdwg.mxu0
    %v2697 = vadd.f32 %v2624, %v2694
    %v2698 = vld [vmem:[#allocation4 + $0x2] sm:$0x1]
    %v2699 = vsel %vm202, %v2621, 0
    %2701 = vmatprep.subr.mxu0 0.0
    %2702 = vmatpush1.msra.mxu0 0.0
    %2703 = vmatprep.subr.mxu0 0.0
    %2704 = vmatpush1.msra.mxu0 0.0
    %2705 = vmatprep.subr.mxu0 0.0
    %2706 = vmatpush1.msra.mxu0 0.0
    %2707 = vmatprep.subr.mxu0 0.0
    %2708 = vmatpush1.msra.mxu0 0.0
    %2709 = vmatprep.subr.mxu0 0.0
    %2710 = vmatpush1.msra.mxu0 0.0
    %2711 = vmatprep.subr.mxu0 0.0
    %2712 = vmatpush1.msra.mxu0 0.0
    %2713 = vmatprep.subr.mxu0 0.0
    %2714 = vmatpush1.msra.mxu0 0.0
    %2715 = vmatprep.subr.mxu0 0.0
    %2716 = vmatpush1.msra.mxu0 0.0
    %2717 = vmatprep.subr.mxu0 0.0
    %2718 = vmatpush1.msra.mxu0 0.0
    %2719 = vmatprep.subr.mxu0 0.0
    %2720 = vmatpush1.msra.mxu0 0.0
    %2721 = vmatprep.subr.mxu0 0.0
    %2722 = vmatpush1.msra.mxu0 0.0
    %2723 = vmatprep.subr.mxu0 0.0
    %2724 = vmatpush1.msra.mxu0 0.0
    %2725 = vmatprep.subr.mxu0 0.0
    %2726 = vmatpush1.msra.mxu0 %v2215
    %2727 = vmatprep.subr.mxu0 0.0
    %2728 = vmatpush1.msra.mxu0 %v2214
    %2729 = vmatprep.subr.mxu0 0.0
    %2730 = vmatpush1.msra.mxu0 %v2213
    %2731 = vmatprep.subr.mxu0 0.0
    %2732 = vmatpush1.msra.mxu0 %v2212
    %2733 = vmatprep.subr.mxu0 0.0
    %2734 = vmatpush2.msra.mxu0 0.0
    %2735 = vmatprep.subr.mxu0 0.0
    %2736 = vmatpush2.msra.mxu0 0.0
    %2737 = vmatprep.subr.mxu0 0.0
    %2738 = vmatpush2.msra.mxu0 0.0
    %2739 = vmatprep.subr.mxu0 0.0
    %2740 = vmatpush2.msra.mxu0 0.0
    %2741 = vmatprep.subr.mxu0 0.0
    %2742 = vmatpush2.msra.mxu0 0.0
    %2743 = vmatprep.subr.mxu0 0.0
    %2744 = vmatpush2.msra.mxu0 0.0
    %2745 = vmatprep.subr.mxu0 0.0
    %2746 = vmatpush2.msra.mxu0 0.0
    %2747 = vmatprep.subr.mxu0 0.0
    %2748 = vmatpush2.msra.mxu0 0.0
    %2749 = vmatprep.subr.mxu0 0.0
    %2750 = vmatpush2.msra.mxu0 0.0
    %2751 = vmatprep.subr.mxu0 0.0
    %2752 = vmatpush2.msra.mxu0 0.0
    %2753 = vmatprep.subr.mxu0 0.0
    %2754 = vmatpush2.msra.mxu0 0.0
    %2755 = vmatprep.subr.mxu0 0.0
    %2756 = vmatpush2.msra.mxu0 0.0
    %2757 = vmatprep.subr.mxu0 0.0
    %2758 = vmatpush2.msra.mxu0 0.0
    %2759 = vmatprep.subr.mxu0 0.0
    %2760 = vmatpush2.msra.mxu0 0.0
    %2761 = vmatprep.subr.mxu0 0.0
    %2762 = vmatpush2.msra.mxu0 0.0
    %2763 = vmatprep.subr.mxu0 0.0
    %2764 = vmatpush2.msra.mxu0 0.0
    %2765 = vmatprep.mubr.f32.mxu0 0.0
    %2766 = vmatmul.mubr.f32.gmra.mxu0 %v2699
    %v2767 = vpop.f32.mrf.mxu0
    %v2768 = vadd.f32 0.0, %v2767
    %v2769 = vpop.f32.mrf.mxu0
    %2770 = vdwg.mxu0
    %v2771 = vadd.f32 %v2698, %v2768
    %v2772 = vxor.u32 %v2697, 2147483648
    %v2773 = vmul.f32 %v2772, 1.442695
    %v2774 = vpow.pop %v2773
    %v2775 = vadd.f32 %v2774, 1.0
    %v2776 = vrcp.pop %v2775
    %v2777 = vmul.f32 1.0, %v2776
    %v2778 = vtanh.pop %v2697
    %v2779 = vxor.u32 %v2771, 2147483648
    %v2780 = vmul.f32 %v2779, 1.442695
    %v2781 = vpow.pop %v2780
    %v2782 = vadd.f32 %v2781, 1.0
    %v2783 = vrcp.pop %v2782
    %v2784 = vmul.f32 1.0, %v2783
    %v2785 = vtanh.pop %v2771
    %v2786 = vmul.f32 %v2777, %v2590
    %2788 = vrot.lane.b32.xlu0 %v2778, 64
    %v2789 = vpop.permute.xlu0 %2788
    %v2791 = vmul.f32 %v2777, %v2789
    %2793 = vrot.lane.b32.xlu0 %v2791, 32
    %v2794 = vpop.permute.xlu0 %2793
    %v2796 = vadd.f32 %v2786, %v2794
    %v2797 = vmul.f32 %v2784, %v2601
    %2799 = vrot.lane.b32.xlu0 %v2785, 64
    %v2800 = vpop.permute.xlu0 %2799
    %v2802 = vmul.f32 %v2784, %v2800
    %2804 = vrot.lane.b32.xlu0 %v2802, 32
    %v2805 = vpop.permute.xlu0 %2804
    %v2807 = vadd.f32 %v2797, %v2805
    %v2808 = vtanh.pop %v2796
    %2810 = vrot.lane.b32.xlu0 %v2808, 64
    %v2811 = vpop.permute.xlu0 %2810
    %v2813 = vmul.f32 %v2777, %v2811
    %v2814 = vtanh.pop %v2807
    %2816 = vrot.lane.b32.xlu0 %v2814, 64
    %v2817 = vpop.permute.xlu0 %2816
    %v2819 = vmul.f32 %v2784, %v2817
    %2821 = vrot.lane.b32.xlu0 %v2813, 32
    %v2822 = vpop.permute.xlu0 %2821
    %2824 = vst.msk [vmem:[#allocation5 + $0x2] sm:$0x1] %vm582, %v2822
    %2826 = vrot.lane.b32.xlu0 %v2819, 32
    %v2827 = vpop.permute.xlu0 %2826
    %2829 = vst.msk [vmem:[#allocation6 + $0x2] sm:$0x1] %vm582, %v2827
    %v2830 = vld [vmem:[#allocation3 + $0x3] sm:$0x1]
    %v2831 = vsel %vm202, %v2822, 0
    %2833 = vmatprep.subr.mxu0 0.0
    %2834 = vmatpush1.msra.mxu0 0.0
    %2835 = vmatprep.subr.mxu0 0.0
    %2836 = vmatpush1.msra.mxu0 0.0
    %2837 = vmatprep.subr.mxu0 0.0
    %2838 = vmatpush1.msra.mxu0 0.0
    %2839 = vmatprep.subr.mxu0 0.0
    %2840 = vmatpush1.msra.mxu0 0.0
    %2841 = vmatprep.subr.mxu0 0.0
    %2842 = vmatpush1.msra.mxu0 0.0
    %2843 = vmatprep.subr.mxu0 0.0
    %2844 = vmatpush1.msra.mxu0 0.0
    %2845 = vmatprep.subr.mxu0 0.0
    %2846 = vmatpush1.msra.mxu0 0.0
    %2847 = vmatprep.subr.mxu0 0.0
    %2848 = vmatpush1.msra.mxu0 0.0
    %2849 = vmatprep.subr.mxu0 0.0
    %2850 = vmatpush1.msra.mxu0 0.0
    %2851 = vmatprep.subr.mxu0 0.0
    %2852 = vmatpush1.msra.mxu0 0.0
    %2853 = vmatprep.subr.mxu0 0.0
    %2854 = vmatpush1.msra.mxu0 0.0
    %2855 = vmatprep.subr.mxu0 0.0
    %2856 = vmatpush1.msra.mxu0 0.0
    %2857 = vmatprep.subr.mxu0 0.0
    %2858 = vmatpush1.msra.mxu0 %v2210
    %2859 = vmatprep.subr.mxu0 0.0
    %2860 = vmatpush1.msra.mxu0 %v2209
    %2861 = vmatprep.subr.mxu0 0.0
    %2862 = vmatpush1.msra.mxu0 %v2208
    %2863 = vmatprep.subr.mxu0 0.0
    %2864 = vmatpush1.msra.mxu0 %v2207
    %2865 = vmatprep.subr.mxu0 0.0
    %2866 = vmatpush2.msra.mxu0 0.0
    %2867 = vmatprep.subr.mxu0 0.0
    %2868 = vmatpush2.msra.mxu0 0.0
    %2869 = vmatprep.subr.mxu0 0.0
    %2870 = vmatpush2.msra.mxu0 0.0
    %2871 = vmatprep.subr.mxu0 0.0
    %2872 = vmatpush2.msra.mxu0 0.0
    %2873 = vmatprep.subr.mxu0 0.0
    %2874 = vmatpush2.msra.mxu0 0.0
    %2875 = vmatprep.subr.mxu0 0.0
    %2876 = vmatpush2.msra.mxu0 0.0
    %2877 = vmatprep.subr.mxu0 0.0
    %2878 = vmatpush2.msra.mxu0 0.0
    %2879 = vmatprep.subr.mxu0 0.0
    %2880 = vmatpush2.msra.mxu0 0.0
    %2881 = vmatprep.subr.mxu0 0.0
    %2882 = vmatpush2.msra.mxu0 0.0
    %2883 = vmatprep.subr.mxu0 0.0
    %2884 = vmatpush2.msra.mxu0 0.0
    %2885 = vmatprep.subr.mxu0 0.0
    %2886 = vmatpush2.msra.mxu0 0.0
    %2887 = vmatprep.subr.mxu0 0.0
    %2888 = vmatpush2.msra.mxu0 0.0
    %2889 = vmatprep.subr.mxu0 0.0
    %2890 = vmatpush2.msra.mxu0 0.0
    %2891 = vmatprep.subr.mxu0 0.0
    %2892 = vmatpush2.msra.mxu0 0.0
    %2893 = vmatprep.subr.mxu0 0.0
    %2894 = vmatpush2.msra.mxu0 0.0
    %2895 = vmatprep.subr.mxu0 0.0
    %2896 = vmatpush2.msra.mxu0 0.0
    %2897 = vmatprep.mubr.f32.mxu0 0.0
    %2898 = vmatmul.mubr.f32.gmra.mxu0 %v2831
    %v2899 = vpop.f32.mrf.mxu0
    %v2900 = vadd.f32 0.0, %v2899
    %v2901 = vpop.f32.mrf.mxu0
    %2902 = vdwg.mxu0
    %v2903 = vadd.f32 %v2830, %v2900
    %v2904 = vld [vmem:[#allocation4 + $0x3] sm:$0x1]
    %v2905 = vsel %vm202, %v2827, 0
    %2907 = vmatprep.subr.mxu0 0.0
    %2908 = vmatpush1.msra.mxu0 0.0
    %2909 = vmatprep.subr.mxu0 0.0
    %2910 = vmatpush1.msra.mxu0 0.0
    %2911 = vmatprep.subr.mxu0 0.0
    %2912 = vmatpush1.msra.mxu0 0.0
    %2913 = vmatprep.subr.mxu0 0.0
    %2914 = vmatpush1.msra.mxu0 0.0
    %2915 = vmatprep.subr.mxu0 0.0
    %2916 = vmatpush1.msra.mxu0 0.0
    %2917 = vmatprep.subr.mxu0 0.0
    %2918 = vmatpush1.msra.mxu0 0.0
    %2919 = vmatprep.subr.mxu0 0.0
    %2920 = vmatpush1.msra.mxu0 0.0
    %2921 = vmatprep.subr.mxu0 0.0
    %2922 = vmatpush1.msra.mxu0 0.0
    %2923 = vmatprep.subr.mxu0 0.0
    %2924 = vmatpush1.msra.mxu0 0.0
    %2925 = vmatprep.subr.mxu0 0.0
    %2926 = vmatpush1.msra.mxu0 0.0
    %2927 = vmatprep.subr.mxu0 0.0
    %2928 = vmatpush1.msra.mxu0 0.0
    %2929 = vmatprep.subr.mxu0 0.0
    %2930 = vmatpush1.msra.mxu0 0.0
    %2931 = vmatprep.subr.mxu0 0.0
    %2932 = vmatpush1.msra.mxu0 %v2215
    %2933 = vmatprep.subr.mxu0 0.0
    %2934 = vmatpush1.msra.mxu0 %v2214
    %2935 = vmatprep.subr.mxu0 0.0
    %2936 = vmatpush1.msra.mxu0 %v2213
    %2937 = vmatprep.subr.mxu0 0.0
    %2938 = vmatpush1.msra.mxu0 %v2212
    %2939 = vmatprep.subr.mxu0 0.0
    %2940 = vmatpush2.msra.mxu0 0.0
    %2941 = vmatprep.subr.mxu0 0.0
    %2942 = vmatpush2.msra.mxu0 0.0
    %2943 = vmatprep.subr.mxu0 0.0
    %2944 = vmatpush2.msra.mxu0 0.0
    %2945 = vmatprep.subr.mxu0 0.0
    %2946 = vmatpush2.msra.mxu0 0.0
    %2947 = vmatprep.subr.mxu0 0.0
    %2948 = vmatpush2.msra.mxu0 0.0
    %2949 = vmatprep.subr.mxu0 0.0
    %2950 = vmatpush2.msra.mxu0 0.0
    %2951 = vmatprep.subr.mxu0 0.0
    %2952 = vmatpush2.msra.mxu0 0.0
    %2953 = vmatprep.subr.mxu0 0.0
    %2954 = vmatpush2.msra.mxu0 0.0
    %2955 = vmatprep.subr.mxu0 0.0
    %2956 = vmatpush2.msra.mxu0 0.0
    %2957 = vmatprep.subr.mxu0 0.0
    %2958 = vmatpush2.msra.mxu0 0.0
    %2959 = vmatprep.subr.mxu0 0.0
    %2960 = vmatpush2.msra.mxu0 0.0
    %2961 = vmatprep.subr.mxu0 0.0
    %2962 = vmatpush2.msra.mxu0 0.0
    %2963 = vmatprep.subr.mxu0 0.0
    %2964 = vmatpush2.msra.mxu0 0.0
    %2965 = vmatprep.subr.mxu0 0.0
    %2966 = vmatpush2.msra.mxu0 0.0
    %2967 = vmatprep.subr.mxu0 0.0
    %2968 = vmatpush2.msra.mxu0 0.0
    %2969 = vmatprep.subr.mxu0 0.0
    %2970 = vmatpush2.msra.mxu0 0.0
    %2971 = vmatprep.mubr.f32.mxu0 0.0
    %2972 = vmatmul.mubr.f32.gmra.mxu0 %v2905
    %v2973 = vpop.f32.mrf.mxu0
    %v2974 = vadd.f32 0.0, %v2973
    %v2975 = vpop.f32.mrf.mxu0
    %2976 = vdwg.mxu0
    %v2977 = vadd.f32 %v2904, %v2974
    %v2978 = vxor.u32 %v2903, 2147483648
    %v2979 = vmul.f32 %v2978, 1.442695
    %v2980 = vpow.pop %v2979
    %v2981 = vadd.f32 %v2980, 1.0
    %v2982 = vrcp.pop %v2981
    %v2983 = vmul.f32 1.0, %v2982
    %v2984 = vtanh.pop %v2903
    %v2985 = vxor.u32 %v2977, 2147483648
    %v2986 = vmul.f32 %v2985, 1.442695
    %v2987 = vpow.pop %v2986
    %v2988 = vadd.f32 %v2987, 1.0
    %v2989 = vrcp.pop %v2988
    %v2990 = vmul.f32 1.0, %v2989
    %v2991 = vtanh.pop %v2977
    %v2992 = vmul.f32 %v2983, %v2796
    %2994 = vrot.lane.b32.xlu0 %v2984, 64
    %v2995 = vpop.permute.xlu0 %2994
    %v2997 = vmul.f32 %v2983, %v2995
    %2999 = vrot.lane.b32.xlu0 %v2997, 32
    %v3000 = vpop.permute.xlu0 %2999
    %v3002 = vadd.f32 %v2992, %v3000
    %v3003 = vmul.f32 %v2990, %v2807
    %3005 = vrot.lane.b32.xlu0 %v2991, 64
    %v3006 = vpop.permute.xlu0 %3005
    %v3008 = vmul.f32 %v2990, %v3006
    %3010 = vrot.lane.b32.xlu0 %v3008, 32
    %v3011 = vpop.permute.xlu0 %3010
    %v3013 = vadd.f32 %v3003, %v3011
    %v3014 = vtanh.pop %v3002
    %3016 = vrot.lane.b32.xlu0 %v3014, 64
    %v3017 = vpop.permute.xlu0 %3016
    %v3019 = vmul.f32 %v2983, %v3017
    %v3020 = vtanh.pop %v3013
    %3022 = vrot.lane.b32.xlu0 %v3020, 64
    %v3023 = vpop.permute.xlu0 %3022
    %v3025 = vmul.f32 %v2990, %v3023
    %3027 = vrot.lane.b32.xlu0 %v3019, 32
    %v3028 = vpop.permute.xlu0 %3027
    %3030 = vst.msk [vmem:[#allocation5 + $0x3] sm:$0x1] %vm582, %v3028
    %3032 = vrot.lane.b32.xlu0 %v3025, 32
    %v3033 = vpop.permute.xlu0 %3032
    %3035 = vst.msk [vmem:[#allocation6 + $0x3] sm:$0x1] %vm582, %v3033
    %v3036 = vld [vmem:[#allocation3 + $0x4] sm:$0x1]
    %v3037 = vsel %vm202, %v3028, 0
    %3039 = vmatprep.subr.mxu0 0.0
    %3040 = vmatpush1.msra.mxu0 0.0
    %3041 = vmatprep.subr.mxu0 0.0
    %3042 = vmatpush1.msra.mxu0 0.0
    %3043 = vmatprep.subr.mxu0 0.0
    %3044 = vmatpush1.msra.mxu0 0.0
    %3045 = vmatprep.subr.mxu0 0.0
    %3046 = vmatpush1.msra.mxu0 0.0
    %3047 = vmatprep.subr.mxu0 0.0
    %3048 = vmatpush1.msra.mxu0 0.0
    %3049 = vmatprep.subr.mxu0 0.0
    %3050 = vmatpush1.msra.mxu0 0.0
    %3051 = vmatprep.subr.mxu0 0.0
    %3052 = vmatpush1.msra.mxu0 0.0
    %3053 = vmatprep.subr.mxu0 0.0
    %3054 = vmatpush1.msra.mxu0 0.0
    %3055 = vmatprep.subr.mxu0 0.0
    %3056 = vmatpush1.msra.mxu0 0.0
    %3057 = vmatprep.subr.mxu0 0.0
    %3058 = vmatpush1.msra.mxu0 0.0
    %3059 = vmatprep.subr.mxu0 0.0
    %3060 = vmatpush1.msra.mxu0 0.0
    %3061 = vmatprep.subr.mxu0 0.0
    %3062 = vmatpush1.msra.mxu0 0.0
    %3063 = vmatprep.subr.mxu0 0.0
    %3064 = vmatpush1.msra.mxu0 %v2210
    %3065 = vmatprep.subr.mxu0 0.0
    %3066 = vmatpush1.msra.mxu0 %v2209
    %3067 = vmatprep.subr.mxu0 0.0
    %3068 = vmatpush1.msra.mxu0 %v2208
    %3069 = vmatprep.subr.mxu0 0.0
    %3070 = vmatpush1.msra.mxu0 %v2207
    %3071 = vmatprep.subr.mxu0 0.0
    %3072 = vmatpush2.msra.mxu0 0.0
    %3073 = vmatprep.subr.mxu0 0.0
    %3074 = vmatpush2.msra.mxu0 0.0
    %3075 = vmatprep.subr.mxu0 0.0
    %3076 = vmatpush2.msra.mxu0 0.0
    %3077 = vmatprep.subr.mxu0 0.0
    %3078 = vmatpush2.msra.mxu0 0.0
    %3079 = vmatprep.subr.mxu0 0.0
    %3080 = vmatpush2.msra.mxu0 0.0
    %3081 = vmatprep.subr.mxu0 0.0
    %3082 = vmatpush2.msra.mxu0 0.0
    %3083 = vmatprep.subr.mxu0 0.0
    %3084 = vmatpush2.msra.mxu0 0.0
    %3085 = vmatprep.subr.mxu0 0.0
    %3086 = vmatpush2.msra.mxu0 0.0
    %3087 = vmatprep.subr.mxu0 0.0
    %3088 = vmatpush2.msra.mxu0 0.0
    %3089 = vmatprep.subr.mxu0 0.0
    %3090 = vmatpush2.msra.mxu0 0.0
    %3091 = vmatprep.subr.mxu0 0.0
    %3092 = vmatpush2.msra.mxu0 0.0
    %3093 = vmatprep.subr.mxu0 0.0
    %3094 = vmatpush2.msra.mxu0 0.0
    %3095 = vmatprep.subr.mxu0 0.0
    %3096 = vmatpush2.msra.mxu0 0.0
    %3097 = vmatprep.subr.mxu0 0.0
    %3098 = vmatpush2.msra.mxu0 0.0
    %3099 = vmatprep.subr.mxu0 0.0
    %3100 = vmatpush2.msra.mxu0 0.0
    %3101 = vmatprep.subr.mxu0 0.0
    %3102 = vmatpush2.msra.mxu0 0.0
    %3103 = vmatprep.mubr.f32.mxu0 0.0
    %3104 = vmatmul.mubr.f32.gmra.mxu0 %v3037
    %v3105 = vpop.f32.mrf.mxu0
    %v3106 = vadd.f32 0.0, %v3105
    %v3107 = vpop.f32.mrf.mxu0
    %3108 = vdwg.mxu0
    %v3109 = vadd.f32 %v3036, %v3106
    %v3110 = vld [vmem:[#allocation4 + $0x4] sm:$0x1]
    %v3111 = vsel %vm202, %v3033, 0
    %3113 = vmatprep.subr.mxu0 0.0
    %3114 = vmatpush1.msra.mxu0 0.0
    %3115 = vmatprep.subr.mxu0 0.0
    %3116 = vmatpush1.msra.mxu0 0.0
    %3117 = vmatprep.subr.mxu0 0.0
    %3118 = vmatpush1.msra.mxu0 0.0
    %3119 = vmatprep.subr.mxu0 0.0
    %3120 = vmatpush1.msra.mxu0 0.0
    %3121 = vmatprep.subr.mxu0 0.0
    %3122 = vmatpush1.msra.mxu0 0.0
    %3123 = vmatprep.subr.mxu0 0.0
    %3124 = vmatpush1.msra.mxu0 0.0
    %3125 = vmatprep.subr.mxu0 0.0
    %3126 = vmatpush1.msra.mxu0 0.0
    %3127 = vmatprep.subr.mxu0 0.0
    %3128 = vmatpush1.msra.mxu0 0.0
    %3129 = vmatprep.subr.mxu0 0.0
    %3130 = vmatpush1.msra.mxu0 0.0
    %3131 = vmatprep.subr.mxu0 0.0
    %3132 = vmatpush1.msra.mxu0 0.0
    %3133 = vmatprep.subr.mxu0 0.0
    %3134 = vmatpush1.msra.mxu0 0.0
    %3135 = vmatprep.subr.mxu0 0.0
    %3136 = vmatpush1.msra.mxu0 0.0
    %3137 = vmatprep.subr.mxu0 0.0
    %3138 = vmatpush1.msra.mxu0 %v2215
    %3139 = vmatprep.subr.mxu0 0.0
    %3140 = vmatpush1.msra.mxu0 %v2214
    %3141 = vmatprep.subr.mxu0 0.0
    %3142 = vmatpush1.msra.mxu0 %v2213
    %3143 = vmatprep.subr.mxu0 0.0
    %3144 = vmatpush1.msra.mxu0 %v2212
    %3145 = vmatprep.subr.mxu0 0.0
    %3146 = vmatpush2.msra.mxu0 0.0
    %3147 = vmatprep.subr.mxu0 0.0
    %3148 = vmatpush2.msra.mxu0 0.0
    %3149 = vmatprep.subr.mxu0 0.0
    %3150 = vmatpush2.msra.mxu0 0.0
    %3151 = vmatprep.subr.mxu0 0.0
    %3152 = vmatpush2.msra.mxu0 0.0
    %3153 = vmatprep.subr.mxu0 0.0
    %3154 = vmatpush2.msra.mxu0 0.0
    %3155 = vmatprep.subr.mxu0 0.0
    %3156 = vmatpush2.msra.mxu0 0.0
    %3157 = vmatprep.subr.mxu0 0.0
    %3158 = vmatpush2.msra.mxu0 0.0
    %3159 = vmatprep.subr.mxu0 0.0
    %3160 = vmatpush2.msra.mxu0 0.0
    %3161 = vmatprep.subr.mxu0 0.0
    %3162 = vmatpush2.msra.mxu0 0.0
    %3163 = vmatprep.subr.mxu0 0.0
    %3164 = vmatpush2.msra.mxu0 0.0
    %3165 = vmatprep.subr.mxu0 0.0
    %3166 = vmatpush2.msra.mxu0 0.0
    %3167 = vmatprep.subr.mxu0 0.0
    %3168 = vmatpush2.msra.mxu0 0.0
    %3169 = vmatprep.subr.mxu0 0.0
    %3170 = vmatpush2.msra.mxu0 0.0
    %3171 = vmatprep.subr.mxu0 0.0
    %3172 = vmatpush2.msra.mxu0 0.0
    %3173 = vmatprep.subr.mxu0 0.0
    %3174 = vmatpush2.msra.mxu0 0.0
    %3175 = vmatprep.subr.mxu0 0.0
    %3176 = vmatpush2.msra.mxu0 0.0
    %3177 = vmatprep.mubr.f32.mxu0 0.0
    %3178 = vmatmul.mubr.f32.gmra.mxu0 %v3111
    %v3179 = vpop.f32.mrf.mxu0
    %v3180 = vadd.f32 0.0, %v3179
    %v3181 = vpop.f32.mrf.mxu0
    %3182 = vdwg.mxu0
    %v3183 = vadd.f32 %v3110, %v3180
    %v3184 = vxor.u32 %v3109, 2147483648
    %v3185 = vmul.f32 %v3184, 1.442695
    %v3186 = vpow.pop %v3185
    %v3187 = vadd.f32 %v3186, 1.0
    %v3188 = vrcp.pop %v3187
    %v3189 = vmul.f32 1.0, %v3188
    %v3190 = vtanh.pop %v3109
    %v3191 = vxor.u32 %v3183, 2147483648
    %v3192 = vmul.f32 %v3191, 1.442695
    %v3193 = vpow.pop %v3192
    %v3194 = vadd.f32 %v3193, 1.0
    %v3195 = vrcp.pop %v3194
    %v3196 = vmul.f32 1.0, %v3195
    %v3197 = vtanh.pop %v3183
    %v3198 = vmul.f32 %v3189, %v3002
    %3200 = vrot.lane.b32.xlu0 %v3190, 64
    %v3201 = vpop.permute.xlu0 %3200
    %v3203 = vmul.f32 %v3189, %v3201
    %3205 = vrot.lane.b32.xlu0 %v3203, 32
    %v3206 = vpop.permute.xlu0 %3205
    %v3208 = vadd.f32 %v3198, %v3206
    %v3209 = vmul.f32 %v3196, %v3013
    %3211 = vrot.lane.b32.xlu0 %v3197, 64
    %v3212 = vpop.permute.xlu0 %3211
    %v3214 = vmul.f32 %v3196, %v3212
    %3216 = vrot.lane.b32.xlu0 %v3214, 32
    %v3217 = vpop.permute.xlu0 %3216
    %v3219 = vadd.f32 %v3209, %v3217
    %v3220 = vtanh.pop %v3208
    %3222 = vrot.lane.b32.xlu0 %v3220, 64
    %v3223 = vpop.permute.xlu0 %3222
    %v3225 = vmul.f32 %v3189, %v3223
    %v3226 = vtanh.pop %v3219
    %3228 = vrot.lane.b32.xlu0 %v3226, 64
    %v3229 = vpop.permute.xlu0 %3228
    %v3231 = vmul.f32 %v3196, %v3229
    %3233 = vrot.lane.b32.xlu0 %v3225, 32
    %v3234 = vpop.permute.xlu0 %3233
    %3236 = vst.msk [vmem:[#allocation5 + $0x4] sm:$0x1] %vm582, %v3234
    %3238 = vrot.lane.b32.xlu0 %v3231, 32
    %v3239 = vpop.permute.xlu0 %3238
    %3241 = vst.msk [vmem:[#allocation6 + $0x4] sm:$0x1] %vm582, %v3239
    %v3242 = vld [vmem:[#allocation3 + $0x5] sm:$0x1]
    %v3243 = vsel %vm202, %v3234, 0
    %3245 = vmatprep.subr.mxu0 0.0
    %3246 = vmatpush1.msra.mxu0 0.0
    %3247 = vmatprep.subr.mxu0 0.0
    %3248 = vmatpush1.msra.mxu0 0.0
    %3249 = vmatprep.subr.mxu0 0.0
    %3250 = vmatpush1.msra.mxu0 0.0
    %3251 = vmatprep.subr.mxu0 0.0
    %3252 = vmatpush1.msra.mxu0 0.0
    %3253 = vmatprep.subr.mxu0 0.0
    %3254 = vmatpush1.msra.mxu0 0.0
    %3255 = vmatprep.subr.mxu0 0.0
    %3256 = vmatpush1.msra.mxu0 0.0
    %3257 = vmatprep.subr.mxu0 0.0
    %3258 = vmatpush1.msra.mxu0 0.0
    %3259 = vmatprep.subr.mxu0 0.0
    %3260 = vmatpush1.msra.mxu0 0.0
    %3261 = vmatprep.subr.mxu0 0.0
    %3262 = vmatpush1.msra.mxu0 0.0
    %3263 = vmatprep.subr.mxu0 0.0
    %3264 = vmatpush1.msra.mxu0 0.0
    %3265 = vmatprep.subr.mxu0 0.0
    %3266 = vmatpush1.msra.mxu0 0.0
    %3267 = vmatprep.subr.mxu0 0.0
    %3268 = vmatpush1.msra.mxu0 0.0
    %3269 = vmatprep.subr.mxu0 0.0
    %3270 = vmatpush1.msra.mxu0 %v2210
    %3271 = vmatprep.subr.mxu0 0.0
    %3272 = vmatpush1.msra.mxu0 %v2209
    %3273 = vmatprep.subr.mxu0 0.0
    %3274 = vmatpush1.msra.mxu0 %v2208
    %3275 = vmatprep.subr.mxu0 0.0
    %3276 = vmatpush1.msra.mxu0 %v2207
    %3277 = vmatprep.subr.mxu0 0.0
    %3278 = vmatpush2.msra.mxu0 0.0
    %3279 = vmatprep.subr.mxu0 0.0
    %3280 = vmatpush2.msra.mxu0 0.0
    %3281 = vmatprep.subr.mxu0 0.0
    %3282 = vmatpush2.msra.mxu0 0.0
    %3283 = vmatprep.subr.mxu0 0.0
    %3284 = vmatpush2.msra.mxu0 0.0
    %3285 = vmatprep.subr.mxu0 0.0
    %3286 = vmatpush2.msra.mxu0 0.0
    %3287 = vmatprep.subr.mxu0 0.0
    %3288 = vmatpush2.msra.mxu0 0.0
    %3289 = vmatprep.subr.mxu0 0.0
    %3290 = vmatpush2.msra.mxu0 0.0
    %3291 = vmatprep.subr.mxu0 0.0
    %3292 = vmatpush2.msra.mxu0 0.0
    %3293 = vmatprep.subr.mxu0 0.0
    %3294 = vmatpush2.msra.mxu0 0.0
    %3295 = vmatprep.subr.mxu0 0.0
    %3296 = vmatpush2.msra.mxu0 0.0
    %3297 = vmatprep.subr.mxu0 0.0
    %3298 = vmatpush2.msra.mxu0 0.0
    %3299 = vmatprep.subr.mxu0 0.0
    %3300 = vmatpush2.msra.mxu0 0.0
    %3301 = vmatprep.subr.mxu0 0.0
    %3302 = vmatpush2.msra.mxu0 0.0
    %3303 = vmatprep.subr.mxu0 0.0
    %3304 = vmatpush2.msra.mxu0 0.0
    %3305 = vmatprep.subr.mxu0 0.0
    %3306 = vmatpush2.msra.mxu0 0.0
    %3307 = vmatprep.subr.mxu0 0.0
    %3308 = vmatpush2.msra.mxu0 0.0
    %3309 = vmatprep.mubr.f32.mxu0 0.0
    %3310 = vmatmul.mubr.f32.gmra.mxu0 %v3243
    %v3311 = vpop.f32.mrf.mxu0
    %v3312 = vadd.f32 0.0, %v3311
    %v3313 = vpop.f32.mrf.mxu0
    %3314 = vdwg.mxu0
    %v3315 = vadd.f32 %v3242, %v3312
    %v3316 = vld [vmem:[#allocation4 + $0x5] sm:$0x1]
    %v3317 = vsel %vm202, %v3239, 0
    %3319 = vmatprep.subr.mxu0 0.0
    %3320 = vmatpush1.msra.mxu0 0.0
    %3321 = vmatprep.subr.mxu0 0.0
    %3322 = vmatpush1.msra.mxu0 0.0
    %3323 = vmatprep.subr.mxu0 0.0
    %3324 = vmatpush1.msra.mxu0 0.0
    %3325 = vmatprep.subr.mxu0 0.0
    %3326 = vmatpush1.msra.mxu0 0.0
    %3327 = vmatprep.subr.mxu0 0.0
    %3328 = vmatpush1.msra.mxu0 0.0
    %3329 = vmatprep.subr.mxu0 0.0
    %3330 = vmatpush1.msra.mxu0 0.0
    %3331 = vmatprep.subr.mxu0 0.0
    %3332 = vmatpush1.msra.mxu0 0.0
    %3333 = vmatprep.subr.mxu0 0.0
    %3334 = vmatpush1.msra.mxu0 0.0
    %3335 = vmatprep.subr.mxu0 0.0
    %3336 = vmatpush1.msra.mxu0 0.0
    %3337 = vmatprep.subr.mxu0 0.0
    %3338 = vmatpush1.msra.mxu0 0.0
    %3339 = vmatprep.subr.mxu0 0.0
    %3340 = vmatpush1.msra.mxu0 0.0
    %3341 = vmatprep.subr.mxu0 0.0
    %3342 = vmatpush1.msra.mxu0 0.0
    %3343 = vmatprep.subr.mxu0 0.0
    %3344 = vmatpush1.msra.mxu0 %v2215
    %3345 = vmatprep.subr.mxu0 0.0
    %3346 = vmatpush1.msra.mxu0 %v2214
    %3347 = vmatprep.subr.mxu0 0.0
    %3348 = vmatpush1.msra.mxu0 %v2213
    %3349 = vmatprep.subr.mxu0 0.0
    %3350 = vmatpush1.msra.mxu0 %v2212
    %3351 = vmatprep.subr.mxu0 0.0
    %3352 = vmatpush2.msra.mxu0 0.0
    %3353 = vmatprep.subr.mxu0 0.0
    %3354 = vmatpush2.msra.mxu0 0.0
    %3355 = vmatprep.subr.mxu0 0.0
    %3356 = vmatpush2.msra.mxu0 0.0
    %3357 = vmatprep.subr.mxu0 0.0
    %3358 = vmatpush2.msra.mxu0 0.0
    %3359 = vmatprep.subr.mxu0 0.0
    %3360 = vmatpush2.msra.mxu0 0.0
    %3361 = vmatprep.subr.mxu0 0.0
    %3362 = vmatpush2.msra.mxu0 0.0
    %3363 = vmatprep.subr.mxu0 0.0
    %3364 = vmatpush2.msra.mxu0 0.0
    %3365 = vmatprep.subr.mxu0 0.0
    %3366 = vmatpush2.msra.mxu0 0.0
    %3367 = vmatprep.subr.mxu0 0.0
    %3368 = vmatpush2.msra.mxu0 0.0
    %3369 = vmatprep.subr.mxu0 0.0
    %3370 = vmatpush2.msra.mxu0 0.0
    %3371 = vmatprep.subr.mxu0 0.0
    %3372 = vmatpush2.msra.mxu0 0.0
    %3373 = vmatprep.subr.mxu0 0.0
    %3374 = vmatpush2.msra.mxu0 0.0
    %3375 = vmatprep.subr.mxu0 0.0
    %3376 = vmatpush2.msra.mxu0 0.0
    %3377 = vmatprep.subr.mxu0 0.0
    %3378 = vmatpush2.msra.mxu0 0.0
    %3379 = vmatprep.subr.mxu0 0.0
    %3380 = vmatpush2.msra.mxu0 0.0
    %3381 = vmatprep.subr.mxu0 0.0
    %3382 = vmatpush2.msra.mxu0 0.0
    %3383 = vmatprep.mubr.f32.mxu0 0.0
    %3384 = vmatmul.mubr.f32.gmra.mxu0 %v3317
    %v3385 = vpop.f32.mrf.mxu0
    %v3386 = vadd.f32 0.0, %v3385
    %v3387 = vpop.f32.mrf.mxu0
    %3388 = vdwg.mxu0
    %v3389 = vadd.f32 %v3316, %v3386
    %v3390 = vxor.u32 %v3315, 2147483648
    %v3391 = vmul.f32 %v3390, 1.442695
    %v3392 = vpow.pop %v3391
    %v3393 = vadd.f32 %v3392, 1.0
    %v3394 = vrcp.pop %v3393
    %v3395 = vmul.f32 1.0, %v3394
    %v3396 = vtanh.pop %v3315
    %v3397 = vxor.u32 %v3389, 2147483648
    %v3398 = vmul.f32 %v3397, 1.442695
    %v3399 = vpow.pop %v3398
    %v3400 = vadd.f32 %v3399, 1.0
    %v3401 = vrcp.pop %v3400
    %v3402 = vmul.f32 1.0, %v3401
    %v3403 = vtanh.pop %v3389
    %v3404 = vmul.f32 %v3395, %v3208
    %3406 = vrot.lane.b32.xlu0 %v3396, 64
    %v3407 = vpop.permute.xlu0 %3406
    %v3409 = vmul.f32 %v3395, %v3407
    %3411 = vrot.lane.b32.xlu0 %v3409, 32
    %v3412 = vpop.permute.xlu0 %3411
    %v3414 = vadd.f32 %v3404, %v3412
    %v3415 = vmul.f32 %v3402, %v3219
    %3417 = vrot.lane.b32.xlu0 %v3403, 64
    %v3418 = vpop.permute.xlu0 %3417
    %v3420 = vmul.f32 %v3402, %v3418
    %3422 = vrot.lane.b32.xlu0 %v3420, 32
    %v3423 = vpop.permute.xlu0 %3422
    %v3425 = vadd.f32 %v3415, %v3423
    %v3426 = vtanh.pop %v3414
    %3428 = vrot.lane.b32.xlu0 %v3426, 64
    %v3429 = vpop.permute.xlu0 %3428
    %v3431 = vmul.f32 %v3395, %v3429
    %v3432 = vtanh.pop %v3425
    %3434 = vrot.lane.b32.xlu0 %v3432, 64
    %v3435 = vpop.permute.xlu0 %3434
    %v3437 = vmul.f32 %v3402, %v3435
    %3439 = vrot.lane.b32.xlu0 %v3431, 32
    %v3440 = vpop.permute.xlu0 %3439
    %3442 = vst.msk [vmem:[#allocation5 + $0x5] sm:$0x1] %vm582, %v3440
    %3444 = vrot.lane.b32.xlu0 %v3437, 32
    %v3445 = vpop.permute.xlu0 %3444
    %3447 = vst.msk [vmem:[#allocation6 + $0x5] sm:$0x1] %vm582, %v3445
    %v3448 = vld [vmem:[#allocation3 + $0x6] sm:$0x1]
    %v3449 = vsel %vm202, %v3440, 0
    %3451 = vmatprep.subr.mxu0 0.0
    %3452 = vmatpush1.msra.mxu0 0.0
    %3453 = vmatprep.subr.mxu0 0.0
    %3454 = vmatpush1.msra.mxu0 0.0
    %3455 = vmatprep.subr.mxu0 0.0
    %3456 = vmatpush1.msra.mxu0 0.0
    %3457 = vmatprep.subr.mxu0 0.0
    %3458 = vmatpush1.msra.mxu0 0.0
    %3459 = vmatprep.subr.mxu0 0.0
    %3460 = vmatpush1.msra.mxu0 0.0
    %3461 = vmatprep.subr.mxu0 0.0
    %3462 = vmatpush1.msra.mxu0 0.0
    %3463 = vmatprep.subr.mxu0 0.0
    %3464 = vmatpush1.msra.mxu0 0.0
    %3465 = vmatprep.subr.mxu0 0.0
    %3466 = vmatpush1.msra.mxu0 0.0
    %3467 = vmatprep.subr.mxu0 0.0
    %3468 = vmatpush1.msra.mxu0 0.0
    %3469 = vmatprep.subr.mxu0 0.0
    %3470 = vmatpush1.msra.mxu0 0.0
    %3471 = vmatprep.subr.mxu0 0.0
    %3472 = vmatpush1.msra.mxu0 0.0
    %3473 = vmatprep.subr.mxu0 0.0
    %3474 = vmatpush1.msra.mxu0 0.0
    %3475 = vmatprep.subr.mxu0 0.0
    %3476 = vmatpush1.msra.mxu0 %v2210
    %3477 = vmatprep.subr.mxu0 0.0
    %3478 = vmatpush1.msra.mxu0 %v2209
    %3479 = vmatprep.subr.mxu0 0.0
    %3480 = vmatpush1.msra.mxu0 %v2208
    %3481 = vmatprep.subr.mxu0 0.0
    %3482 = vmatpush1.msra.mxu0 %v2207
    %3483 = vmatprep.subr.mxu0 0.0
    %3484 = vmatpush2.msra.mxu0 0.0
    %3485 = vmatprep.subr.mxu0 0.0
    %3486 = vmatpush2.msra.mxu0 0.0
    %3487 = vmatprep.subr.mxu0 0.0
    %3488 = vmatpush2.msra.mxu0 0.0
    %3489 = vmatprep.subr.mxu0 0.0
    %3490 = vmatpush2.msra.mxu0 0.0
    %3491 = vmatprep.subr.mxu0 0.0
    %3492 = vmatpush2.msra.mxu0 0.0
    %3493 = vmatprep.subr.mxu0 0.0
    %3494 = vmatpush2.msra.mxu0 0.0
    %3495 = vmatprep.subr.mxu0 0.0
    %3496 = vmatpush2.msra.mxu0 0.0
    %3497 = vmatprep.subr.mxu0 0.0
    %3498 = vmatpush2.msra.mxu0 0.0
    %3499 = vmatprep.subr.mxu0 0.0
    %3500 = vmatpush2.msra.mxu0 0.0
    %3501 = vmatprep.subr.mxu0 0.0
    %3502 = vmatpush2.msra.mxu0 0.0
    %3503 = vmatprep.subr.mxu0 0.0
    %3504 = vmatpush2.msra.mxu0 0.0
    %3505 = vmatprep.subr.mxu0 0.0
    %3506 = vmatpush2.msra.mxu0 0.0
    %3507 = vmatprep.subr.mxu0 0.0
    %3508 = vmatpush2.msra.mxu0 0.0
    %3509 = vmatprep.subr.mxu0 0.0
    %3510 = vmatpush2.msra.mxu0 0.0
    %3511 = vmatprep.subr.mxu0 0.0
    %3512 = vmatpush2.msra.mxu0 0.0
    %3513 = vmatprep.subr.mxu0 0.0
    %3514 = vmatpush2.msra.mxu0 0.0
    %3515 = vmatprep.mubr.f32.mxu0 0.0
    %3516 = vmatmul.mubr.f32.gmra.mxu0 %v3449
    %v3517 = vpop.f32.mrf.mxu0
    %v3518 = vadd.f32 0.0, %v3517
    %v3519 = vpop.f32.mrf.mxu0
    %3520 = vdwg.mxu0
    %v3521 = vadd.f32 %v3448, %v3518
    %v3522 = vld [vmem:[#allocation4 + $0x6] sm:$0x1]
    %v3523 = vsel %vm202, %v3445, 0
    %3525 = vmatprep.subr.mxu0 0.0
    %3526 = vmatpush1.msra.mxu0 0.0
    %3527 = vmatprep.subr.mxu0 0.0
    %3528 = vmatpush1.msra.mxu0 0.0
    %3529 = vmatprep.subr.mxu0 0.0
    %3530 = vmatpush1.msra.mxu0 0.0
    %3531 = vmatprep.subr.mxu0 0.0
    %3532 = vmatpush1.msra.mxu0 0.0
    %3533 = vmatprep.subr.mxu0 0.0
    %3534 = vmatpush1.msra.mxu0 0.0
    %3535 = vmatprep.subr.mxu0 0.0
    %3536 = vmatpush1.msra.mxu0 0.0
    %3537 = vmatprep.subr.mxu0 0.0
    %3538 = vmatpush1.msra.mxu0 0.0
    %3539 = vmatprep.subr.mxu0 0.0
    %3540 = vmatpush1.msra.mxu0 0.0
    %3541 = vmatprep.subr.mxu0 0.0
    %3542 = vmatpush1.msra.mxu0 0.0
    %3543 = vmatprep.subr.mxu0 0.0
    %3544 = vmatpush1.msra.mxu0 0.0
    %3545 = vmatprep.subr.mxu0 0.0
    %3546 = vmatpush1.msra.mxu0 0.0
    %3547 = vmatprep.subr.mxu0 0.0
    %3548 = vmatpush1.msra.mxu0 0.0
    %3549 = vmatprep.subr.mxu0 0.0
    %3550 = vmatpush1.msra.mxu0 %v2215
    %3551 = vmatprep.subr.mxu0 0.0
    %3552 = vmatpush1.msra.mxu0 %v2214
    %3553 = vmatprep.subr.mxu0 0.0
    %3554 = vmatpush1.msra.mxu0 %v2213
    %3555 = vmatprep.subr.mxu0 0.0
    %3556 = vmatpush1.msra.mxu0 %v2212
    %3557 = vmatprep.subr.mxu0 0.0
    %3558 = vmatpush2.msra.mxu0 0.0
    %3559 = vmatprep.subr.mxu0 0.0
    %3560 = vmatpush2.msra.mxu0 0.0
    %3561 = vmatprep.subr.mxu0 0.0
    %3562 = vmatpush2.msra.mxu0 0.0
    %3563 = vmatprep.subr.mxu0 0.0
    %3564 = vmatpush2.msra.mxu0 0.0
    %3565 = vmatprep.subr.mxu0 0.0
    %3566 = vmatpush2.msra.mxu0 0.0
    %3567 = vmatprep.subr.mxu0 0.0
    %3568 = vmatpush2.msra.mxu0 0.0
    %3569 = vmatprep.subr.mxu0 0.0
    %3570 = vmatpush2.msra.mxu0 0.0
    %3571 = vmatprep.subr.mxu0 0.0
    %3572 = vmatpush2.msra.mxu0 0.0
    %3573 = vmatprep.subr.mxu0 0.0
    %3574 = vmatpush2.msra.mxu0 0.0
    %3575 = vmatprep.subr.mxu0 0.0
    %3576 = vmatpush2.msra.mxu0 0.0
    %3577 = vmatprep.subr.mxu0 0.0
    %3578 = vmatpush2.msra.mxu0 0.0
    %3579 = vmatprep.subr.mxu0 0.0
    %3580 = vmatpush2.msra.mxu0 0.0
    %3581 = vmatprep.subr.mxu0 0.0
    %3582 = vmatpush2.msra.mxu0 0.0
    %3583 = vmatprep.subr.mxu0 0.0
    %3584 = vmatpush2.msra.mxu0 0.0
    %3585 = vmatprep.subr.mxu0 0.0
    %3586 = vmatpush2.msra.mxu0 0.0
    %3587 = vmatprep.subr.mxu0 0.0
    %3588 = vmatpush2.msra.mxu0 0.0
    %3589 = vmatprep.mubr.f32.mxu0 0.0
    %3590 = vmatmul.mubr.f32.gmra.mxu0 %v3523
    %v3591 = vpop.f32.mrf.mxu0
    %v3592 = vadd.f32 0.0, %v3591
    %v3593 = vpop.f32.mrf.mxu0
    %3594 = vdwg.mxu0
    %v3595 = vadd.f32 %v3522, %v3592
    %v3596 = vxor.u32 %v3521, 2147483648
    %v3597 = vmul.f32 %v3596, 1.442695
    %v3598 = vpow.pop %v3597
    %v3599 = vadd.f32 %v3598, 1.0
    %v3600 = vrcp.pop %v3599
    %v3601 = vmul.f32 1.0, %v3600
    %v3602 = vtanh.pop %v3521
    %v3603 = vxor.u32 %v3595, 2147483648
    %v3604 = vmul.f32 %v3603, 1.442695
    %v3605 = vpow.pop %v3604
    %v3606 = vadd.f32 %v3605, 1.0
    %v3607 = vrcp.pop %v3606
    %v3608 = vmul.f32 1.0, %v3607
    %v3609 = vtanh.pop %v3595
    %v3610 = vmul.f32 %v3601, %v3414
    %3612 = vrot.lane.b32.xlu0 %v3602, 64
    %v3613 = vpop.permute.xlu0 %3612
    %v3615 = vmul.f32 %v3601, %v3613
    %3617 = vrot.lane.b32.xlu0 %v3615, 32
    %v3618 = vpop.permute.xlu0 %3617
    %v3620 = vadd.f32 %v3610, %v3618
    %v3621 = vmul.f32 %v3608, %v3425
    %3623 = vrot.lane.b32.xlu0 %v3609, 64
    %v3624 = vpop.permute.xlu0 %3623
    %v3626 = vmul.f32 %v3608, %v3624
    %3628 = vrot.lane.b32.xlu0 %v3626, 32
    %v3629 = vpop.permute.xlu0 %3628
    %v3631 = vadd.f32 %v3621, %v3629
    %v3632 = vtanh.pop %v3620
    %3634 = vrot.lane.b32.xlu0 %v3632, 64
    %v3635 = vpop.permute.xlu0 %3634
    %v3637 = vmul.f32 %v3601, %v3635
    %v3638 = vtanh.pop %v3631
    %3640 = vrot.lane.b32.xlu0 %v3638, 64
    %v3641 = vpop.permute.xlu0 %3640
    %v3643 = vmul.f32 %v3608, %v3641
    %3645 = vrot.lane.b32.xlu0 %v3637, 32
    %v3646 = vpop.permute.xlu0 %3645
    %3648 = vst.msk [vmem:[#allocation5 + $0x6] sm:$0x1] %vm582, %v3646
    %3650 = vrot.lane.b32.xlu0 %v3643, 32
    %v3651 = vpop.permute.xlu0 %3650
    %3653 = vst.msk [vmem:[#allocation6 + $0x6] sm:$0x1] %vm582, %v3651
    %v3654 = vld [vmem:[#allocation3 + $0x7] sm:$0x1]
    %v3655 = vsel %vm202, %v3646, 0
    %3657 = vmatprep.subr.mxu0 0.0
    %3658 = vmatpush1.msra.mxu0 0.0
    %3659 = vmatprep.subr.mxu0 0.0
    %3660 = vmatpush1.msra.mxu0 0.0
    %3661 = vmatprep.subr.mxu0 0.0
    %3662 = vmatpush1.msra.mxu0 0.0
    %3663 = vmatprep.subr.mxu0 0.0
    %3664 = vmatpush1.msra.mxu0 0.0
    %3665 = vmatprep.subr.mxu0 0.0
    %3666 = vmatpush1.msra.mxu0 0.0
    %3667 = vmatprep.subr.mxu0 0.0
    %3668 = vmatpush1.msra.mxu0 0.0
    %3669 = vmatprep.subr.mxu0 0.0
    %3670 = vmatpush1.msra.mxu0 0.0
    %3671 = vmatprep.subr.mxu0 0.0
    %3672 = vmatpush1.msra.mxu0 0.0
    %3673 = vmatprep.subr.mxu0 0.0
    %3674 = vmatpush1.msra.mxu0 0.0
    %3675 = vmatprep.subr.mxu0 0.0
    %3676 = vmatpush1.msra.mxu0 0.0
    %3677 = vmatprep.subr.mxu0 0.0
    %3678 = vmatpush1.msra.mxu0 0.0
    %3679 = vmatprep.subr.mxu0 0.0
    %3680 = vmatpush1.msra.mxu0 0.0
    %3681 = vmatprep.subr.mxu0 0.0
    %3682 = vmatpush1.msra.mxu0 %v2210
    %3683 = vmatprep.subr.mxu0 0.0
    %3684 = vmatpush1.msra.mxu0 %v2209
    %3685 = vmatprep.subr.mxu0 0.0
    %3686 = vmatpush1.msra.mxu0 %v2208
    %3687 = vmatprep.subr.mxu0 0.0
    %3688 = vmatpush1.msra.mxu0 %v2207
    %3689 = vmatprep.subr.mxu0 0.0
    %3690 = vmatpush2.msra.mxu0 0.0
    %3691 = vmatprep.subr.mxu0 0.0
    %3692 = vmatpush2.msra.mxu0 0.0
    %3693 = vmatprep.subr.mxu0 0.0
    %3694 = vmatpush2.msra.mxu0 0.0
    %3695 = vmatprep.subr.mxu0 0.0
    %3696 = vmatpush2.msra.mxu0 0.0
    %3697 = vmatprep.subr.mxu0 0.0
    %3698 = vmatpush2.msra.mxu0 0.0
    %3699 = vmatprep.subr.mxu0 0.0
    %3700 = vmatpush2.msra.mxu0 0.0
    %3701 = vmatprep.subr.mxu0 0.0
    %3702 = vmatpush2.msra.mxu0 0.0
    %3703 = vmatprep.subr.mxu0 0.0
    %3704 = vmatpush2.msra.mxu0 0.0
    %3705 = vmatprep.subr.mxu0 0.0
    %3706 = vmatpush2.msra.mxu0 0.0
    %3707 = vmatprep.subr.mxu0 0.0
    %3708 = vmatpush2.msra.mxu0 0.0
    %3709 = vmatprep.subr.mxu0 0.0
    %3710 = vmatpush2.msra.mxu0 0.0
    %3711 = vmatprep.subr.mxu0 0.0
    %3712 = vmatpush2.msra.mxu0 0.0
    %3713 = vmatprep.subr.mxu0 0.0
    %3714 = vmatpush2.msra.mxu0 0.0
    %3715 = vmatprep.subr.mxu0 0.0
    %3716 = vmatpush2.msra.mxu0 0.0
    %3717 = vmatprep.subr.mxu0 0.0
    %3718 = vmatpush2.msra.mxu0 0.0
    %3719 = vmatprep.subr.mxu0 0.0
    %3720 = vmatpush2.msra.mxu0 0.0
    %3721 = vmatprep.mubr.f32.mxu0 0.0
    %3722 = vmatmul.mubr.f32.gmra.mxu0 %v3655
    %v3723 = vpop.f32.mrf.mxu0
    %v3724 = vadd.f32 0.0, %v3723
    %v3725 = vpop.f32.mrf.mxu0
    %3726 = vdwg.mxu0
    %v3727 = vadd.f32 %v3654, %v3724
    %v3728 = vld [vmem:[#allocation4 + $0x7] sm:$0x1]
    %v3729 = vsel %vm202, %v3651, 0
    %3731 = vmatprep.subr.mxu0 0.0
    %3732 = vmatpush1.msra.mxu0 0.0
    %3733 = vmatprep.subr.mxu0 0.0
    %3734 = vmatpush1.msra.mxu0 0.0
    %3735 = vmatprep.subr.mxu0 0.0
    %3736 = vmatpush1.msra.mxu0 0.0
    %3737 = vmatprep.subr.mxu0 0.0
    %3738 = vmatpush1.msra.mxu0 0.0
    %3739 = vmatprep.subr.mxu0 0.0
    %3740 = vmatpush1.msra.mxu0 0.0
    %3741 = vmatprep.subr.mxu0 0.0
    %3742 = vmatpush1.msra.mxu0 0.0
    %3743 = vmatprep.subr.mxu0 0.0
    %3744 = vmatpush1.msra.mxu0 0.0
    %3745 = vmatprep.subr.mxu0 0.0
    %3746 = vmatpush1.msra.mxu0 0.0
    %3747 = vmatprep.subr.mxu0 0.0
    %3748 = vmatpush1.msra.mxu0 0.0
    %3749 = vmatprep.subr.mxu0 0.0
    %3750 = vmatpush1.msra.mxu0 0.0
    %3751 = vmatprep.subr.mxu0 0.0
    %3752 = vmatpush1.msra.mxu0 0.0
    %3753 = vmatprep.subr.mxu0 0.0
    %3754 = vmatpush1.msra.mxu0 0.0
    %3755 = vmatprep.subr.mxu0 0.0
    %3756 = vmatpush1.msra.mxu0 %v2215
    %3757 = vmatprep.subr.mxu0 0.0
    %3758 = vmatpush1.msra.mxu0 %v2214
    %3759 = vmatprep.subr.mxu0 0.0
    %3760 = vmatpush1.msra.mxu0 %v2213
    %3761 = vmatprep.subr.mxu0 0.0
    %3762 = vmatpush1.msra.mxu0 %v2212
    %3763 = vmatprep.subr.mxu0 0.0
    %3764 = vmatpush2.msra.mxu0 0.0
    %3765 = vmatprep.subr.mxu0 0.0
    %3766 = vmatpush2.msra.mxu0 0.0
    %3767 = vmatprep.subr.mxu0 0.0
    %3768 = vmatpush2.msra.mxu0 0.0
    %3769 = vmatprep.subr.mxu0 0.0
    %3770 = vmatpush2.msra.mxu0 0.0
    %3771 = vmatprep.subr.mxu0 0.0
    %3772 = vmatpush2.msra.mxu0 0.0
    %3773 = vmatprep.subr.mxu0 0.0
    %3774 = vmatpush2.msra.mxu0 0.0
    %3775 = vmatprep.subr.mxu0 0.0
    %3776 = vmatpush2.msra.mxu0 0.0
    %3777 = vmatprep.subr.mxu0 0.0
    %3778 = vmatpush2.msra.mxu0 0.0
    %3779 = vmatprep.subr.mxu0 0.0
    %3780 = vmatpush2.msra.mxu0 0.0
    %3781 = vmatprep.subr.mxu0 0.0
    %3782 = vmatpush2.msra.mxu0 0.0
    %3783 = vmatprep.subr.mxu0 0.0
    %3784 = vmatpush2.msra.mxu0 0.0
    %3785 = vmatprep.subr.mxu0 0.0
    %3786 = vmatpush2.msra.mxu0 0.0
    %3787 = vmatprep.subr.mxu0 0.0
    %3788 = vmatpush2.msra.mxu0 0.0
    %3789 = vmatprep.subr.mxu0 0.0
    %3790 = vmatpush2.msra.mxu0 0.0
    %3791 = vmatprep.subr.mxu0 0.0
    %3792 = vmatpush2.msra.mxu0 0.0
    %3793 = vmatprep.subr.mxu0 0.0
    %3794 = vmatpush2.msra.mxu0 0.0
    %3795 = vmatprep.mubr.f32.mxu0 0.0
    %3796 = vmatmul.mubr.f32.gmra.mxu0 %v3729
    %v3797 = vpop.f32.mrf.mxu0
    %v3798 = vadd.f32 0.0, %v3797
    %v3799 = vpop.f32.mrf.mxu0
    %3800 = vdwg.mxu0
    %v3801 = vadd.f32 %v3728, %v3798
    %v3802 = vxor.u32 %v3727, 2147483648
    %v3803 = vmul.f32 %v3802, 1.442695
    %v3804 = vpow.pop %v3803
    %v3805 = vadd.f32 %v3804, 1.0
    %v3806 = vrcp.pop %v3805
    %v3807 = vmul.f32 1.0, %v3806
    %v3808 = vtanh.pop %v3727
    %v3809 = vxor.u32 %v3801, 2147483648
    %v3810 = vmul.f32 %v3809, 1.442695
    %v3811 = vpow.pop %v3810
    %v3812 = vadd.f32 %v3811, 1.0
    %v3813 = vrcp.pop %v3812
    %v3814 = vmul.f32 1.0, %v3813
    %v3815 = vtanh.pop %v3801
    %v3816 = vmul.f32 %v3807, %v3620
    %3818 = vrot.lane.b32.xlu0 %v3808, 64
    %v3819 = vpop.permute.xlu0 %3818
    %v3821 = vmul.f32 %v3807, %v3819
    %3823 = vrot.lane.b32.xlu0 %v3821, 32
    %v3824 = vpop.permute.xlu0 %3823
    %v3826 = vadd.f32 %v3816, %v3824
    %v3827 = vmul.f32 %v3814, %v3631
    %3829 = vrot.lane.b32.xlu0 %v3815, 64
    %v3830 = vpop.permute.xlu0 %3829
    %v3832 = vmul.f32 %v3814, %v3830
    %3834 = vrot.lane.b32.xlu0 %v3832, 32
    %v3835 = vpop.permute.xlu0 %3834
    %v3837 = vadd.f32 %v3827, %v3835
    %v3838 = vtanh.pop %v3826
    %3840 = vrot.lane.b32.xlu0 %v3838, 64
    %v3841 = vpop.permute.xlu0 %3840
    %v3843 = vmul.f32 %v3807, %v3841
    %v3844 = vtanh.pop %v3837
    %3846 = vrot.lane.b32.xlu0 %v3844, 64
    %v3847 = vpop.permute.xlu0 %3846
    %v3849 = vmul.f32 %v3814, %v3847
    %3851 = vrot.lane.b32.xlu0 %v3843, 32
    %v3852 = vpop.permute.xlu0 %3851
    %3854 = vst.msk [vmem:[#allocation5 + $0x7] sm:$0x1] %vm582, %v3852
    %3856 = vrot.lane.b32.xlu0 %v3849, 32
    %v3857 = vpop.permute.xlu0 %3856
    %3859 = vst.msk [vmem:[#allocation6 + $0x7] sm:$0x1] %vm582, %v3857
    %v3860 = vld [vmem:[#allocation5] sm:$0xff]
    %v3861 = vld [vmem:[#allocation6] sm:$0xff]
    %s3862 = scalar_lea.vmem [#allocation12], 32
    %v3863 = vld [vmem:[%s3862] sm:$0xff]
    %v3864 = vld [vmem:[%s3862 + $0x8] sm:$0xff]
    %v3865 = vld [vmem:[%s3862 + $0x10] sm:$0xff]
    %v3866 = vld [vmem:[%s3862 + $0x18] sm:$0xff]
    %s3867 = scalar_lea.vmem [#allocation12], 96
    %v3868 = vld [vmem:[%s3867] sm:$0xff]
    %v3869 = vld [vmem:[%s3867 + $0x8] sm:$0xff]
    %v3870 = vld [vmem:[%s3867 + $0x10] sm:$0xff]
    %v3871 = vld [vmem:[%s3867 + $0x18] sm:$0xff]
    %s3872 = scalar_lea.vmem %s6, 2
    %v3873 = vld [vmem:[%s3872] sm:$0x1]
    %v3875 = vlaneseq
    %v3876 = vshrl.u32 %v3875, 7
    %v3877 = vsub.s32 0, %v3876
    %v3878 = vrot.slane %v3873, %v3877
    %v3881 = vsel %vm202, %v3860, 0
    %3883 = vmatprep.subr.mxu0 0.0
    %3884 = vmatpush1.msra.mxu0 0.0
    %3885 = vmatprep.subr.mxu0 0.0
    %3886 = vmatpush1.msra.mxu0 0.0
    %3887 = vmatprep.subr.mxu0 0.0
    %3888 = vmatpush1.msra.mxu0 0.0
    %3889 = vmatprep.subr.mxu0 0.0
    %3890 = vmatpush1.msra.mxu0 0.0
    %3891 = vmatprep.subr.mxu0 0.0
    %3892 = vmatpush1.msra.mxu0 0.0
    %3893 = vmatprep.subr.mxu0 0.0
    %3894 = vmatpush1.msra.mxu0 0.0
    %3895 = vmatprep.subr.mxu0 0.0
    %3896 = vmatpush1.msra.mxu0 0.0
    %3897 = vmatprep.subr.mxu0 0.0
    %3898 = vmatpush1.msra.mxu0 0.0
    %3899 = vmatprep.subr.mxu0 0.0
    %3900 = vmatpush1.msra.mxu0 0.0
    %3901 = vmatprep.subr.mxu0 0.0
    %3902 = vmatpush1.msra.mxu0 0.0
    %3903 = vmatprep.subr.mxu0 0.0
    %3904 = vmatpush1.msra.mxu0 0.0
    %3905 = vmatprep.subr.mxu0 0.0
    %3906 = vmatpush1.msra.mxu0 0.0
    %3907 = vmatprep.subr.mxu0 0.0
    %3908 = vmatpush1.msra.mxu0 %v3866
    %3909 = vmatprep.subr.mxu0 0.0
    %3910 = vmatpush1.msra.mxu0 %v3865
    %3911 = vmatprep.subr.mxu0 0.0
    %3912 = vmatpush1.msra.mxu0 %v3864
    %3913 = vmatprep.subr.mxu0 0.0
    %3914 = vmatpush1.msra.mxu0 %v3863
    %3915 = vmatprep.subr.mxu0 0.0
    %3916 = vmatpush2.msra.mxu0 0.0
    %3917 = vmatprep.subr.mxu0 0.0
    %3918 = vmatpush2.msra.mxu0 0.0
    %3919 = vmatprep.subr.mxu0 0.0
    %3920 = vmatpush2.msra.mxu0 0.0
    %3921 = vmatprep.subr.mxu0 0.0
    %3922 = vmatpush2.msra.mxu0 0.0
    %3923 = vmatprep.subr.mxu0 0.0
    %3924 = vmatpush2.msra.mxu0 0.0
    %3925 = vmatprep.subr.mxu0 0.0
    %3926 = vmatpush2.msra.mxu0 0.0
    %3927 = vmatprep.subr.mxu0 0.0
    %3928 = vmatpush2.msra.mxu0 0.0
    %3929 = vmatprep.subr.mxu0 0.0
    %3930 = vmatpush2.msra.mxu0 0.0
    %3931 = vmatprep.subr.mxu0 0.0
    %3932 = vmatpush2.msra.mxu0 0.0
    %3933 = vmatprep.subr.mxu0 0.0
    %3934 = vmatpush2.msra.mxu0 0.0
    %3935 = vmatprep.subr.mxu0 0.0
    %3936 = vmatpush2.msra.mxu0 0.0
    %3937 = vmatprep.subr.mxu0 0.0
    %3938 = vmatpush2.msra.mxu0 0.0
    %3939 = vmatprep.subr.mxu0 0.0
    %3940 = vmatpush2.msra.mxu0 0.0
    %3941 = vmatprep.subr.mxu0 0.0
    %3942 = vmatpush2.msra.mxu0 0.0
    %3943 = vmatprep.subr.mxu0 0.0
    %3944 = vmatpush2.msra.mxu0 0.0
    %3945 = vmatprep.subr.mxu0 0.0
    %3946 = vmatpush2.msra.mxu0 0.0
    %3947 = vmatprep.mubr.f32.mxu0 0.0
    %3948 = vmatmul.mubr.f32.gmra.mxu0 %v3881
    %v3949 = vpop.f32.mrf.mxu0
    %v3950 = vadd.f32 %v3878, %v3949
    %v3951 = vpop.f32.mrf.mxu0
    %3952 = vdwg.mxu0
    %3953 = vst [vmem:[#allocation3] sm:$0xff] %v3950
    %s3954 = scalar_lea.vmem %s6, 5
    %v3955 = vld [vmem:[%s3954] sm:$0x1]
    %v3957 = vlaneseq
    %v3958 = vshrl.u32 %v3957, 7
    %v3959 = vsub.s32 0, %v3958
    %v3960 = vrot.slane %v3955, %v3959
    %v3963 = vsel %vm202, %v3861, 0
    %3965 = vmatprep.subr.mxu0 0.0
    %3966 = vmatpush1.msra.mxu0 0.0
    %3967 = vmatprep.subr.mxu0 0.0
    %3968 = vmatpush1.msra.mxu0 0.0
    %3969 = vmatprep.subr.mxu0 0.0
    %3970 = vmatpush1.msra.mxu0 0.0
    %3971 = vmatprep.subr.mxu0 0.0
    %3972 = vmatpush1.msra.mxu0 0.0
    %3973 = vmatprep.subr.mxu0 0.0
    %3974 = vmatpush1.msra.mxu0 0.0
    %3975 = vmatprep.subr.mxu0 0.0
    %3976 = vmatpush1.msra.mxu0 0.0
    %3977 = vmatprep.subr.mxu0 0.0
    %3978 = vmatpush1.msra.mxu0 0.0
    %3979 = vmatprep.subr.mxu0 0.0
    %3980 = vmatpush1.msra.mxu0 0.0
    %3981 = vmatprep.subr.mxu0 0.0
    %3982 = vmatpush1.msra.mxu0 0.0
    %3983 = vmatprep.subr.mxu0 0.0
    %3984 = vmatpush1.msra.mxu0 0.0
    %3985 = vmatprep.subr.mxu0 0.0
    %3986 = vmatpush1.msra.mxu0 0.0
    %3987 = vmatprep.subr.mxu0 0.0
    %3988 = vmatpush1.msra.mxu0 0.0
    %3989 = vmatprep.subr.mxu0 0.0
    %3990 = vmatpush1.msra.mxu0 %v3871
    %3991 = vmatprep.subr.mxu0 0.0
    %3992 = vmatpush1.msra.mxu0 %v3870
    %3993 = vmatprep.subr.mxu0 0.0
    %3994 = vmatpush1.msra.mxu0 %v3869
    %3995 = vmatprep.subr.mxu0 0.0
    %3996 = vmatpush1.msra.mxu0 %v3868
    %3997 = vmatprep.subr.mxu0 0.0
    %3998 = vmatpush2.msra.mxu0 0.0
    %3999 = vmatprep.subr.mxu0 0.0
    %4000 = vmatpush2.msra.mxu0 0.0
    %4001 = vmatprep.subr.mxu0 0.0
    %4002 = vmatpush2.msra.mxu0 0.0
    %4003 = vmatprep.subr.mxu0 0.0
    %4004 = vmatpush2.msra.mxu0 0.0
    %4005 = vmatprep.subr.mxu0 0.0
    %4006 = vmatpush2.msra.mxu0 0.0
    %4007 = vmatprep.subr.mxu0 0.0
    %4008 = vmatpush2.msra.mxu0 0.0
    %4009 = vmatprep.subr.mxu0 0.0
    %4010 = vmatpush2.msra.mxu0 0.0
    %4011 = vmatprep.subr.mxu0 0.0
    %4012 = vmatpush2.msra.mxu0 0.0
    %4013 = vmatprep.subr.mxu0 0.0
    %4014 = vmatpush2.msra.mxu0 0.0
    %4015 = vmatprep.subr.mxu0 0.0
    %4016 = vmatpush2.msra.mxu0 0.0
    %4017 = vmatprep.subr.mxu0 0.0
    %4018 = vmatpush2.msra.mxu0 0.0
    %4019 = vmatprep.subr.mxu0 0.0
    %4020 = vmatpush2.msra.mxu0 0.0
    %4021 = vmatprep.subr.mxu0 0.0
    %4022 = vmatpush2.msra.mxu0 0.0
    %4023 = vmatprep.subr.mxu0 0.0
    %4024 = vmatpush2.msra.mxu0 0.0
    %4025 = vmatprep.subr.mxu0 0.0
    %4026 = vmatpush2.msra.mxu0 0.0
    %4027 = vmatprep.subr.mxu0 0.0
    %4028 = vmatpush2.msra.mxu0 0.0
    %4029 = vmatprep.mubr.f32.mxu0 0.0
    %4030 = vmatmul.mubr.f32.gmra.mxu0 %v3963
    %v4031 = vpop.f32.mrf.mxu0
    %v4032 = vadd.f32 %v3960, %v4031
    %v4033 = vpop.f32.mrf.mxu0
    %4034 = vdwg.mxu0
    %4035 = vst [vmem:[#allocation4] sm:$0xff] %v4032
    %s4036 = scalar_lea.vmem [#allocation14], 64
    %v4037 = vld [vmem:[%s4036] sm:$0xff]
    %v4038 = vld [vmem:[%s4036 + $0x8] sm:$0xff]
    %v4039 = vld [vmem:[%s4036 + $0x10] sm:$0xff]
    %v4040 = vld [vmem:[%s4036 + $0x18] sm:$0xff]
    %s4041 = scalar_lea.vmem [#allocation14], 160
    %v4042 = vld [vmem:[%s4041] sm:$0xff]
    %v4043 = vld [vmem:[%s4041 + $0x8] sm:$0xff]
    %v4044 = vld [vmem:[%s4041 + $0x10] sm:$0xff]
    %v4045 = vld [vmem:[%s4041 + $0x18] sm:$0xff]
    %v4046 = vld [vmem:[#allocation3] sm:$0x1]
    %4047 = vmatprep.subr.mxu0 0.0
    %4048 = vmatpush1.msra.mxu0 0.0
    %4049 = vmatprep.subr.mxu0 0.0
    %4050 = vmatpush1.msra.mxu0 0.0
    %4051 = vmatprep.subr.mxu0 0.0
    %4052 = vmatpush1.msra.mxu0 0.0
    %4053 = vmatprep.subr.mxu0 0.0
    %4054 = vmatpush1.msra.mxu0 0.0
    %4055 = vmatprep.subr.mxu0 0.0
    %4056 = vmatpush1.msra.mxu0 0.0
    %4057 = vmatprep.subr.mxu0 0.0
    %4058 = vmatpush1.msra.mxu0 0.0
    %4059 = vmatprep.subr.mxu0 0.0
    %4060 = vmatpush1.msra.mxu0 0.0
    %4061 = vmatprep.subr.mxu0 0.0
    %4062 = vmatpush1.msra.mxu0 0.0
    %4063 = vmatprep.subr.mxu0 0.0
    %4064 = vmatpush1.msra.mxu0 0.0
    %4065 = vmatprep.subr.mxu0 0.0
    %4066 = vmatpush1.msra.mxu0 0.0
    %4067 = vmatprep.subr.mxu0 0.0
    %4068 = vmatpush1.msra.mxu0 0.0
    %4069 = vmatprep.subr.mxu0 0.0
    %4070 = vmatpush1.msra.mxu0 0.0
    %4071 = vmatprep.subr.mxu0 0.0
    %4072 = vmatpush1.msra.mxu0 %v4040
    %4073 = vmatprep.subr.mxu0 0.0
    %4074 = vmatpush1.msra.mxu0 %v4039
    %4075 = vmatprep.subr.mxu0 0.0
    %4076 = vmatpush1.msra.mxu0 %v4038
    %4077 = vmatprep.subr.mxu0 0.0
    %4078 = vmatpush1.msra.mxu0 %v4037
    %4079 = vmatprep.subr.mxu0 0.0
    %4080 = vmatpush2.msra.mxu0 0.0
    %4081 = vmatprep.subr.mxu0 0.0
    %4082 = vmatpush2.msra.mxu0 0.0
    %4083 = vmatprep.subr.mxu0 0.0
    %4084 = vmatpush2.msra.mxu0 0.0
    %4085 = vmatprep.subr.mxu0 0.0
    %4086 = vmatpush2.msra.mxu0 0.0
    %4087 = vmatprep.subr.mxu0 0.0
    %4088 = vmatpush2.msra.mxu0 0.0
    %4089 = vmatprep.subr.mxu0 0.0
    %4090 = vmatpush2.msra.mxu0 0.0
    %4091 = vmatprep.subr.mxu0 0.0
    %4092 = vmatpush2.msra.mxu0 0.0
    %4093 = vmatprep.subr.mxu0 0.0
    %4094 = vmatpush2.msra.mxu0 0.0
    %4095 = vmatprep.subr.mxu0 0.0
    %4096 = vmatpush2.msra.mxu0 0.0
    %4097 = vmatprep.subr.mxu0 0.0
    %4098 = vmatpush2.msra.mxu0 0.0
    %4099 = vmatprep.subr.mxu0 0.0
    %4100 = vmatpush2.msra.mxu0 0.0
    %4101 = vmatprep.subr.mxu0 0.0
    %4102 = vmatpush2.msra.mxu0 0.0
    %4103 = vmatprep.subr.mxu0 0.0
    %4104 = vmatpush2.msra.mxu0 0.0
    %4105 = vmatprep.subr.mxu0 0.0
    %4106 = vmatpush2.msra.mxu0 0.0
    %4107 = vmatprep.subr.mxu0 0.0
    %4108 = vmatpush2.msra.mxu0 0.0
    %4109 = vmatprep.subr.mxu0 0.0
    %4110 = vmatpush2.msra.mxu0 0.0
    %4111 = vmatprep.mubr.f32.mxu0 0.0
    %4112 = vmatmul.mubr.f32.gmra.mxu0 %v385
    %v4113 = vpop.f32.mrf.mxu0
    %v4114 = vadd.f32 0.0, %v4113
    %v4115 = vpop.f32.mrf.mxu0
    %4116 = vdwg.mxu0
    %v4117 = vadd.f32 %v4046, %v4114
    %v4118 = vld [vmem:[#allocation4] sm:$0x1]
    %4119 = vmatprep.subr.mxu0 0.0
    %4120 = vmatpush1.msra.mxu0 0.0
    %4121 = vmatprep.subr.mxu0 0.0
    %4122 = vmatpush1.msra.mxu0 0.0
    %4123 = vmatprep.subr.mxu0 0.0
    %4124 = vmatpush1.msra.mxu0 0.0
    %4125 = vmatprep.subr.mxu0 0.0
    %4126 = vmatpush1.msra.mxu0 0.0
    %4127 = vmatprep.subr.mxu0 0.0
    %4128 = vmatpush1.msra.mxu0 0.0
    %4129 = vmatprep.subr.mxu0 0.0
    %4130 = vmatpush1.msra.mxu0 0.0
    %4131 = vmatprep.subr.mxu0 0.0
    %4132 = vmatpush1.msra.mxu0 0.0
    %4133 = vmatprep.subr.mxu0 0.0
    %4134 = vmatpush1.msra.mxu0 0.0
    %4135 = vmatprep.subr.mxu0 0.0
    %4136 = vmatpush1.msra.mxu0 0.0
    %4137 = vmatprep.subr.mxu0 0.0
    %4138 = vmatpush1.msra.mxu0 0.0
    %4139 = vmatprep.subr.mxu0 0.0
    %4140 = vmatpush1.msra.mxu0 0.0
    %4141 = vmatprep.subr.mxu0 0.0
    %4142 = vmatpush1.msra.mxu0 0.0
    %4143 = vmatprep.subr.mxu0 0.0
    %4144 = vmatpush1.msra.mxu0 %v4045
    %4145 = vmatprep.subr.mxu0 0.0
    %4146 = vmatpush1.msra.mxu0 %v4044
    %4147 = vmatprep.subr.mxu0 0.0
    %4148 = vmatpush1.msra.mxu0 %v4043
    %4149 = vmatprep.subr.mxu0 0.0
    %4150 = vmatpush1.msra.mxu0 %v4042
    %4151 = vmatprep.subr.mxu0 0.0
    %4152 = vmatpush2.msra.mxu0 0.0
    %4153 = vmatprep.subr.mxu0 0.0
    %4154 = vmatpush2.msra.mxu0 0.0
    %4155 = vmatprep.subr.mxu0 0.0
    %4156 = vmatpush2.msra.mxu0 0.0
    %4157 = vmatprep.subr.mxu0 0.0
    %4158 = vmatpush2.msra.mxu0 0.0
    %4159 = vmatprep.subr.mxu0 0.0
    %4160 = vmatpush2.msra.mxu0 0.0
    %4161 = vmatprep.subr.mxu0 0.0
    %4162 = vmatpush2.msra.mxu0 0.0
    %4163 = vmatprep.subr.mxu0 0.0
    %4164 = vmatpush2.msra.mxu0 0.0
    %4165 = vmatprep.subr.mxu0 0.0
    %4166 = vmatpush2.msra.mxu0 0.0
    %4167 = vmatprep.subr.mxu0 0.0
    %4168 = vmatpush2.msra.mxu0 0.0
    %4169 = vmatprep.subr.mxu0 0.0
    %4170 = vmatpush2.msra.mxu0 0.0
    %4171 = vmatprep.subr.mxu0 0.0
    %4172 = vmatpush2.msra.mxu0 0.0
    %4173 = vmatprep.subr.mxu0 0.0
    %4174 = vmatpush2.msra.mxu0 0.0
    %4175 = vmatprep.subr.mxu0 0.0
    %4176 = vmatpush2.msra.mxu0 0.0
    %4177 = vmatprep.subr.mxu0 0.0
    %4178 = vmatpush2.msra.mxu0 0.0
    %4179 = vmatprep.subr.mxu0 0.0
    %4180 = vmatpush2.msra.mxu0 0.0
    %4181 = vmatprep.subr.mxu0 0.0
    %4182 = vmatpush2.msra.mxu0 0.0
    %4183 = vmatprep.mubr.f32.mxu0 0.0
    %4184 = vmatmul.mubr.f32.gmra.mxu0 %v385
    %v4185 = vpop.f32.mrf.mxu0
    %v4186 = vadd.f32 0.0, %v4185
    %v4187 = vpop.f32.mrf.mxu0
    %4188 = vdwg.mxu0
    %v4189 = vadd.f32 %v4118, %v4186
    %v4190 = vxor.u32 %v4117, 2147483648
    %v4191 = vmul.f32 %v4190, 1.442695
    %v4192 = vpow.pop %v4191
    %v4193 = vadd.f32 %v4192, 1.0
    %v4194 = vrcp.pop %v4193
    %v4195 = vmul.f32 1.0, %v4194
    %v4196 = vtanh.pop %v4117
    %v4197 = vxor.u32 %v4189, 2147483648
    %v4198 = vmul.f32 %v4197, 1.442695
    %v4199 = vpow.pop %v4198
    %v4200 = vadd.f32 %v4199, 1.0
    %v4201 = vrcp.pop %v4200
    %v4202 = vmul.f32 1.0, %v4201
    %v4203 = vtanh.pop %v4189
    %v4204 = vmul.f32 %v4195, 0.0
    %4206 = vrot.lane.b32.xlu0 %v4196, 64
    %v4207 = vpop.permute.xlu0 %4206
    %v4209 = vmul.f32 %v4195, %v4207
    %4211 = vrot.lane.b32.xlu0 %v4209, 32
    %v4212 = vpop.permute.xlu0 %4211
    %v4214 = vadd.f32 %v4204, %v4212
    %v4215 = vmul.f32 %v4202, 0.0
    %4217 = vrot.lane.b32.xlu0 %v4203, 64
    %v4218 = vpop.permute.xlu0 %4217
    %v4220 = vmul.f32 %v4202, %v4218
    %4222 = vrot.lane.b32.xlu0 %v4220, 32
    %v4223 = vpop.permute.xlu0 %4222
    %v4225 = vadd.f32 %v4215, %v4223
    %v4226 = vtanh.pop %v4214
    %4228 = vrot.lane.b32.xlu0 %v4226, 64
    %v4229 = vpop.permute.xlu0 %4228
    %v4231 = vmul.f32 %v4195, %v4229
    %v4232 = vtanh.pop %v4225
    %4234 = vrot.lane.b32.xlu0 %v4232, 64
    %v4235 = vpop.permute.xlu0 %4234
    %v4237 = vmul.f32 %v4202, %v4235
    %4239 = vrot.lane.b32.xlu0 %v4231, 32
    %v4240 = vpop.permute.xlu0 %4239
    %4242 = vst.msk [vmem:[#allocation5] sm:$0x1] %vm582, %v4240
    %4244 = vrot.lane.b32.xlu0 %v4237, 32
    %v4245 = vpop.permute.xlu0 %4244
    %4247 = vst.msk [vmem:[#allocation6] sm:$0x1] %vm582, %v4245
    %v4248 = vld [vmem:[#allocation3 + $0x1] sm:$0x1]
    %v4249 = vsel %vm202, %v4240, 0
    %4251 = vmatprep.subr.mxu0 0.0
    %4252 = vmatpush1.msra.mxu0 0.0
    %4253 = vmatprep.subr.mxu0 0.0
    %4254 = vmatpush1.msra.mxu0 0.0
    %4255 = vmatprep.subr.mxu0 0.0
    %4256 = vmatpush1.msra.mxu0 0.0
    %4257 = vmatprep.subr.mxu0 0.0
    %4258 = vmatpush1.msra.mxu0 0.0
    %4259 = vmatprep.subr.mxu0 0.0
    %4260 = vmatpush1.msra.mxu0 0.0
    %4261 = vmatprep.subr.mxu0 0.0
    %4262 = vmatpush1.msra.mxu0 0.0
    %4263 = vmatprep.subr.mxu0 0.0
    %4264 = vmatpush1.msra.mxu0 0.0
    %4265 = vmatprep.subr.mxu0 0.0
    %4266 = vmatpush1.msra.mxu0 0.0
    %4267 = vmatprep.subr.mxu0 0.0
    %4268 = vmatpush1.msra.mxu0 0.0
    %4269 = vmatprep.subr.mxu0 0.0
    %4270 = vmatpush1.msra.mxu0 0.0
    %4271 = vmatprep.subr.mxu0 0.0
    %4272 = vmatpush1.msra.mxu0 0.0
    %4273 = vmatprep.subr.mxu0 0.0
    %4274 = vmatpush1.msra.mxu0 0.0
    %4275 = vmatprep.subr.mxu0 0.0
    %4276 = vmatpush1.msra.mxu0 %v4040
    %4277 = vmatprep.subr.mxu0 0.0
    %4278 = vmatpush1.msra.mxu0 %v4039
    %4279 = vmatprep.subr.mxu0 0.0
    %4280 = vmatpush1.msra.mxu0 %v4038
    %4281 = vmatprep.subr.mxu0 0.0
    %4282 = vmatpush1.msra.mxu0 %v4037
    %4283 = vmatprep.subr.mxu0 0.0
    %4284 = vmatpush2.msra.mxu0 0.0
    %4285 = vmatprep.subr.mxu0 0.0
    %4286 = vmatpush2.msra.mxu0 0.0
    %4287 = vmatprep.subr.mxu0 0.0
    %4288 = vmatpush2.msra.mxu0 0.0
    %4289 = vmatprep.subr.mxu0 0.0
    %4290 = vmatpush2.msra.mxu0 0.0
    %4291 = vmatprep.subr.mxu0 0.0
    %4292 = vmatpush2.msra.mxu0 0.0
    %4293 = vmatprep.subr.mxu0 0.0
    %4294 = vmatpush2.msra.mxu0 0.0
    %4295 = vmatprep.subr.mxu0 0.0
    %4296 = vmatpush2.msra.mxu0 0.0
    %4297 = vmatprep.subr.mxu0 0.0
    %4298 = vmatpush2.msra.mxu0 0.0
    %4299 = vmatprep.subr.mxu0 0.0
    %4300 = vmatpush2.msra.mxu0 0.0
    %4301 = vmatprep.subr.mxu0 0.0
    %4302 = vmatpush2.msra.mxu0 0.0
    %4303 = vmatprep.subr.mxu0 0.0
    %4304 = vmatpush2.msra.mxu0 0.0
    %4305 = vmatprep.subr.mxu0 0.0
    %4306 = vmatpush2.msra.mxu0 0.0
    %4307 = vmatprep.subr.mxu0 0.0
    %4308 = vmatpush2.msra.mxu0 0.0
    %4309 = vmatprep.subr.mxu0 0.0
    %4310 = vmatpush2.msra.mxu0 0.0
    %4311 = vmatprep.subr.mxu0 0.0
    %4312 = vmatpush2.msra.mxu0 0.0
    %4313 = vmatprep.subr.mxu0 0.0
    %4314 = vmatpush2.msra.mxu0 0.0
    %4315 = vmatprep.mubr.f32.mxu0 0.0
    %4316 = vmatmul.mubr.f32.gmra.mxu0 %v4249
    %v4317 = vpop.f32.mrf.mxu0
    %v4318 = vadd.f32 0.0, %v4317
    %v4319 = vpop.f32.mrf.mxu0
    %4320 = vdwg.mxu0
    %v4321 = vadd.f32 %v4248, %v4318
    %v4322 = vld [vmem:[#allocation4 + $0x1] sm:$0x1]
    %v4323 = vsel %vm202, %v4245, 0
    %4325 = vmatprep.subr.mxu0 0.0
    %4326 = vmatpush1.msra.mxu0 0.0
    %4327 = vmatprep.subr.mxu0 0.0
    %4328 = vmatpush1.msra.mxu0 0.0
    %4329 = vmatprep.subr.mxu0 0.0
    %4330 = vmatpush1.msra.mxu0 0.0
    %4331 = vmatprep.subr.mxu0 0.0
    %4332 = vmatpush1.msra.mxu0 0.0
    %4333 = vmatprep.subr.mxu0 0.0
    %4334 = vmatpush1.msra.mxu0 0.0
    %4335 = vmatprep.subr.mxu0 0.0
    %4336 = vmatpush1.msra.mxu0 0.0
    %4337 = vmatprep.subr.mxu0 0.0
    %4338 = vmatpush1.msra.mxu0 0.0
    %4339 = vmatprep.subr.mxu0 0.0
    %4340 = vmatpush1.msra.mxu0 0.0
    %4341 = vmatprep.subr.mxu0 0.0
    %4342 = vmatpush1.msra.mxu0 0.0
    %4343 = vmatprep.subr.mxu0 0.0
    %4344 = vmatpush1.msra.mxu0 0.0
    %4345 = vmatprep.subr.mxu0 0.0
    %4346 = vmatpush1.msra.mxu0 0.0
    %4347 = vmatprep.subr.mxu0 0.0
    %4348 = vmatpush1.msra.mxu0 0.0
    %4349 = vmatprep.subr.mxu0 0.0
    %4350 = vmatpush1.msra.mxu0 %v4045
    %4351 = vmatprep.subr.mxu0 0.0
    %4352 = vmatpush1.msra.mxu0 %v4044
    %4353 = vmatprep.subr.mxu0 0.0
    %4354 = vmatpush1.msra.mxu0 %v4043
    %4355 = vmatprep.subr.mxu0 0.0
    %4356 = vmatpush1.msra.mxu0 %v4042
    %4357 = vmatprep.subr.mxu0 0.0
    %4358 = vmatpush2.msra.mxu0 0.0
    %4359 = vmatprep.subr.mxu0 0.0
    %4360 = vmatpush2.msra.mxu0 0.0
    %4361 = vmatprep.subr.mxu0 0.0
    %4362 = vmatpush2.msra.mxu0 0.0
    %4363 = vmatprep.subr.mxu0 0.0
    %4364 = vmatpush2.msra.mxu0 0.0
    %4365 = vmatprep.subr.mxu0 0.0
    %4366 = vmatpush2.msra.mxu0 0.0
    %4367 = vmatprep.subr.mxu0 0.0
    %4368 = vmatpush2.msra.mxu0 0.0
    %4369 = vmatprep.subr.mxu0 0.0
    %4370 = vmatpush2.msra.mxu0 0.0
    %4371 = vmatprep.subr.mxu0 0.0
    %4372 = vmatpush2.msra.mxu0 0.0
    %4373 = vmatprep.subr.mxu0 0.0
    %4374 = vmatpush2.msra.mxu0 0.0
    %4375 = vmatprep.subr.mxu0 0.0
    %4376 = vmatpush2.msra.mxu0 0.0
    %4377 = vmatprep.subr.mxu0 0.0
    %4378 = vmatpush2.msra.mxu0 0.0
    %4379 = vmatprep.subr.mxu0 0.0
    %4380 = vmatpush2.msra.mxu0 0.0
    %4381 = vmatprep.subr.mxu0 0.0
    %4382 = vmatpush2.msra.mxu0 0.0
    %4383 = vmatprep.subr.mxu0 0.0
    %4384 = vmatpush2.msra.mxu0 0.0
    %4385 = vmatprep.subr.mxu0 0.0
    %4386 = vmatpush2.msra.mxu0 0.0
    %4387 = vmatprep.subr.mxu0 0.0
    %4388 = vmatpush2.msra.mxu0 0.0
    %4389 = vmatprep.mubr.f32.mxu0 0.0
    %4390 = vmatmul.mubr.f32.gmra.mxu0 %v4323
    %v4391 = vpop.f32.mrf.mxu0
    %v4392 = vadd.f32 0.0, %v4391
    %v4393 = vpop.f32.mrf.mxu0
    %4394 = vdwg.mxu0
    %v4395 = vadd.f32 %v4322, %v4392
    %v4396 = vxor.u32 %v4321, 2147483648
    %v4397 = vmul.f32 %v4396, 1.442695
    %v4398 = vpow.pop %v4397
    %v4399 = vadd.f32 %v4398, 1.0
    %v4400 = vrcp.pop %v4399
    %v4401 = vmul.f32 1.0, %v4400
    %v4402 = vtanh.pop %v4321
    %v4403 = vxor.u32 %v4395, 2147483648
    %v4404 = vmul.f32 %v4403, 1.442695
    %v4405 = vpow.pop %v4404
    %v4406 = vadd.f32 %v4405, 1.0
    %v4407 = vrcp.pop %v4406
    %v4408 = vmul.f32 1.0, %v4407
    %v4409 = vtanh.pop %v4395
    %v4410 = vmul.f32 %v4401, %v4214
    %4412 = vrot.lane.b32.xlu0 %v4402, 64
    %v4413 = vpop.permute.xlu0 %4412
    %v4415 = vmul.f32 %v4401, %v4413
    %4417 = vrot.lane.b32.xlu0 %v4415, 32
    %v4418 = vpop.permute.xlu0 %4417
    %v4420 = vadd.f32 %v4410, %v4418
    %v4421 = vmul.f32 %v4408, %v4225
    %4423 = vrot.lane.b32.xlu0 %v4409, 64
    %v4424 = vpop.permute.xlu0 %4423
    %v4426 = vmul.f32 %v4408, %v4424
    %4428 = vrot.lane.b32.xlu0 %v4426, 32
    %v4429 = vpop.permute.xlu0 %4428
    %v4431 = vadd.f32 %v4421, %v4429
    %v4432 = vtanh.pop %v4420
    %4434 = vrot.lane.b32.xlu0 %v4432, 64
    %v4435 = vpop.permute.xlu0 %4434
    %v4437 = vmul.f32 %v4401, %v4435
    %v4438 = vtanh.pop %v4431
    %4440 = vrot.lane.b32.xlu0 %v4438, 64
    %v4441 = vpop.permute.xlu0 %4440
    %v4443 = vmul.f32 %v4408, %v4441
    %4445 = vrot.lane.b32.xlu0 %v4437, 32
    %v4446 = vpop.permute.xlu0 %4445
    %4448 = vst.msk [vmem:[#allocation5 + $0x1] sm:$0x1] %vm582, %v4446
    %4450 = vrot.lane.b32.xlu0 %v4443, 32
    %v4451 = vpop.permute.xlu0 %4450
    %4453 = vst.msk [vmem:[#allocation6 + $0x1] sm:$0x1] %vm582, %v4451
    %v4454 = vld [vmem:[#allocation3 + $0x2] sm:$0x1]
    %v4455 = vsel %vm202, %v4446, 0
    %4457 = vmatprep.subr.mxu0 0.0
    %4458 = vmatpush1.msra.mxu0 0.0
    %4459 = vmatprep.subr.mxu0 0.0
    %4460 = vmatpush1.msra.mxu0 0.0
    %4461 = vmatprep.subr.mxu0 0.0
    %4462 = vmatpush1.msra.mxu0 0.0
    %4463 = vmatprep.subr.mxu0 0.0
    %4464 = vmatpush1.msra.mxu0 0.0
    %4465 = vmatprep.subr.mxu0 0.0
    %4466 = vmatpush1.msra.mxu0 0.0
    %4467 = vmatprep.subr.mxu0 0.0
    %4468 = vmatpush1.msra.mxu0 0.0
    %4469 = vmatprep.subr.mxu0 0.0
    %4470 = vmatpush1.msra.mxu0 0.0
    %4471 = vmatprep.subr.mxu0 0.0
    %4472 = vmatpush1.msra.mxu0 0.0
    %4473 = vmatprep.subr.mxu0 0.0
    %4474 = vmatpush1.msra.mxu0 0.0
    %4475 = vmatprep.subr.mxu0 0.0
    %4476 = vmatpush1.msra.mxu0 0.0
    %4477 = vmatprep.subr.mxu0 0.0
    %4478 = vmatpush1.msra.mxu0 0.0
    %4479 = vmatprep.subr.mxu0 0.0
    %4480 = vmatpush1.msra.mxu0 0.0
    %4481 = vmatprep.subr.mxu0 0.0
    %4482 = vmatpush1.msra.mxu0 %v4040
    %4483 = vmatprep.subr.mxu0 0.0
    %4484 = vmatpush1.msra.mxu0 %v4039
    %4485 = vmatprep.subr.mxu0 0.0
    %4486 = vmatpush1.msra.mxu0 %v4038
    %4487 = vmatprep.subr.mxu0 0.0
    %4488 = vmatpush1.msra.mxu0 %v4037
    %4489 = vmatprep.subr.mxu0 0.0
    %4490 = vmatpush2.msra.mxu0 0.0
    %4491 = vmatprep.subr.mxu0 0.0
    %4492 = vmatpush2.msra.mxu0 0.0
    %4493 = vmatprep.subr.mxu0 0.0
    %4494 = vmatpush2.msra.mxu0 0.0
    %4495 = vmatprep.subr.mxu0 0.0
    %4496 = vmatpush2.msra.mxu0 0.0
    %4497 = vmatprep.subr.mxu0 0.0
    %4498 = vmatpush2.msra.mxu0 0.0
    %4499 = vmatprep.subr.mxu0 0.0
    %4500 = vmatpush2.msra.mxu0 0.0
    %4501 = vmatprep.subr.mxu0 0.0
    %4502 = vmatpush2.msra.mxu0 0.0
    %4503 = vmatprep.subr.mxu0 0.0
    %4504 = vmatpush2.msra.mxu0 0.0
    %4505 = vmatprep.subr.mxu0 0.0
    %4506 = vmatpush2.msra.mxu0 0.0
    %4507 = vmatprep.subr.mxu0 0.0
    %4508 = vmatpush2.msra.mxu0 0.0
    %4509 = vmatprep.subr.mxu0 0.0
    %4510 = vmatpush2.msra.mxu0 0.0
    %4511 = vmatprep.subr.mxu0 0.0
    %4512 = vmatpush2.msra.mxu0 0.0
    %4513 = vmatprep.subr.mxu0 0.0
    %4514 = vmatpush2.msra.mxu0 0.0
    %4515 = vmatprep.subr.mxu0 0.0
    %4516 = vmatpush2.msra.mxu0 0.0
    %4517 = vmatprep.subr.mxu0 0.0
    %4518 = vmatpush2.msra.mxu0 0.0
    %4519 = vmatprep.subr.mxu0 0.0
    %4520 = vmatpush2.msra.mxu0 0.0
    %4521 = vmatprep.mubr.f32.mxu0 0.0
    %4522 = vmatmul.mubr.f32.gmra.mxu0 %v4455
    %v4523 = vpop.f32.mrf.mxu0
    %v4524 = vadd.f32 0.0, %v4523
    %v4525 = vpop.f32.mrf.mxu0
    %4526 = vdwg.mxu0
    %v4527 = vadd.f32 %v4454, %v4524
    %v4528 = vld [vmem:[#allocation4 + $0x2] sm:$0x1]
    %v4529 = vsel %vm202, %v4451, 0
    %4531 = vmatprep.subr.mxu0 0.0
    %4532 = vmatpush1.msra.mxu0 0.0
    %4533 = vmatprep.subr.mxu0 0.0
    %4534 = vmatpush1.msra.mxu0 0.0
    %4535 = vmatprep.subr.mxu0 0.0
    %4536 = vmatpush1.msra.mxu0 0.0
    %4537 = vmatprep.subr.mxu0 0.0
    %4538 = vmatpush1.msra.mxu0 0.0
    %4539 = vmatprep.subr.mxu0 0.0
    %4540 = vmatpush1.msra.mxu0 0.0
    %4541 = vmatprep.subr.mxu0 0.0
    %4542 = vmatpush1.msra.mxu0 0.0
    %4543 = vmatprep.subr.mxu0 0.0
    %4544 = vmatpush1.msra.mxu0 0.0
    %4545 = vmatprep.subr.mxu0 0.0
    %4546 = vmatpush1.msra.mxu0 0.0
    %4547 = vmatprep.subr.mxu0 0.0
    %4548 = vmatpush1.msra.mxu0 0.0
    %4549 = vmatprep.subr.mxu0 0.0
    %4550 = vmatpush1.msra.mxu0 0.0
    %4551 = vmatprep.subr.mxu0 0.0
    %4552 = vmatpush1.msra.mxu0 0.0
    %4553 = vmatprep.subr.mxu0 0.0
    %4554 = vmatpush1.msra.mxu0 0.0
    %4555 = vmatprep.subr.mxu0 0.0
    %4556 = vmatpush1.msra.mxu0 %v4045
    %4557 = vmatprep.subr.mxu0 0.0
    %4558 = vmatpush1.msra.mxu0 %v4044
    %4559 = vmatprep.subr.mxu0 0.0
    %4560 = vmatpush1.msra.mxu0 %v4043
    %4561 = vmatprep.subr.mxu0 0.0
    %4562 = vmatpush1.msra.mxu0 %v4042
    %4563 = vmatprep.subr.mxu0 0.0
    %4564 = vmatpush2.msra.mxu0 0.0
    %4565 = vmatprep.subr.mxu0 0.0
    %4566 = vmatpush2.msra.mxu0 0.0
    %4567 = vmatprep.subr.mxu0 0.0
    %4568 = vmatpush2.msra.mxu0 0.0
    %4569 = vmatprep.subr.mxu0 0.0
    %4570 = vmatpush2.msra.mxu0 0.0
    %4571 = vmatprep.subr.mxu0 0.0
    %4572 = vmatpush2.msra.mxu0 0.0
    %4573 = vmatprep.subr.mxu0 0.0
    %4574 = vmatpush2.msra.mxu0 0.0
    %4575 = vmatprep.subr.mxu0 0.0
    %4576 = vmatpush2.msra.mxu0 0.0
    %4577 = vmatprep.subr.mxu0 0.0
    %4578 = vmatpush2.msra.mxu0 0.0
    %4579 = vmatprep.subr.mxu0 0.0
    %4580 = vmatpush2.msra.mxu0 0.0
    %4581 = vmatprep.subr.mxu0 0.0
    %4582 = vmatpush2.msra.mxu0 0.0
    %4583 = vmatprep.subr.mxu0 0.0
    %4584 = vmatpush2.msra.mxu0 0.0
    %4585 = vmatprep.subr.mxu0 0.0
    %4586 = vmatpush2.msra.mxu0 0.0
    %4587 = vmatprep.subr.mxu0 0.0
    %4588 = vmatpush2.msra.mxu0 0.0
    %4589 = vmatprep.subr.mxu0 0.0
    %4590 = vmatpush2.msra.mxu0 0.0
    %4591 = vmatprep.subr.mxu0 0.0
    %4592 = vmatpush2.msra.mxu0 0.0
    %4593 = vmatprep.subr.mxu0 0.0
    %4594 = vmatpush2.msra.mxu0 0.0
    %4595 = vmatprep.mubr.f32.mxu0 0.0
    %4596 = vmatmul.mubr.f32.gmra.mxu0 %v4529
    %v4597 = vpop.f32.mrf.mxu0
    %v4598 = vadd.f32 0.0, %v4597
    %v4599 = vpop.f32.mrf.mxu0
    %4600 = vdwg.mxu0
    %v4601 = vadd.f32 %v4528, %v4598
    %v4602 = vxor.u32 %v4527, 2147483648
    %v4603 = vmul.f32 %v4602, 1.442695
    %v4604 = vpow.pop %v4603
    %v4605 = vadd.f32 %v4604, 1.0
    %v4606 = vrcp.pop %v4605
    %v4607 = vmul.f32 1.0, %v4606
    %v4608 = vtanh.pop %v4527
    %v4609 = vxor.u32 %v4601, 2147483648
    %v4610 = vmul.f32 %v4609, 1.442695
    %v4611 = vpow.pop %v4610
    %v4612 = vadd.f32 %v4611, 1.0
    %v4613 = vrcp.pop %v4612
    %v4614 = vmul.f32 1.0, %v4613
    %v4615 = vtanh.pop %v4601
    %v4616 = vmul.f32 %v4607, %v4420
    %4618 = vrot.lane.b32.xlu0 %v4608, 64
    %v4619 = vpop.permute.xlu0 %4618
    %v4621 = vmul.f32 %v4607, %v4619
    %4623 = vrot.lane.b32.xlu0 %v4621, 32
    %v4624 = vpop.permute.xlu0 %4623
    %v4626 = vadd.f32 %v4616, %v4624
    %v4627 = vmul.f32 %v4614, %v4431
    %4629 = vrot.lane.b32.xlu0 %v4615, 64
    %v4630 = vpop.permute.xlu0 %4629
    %v4632 = vmul.f32 %v4614, %v4630
    %4634 = vrot.lane.b32.xlu0 %v4632, 32
    %v4635 = vpop.permute.xlu0 %4634
    %v4637 = vadd.f32 %v4627, %v4635
    %v4638 = vtanh.pop %v4626
    %4640 = vrot.lane.b32.xlu0 %v4638, 64
    %v4641 = vpop.permute.xlu0 %4640
    %v4643 = vmul.f32 %v4607, %v4641
    %v4644 = vtanh.pop %v4637
    %4646 = vrot.lane.b32.xlu0 %v4644, 64
    %v4647 = vpop.permute.xlu0 %4646
    %v4649 = vmul.f32 %v4614, %v4647
    %4651 = vrot.lane.b32.xlu0 %v4643, 32
    %v4652 = vpop.permute.xlu0 %4651
    %4654 = vst.msk [vmem:[#allocation5 + $0x2] sm:$0x1] %vm582, %v4652
    %4656 = vrot.lane.b32.xlu0 %v4649, 32
    %v4657 = vpop.permute.xlu0 %4656
    %4659 = vst.msk [vmem:[#allocation6 + $0x2] sm:$0x1] %vm582, %v4657
    %v4660 = vld [vmem:[#allocation3 + $0x3] sm:$0x1]
    %v4661 = vsel %vm202, %v4652, 0
    %4663 = vmatprep.subr.mxu0 0.0
    %4664 = vmatpush1.msra.mxu0 0.0
    %4665 = vmatprep.subr.mxu0 0.0
    %4666 = vmatpush1.msra.mxu0 0.0
    %4667 = vmatprep.subr.mxu0 0.0
    %4668 = vmatpush1.msra.mxu0 0.0
    %4669 = vmatprep.subr.mxu0 0.0
    %4670 = vmatpush1.msra.mxu0 0.0
    %4671 = vmatprep.subr.mxu0 0.0
    %4672 = vmatpush1.msra.mxu0 0.0
    %4673 = vmatprep.subr.mxu0 0.0
    %4674 = vmatpush1.msra.mxu0 0.0
    %4675 = vmatprep.subr.mxu0 0.0
    %4676 = vmatpush1.msra.mxu0 0.0
    %4677 = vmatprep.subr.mxu0 0.0
    %4678 = vmatpush1.msra.mxu0 0.0
    %4679 = vmatprep.subr.mxu0 0.0
    %4680 = vmatpush1.msra.mxu0 0.0
    %4681 = vmatprep.subr.mxu0 0.0
    %4682 = vmatpush1.msra.mxu0 0.0
    %4683 = vmatprep.subr.mxu0 0.0
    %4684 = vmatpush1.msra.mxu0 0.0
    %4685 = vmatprep.subr.mxu0 0.0
    %4686 = vmatpush1.msra.mxu0 0.0
    %4687 = vmatprep.subr.mxu0 0.0
    %4688 = vmatpush1.msra.mxu0 %v4040
    %4689 = vmatprep.subr.mxu0 0.0
    %4690 = vmatpush1.msra.mxu0 %v4039
    %4691 = vmatprep.subr.mxu0 0.0
    %4692 = vmatpush1.msra.mxu0 %v4038
    %4693 = vmatprep.subr.mxu0 0.0
    %4694 = vmatpush1.msra.mxu0 %v4037
    %4695 = vmatprep.subr.mxu0 0.0
    %4696 = vmatpush2.msra.mxu0 0.0
    %4697 = vmatprep.subr.mxu0 0.0
    %4698 = vmatpush2.msra.mxu0 0.0
    %4699 = vmatprep.subr.mxu0 0.0
    %4700 = vmatpush2.msra.mxu0 0.0
    %4701 = vmatprep.subr.mxu0 0.0
    %4702 = vmatpush2.msra.mxu0 0.0
    %4703 = vmatprep.subr.mxu0 0.0
    %4704 = vmatpush2.msra.mxu0 0.0
    %4705 = vmatprep.subr.mxu0 0.0
    %4706 = vmatpush2.msra.mxu0 0.0
    %4707 = vmatprep.subr.mxu0 0.0
    %4708 = vmatpush2.msra.mxu0 0.0
    %4709 = vmatprep.subr.mxu0 0.0
    %4710 = vmatpush2.msra.mxu0 0.0
    %4711 = vmatprep.subr.mxu0 0.0
    %4712 = vmatpush2.msra.mxu0 0.0
    %4713 = vmatprep.subr.mxu0 0.0
    %4714 = vmatpush2.msra.mxu0 0.0
    %4715 = vmatprep.subr.mxu0 0.0
    %4716 = vmatpush2.msra.mxu0 0.0
    %4717 = vmatprep.subr.mxu0 0.0
    %4718 = vmatpush2.msra.mxu0 0.0
    %4719 = vmatprep.subr.mxu0 0.0
    %4720 = vmatpush2.msra.mxu0 0.0
    %4721 = vmatprep.subr.mxu0 0.0
    %4722 = vmatpush2.msra.mxu0 0.0
    %4723 = vmatprep.subr.mxu0 0.0
    %4724 = vmatpush2.msra.mxu0 0.0
    %4725 = vmatprep.subr.mxu0 0.0
    %4726 = vmatpush2.msra.mxu0 0.0
    %4727 = vmatprep.mubr.f32.mxu0 0.0
    %4728 = vmatmul.mubr.f32.gmra.mxu0 %v4661
    %v4729 = vpop.f32.mrf.mxu0
    %v4730 = vadd.f32 0.0, %v4729
    %v4731 = vpop.f32.mrf.mxu0
    %4732 = vdwg.mxu0
    %v4733 = vadd.f32 %v4660, %v4730
    %v4734 = vld [vmem:[#allocation4 + $0x3] sm:$0x1]
    %v4735 = vsel %vm202, %v4657, 0
    %4737 = vmatprep.subr.mxu0 0.0
    %4738 = vmatpush1.msra.mxu0 0.0
    %4739 = vmatprep.subr.mxu0 0.0
    %4740 = vmatpush1.msra.mxu0 0.0
    %4741 = vmatprep.subr.mxu0 0.0
    %4742 = vmatpush1.msra.mxu0 0.0
    %4743 = vmatprep.subr.mxu0 0.0
    %4744 = vmatpush1.msra.mxu0 0.0
    %4745 = vmatprep.subr.mxu0 0.0
    %4746 = vmatpush1.msra.mxu0 0.0
    %4747 = vmatprep.subr.mxu0 0.0
    %4748 = vmatpush1.msra.mxu0 0.0
    %4749 = vmatprep.subr.mxu0 0.0
    %4750 = vmatpush1.msra.mxu0 0.0
    %4751 = vmatprep.subr.mxu0 0.0
    %4752 = vmatpush1.msra.mxu0 0.0
    %4753 = vmatprep.subr.mxu0 0.0
    %4754 = vmatpush1.msra.mxu0 0.0
    %4755 = vmatprep.subr.mxu0 0.0
    %4756 = vmatpush1.msra.mxu0 0.0
    %4757 = vmatprep.subr.mxu0 0.0
    %4758 = vmatpush1.msra.mxu0 0.0
    %4759 = vmatprep.subr.mxu0 0.0
    %4760 = vmatpush1.msra.mxu0 0.0
    %4761 = vmatprep.subr.mxu0 0.0
    %4762 = vmatpush1.msra.mxu0 %v4045
    %4763 = vmatprep.subr.mxu0 0.0
    %4764 = vmatpush1.msra.mxu0 %v4044
    %4765 = vmatprep.subr.mxu0 0.0
    %4766 = vmatpush1.msra.mxu0 %v4043
    %4767 = vmatprep.subr.mxu0 0.0
    %4768 = vmatpush1.msra.mxu0 %v4042
    %4769 = vmatprep.subr.mxu0 0.0
    %4770 = vmatpush2.msra.mxu0 0.0
    %4771 = vmatprep.subr.mxu0 0.0
    %4772 = vmatpush2.msra.mxu0 0.0
    %4773 = vmatprep.subr.mxu0 0.0
    %4774 = vmatpush2.msra.mxu0 0.0
    %4775 = vmatprep.subr.mxu0 0.0
    %4776 = vmatpush2.msra.mxu0 0.0
    %4777 = vmatprep.subr.mxu0 0.0
    %4778 = vmatpush2.msra.mxu0 0.0
    %4779 = vmatprep.subr.mxu0 0.0
    %4780 = vmatpush2.msra.mxu0 0.0
    %4781 = vmatprep.subr.mxu0 0.0
    %4782 = vmatpush2.msra.mxu0 0.0
    %4783 = vmatprep.subr.mxu0 0.0
    %4784 = vmatpush2.msra.mxu0 0.0
    %4785 = vmatprep.subr.mxu0 0.0
    %4786 = vmatpush2.msra.mxu0 0.0
    %4787 = vmatprep.subr.mxu0 0.0
    %4788 = vmatpush2.msra.mxu0 0.0
    %4789 = vmatprep.subr.mxu0 0.0
    %4790 = vmatpush2.msra.mxu0 0.0
    %4791 = vmatprep.subr.mxu0 0.0
    %4792 = vmatpush2.msra.mxu0 0.0
    %4793 = vmatprep.subr.mxu0 0.0
    %4794 = vmatpush2.msra.mxu0 0.0
    %4795 = vmatprep.subr.mxu0 0.0
    %4796 = vmatpush2.msra.mxu0 0.0
    %4797 = vmatprep.subr.mxu0 0.0
    %4798 = vmatpush2.msra.mxu0 0.0
    %4799 = vmatprep.subr.mxu0 0.0
    %4800 = vmatpush2.msra.mxu0 0.0
    %4801 = vmatprep.mubr.f32.mxu0 0.0
    %4802 = vmatmul.mubr.f32.gmra.mxu0 %v4735
    %v4803 = vpop.f32.mrf.mxu0
    %v4804 = vadd.f32 0.0, %v4803
    %v4805 = vpop.f32.mrf.mxu0
    %4806 = vdwg.mxu0
    %v4807 = vadd.f32 %v4734, %v4804
    %v4808 = vxor.u32 %v4733, 2147483648
    %v4809 = vmul.f32 %v4808, 1.442695
    %v4810 = vpow.pop %v4809
    %v4811 = vadd.f32 %v4810, 1.0
    %v4812 = vrcp.pop %v4811
    %v4813 = vmul.f32 1.0, %v4812
    %v4814 = vtanh.pop %v4733
    %v4815 = vxor.u32 %v4807, 2147483648
    %v4816 = vmul.f32 %v4815, 1.442695
    %v4817 = vpow.pop %v4816
    %v4818 = vadd.f32 %v4817, 1.0
    %v4819 = vrcp.pop %v4818
    %v4820 = vmul.f32 1.0, %v4819
    %v4821 = vtanh.pop %v4807
    %v4822 = vmul.f32 %v4813, %v4626
    %4824 = vrot.lane.b32.xlu0 %v4814, 64
    %v4825 = vpop.permute.xlu0 %4824
    %v4827 = vmul.f32 %v4813, %v4825
    %4829 = vrot.lane.b32.xlu0 %v4827, 32
    %v4830 = vpop.permute.xlu0 %4829
    %v4832 = vadd.f32 %v4822, %v4830
    %v4833 = vmul.f32 %v4820, %v4637
    %4835 = vrot.lane.b32.xlu0 %v4821, 64
    %v4836 = vpop.permute.xlu0 %4835
    %v4838 = vmul.f32 %v4820, %v4836
    %4840 = vrot.lane.b32.xlu0 %v4838, 32
    %v4841 = vpop.permute.xlu0 %4840
    %v4843 = vadd.f32 %v4833, %v4841
    %v4844 = vtanh.pop %v4832
    %4846 = vrot.lane.b32.xlu0 %v4844, 64
    %v4847 = vpop.permute.xlu0 %4846
    %v4849 = vmul.f32 %v4813, %v4847
    %v4850 = vtanh.pop %v4843
    %4852 = vrot.lane.b32.xlu0 %v4850, 64
    %v4853 = vpop.permute.xlu0 %4852
    %v4855 = vmul.f32 %v4820, %v4853
    %4857 = vrot.lane.b32.xlu0 %v4849, 32
    %v4858 = vpop.permute.xlu0 %4857
    %4860 = vst.msk [vmem:[#allocation5 + $0x3] sm:$0x1] %vm582, %v4858
    %4862 = vrot.lane.b32.xlu0 %v4855, 32
    %v4863 = vpop.permute.xlu0 %4862
    %4865 = vst.msk [vmem:[#allocation6 + $0x3] sm:$0x1] %vm582, %v4863
    %v4866 = vld [vmem:[#allocation3 + $0x4] sm:$0x1]
    %v4867 = vsel %vm202, %v4858, 0
    %4869 = vmatprep.subr.mxu0 0.0
    %4870 = vmatpush1.msra.mxu0 0.0
    %4871 = vmatprep.subr.mxu0 0.0
    %4872 = vmatpush1.msra.mxu0 0.0
    %4873 = vmatprep.subr.mxu0 0.0
    %4874 = vmatpush1.msra.mxu0 0.0
    %4875 = vmatprep.subr.mxu0 0.0
    %4876 = vmatpush1.msra.mxu0 0.0
    %4877 = vmatprep.subr.mxu0 0.0
    %4878 = vmatpush1.msra.mxu0 0.0
    %4879 = vmatprep.subr.mxu0 0.0
    %4880 = vmatpush1.msra.mxu0 0.0
    %4881 = vmatprep.subr.mxu0 0.0
    %4882 = vmatpush1.msra.mxu0 0.0
    %4883 = vmatprep.subr.mxu0 0.0
    %4884 = vmatpush1.msra.mxu0 0.0
    %4885 = vmatprep.subr.mxu0 0.0
    %4886 = vmatpush1.msra.mxu0 0.0
    %4887 = vmatprep.subr.mxu0 0.0
    %4888 = vmatpush1.msra.mxu0 0.0
    %4889 = vmatprep.subr.mxu0 0.0
    %4890 = vmatpush1.msra.mxu0 0.0
    %4891 = vmatprep.subr.mxu0 0.0
    %4892 = vmatpush1.msra.mxu0 0.0
    %4893 = vmatprep.subr.mxu0 0.0
    %4894 = vmatpush1.msra.mxu0 %v4040
    %4895 = vmatprep.subr.mxu0 0.0
    %4896 = vmatpush1.msra.mxu0 %v4039
    %4897 = vmatprep.subr.mxu0 0.0
    %4898 = vmatpush1.msra.mxu0 %v4038
    %4899 = vmatprep.subr.mxu0 0.0
    %4900 = vmatpush1.msra.mxu0 %v4037
    %4901 = vmatprep.subr.mxu0 0.0
    %4902 = vmatpush2.msra.mxu0 0.0
    %4903 = vmatprep.subr.mxu0 0.0
    %4904 = vmatpush2.msra.mxu0 0.0
    %4905 = vmatprep.subr.mxu0 0.0
    %4906 = vmatpush2.msra.mxu0 0.0
    %4907 = vmatprep.subr.mxu0 0.0
    %4908 = vmatpush2.msra.mxu0 0.0
    %4909 = vmatprep.subr.mxu0 0.0
    %4910 = vmatpush2.msra.mxu0 0.0
    %4911 = vmatprep.subr.mxu0 0.0
    %4912 = vmatpush2.msra.mxu0 0.0
    %4913 = vmatprep.subr.mxu0 0.0
    %4914 = vmatpush2.msra.mxu0 0.0
    %4915 = vmatprep.subr.mxu0 0.0
    %4916 = vmatpush2.msra.mxu0 0.0
    %4917 = vmatprep.subr.mxu0 0.0
    %4918 = vmatpush2.msra.mxu0 0.0
    %4919 = vmatprep.subr.mxu0 0.0
    %4920 = vmatpush2.msra.mxu0 0.0
    %4921 = vmatprep.subr.mxu0 0.0
    %4922 = vmatpush2.msra.mxu0 0.0
    %4923 = vmatprep.subr.mxu0 0.0
    %4924 = vmatpush2.msra.mxu0 0.0
    %4925 = vmatprep.subr.mxu0 0.0
    %4926 = vmatpush2.msra.mxu0 0.0
    %4927 = vmatprep.subr.mxu0 0.0
    %4928 = vmatpush2.msra.mxu0 0.0
    %4929 = vmatprep.subr.mxu0 0.0
    %4930 = vmatpush2.msra.mxu0 0.0
    %4931 = vmatprep.subr.mxu0 0.0
    %4932 = vmatpush2.msra.mxu0 0.0
    %4933 = vmatprep.mubr.f32.mxu0 0.0
    %4934 = vmatmul.mubr.f32.gmra.mxu0 %v4867
    %v4935 = vpop.f32.mrf.mxu0
    %v4936 = vadd.f32 0.0, %v4935
    %v4937 = vpop.f32.mrf.mxu0
    %4938 = vdwg.mxu0
    %v4939 = vadd.f32 %v4866, %v4936
    %v4940 = vld [vmem:[#allocation4 + $0x4] sm:$0x1]
    %v4941 = vsel %vm202, %v4863, 0
    %4943 = vmatprep.subr.mxu0 0.0
    %4944 = vmatpush1.msra.mxu0 0.0
    %4945 = vmatprep.subr.mxu0 0.0
    %4946 = vmatpush1.msra.mxu0 0.0
    %4947 = vmatprep.subr.mxu0 0.0
    %4948 = vmatpush1.msra.mxu0 0.0
    %4949 = vmatprep.subr.mxu0 0.0
    %4950 = vmatpush1.msra.mxu0 0.0
    %4951 = vmatprep.subr.mxu0 0.0
    %4952 = vmatpush1.msra.mxu0 0.0
    %4953 = vmatprep.subr.mxu0 0.0
    %4954 = vmatpush1.msra.mxu0 0.0
    %4955 = vmatprep.subr.mxu0 0.0
    %4956 = vmatpush1.msra.mxu0 0.0
    %4957 = vmatprep.subr.mxu0 0.0
    %4958 = vmatpush1.msra.mxu0 0.0
    %4959 = vmatprep.subr.mxu0 0.0
    %4960 = vmatpush1.msra.mxu0 0.0
    %4961 = vmatprep.subr.mxu0 0.0
    %4962 = vmatpush1.msra.mxu0 0.0
    %4963 = vmatprep.subr.mxu0 0.0
    %4964 = vmatpush1.msra.mxu0 0.0
    %4965 = vmatprep.subr.mxu0 0.0
    %4966 = vmatpush1.msra.mxu0 0.0
    %4967 = vmatprep.subr.mxu0 0.0
    %4968 = vmatpush1.msra.mxu0 %v4045
    %4969 = vmatprep.subr.mxu0 0.0
    %4970 = vmatpush1.msra.mxu0 %v4044
    %4971 = vmatprep.subr.mxu0 0.0
    %4972 = vmatpush1.msra.mxu0 %v4043
    %4973 = vmatprep.subr.mxu0 0.0
    %4974 = vmatpush1.msra.mxu0 %v4042
    %4975 = vmatprep.subr.mxu0 0.0
    %4976 = vmatpush2.msra.mxu0 0.0
    %4977 = vmatprep.subr.mxu0 0.0
    %4978 = vmatpush2.msra.mxu0 0.0
    %4979 = vmatprep.subr.mxu0 0.0
    %4980 = vmatpush2.msra.mxu0 0.0
    %4981 = vmatprep.subr.mxu0 0.0
    %4982 = vmatpush2.msra.mxu0 0.0
    %4983 = vmatprep.subr.mxu0 0.0
    %4984 = vmatpush2.msra.mxu0 0.0
    %4985 = vmatprep.subr.mxu0 0.0
    %4986 = vmatpush2.msra.mxu0 0.0
    %4987 = vmatprep.subr.mxu0 0.0
    %4988 = vmatpush2.msra.mxu0 0.0
    %4989 = vmatprep.subr.mxu0 0.0
    %4990 = vmatpush2.msra.mxu0 0.0
    %4991 = vmatprep.subr.mxu0 0.0
    %4992 = vmatpush2.msra.mxu0 0.0
    %4993 = vmatprep.subr.mxu0 0.0
    %4994 = vmatpush2.msra.mxu0 0.0
    %4995 = vmatprep.subr.mxu0 0.0
    %4996 = vmatpush2.msra.mxu0 0.0
    %4997 = vmatprep.subr.mxu0 0.0
    %4998 = vmatpush2.msra.mxu0 0.0
    %4999 = vmatprep.subr.mxu0 0.0
    %5000 = vmatpush2.msra.mxu0 0.0
    %5001 = vmatprep.subr.mxu0 0.0
    %5002 = vmatpush2.msra.mxu0 0.0
    %5003 = vmatprep.subr.mxu0 0.0
    %5004 = vmatpush2.msra.mxu0 0.0
    %5005 = vmatprep.subr.mxu0 0.0
    %5006 = vmatpush2.msra.mxu0 0.0
    %5007 = vmatprep.mubr.f32.mxu0 0.0
    %5008 = vmatmul.mubr.f32.gmra.mxu0 %v4941
    %v5009 = vpop.f32.mrf.mxu0
    %v5010 = vadd.f32 0.0, %v5009
    %v5011 = vpop.f32.mrf.mxu0
    %5012 = vdwg.mxu0
    %v5013 = vadd.f32 %v4940, %v5010
    %v5014 = vxor.u32 %v4939, 2147483648
    %v5015 = vmul.f32 %v5014, 1.442695
    %v5016 = vpow.pop %v5015
    %v5017 = vadd.f32 %v5016, 1.0
    %v5018 = vrcp.pop %v5017
    %v5019 = vmul.f32 1.0, %v5018
    %v5020 = vtanh.pop %v4939
    %v5021 = vxor.u32 %v5013, 2147483648
    %v5022 = vmul.f32 %v5021, 1.442695
    %v5023 = vpow.pop %v5022
    %v5024 = vadd.f32 %v5023, 1.0
    %v5025 = vrcp.pop %v5024
    %v5026 = vmul.f32 1.0, %v5025
    %v5027 = vtanh.pop %v5013
    %v5028 = vmul.f32 %v5019, %v4832
    %5030 = vrot.lane.b32.xlu0 %v5020, 64
    %v5031 = vpop.permute.xlu0 %5030
    %v5033 = vmul.f32 %v5019, %v5031
    %5035 = vrot.lane.b32.xlu0 %v5033, 32
    %v5036 = vpop.permute.xlu0 %5035
    %v5038 = vadd.f32 %v5028, %v5036
    %v5039 = vmul.f32 %v5026, %v4843
    %5041 = vrot.lane.b32.xlu0 %v5027, 64
    %v5042 = vpop.permute.xlu0 %5041
    %v5044 = vmul.f32 %v5026, %v5042
    %5046 = vrot.lane.b32.xlu0 %v5044, 32
    %v5047 = vpop.permute.xlu0 %5046
    %v5049 = vadd.f32 %v5039, %v5047
    %v5050 = vtanh.pop %v5038
    %5052 = vrot.lane.b32.xlu0 %v5050, 64
    %v5053 = vpop.permute.xlu0 %5052
    %v5055 = vmul.f32 %v5019, %v5053
    %v5056 = vtanh.pop %v5049
    %5058 = vrot.lane.b32.xlu0 %v5056, 64
    %v5059 = vpop.permute.xlu0 %5058
    %v5061 = vmul.f32 %v5026, %v5059
    %5063 = vrot.lane.b32.xlu0 %v5055, 32
    %v5064 = vpop.permute.xlu0 %5063
    %5066 = vst.msk [vmem:[#allocation5 + $0x4] sm:$0x1] %vm582, %v5064
    %5068 = vrot.lane.b32.xlu0 %v5061, 32
    %v5069 = vpop.permute.xlu0 %5068
    %5071 = vst.msk [vmem:[#allocation6 + $0x4] sm:$0x1] %vm582, %v5069
    %v5072 = vld [vmem:[#allocation3 + $0x5] sm:$0x1]
    %v5073 = vsel %vm202, %v5064, 0
    %5075 = vmatprep.subr.mxu0 0.0
    %5076 = vmatpush1.msra.mxu0 0.0
    %5077 = vmatprep.subr.mxu0 0.0
    %5078 = vmatpush1.msra.mxu0 0.0
    %5079 = vmatprep.subr.mxu0 0.0
    %5080 = vmatpush1.msra.mxu0 0.0
    %5081 = vmatprep.subr.mxu0 0.0
    %5082 = vmatpush1.msra.mxu0 0.0
    %5083 = vmatprep.subr.mxu0 0.0
    %5084 = vmatpush1.msra.mxu0 0.0
    %5085 = vmatprep.subr.mxu0 0.0
    %5086 = vmatpush1.msra.mxu0 0.0
    %5087 = vmatprep.subr.mxu0 0.0
    %5088 = vmatpush1.msra.mxu0 0.0
    %5089 = vmatprep.subr.mxu0 0.0
    %5090 = vmatpush1.msra.mxu0 0.0
    %5091 = vmatprep.subr.mxu0 0.0
    %5092 = vmatpush1.msra.mxu0 0.0
    %5093 = vmatprep.subr.mxu0 0.0
    %5094 = vmatpush1.msra.mxu0 0.0
    %5095 = vmatprep.subr.mxu0 0.0
    %5096 = vmatpush1.msra.mxu0 0.0
    %5097 = vmatprep.subr.mxu0 0.0
    %5098 = vmatpush1.msra.mxu0 0.0
    %5099 = vmatprep.subr.mxu0 0.0
    %5100 = vmatpush1.msra.mxu0 %v4040
    %5101 = vmatprep.subr.mxu0 0.0
    %5102 = vmatpush1.msra.mxu0 %v4039
    %5103 = vmatprep.subr.mxu0 0.0
    %5104 = vmatpush1.msra.mxu0 %v4038
    %5105 = vmatprep.subr.mxu0 0.0
    %5106 = vmatpush1.msra.mxu0 %v4037
    %5107 = vmatprep.subr.mxu0 0.0
    %5108 = vmatpush2.msra.mxu0 0.0
    %5109 = vmatprep.subr.mxu0 0.0
    %5110 = vmatpush2.msra.mxu0 0.0
    %5111 = vmatprep.subr.mxu0 0.0
    %5112 = vmatpush2.msra.mxu0 0.0
    %5113 = vmatprep.subr.mxu0 0.0
    %5114 = vmatpush2.msra.mxu0 0.0
    %5115 = vmatprep.subr.mxu0 0.0
    %5116 = vmatpush2.msra.mxu0 0.0
    %5117 = vmatprep.subr.mxu0 0.0
    %5118 = vmatpush2.msra.mxu0 0.0
    %5119 = vmatprep.subr.mxu0 0.0
    %5120 = vmatpush2.msra.mxu0 0.0
    %5121 = vmatprep.subr.mxu0 0.0
    %5122 = vmatpush2.msra.mxu0 0.0
    %5123 = vmatprep.subr.mxu0 0.0
    %5124 = vmatpush2.msra.mxu0 0.0
    %5125 = vmatprep.subr.mxu0 0.0
    %5126 = vmatpush2.msra.mxu0 0.0
    %5127 = vmatprep.subr.mxu0 0.0
    %5128 = vmatpush2.msra.mxu0 0.0
    %5129 = vmatprep.subr.mxu0 0.0
    %5130 = vmatpush2.msra.mxu0 0.0
    %5131 = vmatprep.subr.mxu0 0.0
    %5132 = vmatpush2.msra.mxu0 0.0
    %5133 = vmatprep.subr.mxu0 0.0
    %5134 = vmatpush2.msra.mxu0 0.0
    %5135 = vmatprep.subr.mxu0 0.0
    %5136 = vmatpush2.msra.mxu0 0.0
    %5137 = vmatprep.subr.mxu0 0.0
    %5138 = vmatpush2.msra.mxu0 0.0
    %5139 = vmatprep.mubr.f32.mxu0 0.0
    %5140 = vmatmul.mubr.f32.gmra.mxu0 %v5073
    %v5141 = vpop.f32.mrf.mxu0
    %v5142 = vadd.f32 0.0, %v5141
    %v5143 = vpop.f32.mrf.mxu0
    %5144 = vdwg.mxu0
    %v5145 = vadd.f32 %v5072, %v5142
    %v5146 = vld [vmem:[#allocation4 + $0x5] sm:$0x1]
    %v5147 = vsel %vm202, %v5069, 0
    %5149 = vmatprep.subr.mxu0 0.0
    %5150 = vmatpush1.msra.mxu0 0.0
    %5151 = vmatprep.subr.mxu0 0.0
    %5152 = vmatpush1.msra.mxu0 0.0
    %5153 = vmatprep.subr.mxu0 0.0
    %5154 = vmatpush1.msra.mxu0 0.0
    %5155 = vmatprep.subr.mxu0 0.0
    %5156 = vmatpush1.msra.mxu0 0.0
    %5157 = vmatprep.subr.mxu0 0.0
    %5158 = vmatpush1.msra.mxu0 0.0
    %5159 = vmatprep.subr.mxu0 0.0
    %5160 = vmatpush1.msra.mxu0 0.0
    %5161 = vmatprep.subr.mxu0 0.0
    %5162 = vmatpush1.msra.mxu0 0.0
    %5163 = vmatprep.subr.mxu0 0.0
    %5164 = vmatpush1.msra.mxu0 0.0
    %5165 = vmatprep.subr.mxu0 0.0
    %5166 = vmatpush1.msra.mxu0 0.0
    %5167 = vmatprep.subr.mxu0 0.0
    %5168 = vmatpush1.msra.mxu0 0.0
    %5169 = vmatprep.subr.mxu0 0.0
    %5170 = vmatpush1.msra.mxu0 0.0
    %5171 = vmatprep.subr.mxu0 0.0
    %5172 = vmatpush1.msra.mxu0 0.0
    %5173 = vmatprep.subr.mxu0 0.0
    %5174 = vmatpush1.msra.mxu0 %v4045
    %5175 = vmatprep.subr.mxu0 0.0
    %5176 = vmatpush1.msra.mxu0 %v4044
    %5177 = vmatprep.subr.mxu0 0.0
    %5178 = vmatpush1.msra.mxu0 %v4043
    %5179 = vmatprep.subr.mxu0 0.0
    %5180 = vmatpush1.msra.mxu0 %v4042
    %5181 = vmatprep.subr.mxu0 0.0
    %5182 = vmatpush2.msra.mxu0 0.0
    %5183 = vmatprep.subr.mxu0 0.0
    %5184 = vmatpush2.msra.mxu0 0.0
    %5185 = vmatprep.subr.mxu0 0.0
    %5186 = vmatpush2.msra.mxu0 0.0
    %5187 = vmatprep.subr.mxu0 0.0
    %5188 = vmatpush2.msra.mxu0 0.0
    %5189 = vmatprep.subr.mxu0 0.0
    %5190 = vmatpush2.msra.mxu0 0.0
    %5191 = vmatprep.subr.mxu0 0.0
    %5192 = vmatpush2.msra.mxu0 0.0
    %5193 = vmatprep.subr.mxu0 0.0
    %5194 = vmatpush2.msra.mxu0 0.0
    %5195 = vmatprep.subr.mxu0 0.0
    %5196 = vmatpush2.msra.mxu0 0.0
    %5197 = vmatprep.subr.mxu0 0.0
    %5198 = vmatpush2.msra.mxu0 0.0
    %5199 = vmatprep.subr.mxu0 0.0
    %5200 = vmatpush2.msra.mxu0 0.0
    %5201 = vmatprep.subr.mxu0 0.0
    %5202 = vmatpush2.msra.mxu0 0.0
    %5203 = vmatprep.subr.mxu0 0.0
    %5204 = vmatpush2.msra.mxu0 0.0
    %5205 = vmatprep.subr.mxu0 0.0
    %5206 = vmatpush2.msra.mxu0 0.0
    %5207 = vmatprep.subr.mxu0 0.0
    %5208 = vmatpush2.msra.mxu0 0.0
    %5209 = vmatprep.subr.mxu0 0.0
    %5210 = vmatpush2.msra.mxu0 0.0
    %5211 = vmatprep.subr.mxu0 0.0
    %5212 = vmatpush2.msra.mxu0 0.0
    %5213 = vmatprep.mubr.f32.mxu0 0.0
    %5214 = vmatmul.mubr.f32.gmra.mxu0 %v5147
    %v5215 = vpop.f32.mrf.mxu0
    %v5216 = vadd.f32 0.0, %v5215
    %v5217 = vpop.f32.mrf.mxu0
    %5218 = vdwg.mxu0
    %v5219 = vadd.f32 %v5146, %v5216
    %v5220 = vxor.u32 %v5145, 2147483648
    %v5221 = vmul.f32 %v5220, 1.442695
    %v5222 = vpow.pop %v5221
    %v5223 = vadd.f32 %v5222, 1.0
    %v5224 = vrcp.pop %v5223
    %v5225 = vmul.f32 1.0, %v5224
    %v5226 = vtanh.pop %v5145
    %v5227 = vxor.u32 %v5219, 2147483648
    %v5228 = vmul.f32 %v5227, 1.442695
    %v5229 = vpow.pop %v5228
    %v5230 = vadd.f32 %v5229, 1.0
    %v5231 = vrcp.pop %v5230
    %v5232 = vmul.f32 1.0, %v5231
    %v5233 = vtanh.pop %v5219
    %v5234 = vmul.f32 %v5225, %v5038
    %5236 = vrot.lane.b32.xlu0 %v5226, 64
    %v5237 = vpop.permute.xlu0 %5236
    %v5239 = vmul.f32 %v5225, %v5237
    %5241 = vrot.lane.b32.xlu0 %v5239, 32
    %v5242 = vpop.permute.xlu0 %5241
    %v5244 = vadd.f32 %v5234, %v5242
    %v5245 = vmul.f32 %v5232, %v5049
    %5247 = vrot.lane.b32.xlu0 %v5233, 64
    %v5248 = vpop.permute.xlu0 %5247
    %v5250 = vmul.f32 %v5232, %v5248
    %5252 = vrot.lane.b32.xlu0 %v5250, 32
    %v5253 = vpop.permute.xlu0 %5252
    %v5255 = vadd.f32 %v5245, %v5253
    %v5256 = vtanh.pop %v5244
    %5258 = vrot.lane.b32.xlu0 %v5256, 64
    %v5259 = vpop.permute.xlu0 %5258
    %v5261 = vmul.f32 %v5225, %v5259
    %v5262 = vtanh.pop %v5255
    %5264 = vrot.lane.b32.xlu0 %v5262, 64
    %v5265 = vpop.permute.xlu0 %5264
    %v5267 = vmul.f32 %v5232, %v5265
    %5269 = vrot.lane.b32.xlu0 %v5261, 32
    %v5270 = vpop.permute.xlu0 %5269
    %5272 = vst.msk [vmem:[#allocation5 + $0x5] sm:$0x1] %vm582, %v5270
    %5274 = vrot.lane.b32.xlu0 %v5267, 32
    %v5275 = vpop.permute.xlu0 %5274
    %5277 = vst.msk [vmem:[#allocation6 + $0x5] sm:$0x1] %vm582, %v5275
    %v5278 = vld [vmem:[#allocation3 + $0x6] sm:$0x1]
    %v5279 = vsel %vm202, %v5270, 0
    %5281 = vmatprep.subr.mxu0 0.0
    %5282 = vmatpush1.msra.mxu0 0.0
    %5283 = vmatprep.subr.mxu0 0.0
    %5284 = vmatpush1.msra.mxu0 0.0
    %5285 = vmatprep.subr.mxu0 0.0
    %5286 = vmatpush1.msra.mxu0 0.0
    %5287 = vmatprep.subr.mxu0 0.0
    %5288 = vmatpush1.msra.mxu0 0.0
    %5289 = vmatprep.subr.mxu0 0.0
    %5290 = vmatpush1.msra.mxu0 0.0
    %5291 = vmatprep.subr.mxu0 0.0
    %5292 = vmatpush1.msra.mxu0 0.0
    %5293 = vmatprep.subr.mxu0 0.0
    %5294 = vmatpush1.msra.mxu0 0.0
    %5295 = vmatprep.subr.mxu0 0.0
    %5296 = vmatpush1.msra.mxu0 0.0
    %5297 = vmatprep.subr.mxu0 0.0
    %5298 = vmatpush1.msra.mxu0 0.0
    %5299 = vmatprep.subr.mxu0 0.0
    %5300 = vmatpush1.msra.mxu0 0.0
    %5301 = vmatprep.subr.mxu0 0.0
    %5302 = vmatpush1.msra.mxu0 0.0
    %5303 = vmatprep.subr.mxu0 0.0
    %5304 = vmatpush1.msra.mxu0 0.0
    %5305 = vmatprep.subr.mxu0 0.0
    %5306 = vmatpush1.msra.mxu0 %v4040
    %5307 = vmatprep.subr.mxu0 0.0
    %5308 = vmatpush1.msra.mxu0 %v4039
    %5309 = vmatprep.subr.mxu0 0.0
    %5310 = vmatpush1.msra.mxu0 %v4038
    %5311 = vmatprep.subr.mxu0 0.0
    %5312 = vmatpush1.msra.mxu0 %v4037
    %5313 = vmatprep.subr.mxu0 0.0
    %5314 = vmatpush2.msra.mxu0 0.0
    %5315 = vmatprep.subr.mxu0 0.0
    %5316 = vmatpush2.msra.mxu0 0.0
    %5317 = vmatprep.subr.mxu0 0.0
    %5318 = vmatpush2.msra.mxu0 0.0
    %5319 = vmatprep.subr.mxu0 0.0
    %5320 = vmatpush2.msra.mxu0 0.0
    %5321 = vmatprep.subr.mxu0 0.0
    %5322 = vmatpush2.msra.mxu0 0.0
    %5323 = vmatprep.subr.mxu0 0.0
    %5324 = vmatpush2.msra.mxu0 0.0
    %5325 = vmatprep.subr.mxu0 0.0
    %5326 = vmatpush2.msra.mxu0 0.0
    %5327 = vmatprep.subr.mxu0 0.0
    %5328 = vmatpush2.msra.mxu0 0.0
    %5329 = vmatprep.subr.mxu0 0.0
    %5330 = vmatpush2.msra.mxu0 0.0
    %5331 = vmatprep.subr.mxu0 0.0
    %5332 = vmatpush2.msra.mxu0 0.0
    %5333 = vmatprep.subr.mxu0 0.0
    %5334 = vmatpush2.msra.mxu0 0.0
    %5335 = vmatprep.subr.mxu0 0.0
    %5336 = vmatpush2.msra.mxu0 0.0
    %5337 = vmatprep.subr.mxu0 0.0
    %5338 = vmatpush2.msra.mxu0 0.0
    %5339 = vmatprep.subr.mxu0 0.0
    %5340 = vmatpush2.msra.mxu0 0.0
    %5341 = vmatprep.subr.mxu0 0.0
    %5342 = vmatpush2.msra.mxu0 0.0
    %5343 = vmatprep.subr.mxu0 0.0
    %5344 = vmatpush2.msra.mxu0 0.0
    %5345 = vmatprep.mubr.f32.mxu0 0.0
    %5346 = vmatmul.mubr.f32.gmra.mxu0 %v5279
    %v5347 = vpop.f32.mrf.mxu0
    %v5348 = vadd.f32 0.0, %v5347
    %v5349 = vpop.f32.mrf.mxu0
    %5350 = vdwg.mxu0
    %v5351 = vadd.f32 %v5278, %v5348
    %v5352 = vld [vmem:[#allocation4 + $0x6] sm:$0x1]
    %v5353 = vsel %vm202, %v5275, 0
    %5355 = vmatprep.subr.mxu0 0.0
    %5356 = vmatpush1.msra.mxu0 0.0
    %5357 = vmatprep.subr.mxu0 0.0
    %5358 = vmatpush1.msra.mxu0 0.0
    %5359 = vmatprep.subr.mxu0 0.0
    %5360 = vmatpush1.msra.mxu0 0.0
    %5361 = vmatprep.subr.mxu0 0.0
    %5362 = vmatpush1.msra.mxu0 0.0
    %5363 = vmatprep.subr.mxu0 0.0
    %5364 = vmatpush1.msra.mxu0 0.0
    %5365 = vmatprep.subr.mxu0 0.0
    %5366 = vmatpush1.msra.mxu0 0.0
    %5367 = vmatprep.subr.mxu0 0.0
    %5368 = vmatpush1.msra.mxu0 0.0
    %5369 = vmatprep.subr.mxu0 0.0
    %5370 = vmatpush1.msra.mxu0 0.0
    %5371 = vmatprep.subr.mxu0 0.0
    %5372 = vmatpush1.msra.mxu0 0.0
    %5373 = vmatprep.subr.mxu0 0.0
    %5374 = vmatpush1.msra.mxu0 0.0
    %5375 = vmatprep.subr.mxu0 0.0
    %5376 = vmatpush1.msra.mxu0 0.0
    %5377 = vmatprep.subr.mxu0 0.0
    %5378 = vmatpush1.msra.mxu0 0.0
    %5379 = vmatprep.subr.mxu0 0.0
    %5380 = vmatpush1.msra.mxu0 %v4045
    %5381 = vmatprep.subr.mxu0 0.0
    %5382 = vmatpush1.msra.mxu0 %v4044
    %5383 = vmatprep.subr.mxu0 0.0
    %5384 = vmatpush1.msra.mxu0 %v4043
    %5385 = vmatprep.subr.mxu0 0.0
    %5386 = vmatpush1.msra.mxu0 %v4042
    %5387 = vmatprep.subr.mxu0 0.0
    %5388 = vmatpush2.msra.mxu0 0.0
    %5389 = vmatprep.subr.mxu0 0.0
    %5390 = vmatpush2.msra.mxu0 0.0
    %5391 = vmatprep.subr.mxu0 0.0
    %5392 = vmatpush2.msra.mxu0 0.0
    %5393 = vmatprep.subr.mxu0 0.0
    %5394 = vmatpush2.msra.mxu0 0.0
    %5395 = vmatprep.subr.mxu0 0.0
    %5396 = vmatpush2.msra.mxu0 0.0
    %5397 = vmatprep.subr.mxu0 0.0
    %5398 = vmatpush2.msra.mxu0 0.0
    %5399 = vmatprep.subr.mxu0 0.0
    %5400 = vmatpush2.msra.mxu0 0.0
    %5401 = vmatprep.subr.mxu0 0.0
    %5402 = vmatpush2.msra.mxu0 0.0
    %5403 = vmatprep.subr.mxu0 0.0
    %5404 = vmatpush2.msra.mxu0 0.0
    %5405 = vmatprep.subr.mxu0 0.0
    %5406 = vmatpush2.msra.mxu0 0.0
    %5407 = vmatprep.subr.mxu0 0.0
    %5408 = vmatpush2.msra.mxu0 0.0
    %5409 = vmatprep.subr.mxu0 0.0
    %5410 = vmatpush2.msra.mxu0 0.0
    %5411 = vmatprep.subr.mxu0 0.0
    %5412 = vmatpush2.msra.mxu0 0.0
    %5413 = vmatprep.subr.mxu0 0.0
    %5414 = vmatpush2.msra.mxu0 0.0
    %5415 = vmatprep.subr.mxu0 0.0
    %5416 = vmatpush2.msra.mxu0 0.0
    %5417 = vmatprep.subr.mxu0 0.0
    %5418 = vmatpush2.msra.mxu0 0.0
    %5419 = vmatprep.mubr.f32.mxu0 0.0
    %5420 = vmatmul.mubr.f32.gmra.mxu0 %v5353
    %v5421 = vpop.f32.mrf.mxu0
    %v5422 = vadd.f32 0.0, %v5421
    %v5423 = vpop.f32.mrf.mxu0
    %5424 = vdwg.mxu0
    %v5425 = vadd.f32 %v5352, %v5422
    %v5426 = vxor.u32 %v5351, 2147483648
    %v5427 = vmul.f32 %v5426, 1.442695
    %v5428 = vpow.pop %v5427
    %v5429 = vadd.f32 %v5428, 1.0
    %v5430 = vrcp.pop %v5429
    %v5431 = vmul.f32 1.0, %v5430
    %v5432 = vtanh.pop %v5351
    %v5433 = vxor.u32 %v5425, 2147483648
    %v5434 = vmul.f32 %v5433, 1.442695
    %v5435 = vpow.pop %v5434
    %v5436 = vadd.f32 %v5435, 1.0
    %v5437 = vrcp.pop %v5436
    %v5438 = vmul.f32 1.0, %v5437
    %v5439 = vtanh.pop %v5425
    %v5440 = vmul.f32 %v5431, %v5244
    %5442 = vrot.lane.b32.xlu0 %v5432, 64
    %v5443 = vpop.permute.xlu0 %5442
    %v5445 = vmul.f32 %v5431, %v5443
    %5447 = vrot.lane.b32.xlu0 %v5445, 32
    %v5448 = vpop.permute.xlu0 %5447
    %v5450 = vadd.f32 %v5440, %v5448
    %v5451 = vmul.f32 %v5438, %v5255
    %5453 = vrot.lane.b32.xlu0 %v5439, 64
    %v5454 = vpop.permute.xlu0 %5453
    %v5456 = vmul.f32 %v5438, %v5454
    %5458 = vrot.lane.b32.xlu0 %v5456, 32
    %v5459 = vpop.permute.xlu0 %5458
    %v5461 = vadd.f32 %v5451, %v5459
    %v5462 = vtanh.pop %v5450
    %5464 = vrot.lane.b32.xlu0 %v5462, 64
    %v5465 = vpop.permute.xlu0 %5464
    %v5467 = vmul.f32 %v5431, %v5465
    %v5468 = vtanh.pop %v5461
    %5470 = vrot.lane.b32.xlu0 %v5468, 64
    %v5471 = vpop.permute.xlu0 %5470
    %v5473 = vmul.f32 %v5438, %v5471
    %5475 = vrot.lane.b32.xlu0 %v5467, 32
    %v5476 = vpop.permute.xlu0 %5475
    %5478 = vst.msk [vmem:[#allocation5 + $0x6] sm:$0x1] %vm582, %v5476
    %5480 = vrot.lane.b32.xlu0 %v5473, 32
    %v5481 = vpop.permute.xlu0 %5480
    %5483 = vst.msk [vmem:[#allocation6 + $0x6] sm:$0x1] %vm582, %v5481
    %v5484 = vld [vmem:[#allocation3 + $0x7] sm:$0x1]
    %v5485 = vsel %vm202, %v5476, 0
    %5487 = vmatprep.subr.mxu0 0.0
    %5488 = vmatpush1.msra.mxu0 0.0
    %5489 = vmatprep.subr.mxu0 0.0
    %5490 = vmatpush1.msra.mxu0 0.0
    %5491 = vmatprep.subr.mxu0 0.0
    %5492 = vmatpush1.msra.mxu0 0.0
    %5493 = vmatprep.subr.mxu0 0.0
    %5494 = vmatpush1.msra.mxu0 0.0
    %5495 = vmatprep.subr.mxu0 0.0
    %5496 = vmatpush1.msra.mxu0 0.0
    %5497 = vmatprep.subr.mxu0 0.0
    %5498 = vmatpush1.msra.mxu0 0.0
    %5499 = vmatprep.subr.mxu0 0.0
    %5500 = vmatpush1.msra.mxu0 0.0
    %5501 = vmatprep.subr.mxu0 0.0
    %5502 = vmatpush1.msra.mxu0 0.0
    %5503 = vmatprep.subr.mxu0 0.0
    %5504 = vmatpush1.msra.mxu0 0.0
    %5505 = vmatprep.subr.mxu0 0.0
    %5506 = vmatpush1.msra.mxu0 0.0
    %5507 = vmatprep.subr.mxu0 0.0
    %5508 = vmatpush1.msra.mxu0 0.0
    %5509 = vmatprep.subr.mxu0 0.0
    %5510 = vmatpush1.msra.mxu0 0.0
    %5511 = vmatprep.subr.mxu0 0.0
    %5512 = vmatpush1.msra.mxu0 %v4040
    %5513 = vmatprep.subr.mxu0 0.0
    %5514 = vmatpush1.msra.mxu0 %v4039
    %5515 = vmatprep.subr.mxu0 0.0
    %5516 = vmatpush1.msra.mxu0 %v4038
    %5517 = vmatprep.subr.mxu0 0.0
    %5518 = vmatpush1.msra.mxu0 %v4037
    %5519 = vmatprep.subr.mxu0 0.0
    %5520 = vmatpush2.msra.mxu0 0.0
    %5521 = vmatprep.subr.mxu0 0.0
    %5522 = vmatpush2.msra.mxu0 0.0
    %5523 = vmatprep.subr.mxu0 0.0
    %5524 = vmatpush2.msra.mxu0 0.0
    %5525 = vmatprep.subr.mxu0 0.0
    %5526 = vmatpush2.msra.mxu0 0.0
    %5527 = vmatprep.subr.mxu0 0.0
    %5528 = vmatpush2.msra.mxu0 0.0
    %5529 = vmatprep.subr.mxu0 0.0
    %5530 = vmatpush2.msra.mxu0 0.0
    %5531 = vmatprep.subr.mxu0 0.0
    %5532 = vmatpush2.msra.mxu0 0.0
    %5533 = vmatprep.subr.mxu0 0.0
    %5534 = vmatpush2.msra.mxu0 0.0
    %5535 = vmatprep.subr.mxu0 0.0
    %5536 = vmatpush2.msra.mxu0 0.0
    %5537 = vmatprep.subr.mxu0 0.0
    %5538 = vmatpush2.msra.mxu0 0.0
    %5539 = vmatprep.subr.mxu0 0.0
    %5540 = vmatpush2.msra.mxu0 0.0
    %5541 = vmatprep.subr.mxu0 0.0
    %5542 = vmatpush2.msra.mxu0 0.0
    %5543 = vmatprep.subr.mxu0 0.0
    %5544 = vmatpush2.msra.mxu0 0.0
    %5545 = vmatprep.subr.mxu0 0.0
    %5546 = vmatpush2.msra.mxu0 0.0
    %5547 = vmatprep.subr.mxu0 0.0
    %5548 = vmatpush2.msra.mxu0 0.0
    %5549 = vmatprep.subr.mxu0 0.0
    %5550 = vmatpush2.msra.mxu0 0.0
    %5551 = vmatprep.mubr.f32.mxu0 0.0
    %5552 = vmatmul.mubr.f32.gmra.mxu0 %v5485
    %v5553 = vpop.f32.mrf.mxu0
    %v5554 = vadd.f32 0.0, %v5553
    %v5555 = vpop.f32.mrf.mxu0
    %5556 = vdwg.mxu0
    %v5557 = vadd.f32 %v5484, %v5554
    %v5558 = vld [vmem:[#allocation4 + $0x7] sm:$0x1]
    %v5559 = vsel %vm202, %v5481, 0
    %5561 = vmatprep.subr.mxu0 0.0
    %5562 = vmatpush1.msra.mxu0 0.0
    %5563 = vmatprep.subr.mxu0 0.0
    %5564 = vmatpush1.msra.mxu0 0.0
    %5565 = vmatprep.subr.mxu0 0.0
    %5566 = vmatpush1.msra.mxu0 0.0
    %5567 = vmatprep.subr.mxu0 0.0
    %5568 = vmatpush1.msra.mxu0 0.0
    %5569 = vmatprep.subr.mxu0 0.0
    %5570 = vmatpush1.msra.mxu0 0.0
    %5571 = vmatprep.subr.mxu0 0.0
    %5572 = vmatpush1.msra.mxu0 0.0
    %5573 = vmatprep.subr.mxu0 0.0
    %5574 = vmatpush1.msra.mxu0 0.0
    %5575 = vmatprep.subr.mxu0 0.0
    %5576 = vmatpush1.msra.mxu0 0.0
    %5577 = vmatprep.subr.mxu0 0.0
    %5578 = vmatpush1.msra.mxu0 0.0
    %5579 = vmatprep.subr.mxu0 0.0
    %5580 = vmatpush1.msra.mxu0 0.0
    %5581 = vmatprep.subr.mxu0 0.0
    %5582 = vmatpush1.msra.mxu0 0.0
    %5583 = vmatprep.subr.mxu0 0.0
    %5584 = vmatpush1.msra.mxu0 0.0
    %5585 = vmatprep.subr.mxu0 0.0
    %5586 = vmatpush1.msra.mxu0 %v4045
    %5587 = vmatprep.subr.mxu0 0.0
    %5588 = vmatpush1.msra.mxu0 %v4044
    %5589 = vmatprep.subr.mxu0 0.0
    %5590 = vmatpush1.msra.mxu0 %v4043
    %5591 = vmatprep.subr.mxu0 0.0
    %5592 = vmatpush1.msra.mxu0 %v4042
    %5593 = vmatprep.subr.mxu0 0.0
    %5594 = vmatpush2.msra.mxu0 0.0
    %5595 = vmatprep.subr.mxu0 0.0
    %5596 = vmatpush2.msra.mxu0 0.0
    %5597 = vmatprep.subr.mxu0 0.0
    %5598 = vmatpush2.msra.mxu0 0.0
    %5599 = vmatprep.subr.mxu0 0.0
    %5600 = vmatpush2.msra.mxu0 0.0
    %5601 = vmatprep.subr.mxu0 0.0
    %5602 = vmatpush2.msra.mxu0 0.0
    %5603 = vmatprep.subr.mxu0 0.0
    %5604 = vmatpush2.msra.mxu0 0.0
    %5605 = vmatprep.subr.mxu0 0.0
    %5606 = vmatpush2.msra.mxu0 0.0
    %5607 = vmatprep.subr.mxu0 0.0
    %5608 = vmatpush2.msra.mxu0 0.0
    %5609 = vmatprep.subr.mxu0 0.0
    %5610 = vmatpush2.msra.mxu0 0.0
    %5611 = vmatprep.subr.mxu0 0.0
    %5612 = vmatpush2.msra.mxu0 0.0
    %5613 = vmatprep.subr.mxu0 0.0
    %5614 = vmatpush2.msra.mxu0 0.0
    %5615 = vmatprep.subr.mxu0 0.0
    %5616 = vmatpush2.msra.mxu0 0.0
    %5617 = vmatprep.subr.mxu0 0.0
    %5618 = vmatpush2.msra.mxu0 0.0
    %5619 = vmatprep.subr.mxu0 0.0
    %5620 = vmatpush2.msra.mxu0 0.0
    %5621 = vmatprep.subr.mxu0 0.0
    %5622 = vmatpush2.msra.mxu0 0.0
    %5623 = vmatprep.subr.mxu0 0.0
    %5624 = vmatpush2.msra.mxu0 0.0
    %5625 = vmatprep.mubr.f32.mxu0 0.0
    %5626 = vmatmul.mubr.f32.gmra.mxu0 %v5559
    %v5627 = vpop.f32.mrf.mxu0
    %v5628 = vadd.f32 0.0, %v5627
    %v5629 = vpop.f32.mrf.mxu0
    %5630 = vdwg.mxu0
    %v5631 = vadd.f32 %v5558, %v5628
    %v5632 = vxor.u32 %v5557, 2147483648
    %v5633 = vmul.f32 %v5632, 1.442695
    %v5634 = vpow.pop %v5633
    %v5635 = vadd.f32 %v5634, 1.0
    %v5636 = vrcp.pop %v5635
    %v5637 = vmul.f32 1.0, %v5636
    %v5638 = vtanh.pop %v5557
    %v5639 = vxor.u32 %v5631, 2147483648
    %v5640 = vmul.f32 %v5639, 1.442695
    %v5641 = vpow.pop %v5640
    %v5642 = vadd.f32 %v5641, 1.0
    %v5643 = vrcp.pop %v5642
    %v5644 = vmul.f32 1.0, %v5643
    %v5645 = vtanh.pop %v5631
    %v5646 = vmul.f32 %v5637, %v5450
    %5648 = vrot.lane.b32.xlu0 %v5638, 64
    %v5649 = vpop.permute.xlu0 %5648
    %v5651 = vmul.f32 %v5637, %v5649
    %5653 = vrot.lane.b32.xlu0 %v5651, 32
    %v5654 = vpop.permute.xlu0 %5653
    %v5656 = vadd.f32 %v5646, %v5654
    %v5657 = vmul.f32 %v5644, %v5461
    %5659 = vrot.lane.b32.xlu0 %v5645, 64
    %v5660 = vpop.permute.xlu0 %5659
    %v5662 = vmul.f32 %v5644, %v5660
    %5664 = vrot.lane.b32.xlu0 %v5662, 32
    %v5665 = vpop.permute.xlu0 %5664
    %v5667 = vadd.f32 %v5657, %v5665
    %v5668 = vtanh.pop %v5656
    %5670 = vrot.lane.b32.xlu0 %v5668, 64
    %v5671 = vpop.permute.xlu0 %5670
    %v5673 = vmul.f32 %v5637, %v5671
    %v5674 = vtanh.pop %v5667
    %5676 = vrot.lane.b32.xlu0 %v5674, 64
    %v5677 = vpop.permute.xlu0 %5676
    %v5679 = vmul.f32 %v5644, %v5677
    %5681 = vrot.lane.b32.xlu0 %v5673, 32
    %v5682 = vpop.permute.xlu0 %5681
    %5684 = vst.msk [vmem:[#allocation5 + $0x7] sm:$0x1] %vm582, %v5682
    %5686 = vrot.lane.b32.xlu0 %v5679, 32
    %v5687 = vpop.permute.xlu0 %5686
    %5689 = vst.msk [vmem:[#allocation6 + $0x7] sm:$0x1] %vm582, %v5687
    %v5690 = vld [vmem:[#allocation5] sm:$0xff]
    %v5691 = vld [vmem:[%s7] sm:$0x1]
    %v5693 = vlaneseq
    %v5694 = vshrl.u32 %v5693, 7
    %v5695 = vsub.s32 0, %v5694
    %v5696 = vrot.slane %v5691, %v5695
    %v5698 = vmul.f32 %v5690, %v5696
    %v5699 = vsel %vm202, %v5698, 0.0
    %5700 = vadd.xlane.f32.xlu0 %v5699
    %v5701 = vpop.xlane.xlu0 %5700
    %v5702 = vld [vmem:[#allocation7] sm:$0x1]
    %v5704 = vlaneseq
    %v5705 = vshrl.u32 %v5704, 7
    %v5706 = vsub.s32 0, %v5705
    %v5707 = vrot.slane %v5702, %v5706
    %v5709 = vadd.f32 %v5701, %v5707
    %v5710 = vxor.u32 %v5709, 2147483648
    %v5711 = vmul.f32 %v5710, 1.442695
    %v5712 = vpow.pop %v5711
    %v5713 = vadd.f32 %v5712, 1.0
    %v5714 = vrcp.pop %v5713
    %v5715 = vmul.f32 1.0, %v5714
    %v5716 = vld [vmem:[#allocation6] sm:$0xff]
    %v5717 = vld [vmem:[#allocation15] sm:$0xff]
    %v5718 = vld [vmem:[#allocation15 + $0x8] sm:$0xff]
    %v5719 = vld [vmem:[#allocation15 + $0x10] sm:$0xff]
    %v5720 = vld [vmem:[#allocation15 + $0x18] sm:$0xff]
    %v5721 = vld [vmem:[#allocation17] sm:$0x1]
    %v5723 = vlaneseq
    %v5724 = vshrl.u32 %v5723, 7
    %v5725 = vsub.s32 0, %v5724
    %v5726 = vrot.slane %v5721, %v5725
    %v5729 = vsel %vm202, %v5716, 0
    %5731 = vmatprep.subr.mxu0 0.0
    %5732 = vmatpush1.msra.mxu0 0.0
    %5733 = vmatprep.subr.mxu0 0.0
    %5734 = vmatpush1.msra.mxu0 0.0
    %5735 = vmatprep.subr.mxu0 0.0
    %5736 = vmatpush1.msra.mxu0 0.0
    %5737 = vmatprep.subr.mxu0 0.0
    %5738 = vmatpush1.msra.mxu0 0.0
    %5739 = vmatprep.subr.mxu0 0.0
    %5740 = vmatpush1.msra.mxu0 0.0
    %5741 = vmatprep.subr.mxu0 0.0
    %5742 = vmatpush1.msra.mxu0 0.0
    %5743 = vmatprep.subr.mxu0 0.0
    %5744 = vmatpush1.msra.mxu0 0.0
    %5745 = vmatprep.subr.mxu0 0.0
    %5746 = vmatpush1.msra.mxu0 0.0
    %5747 = vmatprep.subr.mxu0 0.0
    %5748 = vmatpush1.msra.mxu0 0.0
    %5749 = vmatprep.subr.mxu0 0.0
    %5750 = vmatpush1.msra.mxu0 0.0
    %5751 = vmatprep.subr.mxu0 0.0
    %5752 = vmatpush1.msra.mxu0 0.0
    %5753 = vmatprep.subr.mxu0 0.0
    %5754 = vmatpush1.msra.mxu0 0.0
    %5755 = vmatprep.subr.mxu0 0.0
    %5756 = vmatpush1.msra.mxu0 %v5720
    %5757 = vmatprep.subr.mxu0 0.0
    %5758 = vmatpush1.msra.mxu0 %v5719
    %5759 = vmatprep.subr.mxu0 0.0
    %5760 = vmatpush1.msra.mxu0 %v5718
    %5761 = vmatprep.subr.mxu0 0.0
    %5762 = vmatpush1.msra.mxu0 %v5717
    %5763 = vmatprep.subr.mxu0 0.0
    %5764 = vmatpush2.msra.mxu0 0.0
    %5765 = vmatprep.subr.mxu0 0.0
    %5766 = vmatpush2.msra.mxu0 0.0
    %5767 = vmatprep.subr.mxu0 0.0
    %5768 = vmatpush2.msra.mxu0 0.0
    %5769 = vmatprep.subr.mxu0 0.0
    %5770 = vmatpush2.msra.mxu0 0.0
    %5771 = vmatprep.subr.mxu0 0.0
    %5772 = vmatpush2.msra.mxu0 0.0
    %5773 = vmatprep.subr.mxu0 0.0
    %5774 = vmatpush2.msra.mxu0 0.0
    %5775 = vmatprep.subr.mxu0 0.0
    %5776 = vmatpush2.msra.mxu0 0.0
    %5777 = vmatprep.subr.mxu0 0.0
    %5778 = vmatpush2.msra.mxu0 0.0
    %5779 = vmatprep.subr.mxu0 0.0
    %5780 = vmatpush2.msra.mxu0 0.0
    %5781 = vmatprep.subr.mxu0 0.0
    %5782 = vmatpush2.msra.mxu0 0.0
    %5783 = vmatprep.subr.mxu0 0.0
    %5784 = vmatpush2.msra.mxu0 0.0
    %5785 = vmatprep.subr.mxu0 0.0
    %5786 = vmatpush2.msra.mxu0 0.0
    %5787 = vmatprep.subr.mxu0 0.0
    %5788 = vmatpush2.msra.mxu0 0.0
    %5789 = vmatprep.subr.mxu0 0.0
    %5790 = vmatpush2.msra.mxu0 0.0
    %5791 = vmatprep.subr.mxu0 0.0
    %5792 = vmatpush2.msra.mxu0 0.0
    %5793 = vmatprep.subr.mxu0 0.0
    %5794 = vmatpush2.msra.mxu0 0.0
    %5795 = vmatprep.mubr.f32.mxu0 0.0
    %5796 = vmatmul.mubr.f32.gmra.mxu0 %v5729
    %v5797 = vpop.f32.mrf.mxu0
    %v5798 = vadd.f32 %v5726, %v5797
    %v5799 = vpop.f32.mrf.mxu0
    %5800 = vdwg.mxu0
    %v5801 = vxor.u32 %v5798, 2147483648
    %v5802 = vmul.f32 %v5801, 1.442695
    %v5803 = vpow.pop %v5802
    %v5804 = vadd.f32 %v5803, 1.0
    %v5805 = vrcp.pop %v5804
    %v5806 = vmul.f32 1.0, %v5805
    %v5807 = vld [vmem:[#allocation2] sm:$0xff]
    %v5808 = vmul.f32 %v5807, %v5806
    %5810 = vset.pattern.permute.xlu0 0
    %5811 = vperm.xlu0 %5810, %v5715
    %v5812 = vpop.permute.xlu0 %5811
    %v5814 = vmul.f32 %v5808, %v5812
    %v5815 = vld [vmem:[%s11] sm:$0x1]
    %v5817 = vlaneseq
    %v5818 = vshrl.u32 %v5817, 7
    %v5819 = vsub.s32 0, %v5818
    %v5820 = vrot.slane %v5815, %v5819
    %v5822 = vmul.f32 %v5814, %v5820
    %v5823 = vsel %vm202, %v5822, 0.0
    %5824 = vadd.xlane.f32.xlu0 %v5823
    %v5825 = vpop.xlane.xlu0 %5824
    %v5826 = vld [vmem:[#allocation8] sm:$0x1]
    %v5828 = vlaneseq
    %v5829 = vshrl.u32 %v5828, 7
    %v5830 = vsub.s32 0, %v5829
    %v5831 = vrot.slane %v5826, %v5830
    %v5833 = vadd.f32 %v5825, %v5831
    %v5834 = vmax.f32 %v5833, 0.0
    %vm5835 = vcmask 7168
    %5836 = vst.msk [vmem:[%s13] sm:$0xff] %vm5835, %v5715
    %5837 = vst.msk [vmem:[#allocation18] sm:$0xff] %vm202, %v5806
    %5838 = vst.msk [vmem:[%s15] sm:$0xff] %vm5835, %v5834
    // Predicated region
    $region74: #{retain_forward.1} parent=1 // pred_check
      _
    $region75: #{retain_forward.1} parent=1 // pred_check_branch
      %5840 = sbr.rel (0) target = $region77
    $region76: #{retain_forward.1} parent=1 // pred_region
      _
    $region77: #{retain_forward.1} parent=1 // pred_fallthru
      _
    // Predicated region
    $region78: #{retain_forward.1} parent=1 // pred_check
      _
    $region79: #{retain_forward.1} parent=1 // pred_check_branch
      %5842 = sbr.rel (0) target = $region81
    $region80: #{retain_forward.1} parent=1 // pred_region
      %s5844 = ssub.s32 128, 128
      %5845 = vsyncadd [#allocation11], %s5844
      %s5847 = sshll.u32 [#allocation18], 4
      %s5848 = int_to_ptr.vmem [resolvable:$true] %s5847
      %5850 = dma.vmem_to_hbm [thread:$0]  %s5848, 128, %s14, [#allocation11]
    $region81: #{retain_forward.1} parent=1 // pred_fallthru
      _
    // Predicated region
    $region82: #{retain_forward.1} parent=1 // pred_check
      _
    $region83: #{retain_forward.1} parent=1 // pred_check_branch
      %5852 = sbr.rel (0) target = $region85
    $region84: #{retain_forward.1} parent=1 // pred_region
      _
    $region85: #{retain_forward.1} parent=1 // pred_fallthru
      _
    // Predicated region
    $region86: #{retain_forward.1} parent=1 // pred_check
      _
    $region87: #{retain_forward.1} parent=1 // pred_check_branch
      %5854 = sbr.rel (0) target = $region89
    $region88: #{retain_forward.1} parent=1 // pred_region
      _
    $region89: #{retain_forward.1} parent=1 // pred_fallthru
      _
    // Predicated region
    $region90: #{retain_forward.1} parent=1 // pred_check
      _
    $region91: #{retain_forward.1} parent=1 // pred_check_branch
      %5856 = sbr.rel (0) target = $region93
    $region92: #{retain_forward.1} parent=1 // pred_region
      %5857 = dma.done [#allocation11], 128
    $region93: #{retain_forward.1} parent=1 // pred_fallthru
      _
    // Predicated region
    $region94: #{retain_forward.1} parent=1 // pred_check
      _
    $region95: #{retain_forward.1} parent=1 // pred_check_branch
      %5859 = sbr.rel (0) target = $region97
    $region96: #{retain_forward.1} parent=1 // pred_region
      _
    $region97: #{retain_forward.1} parent=1 // pred_fallthru
      _
    %5860 = vsyncpa [#allocation10], 1
    %5861 = vsyncpa [#allocation13], 1
    %5862 = vsyncpa [#allocation16], 1
    %5863 = vsyncpa [#allocation11], 1

</llo_original>
